<compile_context>
chip_gen: v7x
topology: tpu7x:2x2x1
jax: 0.10.0
libtpu: 0.0.40
codegen_flags: <defaults>
</compile_context>

<pallas_src>
import math
import numpy as np
import jax
import jax.numpy as jnp
from jax import lax
from jax.experimental import pallas as pl
from jax.experimental.pallas import tpu as pltpu

HID_DIM = 48            # d_model; must be divisible by the head count
N_HEADS = 6
D_K = HID_DIM // N_HEADS
NEG_INF = -1e9


# ----------------------------------------------------------------------------
# Fused kernel: attention mix + BiGRU + masked-mean readout for one batch block
# ----------------------------------------------------------------------------
def _fused_kernel(sizes_a_ref, sizes_p_ref,                    # SMEM (B_pad,)
                  a_ref, p_ref,
                  wq_ref, bq_ref, wk_ref, bk_ref, wv_ref, bv_ref, wo_ref, bo_ref,
                  wih_f_ref, whh_f_ref, bih_f_ref, bhh_f_ref,
                  wih_b_ref, whh_b_ref, bih_b_ref, bhh_b_ref,
                  emb_ref,                                     # (Bblk, 2D) out
                  gif_scr, gib_scr):                           # (Bblk, Na, 3D)
    Bblk, Na, D = a_ref.shape
    Np = p_ref.shape[1]
    D3 = 3 * D

    # ---- per-block graph sizes (SMEM scalars -> small per-graph vectors) ----
    b0 = pl.program_id(0) * Bblk
    bidx = lax.broadcasted_iota(jnp.int32, (Bblk, 1), 0)
    sa_vec = jnp.zeros((Bblk, 1), jnp.int32)
    sp_vec = jnp.zeros((Bblk, 1), jnp.int32)
    for bb in range(Bblk):                                     # Bblk is static
        sa_vec = jnp.where(bidx == bb, sizes_a_ref[b0 + bb], sa_vec)
        sp_vec = jnp.where(bidx == bb, sizes_p_ref[b0 + bb], sp_vec)

    # ---- attention projections on the flattened (Bblk*Na, D) block ----------
    a3 = a_ref[...]                                            # (Bblk, Na, D)
    p3 = p_ref[...]                                            # (Bblk, Np, D)
    a2 = a3.reshape(Bblk * Na, D)
    p2 = p3.reshape(Bblk * Np, D)
    q3 = (jnp.dot(a2, wq_ref[...], preferred_element_type=jnp.float32)
          + bq_ref[...]).reshape(Bblk, Na, D)
    k3 = (jnp.dot(p2, wk_ref[...], preferred_element_type=jnp.float32)
          + bk_ref[...]).reshape(Bblk, Np, D)
    v3 = (jnp.dot(p2, wv_ref[...], preferred_element_type=jnp.float32)
          + bv_ref[...]).reshape(Bblk, Np, D)

    # padding mask straight from the node counts: masked if i>=size_a or j>=size_p
    i_idx = lax.broadcasted_iota(jnp.int32, (Bblk, Na, Np), 1)
    j_idx = lax.broadcasted_iota(jnp.int32, (Bblk, Na, Np), 2)
    mask = (i_idx >= sa_vec.reshape(Bblk, 1, 1)) | (j_idx >= sp_vec.reshape(Bblk, 1, 1))

    # ---- multi-head attention via lane masks (no 8-lane slices, no concat) --
    lane = lax.broadcasted_iota(jnp.int32, (1, 1, D), 2)
    scale = 1.0 / math.sqrt(D_K)
    o3 = jnp.zeros((Bblk, Na, D), jnp.float32)
    for hh in range(N_HEADS):
        mh = ((lane >= hh * D_K) & (lane < (hh + 1) * D_K)).astype(jnp.float32)
        # (q * mh) @ k^T contracts only over head hh's lanes -> per-head scores
        s = jnp.einsum('bnd,bmd->bnm', q3 * mh, k3,
                       preferred_element_type=jnp.float32) * scale
        s = jnp.where(mask, NEG_INF, s)
        pa = jax.nn.softmax(s, axis=-1)
        # pa @ (v * mh) writes head hh's output into its own lanes (zeros elsewhere)
        o3 = o3 + jnp.einsum('bnm,bmd->bnd', pa, v3 * mh,
                             preferred_element_type=jnp.float32)

    y2 = (jnp.dot(o3.reshape(Bblk * Na, D), wo_ref[...],
                  preferred_element_type=jnp.float32) + bo_ref[...]) + a2
    y3 = y2.reshape(Bblk, Na, D)                               # attention-mixed h
    h0 = jnp.max(y3, axis=1)                                   # (Bblk, D) GRU init

    # ---- GRU: hoist the input projections out of the time loop --------------
    gif_scr[...] = (jnp.dot(y2, wih_f_ref[...], preferred_element_type=jnp.float32)
                    + bih_f_ref[...]).reshape(Bblk, Na, D3)
    gib_scr[...] = (jnp.dot(y2, wih_b_ref[...], preferred_element_type=jnp.float32)
                    + bih_b_ref[...]).reshape(Bblk, Na, D3)

    whh_f = whh_f_ref[...]
    bhh_f = bhh_f_ref[...]
    whh_b = whh_b_ref[...]
    bhh_b = bhh_b_ref[...]

    def cell(gi, hprev, whh, bhh):
        gh = jnp.dot(hprev, whh, preferred_element_type=jnp.float32) + bhh
        r = jax.nn.sigmoid(gi[:, 0:D] + gh[:, 0:D])
        z = jax.nn.sigmoid(gi[:, D:2 * D] + gh[:, D:2 * D])
        n = jnp.tanh(gi[:, 2 * D:D3] + r * gh[:, 2 * D:D3])
        return (1.0 - z) * n + z * hprev

    zeros_acc = jnp.zeros((Bblk, D), jnp.float32)

    # forward direction: accumulate the masked readout sum on the fly
    def fwd_body(t, carry):
        hprev, acc = carry
        gi = gif_scr[:, pl.ds(t, 1), :].reshape(Bblk, D3)
        hnew = cell(gi, hprev, whh_f, bhh_f)
        keep = (t < sp_vec).astype(jnp.float32)                # (Bblk, 1)
        return hnew, acc + hnew * keep

    # backward direction (same initial hidden, per nn.GRU hidden.repeat(2,1,1))
    def bwd_body(i, carry):
        t = Na - 1 - i
        hprev, acc = carry
        gi = gib_scr[:, pl.ds(t, 1), :].reshape(Bblk, D3)
        hnew = cell(gi, hprev, whh_b, bhh_b)
        keep = (t < sp_vec).astype(jnp.float32)
        return hnew, acc + hnew * keep

    _, acc_f = lax.fori_loop(0, Na, fwd_body, (h0, zeros_acc), unroll=True)
    _, acc_b = lax.fori_loop(0, Na, bwd_body, (h0, zeros_acc), unroll=True)

    # masked mean readout; guard against empty graphs (size == 0)
    sp_f = jnp.maximum(sp_vec.astype(jnp.float32), 1.0)
    inv = pl.reciprocal(sp_f, approx=True)                     # (Bblk, 1)
    emb_ref[...] = jnp.concatenate([acc_f * inv, acc_b * inv], axis=-1)


# ----------------------------------------------------------------------------
# Wrapper: single fused pallas_call over batch blocks
# ----------------------------------------------------------------------------
def fused_forward(a_pharmj, p_pharmj, sizes_a, sizes_p,
                  attn_params, gru_params, b_blk=None):
    B, Na, D = a_pharmj.shape
    Np = p_pharmj.shape[1]
    assert D == HID_DIM and D % N_HEADS == 0

    # whole batch in one block for small B; blocks of 8 otherwise (keeps the
    # leading block dim either == full B or a multiple of 8 for the output).
    if b_blk is None:
        b_blk = B if B <= 8 else 8
    n_blocks = (B + b_blk - 1) // b_blk
    B_pad = n_blocks * b_blk
    if B_pad != B:
        pad = B_pad - B
        a_pharmj = jnp.pad(a_pharmj, ((0, pad), (0, 0), (0, 0)))
        p_pharmj = jnp.pad(p_pharmj, ((0, pad), (0, 0), (0, 0)))
        sizes_a = jnp.pad(sizes_a, (0, pad))
        sizes_p = jnp.pad(sizes_p, (0, pad))

    wq, bq, wk, bk, wv, bv, wo, bo = attn_params
    wih_f, whh_f, bih_f, bhh_f, wih_b, whh_b, bih_b, bhh_b = gru_params

    full2d = lambda g, sa, sp: (0, 0)
    blk3 = lambda g, sa, sp: (g, 0, 0)

    grid_spec = pltpu.PrefetchScalarGridSpec(
        num_scalar_prefetch=2,
        grid=(n_blocks,),
        in_specs=[
            pl.BlockSpec((b_blk, Na, D), blk3),
            pl.BlockSpec((b_blk, Np, D), blk3),
            pl.BlockSpec((D, D), full2d), pl.BlockSpec((1, D), full2d),
            pl.BlockSpec((D, D), full2d), pl.BlockSpec((1, D), full2d),
            pl.BlockSpec((D, D), full2d), pl.BlockSpec((1, D), full2d),
            pl.BlockSpec((D, D), full2d), pl.BlockSpec((1, D), full2d),
            pl.BlockSpec((D, 3 * D), full2d), pl.BlockSpec((D, 3 * D), full2d),
            pl.BlockSpec((1, 3 * D), full2d), pl.BlockSpec((1, 3 * D), full2d),
            pl.BlockSpec((D, 3 * D), full2d), pl.BlockSpec((D, 3 * D), full2d),
            pl.BlockSpec((1, 3 * D), full2d), pl.BlockSpec((1, 3 * D), full2d),
        ],
        out_specs=pl.BlockSpec((b_blk, 2 * D), lambda g, sa, sp: (g, 0)),
        scratch_shapes=[pltpu.VMEM((b_blk, Na, 3 * D), jnp.float32),
                        pltpu.VMEM((b_blk, Na, 3 * D), jnp.float32)],
    )

    emb = pl.pallas_call(
        _fused_kernel,
        out_shape=jax.ShapeDtypeStruct((B_pad, 2 * D), jnp.float32),
        grid_spec=grid_spec,
        compiler_params=pltpu.CompilerParams(
            dimension_semantics=("parallel",)),      # v7x: shard blocks over 2 TCs
    )(sizes_a.astype(jnp.int32), sizes_p.astype(jnp.int32),
      a_pharmj, p_pharmj,
      wq, bq, wk, bk, wv, bv, wo, bo,
      wih_f, whh_f, bih_f, bhh_f, wih_b, whh_b, bih_b, bhh_b)
    return emb[:B]                                   # (B, 2*D)


# ----------------------------------------------------------------------------
# Pure-JAX reference (mirrors the PyTorch forward) for correctness checking
# ----------------------------------------------------------------------------
def _ref_forward(a, p, sizes_p, attn_params, gru_params):
    HI = jax.lax.Precision.HIGHEST
    D = HID_DIM
    wq, bq, wk, bk, wv, bv, wo, bo = attn_params
    B, Na, _ = a.shape
    Np = p.shape[1]
    q = jnp.matmul(a, wq, precision=HI) + bq
    k = jnp.matmul(p, wk, precision=HI) + bk
    v = jnp.matmul(p, wv, precision=HI) + bv
    qh = q.reshape(B, Na, N_HEADS, D_K).transpose(0, 2, 1, 3)
    kh = k.reshape(B, Np, N_HEADS, D_K).transpose(0, 2, 1, 3)
    vh = v.reshape(B, Np, N_HEADS, D_K).transpose(0, 2, 1, 3)
    cnt = jnp.matmul((a != 0).astype(jnp.float32),
                     (p != 0).astype(jnp.float32).transpose(0, 2, 1), precision=HI)
    mask = (cnt == 0)[:, None, :, :]
    s = jnp.matmul(qh, kh.transpose(0, 1, 3, 2), precision=HI) / math.sqrt(D_K)
    s = jnp.where(mask, NEG_INF, s)
    pa = jax.nn.softmax(s, axis=-1)
    o = jnp.matmul(pa, vh, precision=HI).transpose(0, 2, 1, 3).reshape(B, Na, D)
    h = jnp.matmul(o, wo, precision=HI) + bo + a
    h0 = jnp.max(h, axis=1)

    wih_f, whh_f, bih_f, bhh_f, wih_b, whh_b, bih_b, bhh_b = gru_params

    def cell(xt, hprev, wih, whh, bih, bhh):
        gi = jnp.matmul(xt, wih, precision=HI) + bih
        gh = jnp.matmul(hprev, whh, precision=HI) + bhh
        r = jax.nn.sigmoid(gi[:, 0:D] + gh[:, 0:D])
        z = jax.nn.sigmoid(gi[:, D:2 * D] + gh[:, D:2 * D])
        n = jnp.tanh(gi[:, 2 * D:3 * D] + r * gh[:, 2 * D:3 * D])
        return (1.0 - z) * n + z * hprev

    hf, out_f = h0, []
    for t in range(Na):
        hf = cell(h[:, t], hf, wih_f, whh_f, bih_f, bhh_f)
        out_f.append(hf)
    hb, out_b = h0, [None] * Na
    for i in range(Na):
        t = Na - 1 - i
        hb = cell(h[:, t], hb, wih_b, whh_b, bih_b, bhh_b)
        out_b[t] = hb
    hcat = jnp.concatenate([jnp.stack(out_f, 1), jnp.stack(out_b, 1)], axis=-1)
    embeds = [jnp.mean(hcat[i, :int(sizes_p[i])], axis=0) for i in range(B)]
    return jnp.stack(embeds, 0)


# ----------------------------------------------------------------------------
if __name__ == "__main__":
    D = HID_DIM
    Na, Np = 10, 8
    key = jax.random.PRNGKey(0)
    ks = jax.random.split(key, 24)

    def uinit(k, fan_in, shape):
        bound = 1.0 / math.sqrt(fan_in)
        return jax.random.uniform(k, shape, jnp.float32, -bound, bound)

    # MultiHeadedAttention(6, D): 4 Linear(D, D); weights stored as x @ W + b
    attn_params = (uinit(ks[0], D, (D, D)), uinit(ks[1], D, (1, D)),
                   uinit(ks[2], D, (D, D)), uinit(ks[3], D, (1, D)),
                   uinit(ks[4], D, (D, D)), uinit(ks[5], D, (1, D)),
                   uinit(ks[6], D, (D, D)), uinit(ks[7], D, (1, D)))
    # nn.GRU(D, D, bidirectional=True); gate column order (r | z | n)
    gru_params = (uinit(ks[8], D, (D, 3 * D)), uinit(ks[9], D, (D, 3 * D)),
                  uinit(ks[10], D, (1, 3 * D)), uinit(ks[11], D, (1, 3 * D)),
                  uinit(ks[12], D, (D, 3 * D)), uinit(ks[13], D, (D, 3 * D)),
                  uinit(ks[14], D, (1, 3 * D)), uinit(ks[15], D, (1, 3 * D)))

    def make_case(key_a, key_p, sizes_a, sizes_p):
        B = len(sizes_a)
        a_raw = 0.5 * jax.random.normal(key_a, (B, Na, D), jnp.float32)
        p_raw = 0.5 * jax.random.normal(key_p, (B, Np, D), jnp.float32)
        a_m = (np.arange(Na)[None, :] < sizes_a[:, None]).astype(np.float32)[:, :, None]
        p_m = (np.arange(Np)[None, :] < sizes_p[:, None]).astype(np.float32)[:, :, None]
        return a_raw * jnp.asarray(a_m), p_raw * jnp.asarray(p_m)

    fwd = jax.jit(fused_forward)

    # case 1: small batch -> whole batch in one block, grid=(1,)
    sizes_a1 = np.array([10, 7], dtype=np.int32)
    sizes_p1 = np.array([8, 5], dtype=np.int32)
    a1, p1 = make_case(ks[16], ks[17], sizes_a1, sizes_p1)
    out1 = jax.block_until_ready(
        fwd(a1, p1, jnp.asarray(sizes_a1), jnp.asarray(sizes_p1),
            attn_params, gru_params))
    assert out1.shape == (2, 2 * D)
    ref1 = _ref_forward(a1, p1, sizes_p1, attn_params, gru_params)
    np.testing.assert_allclose(np.asarray(out1), np.asarray(ref1),
                               rtol=2e-3, atol=2e-3)

    # case 2: B=9 -> batch blocks of 8 with padding, grid=(2,) ("parallel")
    sizes_a2 = np.array([10, 7, 3, 10, 1, 8, 5, 9, 2], dtype=np.int32)
    sizes_p2 = np.array([8, 5, 2, 8, 1, 6, 4, 7, 3], dtype=np.int32)
    a2, p2 = make_case(ks[18], ks[19], sizes_a2, sizes_p2)
    out2 = jax.block_until_ready(
        fwd(a2, p2, jnp.asarray(sizes_a2), jnp.asarray(sizes_p2),
            attn_params, gru_params))
    assert out2.shape == (9, 2 * D)
    ref2 = _ref_forward(a2, p2, sizes_p2, attn_params, gru_params)
    np.testing.assert_allclose(np.asarray(out2), np.asarray(ref2),
                               rtol=2e-3, atol=2e-3)

    print("KERNEL_OK")
</pallas_src>

<mosaic_0001>
module attributes {stable_mosaic.version = 11 : i64} {
  func.func @_fused_kernel(%arg0: i32, %arg1: memref<2xi32, #tpu.memory_space<smem>>, %arg2: memref<2xi32, #tpu.memory_space<smem>>, %arg3: memref<2x10x48xf32, #tpu.memory_space<vmem>>, %arg4: memref<2x8x48xf32, #tpu.memory_space<vmem>>, %arg5: memref<48x48xf32, #tpu.memory_space<vmem>>, %arg6: memref<1x48xf32, #tpu.memory_space<vmem>>, %arg7: memref<48x48xf32, #tpu.memory_space<vmem>>, %arg8: memref<1x48xf32, #tpu.memory_space<vmem>>, %arg9: memref<48x48xf32, #tpu.memory_space<vmem>>, %arg10: memref<1x48xf32, #tpu.memory_space<vmem>>, %arg11: memref<48x48xf32, #tpu.memory_space<vmem>>, %arg12: memref<1x48xf32, #tpu.memory_space<vmem>>, %arg13: memref<48x144xf32, #tpu.memory_space<vmem>>, %arg14: memref<48x144xf32, #tpu.memory_space<vmem>>, %arg15: memref<1x144xf32, #tpu.memory_space<vmem>>, %arg16: memref<1x144xf32, #tpu.memory_space<vmem>>, %arg17: memref<48x144xf32, #tpu.memory_space<vmem>>, %arg18: memref<48x144xf32, #tpu.memory_space<vmem>>, %arg19: memref<1x144xf32, #tpu.memory_space<vmem>>, %arg20: memref<1x144xf32, #tpu.memory_space<vmem>>, %arg21: memref<2x96xf32, #tpu.memory_space<vmem>>, %arg22: memref<2x10x144xf32, #tpu.memory_space<vmem>>, %arg23: memref<2x10x144xf32, #tpu.memory_space<vmem>>) attributes {dimension_semantics = [#tpu.dimension_semantics<parallel>], iteration_bounds = array<i64: 1>, scalar_prefetch = 2 : i64, scratch_operands = 2 : i64, tpu.core_type = #tpu.core_type<tc>, window_params = [{transform_indices = @transform_0, window_bounds = array<i64: 2, 10, 48>}, {transform_indices = @transform_1, window_bounds = array<i64: 2, 8, 48>}, {pipeline_mode = #tpu.pipeline_mode<synchronous>, transform_indices = @transform_2, window_bounds = array<i64: 48, 48>}, {pipeline_mode = #tpu.pipeline_mode<synchronous>, transform_indices = @transform_3, window_bounds = array<i64: 1, 48>}, {pipeline_mode = #tpu.pipeline_mode<synchronous>, transform_indices = @transform_4, window_bounds = array<i64: 48, 48>}, {pipeline_mode = #tpu.pipeline_mode<synchronous>, transform_indices = @transform_5, window_bounds = array<i64: 1, 48>}, {pipeline_mode = #tpu.pipeline_mode<synchronous>, transform_indices = @transform_6, window_bounds = array<i64: 48, 48>}, {pipeline_mode = #tpu.pipeline_mode<synchronous>, transform_indices = @transform_7, window_bounds = array<i64: 1, 48>}, {pipeline_mode = #tpu.pipeline_mode<synchronous>, transform_indices = @transform_8, window_bounds = array<i64: 48, 48>}, {pipeline_mode = #tpu.pipeline_mode<synchronous>, transform_indices = @transform_9, window_bounds = array<i64: 1, 48>}, {pipeline_mode = #tpu.pipeline_mode<synchronous>, transform_indices = @transform_10, window_bounds = array<i64: 48, 144>}, {pipeline_mode = #tpu.pipeline_mode<synchronous>, transform_indices = @transform_11, window_bounds = array<i64: 48, 144>}, {pipeline_mode = #tpu.pipeline_mode<synchronous>, transform_indices = @transform_12, window_bounds = array<i64: 1, 144>}, {pipeline_mode = #tpu.pipeline_mode<synchronous>, transform_indices = @transform_13, window_bounds = array<i64: 1, 144>}, {pipeline_mode = #tpu.pipeline_mode<synchronous>, transform_indices = @transform_14, window_bounds = array<i64: 48, 144>}, {pipeline_mode = #tpu.pipeline_mode<synchronous>, transform_indices = @transform_15, window_bounds = array<i64: 48, 144>}, {pipeline_mode = #tpu.pipeline_mode<synchronous>, transform_indices = @transform_16, window_bounds = array<i64: 1, 144>}, {pipeline_mode = #tpu.pipeline_mode<synchronous>, transform_indices = @transform_17, window_bounds = array<i64: 1, 144>}, {transform_indices = @transform_18, window_bounds = array<i64: 2, 96>}]} {
    %c2_i32 = arith.constant 2 : i32
    %0 = arith.muli %arg0, %c2_i32 : i32
    %1 = tpu.iota {dimensions = array<i32: 0>} : vector<2x1xi32>
    %c0_i32 = arith.constant 0 : i32
    %2 = vector.broadcast %c0_i32 : i32 to vector<2x1xi32>
    %c0_i32_0 = arith.constant 0 : i32
    %3 = vector.broadcast %c0_i32_0 : i32 to vector<2x1xi32>
    %c0_i32_1 = arith.constant 0 : i32
    %4 = vector.broadcast %c0_i32_1 : i32 to vector<2x1xi32>
    %5 = arith.cmpi eq, %1, %4 : vector<2x1xi32>
    %c0_i32_2 = arith.constant 0 : i32
    %6 = arith.addi %0, %c0_i32_2 : i32
    %7 = arith.index_cast %6 : i32 to index
    %8 = memref.load %arg1[%7] : memref<2xi32, #tpu.memory_space<smem>>
    %9 = vector.broadcast %8 : i32 to vector<2x1xi32>
    %10 = arith.select %5, %9, %2 : vector<2x1xi1>, vector<2x1xi32>
    %c0_i32_3 = arith.constant 0 : i32
    %11 = vector.broadcast %c0_i32_3 : i32 to vector<2x1xi32>
    %12 = arith.cmpi eq, %1, %11 : vector<2x1xi32>
    %c0_i32_4 = arith.constant 0 : i32
    %13 = arith.addi %0, %c0_i32_4 : i32
    %14 = arith.index_cast %13 : i32 to index
    %15 = memref.load %arg2[%14] : memref<2xi32, #tpu.memory_space<smem>>
    %16 = vector.broadcast %15 : i32 to vector<2x1xi32>
    %17 = arith.select %12, %16, %3 : vector<2x1xi1>, vector<2x1xi32>
    %c1_i32 = arith.constant 1 : i32
    %18 = vector.broadcast %c1_i32 : i32 to vector<2x1xi32>
    %19 = arith.cmpi eq, %1, %18 : vector<2x1xi32>
    %c1_i32_5 = arith.constant 1 : i32
    %20 = arith.addi %0, %c1_i32_5 : i32
    %21 = arith.index_cast %20 : i32 to index
    %22 = memref.load %arg1[%21] : memref<2xi32, #tpu.memory_space<smem>>
    %23 = vector.broadcast %22 : i32 to vector<2x1xi32>
    %24 = arith.select %19, %23, %10 : vector<2x1xi1>, vector<2x1xi32>
    %c1_i32_6 = arith.constant 1 : i32
    %25 = vector.broadcast %c1_i32_6 : i32 to vector<2x1xi32>
    %26 = arith.cmpi eq, %1, %25 : vector<2x1xi32>
    %c1_i32_7 = arith.constant 1 : i32
    %27 = arith.addi %0, %c1_i32_7 : i32
    %28 = arith.index_cast %27 : i32 to index
    %29 = memref.load %arg2[%28] : memref<2xi32, #tpu.memory_space<smem>>
    %30 = vector.broadcast %29 : i32 to vector<2x1xi32>
    %31 = arith.select %26, %30, %17 : vector<2x1xi1>, vector<2x1xi32>
    %c0 = arith.constant 0 : index
    %c0_8 = arith.constant 0 : index
    %c0_9 = arith.constant 0 : index
    %32 = vector.load %arg3[%c0, %c0_8, %c0_9] : memref<2x10x48xf32, #tpu.memory_space<vmem>>, vector<2x10x48xf32>
    %c0_10 = arith.constant 0 : index
    %c0_11 = arith.constant 0 : index
    %c0_12 = arith.constant 0 : index
    %33 = vector.load %arg4[%c0_10, %c0_11, %c0_12] : memref<2x8x48xf32, #tpu.memory_space<vmem>>, vector<2x8x48xf32>
    %34 = vector.shape_cast %32 : vector<2x10x48xf32> to vector<20x48xf32>
    %35 = vector.shape_cast %33 : vector<2x8x48xf32> to vector<16x48xf32>
    %c0_13 = arith.constant 0 : index
    %c0_14 = arith.constant 0 : index
    %36 = vector.load %arg5[%c0_13, %c0_14] : memref<48x48xf32, #tpu.memory_space<vmem>>, vector<48x48xf32>
    %cst = arith.constant dense<0.000000e+00> : vector<20x48xf32>
    %37 = tpu.matmul %34, %36, %cst {dimension_numbers = #tpu.dot_dimension_numbers<[1], [0], [0], [1], [0, 0, 1, 1], [], []>} : vector<20x48xf32>, vector<48x48xf32>, vector<20x48xf32> -> vector<20x48xf32>
    %c0_15 = arith.constant 0 : index
    %c0_16 = arith.constant 0 : index
    %38 = vector.load %arg6[%c0_15, %c0_16] : memref<1x48xf32, #tpu.memory_space<vmem>>, vector<1x48xf32>
    %39 = vector.broadcast %38 : vector<1x48xf32> to vector<20x48xf32>
    %40 = arith.addf %37, %39 : vector<20x48xf32>
    %41 = vector.shape_cast %40 : vector<20x48xf32> to vector<2x10x48xf32>
    %c0_17 = arith.constant 0 : index
    %c0_18 = arith.constant 0 : index
    %42 = vector.load %arg7[%c0_17, %c0_18] : memref<48x48xf32, #tpu.memory_space<vmem>>, vector<48x48xf32>
    %cst_19 = arith.constant dense<0.000000e+00> : vector<16x48xf32>
    %43 = tpu.matmul %35, %42, %cst_19 {dimension_numbers = #tpu.dot_dimension_numbers<[1], [0], [0], [1], [0, 0, 1, 1], [], []>} : vector<16x48xf32>, vector<48x48xf32>, vector<16x48xf32> -> vector<16x48xf32>
    %c0_20 = arith.constant 0 : index
    %c0_21 = arith.constant 0 : index
    %44 = vector.load %arg8[%c0_20, %c0_21] : memref<1x48xf32, #tpu.memory_space<vmem>>, vector<1x48xf32>
    %45 = vector.broadcast %44 : vector<1x48xf32> to vector<16x48xf32>
    %46 = arith.addf %43, %45 : vector<16x48xf32>
    %47 = vector.shape_cast %46 : vector<16x48xf32> to vector<2x8x48xf32>
    %c0_22 = arith.constant 0 : index
    %c0_23 = arith.constant 0 : index
    %48 = vector.load %arg9[%c0_22, %c0_23] : memref<48x48xf32, #tpu.memory_space<vmem>>, vector<48x48xf32>
    %cst_24 = arith.constant dense<0.000000e+00> : vector<16x48xf32>
    %49 = tpu.matmul %35, %48, %cst_24 {dimension_numbers = #tpu.dot_dimension_numbers<[1], [0], [0], [1], [0, 0, 1, 1], [], []>} : vector<16x48xf32>, vector<48x48xf32>, vector<16x48xf32> -> vector<16x48xf32>
    %c0_25 = arith.constant 0 : index
    %c0_26 = arith.constant 0 : index
    %50 = vector.load %arg10[%c0_25, %c0_26] : memref<1x48xf32, #tpu.memory_space<vmem>>, vector<1x48xf32>
    %51 = vector.broadcast %50 : vector<1x48xf32> to vector<16x48xf32>
    %52 = arith.addf %49, %51 : vector<16x48xf32>
    %53 = vector.shape_cast %52 : vector<16x48xf32> to vector<2x8x48xf32>
    %54 = tpu.iota {dimensions = array<i32: 1>} : vector<2x10x8xi32>
    %55 = tpu.iota {dimensions = array<i32: 2>} : vector<2x10x8xi32>
    %56 = vector.shape_cast %24 : vector<2x1xi32> to vector<2x1x1xi32>
    %57 = vector.broadcast %56 : vector<2x1x1xi32> to vector<2x10x8xi32>
    %58 = arith.cmpi sge, %54, %57 : vector<2x10x8xi32>
    %59 = vector.shape_cast %31 : vector<2x1xi32> to vector<2x1x1xi32>
    %60 = vector.broadcast %59 : vector<2x1x1xi32> to vector<2x10x8xi32>
    %61 = arith.cmpi sge, %55, %60 : vector<2x10x8xi32>
    %62 = arith.ori %58, %61 : vector<2x10x8xi1>
    %63 = tpu.iota {dimensions = array<i32: 2>} : vector<1x1x48xi32>
    %cst_27 = arith.constant 0.000000e+00 : f32
    %64 = vector.broadcast %cst_27 : f32 to vector<2x10x48xf32>
    %c0_i32_28 = arith.constant 0 : i32
    %65 = vector.broadcast %c0_i32_28 : i32 to vector<1x1x48xi32>
    %66 = arith.cmpi sge, %63, %65 : vector<1x1x48xi32>
    %c8_i32 = arith.constant 8 : i32
    %67 = vector.broadcast %c8_i32 : i32 to vector<1x1x48xi32>
    %68 = arith.cmpi slt, %63, %67 : vector<1x1x48xi32>
    %69 = arith.andi %66, %68 : vector<1x1x48xi1>
    %70 = arith.extui %69 : vector<1x1x48xi1> to vector<1x1x48xi32>
    %71 = arith.sitofp %70 : vector<1x1x48xi32> to vector<1x1x48xf32>
    %72 = vector.broadcast %71 : vector<1x1x48xf32> to vector<2x10x48xf32>
    %73 = arith.mulf %41, %72 : vector<2x10x48xf32>
    "tpu.trace_start"() <{level = 10 : i32, message = "bnd,bmd->bnm"}> : () -> ()
    %cst_29 = arith.constant dense<0.000000e+00> : vector<2x10x8xf32>
    %74 = tpu.matmul %73, %47, %cst_29 {dimension_numbers = #tpu.dot_dimension_numbers<[2], [2], [1], [1], [0, 0, 0, 1, 1, 1], [0], [0]>} : vector<2x10x48xf32>, vector<2x8x48xf32>, vector<2x10x8xf32> -> vector<2x10x8xf32>
    "tpu.trace_stop"() : () -> ()
    %cst_30 = arith.constant 0.353553385 : f32
    %75 = vector.broadcast %cst_30 : f32 to vector<2x10x8xf32>
    %76 = arith.mulf %74, %75 : vector<2x10x8xf32>
    %cst_31 = arith.constant -1.000000e+09 : f32
    %77 = vector.broadcast %cst_31 : f32 to vector<2x10x8xf32>
    %78 = arith.select %62, %77, %76 : vector<2x10x8xi1>, vector<2x10x8xf32>
    %cst_32 = arith.constant dense<0xFF800000> : vector<2x10xf32>
    %79 = vector.multi_reduction <maximumf>, %78, %cst_32 [2] : vector<2x10x8xf32> to vector<2x10xf32>
    %cst_33 = arith.constant 0xFF800000 : f32
    %80 = vector.broadcast %cst_33 : f32 to vector<2x10xf32>
    %81 = arith.maximumf %80, %79 : vector<2x10xf32>
    %82 = vector.shape_cast %81 : vector<2x10xf32> to vector<2x10x1xf32>
    %83 = vector.broadcast %82 : vector<2x10x1xf32> to vector<2x10x8xf32>
    %84 = arith.subf %78, %83 : vector<2x10x8xf32>
    %85 = math.exp %84 : vector<2x10x8xf32>
    %cst_34 = arith.constant dense<0.000000e+00> : vector<2x10xf32>
    %86 = vector.multi_reduction <add>, %85, %cst_34 [2] : vector<2x10x8xf32> to vector<2x10xf32>
    %87 = vector.shape_cast %86 : vector<2x10xf32> to vector<2x10x1xf32>
    %88 = vector.broadcast %87 : vector<2x10x1xf32> to vector<2x10x8xf32>
    %89 = arith.divf %85, %88 : vector<2x10x8xf32>
    %90 = vector.broadcast %71 : vector<1x1x48xf32> to vector<2x8x48xf32>
    %91 = arith.mulf %53, %90 : vector<2x8x48xf32>
    "tpu.trace_start"() <{level = 10 : i32, message = "bnm,bmd->bnd"}> : () -> ()
    %cst_35 = arith.constant dense<0.000000e+00> : vector<2x10x48xf32>
    %92 = tpu.matmul %89, %91, %cst_35 {dimension_numbers = #tpu.dot_dimension_numbers<[2], [1], [1], [2], [0, 0, 0, 1, 1, 2], [0], [0]>} : vector<2x10x8xf32>, vector<2x8x48xf32>, vector<2x10x48xf32> -> vector<2x10x48xf32>
    "tpu.trace_stop"() : () -> ()
    %93 = arith.addf %64, %92 : vector<2x10x48xf32>
    %c8_i32_36 = arith.constant 8 : i32
    %94 = vector.broadcast %c8_i32_36 : i32 to vector<1x1x48xi32>
    %95 = arith.cmpi sge, %63, %94 : vector<1x1x48xi32>
    %c16_i32 = arith.constant 16 : i32
    %96 = vector.broadcast %c16_i32 : i32 to vector<1x1x48xi32>
    %97 = arith.cmpi slt, %63, %96 : vector<1x1x48xi32>
    %98 = arith.andi %95, %97 : vector<1x1x48xi1>
    %99 = arith.extui %98 : vector<1x1x48xi1> to vector<1x1x48xi32>
    %100 = arith.sitofp %99 : vector<1x1x48xi32> to vector<1x1x48xf32>
    %101 = vector.broadcast %100 : vector<1x1x48xf32> to vector<2x10x48xf32>
    %102 = arith.mulf %41, %101 : vector<2x10x48xf32>
    "tpu.trace_start"() <{level = 10 : i32, message = "bnd,bmd->bnm"}> : () -> ()
    %cst_37 = arith.constant dense<0.000000e+00> : vector<2x10x8xf32>
    %103 = tpu.matmul %102, %47, %cst_37 {dimension_numbers = #tpu.dot_dimension_numbers<[2], [2], [1], [1], [0, 0, 0, 1, 1, 1], [0], [0]>} : vector<2x10x48xf32>, vector<2x8x48xf32>, vector<2x10x8xf32> -> vector<2x10x8xf32>
    "tpu.trace_stop"() : () -> ()
    %cst_38 = arith.constant 0.353553385 : f32
    %104 = vector.broadcast %cst_38 : f32 to vector<2x10x8xf32>
    %105 = arith.mulf %103, %104 : vector<2x10x8xf32>
    %cst_39 = arith.constant -1.000000e+09 : f32
    %106 = vector.broadcast %cst_39 : f32 to vector<2x10x8xf32>
    %107 = arith.select %62, %106, %105 : vector<2x10x8xi1>, vector<2x10x8xf32>
    %cst_40 = arith.constant dense<0xFF800000> : vector<2x10xf32>
    %108 = vector.multi_reduction <maximumf>, %107, %cst_40 [2] : vector<2x10x8xf32> to vector<2x10xf32>
    %cst_41 = arith.constant 0xFF800000 : f32
    %109 = vector.broadcast %cst_41 : f32 to vector<2x10xf32>
    %110 = arith.maximumf %109, %108 : vector<2x10xf32>
    %111 = vector.shape_cast %110 : vector<2x10xf32> to vector<2x10x1xf32>
    %112 = vector.broadcast %111 : vector<2x10x1xf32> to vector<2x10x8xf32>
    %113 = arith.subf %107, %112 : vector<2x10x8xf32>
    %114 = math.exp %113 : vector<2x10x8xf32>
    %cst_42 = arith.constant dense<0.000000e+00> : vector<2x10xf32>
    %115 = vector.multi_reduction <add>, %114, %cst_42 [2] : vector<2x10x8xf32> to vector<2x10xf32>
    %116 = vector.shape_cast %115 : vector<2x10xf32> to vector<2x10x1xf32>
    %117 = vector.broadcast %116 : vector<2x10x1xf32> to vector<2x10x8xf32>
    %118 = arith.divf %114, %117 : vector<2x10x8xf32>
    %119 = vector.broadcast %100 : vector<1x1x48xf32> to vector<2x8x48xf32>
    %120 = arith.mulf %53, %119 : vector<2x8x48xf32>
    "tpu.trace_start"() <{level = 10 : i32, message = "bnm,bmd->bnd"}> : () -> ()
    %cst_43 = arith.constant dense<0.000000e+00> : vector<2x10x48xf32>
    %121 = tpu.matmul %118, %120, %cst_43 {dimension_numbers = #tpu.dot_dimension_numbers<[2], [1], [1], [2], [0, 0, 0, 1, 1, 2], [0], [0]>} : vector<2x10x8xf32>, vector<2x8x48xf32>, vector<2x10x48xf32> -> vector<2x10x48xf32>
    "tpu.trace_stop"() : () -> ()
    %122 = arith.addf %93, %121 : vector<2x10x48xf32>
    %c16_i32_44 = arith.constant 16 : i32
    %123 = vector.broadcast %c16_i32_44 : i32 to vector<1x1x48xi32>
    %124 = arith.cmpi sge, %63, %123 : vector<1x1x48xi32>
    %c24_i32 = arith.constant 24 : i32
    %125 = vector.broadcast %c24_i32 : i32 to vector<1x1x48xi32>
    %126 = arith.cmpi slt, %63, %125 : vector<1x1x48xi32>
    %127 = arith.andi %124, %126 : vector<1x1x48xi1>
    %128 = arith.extui %127 : vector<1x1x48xi1> to vector<1x1x48xi32>
    %129 = arith.sitofp %128 : vector<1x1x48xi32> to vector<1x1x48xf32>
    %130 = vector.broadcast %129 : vector<1x1x48xf32> to vector<2x10x48xf32>
    %131 = arith.mulf %41, %130 : vector<2x10x48xf32>
    "tpu.trace_start"() <{level = 10 : i32, message = "bnd,bmd->bnm"}> : () -> ()
    %cst_45 = arith.constant dense<0.000000e+00> : vector<2x10x8xf32>
    %132 = tpu.matmul %131, %47, %cst_45 {dimension_numbers = #tpu.dot_dimension_numbers<[2], [2], [1], [1], [0, 0, 0, 1, 1, 1], [0], [0]>} : vector<2x10x48xf32>, vector<2x8x48xf32>, vector<2x10x8xf32> -> vector<2x10x8xf32>
    "tpu.trace_stop"() : () -> ()
    %cst_46 = arith.constant 0.353553385 : f32
    %133 = vector.broadcast %cst_46 : f32 to vector<2x10x8xf32>
    %134 = arith.mulf %132, %133 : vector<2x10x8xf32>
    %cst_47 = arith.constant -1.000000e+09 : f32
    %135 = vector.broadcast %cst_47 : f32 to vector<2x10x8xf32>
    %136 = arith.select %62, %135, %134 : vector<2x10x8xi1>, vector<2x10x8xf32>
    %cst_48 = arith.constant dense<0xFF800000> : vector<2x10xf32>
    %137 = vector.multi_reduction <maximumf>, %136, %cst_48 [2] : vector<2x10x8xf32> to vector<2x10xf32>
    %cst_49 = arith.constant 0xFF800000 : f32
    %138 = vector.broadcast %cst_49 : f32 to vector<2x10xf32>
    %139 = arith.maximumf %138, %137 : vector<2x10xf32>
    %140 = vector.shape_cast %139 : vector<2x10xf32> to vector<2x10x1xf32>
    %141 = vector.broadcast %140 : vector<2x10x1xf32> to vector<2x10x8xf32>
    %142 = arith.subf %136, %141 : vector<2x10x8xf32>
    %143 = math.exp %142 : vector<2x10x8xf32>
    %cst_50 = arith.constant dense<0.000000e+00> : vector<2x10xf32>
    %144 = vector.multi_reduction <add>, %143, %cst_50 [2] : vector<2x10x8xf32> to vector<2x10xf32>
    %145 = vector.shape_cast %144 : vector<2x10xf32> to vector<2x10x1xf32>
    %146 = vector.broadcast %145 : vector<2x10x1xf32> to vector<2x10x8xf32>
    %147 = arith.divf %143, %146 : vector<2x10x8xf32>
    %148 = vector.broadcast %129 : vector<1x1x48xf32> to vector<2x8x48xf32>
    %149 = arith.mulf %53, %148 : vector<2x8x48xf32>
    "tpu.trace_start"() <{level = 10 : i32, message = "bnm,bmd->bnd"}> : () -> ()
    %cst_51 = arith.constant dense<0.000000e+00> : vector<2x10x48xf32>
    %150 = tpu.matmul %147, %149, %cst_51 {dimension_numbers = #tpu.dot_dimension_numbers<[2], [1], [1], [2], [0, 0, 0, 1, 1, 2], [0], [0]>} : vector<2x10x8xf32>, vector<2x8x48xf32>, vector<2x10x48xf32> -> vector<2x10x48xf32>
    "tpu.trace_stop"() : () -> ()
    %151 = arith.addf %122, %150 : vector<2x10x48xf32>
    %c24_i32_52 = arith.constant 24 : i32
    %152 = vector.broadcast %c24_i32_52 : i32 to vector<1x1x48xi32>
    %153 = arith.cmpi sge, %63, %152 : vector<1x1x48xi32>
    %c32_i32 = arith.constant 32 : i32
    %154 = vector.broadcast %c32_i32 : i32 to vector<1x1x48xi32>
    %155 = arith.cmpi slt, %63, %154 : vector<1x1x48xi32>
    %156 = arith.andi %153, %155 : vector<1x1x48xi1>
    %157 = arith.extui %156 : vector<1x1x48xi1> to vector<1x1x48xi32>
    %158 = arith.sitofp %157 : vector<1x1x48xi32> to vector<1x1x48xf32>
    %159 = vector.broadcast %158 : vector<1x1x48xf32> to vector<2x10x48xf32>
    %160 = arith.mulf %41, %159 : vector<2x10x48xf32>
    "tpu.trace_start"() <{level = 10 : i32, message = "bnd,bmd->bnm"}> : () -> ()
    %cst_53 = arith.constant dense<0.000000e+00> : vector<2x10x8xf32>
    %161 = tpu.matmul %160, %47, %cst_53 {dimension_numbers = #tpu.dot_dimension_numbers<[2], [2], [1], [1], [0, 0, 0, 1, 1, 1], [0], [0]>} : vector<2x10x48xf32>, vector<2x8x48xf32>, vector<2x10x8xf32> -> vector<2x10x8xf32>
    "tpu.trace_stop"() : () -> ()
    %cst_54 = arith.constant 0.353553385 : f32
    %162 = vector.broadcast %cst_54 : f32 to vector<2x10x8xf32>
    %163 = arith.mulf %161, %162 : vector<2x10x8xf32>
    %cst_55 = arith.constant -1.000000e+09 : f32
    %164 = vector.broadcast %cst_55 : f32 to vector<2x10x8xf32>
    %165 = arith.select %62, %164, %163 : vector<2x10x8xi1>, vector<2x10x8xf32>
    %cst_56 = arith.constant dense<0xFF800000> : vector<2x10xf32>
    %166 = vector.multi_reduction <maximumf>, %165, %cst_56 [2] : vector<2x10x8xf32> to vector<2x10xf32>
    %cst_57 = arith.constant 0xFF800000 : f32
    %167 = vector.broadcast %cst_57 : f32 to vector<2x10xf32>
    %168 = arith.maximumf %167, %166 : vector<2x10xf32>
    %169 = vector.shape_cast %168 : vector<2x10xf32> to vector<2x10x1xf32>
    %170 = vector.broadcast %169 : vector<2x10x1xf32> to vector<2x10x8xf32>
    %171 = arith.subf %165, %170 : vector<2x10x8xf32>
    %172 = math.exp %171 : vector<2x10x8xf32>
    %cst_58 = arith.constant dense<0.000000e+00> : vector<2x10xf32>
    %173 = vector.multi_reduction <add>, %172, %cst_58 [2] : vector<2x10x8xf32> to vector<2x10xf32>
    %174 = vector.shape_cast %173 : vector<2x10xf32> to vector<2x10x1xf32>
    %175 = vector.broadcast %174 : vector<2x10x1xf32> to vector<2x10x8xf32>
    %176 = arith.divf %172, %175 : vector<2x10x8xf32>
    %177 = vector.broadcast %158 : vector<1x1x48xf32> to vector<2x8x48xf32>
    %178 = arith.mulf %53, %177 : vector<2x8x48xf32>
    "tpu.trace_start"() <{level = 10 : i32, message = "bnm,bmd->bnd"}> : () -> ()
    %cst_59 = arith.constant dense<0.000000e+00> : vector<2x10x48xf32>
    %179 = tpu.matmul %176, %178, %cst_59 {dimension_numbers = #tpu.dot_dimension_numbers<[2], [1], [1], [2], [0, 0, 0, 1, 1, 2], [0], [0]>} : vector<2x10x8xf32>, vector<2x8x48xf32>, vector<2x10x48xf32> -> vector<2x10x48xf32>
    "tpu.trace_stop"() : () -> ()
    %180 = arith.addf %151, %179 : vector<2x10x48xf32>
    %c32_i32_60 = arith.constant 32 : i32
    %181 = vector.broadcast %c32_i32_60 : i32 to vector<1x1x48xi32>
    %182 = arith.cmpi sge, %63, %181 : vector<1x1x48xi32>
    %c40_i32 = arith.constant 40 : i32
    %183 = vector.broadcast %c40_i32 : i32 to vector<1x1x48xi32>
    %184 = arith.cmpi slt, %63, %183 : vector<1x1x48xi32>
    %185 = arith.andi %182, %184 : vector<1x1x48xi1>
    %186 = arith.extui %185 : vector<1x1x48xi1> to vector<1x1x48xi32>
    %187 = arith.sitofp %186 : vector<1x1x48xi32> to vector<1x1x48xf32>
    %188 = vector.broadcast %187 : vector<1x1x48xf32> to vector<2x10x48xf32>
    %189 = arith.mulf %41, %188 : vector<2x10x48xf32>
    "tpu.trace_start"() <{level = 10 : i32, message = "bnd,bmd->bnm"}> : () -> ()
    %cst_61 = arith.constant dense<0.000000e+00> : vector<2x10x8xf32>
    %190 = tpu.matmul %189, %47, %cst_61 {dimension_numbers = #tpu.dot_dimension_numbers<[2], [2], [1], [1], [0, 0, 0, 1, 1, 1], [0], [0]>} : vector<2x10x48xf32>, vector<2x8x48xf32>, vector<2x10x8xf32> -> vector<2x10x8xf32>
    "tpu.trace_stop"() : () -> ()
    %cst_62 = arith.constant 0.353553385 : f32
    %191 = vector.broadcast %cst_62 : f32 to vector<2x10x8xf32>
    %192 = arith.mulf %190, %191 : vector<2x10x8xf32>
    %cst_63 = arith.constant -1.000000e+09 : f32
    %193 = vector.broadcast %cst_63 : f32 to vector<2x10x8xf32>
    %194 = arith.select %62, %193, %192 : vector<2x10x8xi1>, vector<2x10x8xf32>
    %cst_64 = arith.constant dense<0xFF800000> : vector<2x10xf32>
    %195 = vector.multi_reduction <maximumf>, %194, %cst_64 [2] : vector<2x10x8xf32> to vector<2x10xf32>
    %cst_65 = arith.constant 0xFF800000 : f32
    %196 = vector.broadcast %cst_65 : f32 to vector<2x10xf32>
    %197 = arith.maximumf %196, %195 : vector<2x10xf32>
    %198 = vector.shape_cast %197 : vector<2x10xf32> to vector<2x10x1xf32>
    %199 = vector.broadcast %198 : vector<2x10x1xf32> to vector<2x10x8xf32>
    %200 = arith.subf %194, %199 : vector<2x10x8xf32>
    %201 = math.exp %200 : vector<2x10x8xf32>
    %cst_66 = arith.constant dense<0.000000e+00> : vector<2x10xf32>
    %202 = vector.multi_reduction <add>, %201, %cst_66 [2] : vector<2x10x8xf32> to vector<2x10xf32>
    %203 = vector.shape_cast %202 : vector<2x10xf32> to vector<2x10x1xf32>
    %204 = vector.broadcast %203 : vector<2x10x1xf32> to vector<2x10x8xf32>
    %205 = arith.divf %201, %204 : vector<2x10x8xf32>
    %206 = vector.broadcast %187 : vector<1x1x48xf32> to vector<2x8x48xf32>
    %207 = arith.mulf %53, %206 : vector<2x8x48xf32>
    "tpu.trace_start"() <{level = 10 : i32, message = "bnm,bmd->bnd"}> : () -> ()
    %cst_67 = arith.constant dense<0.000000e+00> : vector<2x10x48xf32>
    %208 = tpu.matmul %205, %207, %cst_67 {dimension_numbers = #tpu.dot_dimension_numbers<[2], [1], [1], [2], [0, 0, 0, 1, 1, 2], [0], [0]>} : vector<2x10x8xf32>, vector<2x8x48xf32>, vector<2x10x48xf32> -> vector<2x10x48xf32>
    "tpu.trace_stop"() : () -> ()
    %209 = arith.addf %180, %208 : vector<2x10x48xf32>
    %c40_i32_68 = arith.constant 40 : i32
    %210 = vector.broadcast %c40_i32_68 : i32 to vector<1x1x48xi32>
    %211 = arith.cmpi sge, %63, %210 : vector<1x1x48xi32>
    %c48_i32 = arith.constant 48 : i32
    %212 = vector.broadcast %c48_i32 : i32 to vector<1x1x48xi32>
    %213 = arith.cmpi slt, %63, %212 : vector<1x1x48xi32>
    %214 = arith.andi %211, %213 : vector<1x1x48xi1>
    %215 = arith.extui %214 : vector<1x1x48xi1> to vector<1x1x48xi32>
    %216 = arith.sitofp %215 : vector<1x1x48xi32> to vector<1x1x48xf32>
    %217 = vector.broadcast %216 : vector<1x1x48xf32> to vector<2x10x48xf32>
    %218 = arith.mulf %41, %217 : vector<2x10x48xf32>
    "tpu.trace_start"() <{level = 10 : i32, message = "bnd,bmd->bnm"}> : () -> ()
    %cst_69 = arith.constant dense<0.000000e+00> : vector<2x10x8xf32>
    %219 = tpu.matmul %218, %47, %cst_69 {dimension_numbers = #tpu.dot_dimension_numbers<[2], [2], [1], [1], [0, 0, 0, 1, 1, 1], [0], [0]>} : vector<2x10x48xf32>, vector<2x8x48xf32>, vector<2x10x8xf32> -> vector<2x10x8xf32>
    "tpu.trace_stop"() : () -> ()
    %cst_70 = arith.constant 0.353553385 : f32
    %220 = vector.broadcast %cst_70 : f32 to vector<2x10x8xf32>
    %221 = arith.mulf %219, %220 : vector<2x10x8xf32>
    %cst_71 = arith.constant -1.000000e+09 : f32
    %222 = vector.broadcast %cst_71 : f32 to vector<2x10x8xf32>
    %223 = arith.select %62, %222, %221 : vector<2x10x8xi1>, vector<2x10x8xf32>
    %cst_72 = arith.constant dense<0xFF800000> : vector<2x10xf32>
    %224 = vector.multi_reduction <maximumf>, %223, %cst_72 [2] : vector<2x10x8xf32> to vector<2x10xf32>
    %cst_73 = arith.constant 0xFF800000 : f32
    %225 = vector.broadcast %cst_73 : f32 to vector<2x10xf32>
    %226 = arith.maximumf %225, %224 : vector<2x10xf32>
    %227 = vector.shape_cast %226 : vector<2x10xf32> to vector<2x10x1xf32>
    %228 = vector.broadcast %227 : vector<2x10x1xf32> to vector<2x10x8xf32>
    %229 = arith.subf %223, %228 : vector<2x10x8xf32>
    %230 = math.exp %229 : vector<2x10x8xf32>
    %cst_74 = arith.constant dense<0.000000e+00> : vector<2x10xf32>
    %231 = vector.multi_reduction <add>, %230, %cst_74 [2] : vector<2x10x8xf32> to vector<2x10xf32>
    %232 = vector.shape_cast %231 : vector<2x10xf32> to vector<2x10x1xf32>
    %233 = vector.broadcast %232 : vector<2x10x1xf32> to vector<2x10x8xf32>
    %234 = arith.divf %230, %233 : vector<2x10x8xf32>
    %235 = vector.broadcast %216 : vector<1x1x48xf32> to vector<2x8x48xf32>
    %236 = arith.mulf %53, %235 : vector<2x8x48xf32>
    "tpu.trace_start"() <{level = 10 : i32, message = "bnm,bmd->bnd"}> : () -> ()
    %cst_75 = arith.constant dense<0.000000e+00> : vector<2x10x48xf32>
    %237 = tpu.matmul %234, %236, %cst_75 {dimension_numbers = #tpu.dot_dimension_numbers<[2], [1], [1], [2], [0, 0, 0, 1, 1, 2], [0], [0]>} : vector<2x10x8xf32>, vector<2x8x48xf32>, vector<2x10x48xf32> -> vector<2x10x48xf32>
    "tpu.trace_stop"() : () -> ()
    %238 = arith.addf %209, %237 : vector<2x10x48xf32>
    %239 = vector.shape_cast %238 : vector<2x10x48xf32> to vector<20x48xf32>
    %c0_76 = arith.constant 0 : index
    %c0_77 = arith.constant 0 : index
    %240 = vector.load %arg11[%c0_76, %c0_77] : memref<48x48xf32, #tpu.memory_space<vmem>>, vector<48x48xf32>
    %cst_78 = arith.constant dense<0.000000e+00> : vector<20x48xf32>
    %241 = tpu.matmul %239, %240, %cst_78 {dimension_numbers = #tpu.dot_dimension_numbers<[1], [0], [0], [1], [0, 0, 1, 1], [], []>} : vector<20x48xf32>, vector<48x48xf32>, vector<20x48xf32> -> vector<20x48xf32>
    %c0_79 = arith.constant 0 : index
    %c0_80 = arith.constant 0 : index
    %242 = vector.load %arg12[%c0_79, %c0_80] : memref<1x48xf32, #tpu.memory_space<vmem>>, vector<1x48xf32>
    %243 = vector.broadcast %242 : vector<1x48xf32> to vector<20x48xf32>
    %244 = arith.addf %241, %243 : vector<20x48xf32>
    %245 = arith.addf %244, %34 : vector<20x48xf32>
    %246 = vector.shape_cast %245 : vector<20x48xf32> to vector<2x10x48xf32>
    %cst_81 = arith.constant dense<0xFF800000> : vector<2x48xf32>
    %247 = vector.multi_reduction <maximumf>, %246, %cst_81 [1] : vector<2x10x48xf32> to vector<2x48xf32>
    %c0_82 = arith.constant 0 : index
    %c0_83 = arith.constant 0 : index
    %248 = vector.load %arg13[%c0_82, %c0_83] : memref<48x144xf32, #tpu.memory_space<vmem>>, vector<48x144xf32>
    %cst_84 = arith.constant dense<0.000000e+00> : vector<20x144xf32>
    %249 = tpu.matmul %245, %248, %cst_84 {dimension_numbers = #tpu.dot_dimension_numbers<[1], [0], [0], [1], [0, 0, 1, 1], [], []>} : vector<20x48xf32>, vector<48x144xf32>, vector<20x144xf32> -> vector<20x144xf32>
    %c0_85 = arith.constant 0 : index
    %c0_86 = arith.constant 0 : index
    %250 = vector.load %arg15[%c0_85, %c0_86] : memref<1x144xf32, #tpu.memory_space<vmem>>, vector<1x144xf32>
    %251 = vector.broadcast %250 : vector<1x144xf32> to vector<20x144xf32>
    %252 = arith.addf %249, %251 : vector<20x144xf32>
    %253 = vector.shape_cast %252 : vector<20x144xf32> to vector<2x10x144xf32>
    %c0_87 = arith.constant 0 : index
    %c0_88 = arith.constant 0 : index
    %c0_89 = arith.constant 0 : index
    %254 = vector.load %arg22[%c0_87, %c0_88, %c0_89] : memref<2x10x144xf32, #tpu.memory_space<vmem>>, vector<2x10x144xf32>
    tpu.vector_store %arg22[%c0_87, %c0_88, %c0_89], %253 {strides = array<i32>} : memref<2x10x144xf32, #tpu.memory_space<vmem>>, vector<2x10x144xf32>,
    %c0_90 = arith.constant 0 : index
    %c0_91 = arith.constant 0 : index
    %255 = vector.load %arg17[%c0_90, %c0_91] : memref<48x144xf32, #tpu.memory_space<vmem>>, vector<48x144xf32>
    %cst_92 = arith.constant dense<0.000000e+00> : vector<20x144xf32>
    %256 = tpu.matmul %245, %255, %cst_92 {dimension_numbers = #tpu.dot_dimension_numbers<[1], [0], [0], [1], [0, 0, 1, 1], [], []>} : vector<20x48xf32>, vector<48x144xf32>, vector<20x144xf32> -> vector<20x144xf32>
    %c0_93 = arith.constant 0 : index
    %c0_94 = arith.constant 0 : index
    %257 = vector.load %arg19[%c0_93, %c0_94] : memref<1x144xf32, #tpu.memory_space<vmem>>, vector<1x144xf32>
    %258 = vector.broadcast %257 : vector<1x144xf32> to vector<20x144xf32>
    %259 = arith.addf %256, %258 : vector<20x144xf32>
    %260 = vector.shape_cast %259 : vector<20x144xf32> to vector<2x10x144xf32>
    %c0_95 = arith.constant 0 : index
    %c0_96 = arith.constant 0 : index
    %c0_97 = arith.constant 0 : index
    %261 = vector.load %arg23[%c0_95, %c0_96, %c0_97] : memref<2x10x144xf32, #tpu.memory_space<vmem>>, vector<2x10x144xf32>
    tpu.vector_store %arg23[%c0_95, %c0_96, %c0_97], %260 {strides = array<i32>} : memref<2x10x144xf32, #tpu.memory_space<vmem>>, vector<2x10x144xf32>,
    %c0_98 = arith.constant 0 : index
    %c0_99 = arith.constant 0 : index
    %262 = vector.load %arg14[%c0_98, %c0_99] : memref<48x144xf32, #tpu.memory_space<vmem>>, vector<48x144xf32>
    %c0_100 = arith.constant 0 : index
    %c0_101 = arith.constant 0 : index
    %263 = vector.load %arg16[%c0_100, %c0_101] : memref<1x144xf32, #tpu.memory_space<vmem>>, vector<1x144xf32>
    %c0_102 = arith.constant 0 : index
    %c0_103 = arith.constant 0 : index
    %264 = vector.load %arg18[%c0_102, %c0_103] : memref<48x144xf32, #tpu.memory_space<vmem>>, vector<48x144xf32>
    %c0_104 = arith.constant 0 : index
    %c0_105 = arith.constant 0 : index
    %265 = vector.load %arg20[%c0_104, %c0_105] : memref<1x144xf32, #tpu.memory_space<vmem>>, vector<1x144xf32>
    %cst_106 = arith.constant 0.000000e+00 : f32
    %266 = vector.broadcast %cst_106 : f32 to vector<2x48xf32>
    %c0_i32_107 = arith.constant 0 : i32
    %c0_108 = arith.constant 0 : index
    %267 = arith.index_cast %c0_i32_107 : i32 to index
    %c0_109 = arith.constant 0 : index
    %268 = vector.load %arg22[%c0_108, %267, %c0_109] : memref<2x10x144xf32, #tpu.memory_space<vmem>>, vector<2x1x144xf32>
    %269 = vector.shape_cast %268 : vector<2x1x144xf32> to vector<2x144xf32>
    %cst_110 = arith.constant dense<0.000000e+00> : vector<2x144xf32>
    %270 = tpu.matmul %247, %262, %cst_110 {dimension_numbers = #tpu.dot_dimension_numbers<[1], [0], [0], [1], [0, 0, 1, 1], [], []>} : vector<2x48xf32>, vector<48x144xf32>, vector<2x144xf32> -> vector<2x144xf32>
    %271 = vector.broadcast %263 : vector<1x144xf32> to vector<2x144xf32>
    %272 = arith.addf %270, %271 : vector<2x144xf32>
    %273 = vector.extract_strided_slice %269 {offsets = [0, 0], sizes = [2, 48], strides = [1, 1]} : vector<2x144xf32> to vector<2x48xf32>
    %274 = vector.extract_strided_slice %272 {offsets = [0, 0], sizes = [2, 48], strides = [1, 1]} : vector<2x144xf32> to vector<2x48xf32>
    %275 = arith.addf %273, %274 : vector<2x48xf32>
    %276 = arith.negf %275 : vector<2x48xf32>
    %277 = math.exp %276 : vector<2x48xf32>
    %cst_111 = arith.constant 1.000000e+00 : f32
    %278 = vector.broadcast %cst_111 : f32 to vector<2x48xf32>
    %279 = arith.addf %278, %277 : vector<2x48xf32>
    %280 = arith.divf %278, %279 : vector<2x48xf32>
    %281 = vector.extract_strided_slice %269 {offsets = [0, 48], sizes = [2, 48], strides = [1, 1]} : vector<2x144xf32> to vector<2x48xf32>
    %282 = vector.extract_strided_slice %272 {offsets = [0, 48], sizes = [2, 48], strides = [1, 1]} : vector<2x144xf32> to vector<2x48xf32>
    %283 = arith.addf %281, %282 : vector<2x48xf32>
    %284 = arith.negf %283 : vector<2x48xf32>
    %285 = math.exp %284 : vector<2x48xf32>
    %cst_112 = arith.constant 1.000000e+00 : f32
    %286 = vector.broadcast %cst_112 : f32 to vector<2x48xf32>
    %287 = arith.addf %286, %285 : vector<2x48xf32>
    %288 = arith.divf %286, %287 : vector<2x48xf32>
    %289 = vector.extract_strided_slice %269 {offsets = [0, 96], sizes = [2, 48], strides = [1, 1]} : vector<2x144xf32> to vector<2x48xf32>
    %290 = vector.extract_strided_slice %272 {offsets = [0, 96], sizes = [2, 48], strides = [1, 1]} : vector<2x144xf32> to vector<2x48xf32>
    %291 = arith.mulf %280, %290 : vector<2x48xf32>
    %292 = arith.addf %289, %291 : vector<2x48xf32>
    %293 = math.tanh %292 : vector<2x48xf32>
    %cst_113 = arith.constant 1.000000e+00 : f32
    %294 = vector.broadcast %cst_113 : f32 to vector<2x48xf32>
    %295 = arith.subf %294, %288 : vector<2x48xf32>
    %296 = arith.mulf %295, %293 : vector<2x48xf32>
    %297 = arith.mulf %288, %247 : vector<2x48xf32>
    %298 = arith.addf %296, %297 : vector<2x48xf32>
    %299 = vector.broadcast %c0_i32_107 : i32 to vector<2x1xi32>
    %300 = arith.cmpi slt, %299, %31 : vector<2x1xi32>
    %301 = arith.extui %300 : vector<2x1xi1> to vector<2x1xi32>
    %302 = arith.sitofp %301 : vector<2x1xi32> to vector<2x1xf32>
    %303 = vector.broadcast %302 : vector<2x1xf32> to vector<2x48xf32>
    %304 = arith.mulf %298, %303 : vector<2x48xf32>
    %305 = arith.addf %266, %304 : vector<2x48xf32>
    %c1_i32_114 = arith.constant 1 : i32
    %c0_115 = arith.constant 0 : index
    %306 = arith.index_cast %c1_i32_114 : i32 to index
    %c0_116 = arith.constant 0 : index
    %307 = vector.load %arg22[%c0_115, %306, %c0_116] : memref<2x10x144xf32, #tpu.memory_space<vmem>>, vector<2x1x144xf32>
    %308 = vector.shape_cast %307 : vector<2x1x144xf32> to vector<2x144xf32>
    %cst_117 = arith.constant dense<0.000000e+00> : vector<2x144xf32>
    %309 = tpu.matmul %298, %262, %cst_117 {dimension_numbers = #tpu.dot_dimension_numbers<[1], [0], [0], [1], [0, 0, 1, 1], [], []>} : vector<2x48xf32>, vector<48x144xf32>, vector<2x144xf32> -> vector<2x144xf32>
    %310 = vector.broadcast %263 : vector<1x144xf32> to vector<2x144xf32>
    %311 = arith.addf %309, %310 : vector<2x144xf32>
    %312 = vector.extract_strided_slice %308 {offsets = [0, 0], sizes = [2, 48], strides = [1, 1]} : vector<2x144xf32> to vector<2x48xf32>
    %313 = vector.extract_strided_slice %311 {offsets = [0, 0], sizes = [2, 48], strides = [1, 1]} : vector<2x144xf32> to vector<2x48xf32>
    %314 = arith.addf %312, %313 : vector<2x48xf32>
    %315 = arith.negf %314 : vector<2x48xf32>
    %316 = math.exp %315 : vector<2x48xf32>
    %cst_118 = arith.constant 1.000000e+00 : f32
    %317 = vector.broadcast %cst_118 : f32 to vector<2x48xf32>
    %318 = arith.addf %317, %316 : vector<2x48xf32>
    %319 = arith.divf %317, %318 : vector<2x48xf32>
    %320 = vector.extract_strided_slice %308 {offsets = [0, 48], sizes = [2, 48], strides = [1, 1]} : vector<2x144xf32> to vector<2x48xf32>
    %321 = vector.extract_strided_slice %311 {offsets = [0, 48], sizes = [2, 48], strides = [1, 1]} : vector<2x144xf32> to vector<2x48xf32>
    %322 = arith.addf %320, %321 : vector<2x48xf32>
    %323 = arith.negf %322 : vector<2x48xf32>
    %324 = math.exp %323 : vector<2x48xf32>
    %cst_119 = arith.constant 1.000000e+00 : f32
    %325 = vector.broadcast %cst_119 : f32 to vector<2x48xf32>
    %326 = arith.addf %325, %324 : vector<2x48xf32>
    %327 = arith.divf %325, %326 : vector<2x48xf32>
    %328 = vector.extract_strided_slice %308 {offsets = [0, 96], sizes = [2, 48], strides = [1, 1]} : vector<2x144xf32> to vector<2x48xf32>
    %329 = vector.extract_strided_slice %311 {offsets = [0, 96], sizes = [2, 48], strides = [1, 1]} : vector<2x144xf32> to vector<2x48xf32>
    %330 = arith.mulf %319, %329 : vector<2x48xf32>
    %331 = arith.addf %328, %330 : vector<2x48xf32>
    %332 = math.tanh %331 : vector<2x48xf32>
    %cst_120 = arith.constant 1.000000e+00 : f32
    %333 = vector.broadcast %cst_120 : f32 to vector<2x48xf32>
    %334 = arith.subf %333, %327 : vector<2x48xf32>
    %335 = arith.mulf %334, %332 : vector<2x48xf32>
    %336 = arith.mulf %327, %298 : vector<2x48xf32>
    %337 = arith.addf %335, %336 : vector<2x48xf32>
    %338 = vector.broadcast %c1_i32_114 : i32 to vector<2x1xi32>
    %339 = arith.cmpi slt, %338, %31 : vector<2x1xi32>
    %340 = arith.extui %339 : vector<2x1xi1> to vector<2x1xi32>
    %341 = arith.sitofp %340 : vector<2x1xi32> to vector<2x1xf32>
    %342 = vector.broadcast %341 : vector<2x1xf32> to vector<2x48xf32>
    %343 = arith.mulf %337, %342 : vector<2x48xf32>
    %344 = arith.addf %305, %343 : vector<2x48xf32>
    %c2_i32_121 = arith.constant 2 : i32
    %c0_122 = arith.constant 0 : index
    %345 = arith.index_cast %c2_i32_121 : i32 to index
    %c0_123 = arith.constant 0 : index
    %346 = vector.load %arg22[%c0_122, %345, %c0_123] : memref<2x10x144xf32, #tpu.memory_space<vmem>>, vector<2x1x144xf32>
    %347 = vector.shape_cast %346 : vector<2x1x144xf32> to vector<2x144xf32>
    %cst_124 = arith.constant dense<0.000000e+00> : vector<2x144xf32>
    %348 = tpu.matmul %337, %262, %cst_124 {dimension_numbers = #tpu.dot_dimension_numbers<[1], [0], [0], [1], [0, 0, 1, 1], [], []>} : vector<2x48xf32>, vector<48x144xf32>, vector<2x144xf32> -> vector<2x144xf32>
    %349 = vector.broadcast %263 : vector<1x144xf32> to vector<2x144xf32>
    %350 = arith.addf %348, %349 : vector<2x144xf32>
    %351 = vector.extract_strided_slice %347 {offsets = [0, 0], sizes = [2, 48], strides = [1, 1]} : vector<2x144xf32> to vector<2x48xf32>
    %352 = vector.extract_strided_slice %350 {offsets = [0, 0], sizes = [2, 48], strides = [1, 1]} : vector<2x144xf32> to vector<2x48xf32>
    %353 = arith.addf %351, %352 : vector<2x48xf32>
    %354 = arith.negf %353 : vector<2x48xf32>
    %355 = math.exp %354 : vector<2x48xf32>
    %cst_125 = arith.constant 1.000000e+00 : f32
    %356 = vector.broadcast %cst_125 : f32 to vector<2x48xf32>
    %357 = arith.addf %356, %355 : vector<2x48xf32>
    %358 = arith.divf %356, %357 : vector<2x48xf32>
    %359 = vector.extract_strided_slice %347 {offsets = [0, 48], sizes = [2, 48], strides = [1, 1]} : vector<2x144xf32> to vector<2x48xf32>
    %360 = vector.extract_strided_slice %350 {offsets = [0, 48], sizes = [2, 48], strides = [1, 1]} : vector<2x144xf32> to vector<2x48xf32>
    %361 = arith.addf %359, %360 : vector<2x48xf32>
    %362 = arith.negf %361 : vector<2x48xf32>
    %363 = math.exp %362 : vector<2x48xf32>
    %cst_126 = arith.constant 1.000000e+00 : f32
    %364 = vector.broadcast %cst_126 : f32 to vector<2x48xf32>
    %365 = arith.addf %364, %363 : vector<2x48xf32>
    %366 = arith.divf %364, %365 : vector<2x48xf32>
    %367 = vector.extract_strided_slice %347 {offsets = [0, 96], sizes = [2, 48], strides = [1, 1]} : vector<2x144xf32> to vector<2x48xf32>
    %368 = vector.extract_strided_slice %350 {offsets = [0, 96], sizes = [2, 48], strides = [1, 1]} : vector<2x144xf32> to vector<2x48xf32>
    %369 = arith.mulf %358, %368 : vector<2x48xf32>
    %370 = arith.addf %367, %369 : vector<2x48xf32>
    %371 = math.tanh %370 : vector<2x48xf32>
    %cst_127 = arith.constant 1.000000e+00 : f32
    %372 = vector.broadcast %cst_127 : f32 to vector<2x48xf32>
    %373 = arith.subf %372, %366 : vector<2x48xf32>
    %374 = arith.mulf %373, %371 : vector<2x48xf32>
    %375 = arith.mulf %366, %337 : vector<2x48xf32>
    %376 = arith.addf %374, %375 : vector<2x48xf32>
    %377 = vector.broadcast %c2_i32_121 : i32 to vector<2x1xi32>
    %378 = arith.cmpi slt, %377, %31 : vector<2x1xi32>
    %379 = arith.extui %378 : vector<2x1xi1> to vector<2x1xi32>
    %380 = arith.sitofp %379 : vector<2x1xi32> to vector<2x1xf32>
    %381 = vector.broadcast %380 : vector<2x1xf32> to vector<2x48xf32>
    %382 = arith.mulf %376, %381 : vector<2x48xf32>
    %383 = arith.addf %344, %382 : vector<2x48xf32>
    %c3_i32 = arith.constant 3 : i32
    %c0_128 = arith.constant 0 : index
    %384 = arith.index_cast %c3_i32 : i32 to index
    %c0_129 = arith.constant 0 : index
    %385 = vector.load %arg22[%c0_128, %384, %c0_129] : memref<2x10x144xf32, #tpu.memory_space<vmem>>, vector<2x1x144xf32>
    %386 = vector.shape_cast %385 : vector<2x1x144xf32> to vector<2x144xf32>
    %cst_130 = arith.constant dense<0.000000e+00> : vector<2x144xf32>
    %387 = tpu.matmul %376, %262, %cst_130 {dimension_numbers = #tpu.dot_dimension_numbers<[1], [0], [0], [1], [0, 0, 1, 1], [], []>} : vector<2x48xf32>, vector<48x144xf32>, vector<2x144xf32> -> vector<2x144xf32>
    %388 = vector.broadcast %263 : vector<1x144xf32> to vector<2x144xf32>
    %389 = arith.addf %387, %388 : vector<2x144xf32>
    %390 = vector.extract_strided_slice %386 {offsets = [0, 0], sizes = [2, 48], strides = [1, 1]} : vector<2x144xf32> to vector<2x48xf32>
    %391 = vector.extract_strided_slice %389 {offsets = [0, 0], sizes = [2, 48], strides = [1, 1]} : vector<2x144xf32> to vector<2x48xf32>
    %392 = arith.addf %390, %391 : vector<2x48xf32>
    %393 = arith.negf %392 : vector<2x48xf32>
    %394 = math.exp %393 : vector<2x48xf32>
    %cst_131 = arith.constant 1.000000e+00 : f32
    %395 = vector.broadcast %cst_131 : f32 to vector<2x48xf32>
    %396 = arith.addf %395, %394 : vector<2x48xf32>
    %397 = arith.divf %395, %396 : vector<2x48xf32>
    %398 = vector.extract_strided_slice %386 {offsets = [0, 48], sizes = [2, 48], strides = [1, 1]} : vector<2x144xf32> to vector<2x48xf32>
    %399 = vector.extract_strided_slice %389 {offsets = [0, 48], sizes = [2, 48], strides = [1, 1]} : vector<2x144xf32> to vector<2x48xf32>
    %400 = arith.addf %398, %399 : vector<2x48xf32>
    %401 = arith.negf %400 : vector<2x48xf32>
    %402 = math.exp %401 : vector<2x48xf32>
    %cst_132 = arith.constant 1.000000e+00 : f32
    %403 = vector.broadcast %cst_132 : f32 to vector<2x48xf32>
    %404 = arith.addf %403, %402 : vector<2x48xf32>
    %405 = arith.divf %403, %404 : vector<2x48xf32>
    %406 = vector.extract_strided_slice %386 {offsets = [0, 96], sizes = [2, 48], strides = [1, 1]} : vector<2x144xf32> to vector<2x48xf32>
    %407 = vector.extract_strided_slice %389 {offsets = [0, 96], sizes = [2, 48], strides = [1, 1]} : vector<2x144xf32> to vector<2x48xf32>
    %408 = arith.mulf %397, %407 : vector<2x48xf32>
    %409 = arith.addf %406, %408 : vector<2x48xf32>
    %410 = math.tanh %409 : vector<2x48xf32>
    %cst_133 = arith.constant 1.000000e+00 : f32
    %411 = vector.broadcast %cst_133 : f32 to vector<2x48xf32>
    %412 = arith.subf %411, %405 : vector<2x48xf32>
    %413 = arith.mulf %412, %410 : vector<2x48xf32>
    %414 = arith.mulf %405, %376 : vector<2x48xf32>
    %415 = arith.addf %413, %414 : vector<2x48xf32>
    %416 = vector.broadcast %c3_i32 : i32 to vector<2x1xi32>
    %417 = arith.cmpi slt, %416, %31 : vector<2x1xi32>
    %418 = arith.extui %417 : vector<2x1xi1> to vector<2x1xi32>
    %419 = arith.sitofp %418 : vector<2x1xi32> to vector<2x1xf32>
    %420 = vector.broadcast %419 : vector<2x1xf32> to vector<2x48xf32>
    %421 = arith.mulf %415, %420 : vector<2x48xf32>
    %422 = arith.addf %383, %421 : vector<2x48xf32>
    %c4_i32 = arith.constant 4 : i32
    %c0_134 = arith.constant 0 : index
    %423 = arith.index_cast %c4_i32 : i32 to index
    %c0_135 = arith.constant 0 : index
    %424 = vector.load %arg22[%c0_134, %423, %c0_135] : memref<2x10x144xf32, #tpu.memory_space<vmem>>, vector<2x1x144xf32>
    %425 = vector.shape_cast %424 : vector<2x1x144xf32> to vector<2x144xf32>
    %cst_136 = arith.constant dense<0.000000e+00> : vector<2x144xf32>
    %426 = tpu.matmul %415, %262, %cst_136 {dimension_numbers = #tpu.dot_dimension_numbers<[1], [0], [0], [1], [0, 0, 1, 1], [], []>} : vector<2x48xf32>, vector<48x144xf32>, vector<2x144xf32> -> vector<2x144xf32>
    %427 = vector.broadcast %263 : vector<1x144xf32> to vector<2x144xf32>
    %428 = arith.addf %426, %427 : vector<2x144xf32>
    %429 = vector.extract_strided_slice %425 {offsets = [0, 0], sizes = [2, 48], strides = [1, 1]} : vector<2x144xf32> to vector<2x48xf32>
    %430 = vector.extract_strided_slice %428 {offsets = [0, 0], sizes = [2, 48], strides = [1, 1]} : vector<2x144xf32> to vector<2x48xf32>
    %431 = arith.addf %429, %430 : vector<2x48xf32>
    %432 = arith.negf %431 : vector<2x48xf32>
    %433 = math.exp %432 : vector<2x48xf32>
    %cst_137 = arith.constant 1.000000e+00 : f32
    %434 = vector.broadcast %cst_137 : f32 to vector<2x48xf32>
    %435 = arith.addf %434, %433 : vector<2x48xf32>
    %436 = arith.divf %434, %435 : vector<2x48xf32>
    %437 = vector.extract_strided_slice %425 {offsets = [0, 48], sizes = [2, 48], strides = [1, 1]} : vector<2x144xf32> to vector<2x48xf32>
    %438 = vector.extract_strided_slice %428 {offsets = [0, 48], sizes = [2, 48], strides = [1, 1]} : vector<2x144xf32> to vector<2x48xf32>
    %439 = arith.addf %437, %438 : vector<2x48xf32>
    %440 = arith.negf %439 : vector<2x48xf32>
    %441 = math.exp %440 : vector<2x48xf32>
    %cst_138 = arith.constant 1.000000e+00 : f32
    %442 = vector.broadcast %cst_138 : f32 to vector<2x48xf32>
    %443 = arith.addf %442, %441 : vector<2x48xf32>
    %444 = arith.divf %442, %443 : vector<2x48xf32>
    %445 = vector.extract_strided_slice %425 {offsets = [0, 96], sizes = [2, 48], strides = [1, 1]} : vector<2x144xf32> to vector<2x48xf32>
    %446 = vector.extract_strided_slice %428 {offsets = [0, 96], sizes = [2, 48], strides = [1, 1]} : vector<2x144xf32> to vector<2x48xf32>
    %447 = arith.mulf %436, %446 : vector<2x48xf32>
    %448 = arith.addf %445, %447 : vector<2x48xf32>
    %449 = math.tanh %448 : vector<2x48xf32>
    %cst_139 = arith.constant 1.000000e+00 : f32
    %450 = vector.broadcast %cst_139 : f32 to vector<2x48xf32>
    %451 = arith.subf %450, %444 : vector<2x48xf32>
    %452 = arith.mulf %451, %449 : vector<2x48xf32>
    %453 = arith.mulf %444, %415 : vector<2x48xf32>
    %454 = arith.addf %452, %453 : vector<2x48xf32>
    %455 = vector.broadcast %c4_i32 : i32 to vector<2x1xi32>
    %456 = arith.cmpi slt, %455, %31 : vector<2x1xi32>
    %457 = arith.extui %456 : vector<2x1xi1> to vector<2x1xi32>
    %458 = arith.sitofp %457 : vector<2x1xi32> to vector<2x1xf32>
    %459 = vector.broadcast %458 : vector<2x1xf32> to vector<2x48xf32>
    %460 = arith.mulf %454, %459 : vector<2x48xf32>
    %461 = arith.addf %422, %460 : vector<2x48xf32>
    %c5_i32 = arith.constant 5 : i32
    %c0_140 = arith.constant 0 : index
    %462 = arith.index_cast %c5_i32 : i32 to index
    %c0_141 = arith.constant 0 : index
    %463 = vector.load %arg22[%c0_140, %462, %c0_141] : memref<2x10x144xf32, #tpu.memory_space<vmem>>, vector<2x1x144xf32>
    %464 = vector.shape_cast %463 : vector<2x1x144xf32> to vector<2x144xf32>
    %cst_142 = arith.constant dense<0.000000e+00> : vector<2x144xf32>
    %465 = tpu.matmul %454, %262, %cst_142 {dimension_numbers = #tpu.dot_dimension_numbers<[1], [0], [0], [1], [0, 0, 1, 1], [], []>} : vector<2x48xf32>, vector<48x144xf32>, vector<2x144xf32> -> vector<2x144xf32>
    %466 = vector.broadcast %263 : vector<1x144xf32> to vector<2x144xf32>
    %467 = arith.addf %465, %466 : vector<2x144xf32>
    %468 = vector.extract_strided_slice %464 {offsets = [0, 0], sizes = [2, 48], strides = [1, 1]} : vector<2x144xf32> to vector<2x48xf32>
    %469 = vector.extract_strided_slice %467 {offsets = [0, 0], sizes = [2, 48], strides = [1, 1]} : vector<2x144xf32> to vector<2x48xf32>
    %470 = arith.addf %468, %469 : vector<2x48xf32>
    %471 = arith.negf %470 : vector<2x48xf32>
    %472 = math.exp %471 : vector<2x48xf32>
    %cst_143 = arith.constant 1.000000e+00 : f32
    %473 = vector.broadcast %cst_143 : f32 to vector<2x48xf32>
    %474 = arith.addf %473, %472 : vector<2x48xf32>
    %475 = arith.divf %473, %474 : vector<2x48xf32>
    %476 = vector.extract_strided_slice %464 {offsets = [0, 48], sizes = [2, 48], strides = [1, 1]} : vector<2x144xf32> to vector<2x48xf32>
    %477 = vector.extract_strided_slice %467 {offsets = [0, 48], sizes = [2, 48], strides = [1, 1]} : vector<2x144xf32> to vector<2x48xf32>
    %478 = arith.addf %476, %477 : vector<2x48xf32>
    %479 = arith.negf %478 : vector<2x48xf32>
    %480 = math.exp %479 : vector<2x48xf32>
    %cst_144 = arith.constant 1.000000e+00 : f32
    %481 = vector.broadcast %cst_144 : f32 to vector<2x48xf32>
    %482 = arith.addf %481, %480 : vector<2x48xf32>
    %483 = arith.divf %481, %482 : vector<2x48xf32>
    %484 = vector.extract_strided_slice %464 {offsets = [0, 96], sizes = [2, 48], strides = [1, 1]} : vector<2x144xf32> to vector<2x48xf32>
    %485 = vector.extract_strided_slice %467 {offsets = [0, 96], sizes = [2, 48], strides = [1, 1]} : vector<2x144xf32> to vector<2x48xf32>
    %486 = arith.mulf %475, %485 : vector<2x48xf32>
    %487 = arith.addf %484, %486 : vector<2x48xf32>
    %488 = math.tanh %487 : vector<2x48xf32>
    %cst_145 = arith.constant 1.000000e+00 : f32
    %489 = vector.broadcast %cst_145 : f32 to vector<2x48xf32>
    %490 = arith.subf %489, %483 : vector<2x48xf32>
    %491 = arith.mulf %490, %488 : vector<2x48xf32>
    %492 = arith.mulf %483, %454 : vector<2x48xf32>
    %493 = arith.addf %491, %492 : vector<2x48xf32>
    %494 = vector.broadcast %c5_i32 : i32 to vector<2x1xi32>
    %495 = arith.cmpi slt, %494, %31 : vector<2x1xi32>
    %496 = arith.extui %495 : vector<2x1xi1> to vector<2x1xi32>
    %497 = arith.sitofp %496 : vector<2x1xi32> to vector<2x1xf32>
    %498 = vector.broadcast %497 : vector<2x1xf32> to vector<2x48xf32>
    %499 = arith.mulf %493, %498 : vector<2x48xf32>
    %500 = arith.addf %461, %499 : vector<2x48xf32>
    %c6_i32 = arith.constant 6 : i32
    %c0_146 = arith.constant 0 : index
    %501 = arith.index_cast %c6_i32 : i32 to index
    %c0_147 = arith.constant 0 : index
    %502 = vector.load %arg22[%c0_146, %501, %c0_147] : memref<2x10x144xf32, #tpu.memory_space<vmem>>, vector<2x1x144xf32>
    %503 = vector.shape_cast %502 : vector<2x1x144xf32> to vector<2x144xf32>
    %cst_148 = arith.constant dense<0.000000e+00> : vector<2x144xf32>
    %504 = tpu.matmul %493, %262, %cst_148 {dimension_numbers = #tpu.dot_dimension_numbers<[1], [0], [0], [1], [0, 0, 1, 1], [], []>} : vector<2x48xf32>, vector<48x144xf32>, vector<2x144xf32> -> vector<2x144xf32>
    %505 = vector.broadcast %263 : vector<1x144xf32> to vector<2x144xf32>
    %506 = arith.addf %504, %505 : vector<2x144xf32>
    %507 = vector.extract_strided_slice %503 {offsets = [0, 0], sizes = [2, 48], strides = [1, 1]} : vector<2x144xf32> to vector<2x48xf32>
    %508 = vector.extract_strided_slice %506 {offsets = [0, 0], sizes = [2, 48], strides = [1, 1]} : vector<2x144xf32> to vector<2x48xf32>
    %509 = arith.addf %507, %508 : vector<2x48xf32>
    %510 = arith.negf %509 : vector<2x48xf32>
    %511 = math.exp %510 : vector<2x48xf32>
    %cst_149 = arith.constant 1.000000e+00 : f32
    %512 = vector.broadcast %cst_149 : f32 to vector<2x48xf32>
    %513 = arith.addf %512, %511 : vector<2x48xf32>
    %514 = arith.divf %512, %513 : vector<2x48xf32>
    %515 = vector.extract_strided_slice %503 {offsets = [0, 48], sizes = [2, 48], strides = [1, 1]} : vector<2x144xf32> to vector<2x48xf32>
    %516 = vector.extract_strided_slice %506 {offsets = [0, 48], sizes = [2, 48], strides = [1, 1]} : vector<2x144xf32> to vector<2x48xf32>
    %517 = arith.addf %515, %516 : vector<2x48xf32>
    %518 = arith.negf %517 : vector<2x48xf32>
    %519 = math.exp %518 : vector<2x48xf32>
    %cst_150 = arith.constant 1.000000e+00 : f32
    %520 = vector.broadcast %cst_150 : f32 to vector<2x48xf32>
    %521 = arith.addf %520, %519 : vector<2x48xf32>
    %522 = arith.divf %520, %521 : vector<2x48xf32>
    %523 = vector.extract_strided_slice %503 {offsets = [0, 96], sizes = [2, 48], strides = [1, 1]} : vector<2x144xf32> to vector<2x48xf32>
    %524 = vector.extract_strided_slice %506 {offsets = [0, 96], sizes = [2, 48], strides = [1, 1]} : vector<2x144xf32> to vector<2x48xf32>
    %525 = arith.mulf %514, %524 : vector<2x48xf32>
    %526 = arith.addf %523, %525 : vector<2x48xf32>
    %527 = math.tanh %526 : vector<2x48xf32>
    %cst_151 = arith.constant 1.000000e+00 : f32
    %528 = vector.broadcast %cst_151 : f32 to vector<2x48xf32>
    %529 = arith.subf %528, %522 : vector<2x48xf32>
    %530 = arith.mulf %529, %527 : vector<2x48xf32>
    %531 = arith.mulf %522, %493 : vector<2x48xf32>
    %532 = arith.addf %530, %531 : vector<2x48xf32>
    %533 = vector.broadcast %c6_i32 : i32 to vector<2x1xi32>
    %534 = arith.cmpi slt, %533, %31 : vector<2x1xi32>
    %535 = arith.extui %534 : vector<2x1xi1> to vector<2x1xi32>
    %536 = arith.sitofp %535 : vector<2x1xi32> to vector<2x1xf32>
    %537 = vector.broadcast %536 : vector<2x1xf32> to vector<2x48xf32>
    %538 = arith.mulf %532, %537 : vector<2x48xf32>
    %539 = arith.addf %500, %538 : vector<2x48xf32>
    %c7_i32 = arith.constant 7 : i32
    %c0_152 = arith.constant 0 : index
    %540 = arith.index_cast %c7_i32 : i32 to index
    %c0_153 = arith.constant 0 : index
    %541 = vector.load %arg22[%c0_152, %540, %c0_153] : memref<2x10x144xf32, #tpu.memory_space<vmem>>, vector<2x1x144xf32>
    %542 = vector.shape_cast %541 : vector<2x1x144xf32> to vector<2x144xf32>
    %cst_154 = arith.constant dense<0.000000e+00> : vector<2x144xf32>
    %543 = tpu.matmul %532, %262, %cst_154 {dimension_numbers = #tpu.dot_dimension_numbers<[1], [0], [0], [1], [0, 0, 1, 1], [], []>} : vector<2x48xf32>, vector<48x144xf32>, vector<2x144xf32> -> vector<2x144xf32>
    %544 = vector.broadcast %263 : vector<1x144xf32> to vector<2x144xf32>
    %545 = arith.addf %543, %544 : vector<2x144xf32>
    %546 = vector.extract_strided_slice %542 {offsets = [0, 0], sizes = [2, 48], strides = [1, 1]} : vector<2x144xf32> to vector<2x48xf32>
    %547 = vector.extract_strided_slice %545 {offsets = [0, 0], sizes = [2, 48], strides = [1, 1]} : vector<2x144xf32> to vector<2x48xf32>
    %548 = arith.addf %546, %547 : vector<2x48xf32>
    %549 = arith.negf %548 : vector<2x48xf32>
    %550 = math.exp %549 : vector<2x48xf32>
    %cst_155 = arith.constant 1.000000e+00 : f32
    %551 = vector.broadcast %cst_155 : f32 to vector<2x48xf32>
    %552 = arith.addf %551, %550 : vector<2x48xf32>
    %553 = arith.divf %551, %552 : vector<2x48xf32>
    %554 = vector.extract_strided_slice %542 {offsets = [0, 48], sizes = [2, 48], strides = [1, 1]} : vector<2x144xf32> to vector<2x48xf32>
    %555 = vector.extract_strided_slice %545 {offsets = [0, 48], sizes = [2, 48], strides = [1, 1]} : vector<2x144xf32> to vector<2x48xf32>
    %556 = arith.addf %554, %555 : vector<2x48xf32>
    %557 = arith.negf %556 : vector<2x48xf32>
    %558 = math.exp %557 : vector<2x48xf32>
    %cst_156 = arith.constant 1.000000e+00 : f32
    %559 = vector.broadcast %cst_156 : f32 to vector<2x48xf32>
    %560 = arith.addf %559, %558 : vector<2x48xf32>
    %561 = arith.divf %559, %560 : vector<2x48xf32>
    %562 = vector.extract_strided_slice %542 {offsets = [0, 96], sizes = [2, 48], strides = [1, 1]} : vector<2x144xf32> to vector<2x48xf32>
    %563 = vector.extract_strided_slice %545 {offsets = [0, 96], sizes = [2, 48], strides = [1, 1]} : vector<2x144xf32> to vector<2x48xf32>
    %564 = arith.mulf %553, %563 : vector<2x48xf32>
    %565 = arith.addf %562, %564 : vector<2x48xf32>
    %566 = math.tanh %565 : vector<2x48xf32>
    %cst_157 = arith.constant 1.000000e+00 : f32
    %567 = vector.broadcast %cst_157 : f32 to vector<2x48xf32>
    %568 = arith.subf %567, %561 : vector<2x48xf32>
    %569 = arith.mulf %568, %566 : vector<2x48xf32>
    %570 = arith.mulf %561, %532 : vector<2x48xf32>
    %571 = arith.addf %569, %570 : vector<2x48xf32>
    %572 = vector.broadcast %c7_i32 : i32 to vector<2x1xi32>
    %573 = arith.cmpi slt, %572, %31 : vector<2x1xi32>
    %574 = arith.extui %573 : vector<2x1xi1> to vector<2x1xi32>
    %575 = arith.sitofp %574 : vector<2x1xi32> to vector<2x1xf32>
    %576 = vector.broadcast %575 : vector<2x1xf32> to vector<2x48xf32>
    %577 = arith.mulf %571, %576 : vector<2x48xf32>
    %578 = arith.addf %539, %577 : vector<2x48xf32>
    %c8_i32_158 = arith.constant 8 : i32
    %c0_159 = arith.constant 0 : index
    %579 = arith.index_cast %c8_i32_158 : i32 to index
    %c0_160 = arith.constant 0 : index
    %580 = vector.load %arg22[%c0_159, %579, %c0_160] : memref<2x10x144xf32, #tpu.memory_space<vmem>>, vector<2x1x144xf32>
    %581 = vector.shape_cast %580 : vector<2x1x144xf32> to vector<2x144xf32>
    %cst_161 = arith.constant dense<0.000000e+00> : vector<2x144xf32>
    %582 = tpu.matmul %571, %262, %cst_161 {dimension_numbers = #tpu.dot_dimension_numbers<[1], [0], [0], [1], [0, 0, 1, 1], [], []>} : vector<2x48xf32>, vector<48x144xf32>, vector<2x144xf32> -> vector<2x144xf32>
    %583 = vector.broadcast %263 : vector<1x144xf32> to vector<2x144xf32>
    %584 = arith.addf %582, %583 : vector<2x144xf32>
    %585 = vector.extract_strided_slice %581 {offsets = [0, 0], sizes = [2, 48], strides = [1, 1]} : vector<2x144xf32> to vector<2x48xf32>
    %586 = vector.extract_strided_slice %584 {offsets = [0, 0], sizes = [2, 48], strides = [1, 1]} : vector<2x144xf32> to vector<2x48xf32>
    %587 = arith.addf %585, %586 : vector<2x48xf32>
    %588 = arith.negf %587 : vector<2x48xf32>
    %589 = math.exp %588 : vector<2x48xf32>
    %cst_162 = arith.constant 1.000000e+00 : f32
    %590 = vector.broadcast %cst_162 : f32 to vector<2x48xf32>
    %591 = arith.addf %590, %589 : vector<2x48xf32>
    %592 = arith.divf %590, %591 : vector<2x48xf32>
    %593 = vector.extract_strided_slice %581 {offsets = [0, 48], sizes = [2, 48], strides = [1, 1]} : vector<2x144xf32> to vector<2x48xf32>
    %594 = vector.extract_strided_slice %584 {offsets = [0, 48], sizes = [2, 48], strides = [1, 1]} : vector<2x144xf32> to vector<2x48xf32>
    %595 = arith.addf %593, %594 : vector<2x48xf32>
    %596 = arith.negf %595 : vector<2x48xf32>
    %597 = math.exp %596 : vector<2x48xf32>
    %cst_163 = arith.constant 1.000000e+00 : f32
    %598 = vector.broadcast %cst_163 : f32 to vector<2x48xf32>
    %599 = arith.addf %598, %597 : vector<2x48xf32>
    %600 = arith.divf %598, %599 : vector<2x48xf32>
    %601 = vector.extract_strided_slice %581 {offsets = [0, 96], sizes = [2, 48], strides = [1, 1]} : vector<2x144xf32> to vector<2x48xf32>
    %602 = vector.extract_strided_slice %584 {offsets = [0, 96], sizes = [2, 48], strides = [1, 1]} : vector<2x144xf32> to vector<2x48xf32>
    %603 = arith.mulf %592, %602 : vector<2x48xf32>
    %604 = arith.addf %601, %603 : vector<2x48xf32>
    %605 = math.tanh %604 : vector<2x48xf32>
    %cst_164 = arith.constant 1.000000e+00 : f32
    %606 = vector.broadcast %cst_164 : f32 to vector<2x48xf32>
    %607 = arith.subf %606, %600 : vector<2x48xf32>
    %608 = arith.mulf %607, %605 : vector<2x48xf32>
    %609 = arith.mulf %600, %571 : vector<2x48xf32>
    %610 = arith.addf %608, %609 : vector<2x48xf32>
    %611 = vector.broadcast %c8_i32_158 : i32 to vector<2x1xi32>
    %612 = arith.cmpi slt, %611, %31 : vector<2x1xi32>
    %613 = arith.extui %612 : vector<2x1xi1> to vector<2x1xi32>
    %614 = arith.sitofp %613 : vector<2x1xi32> to vector<2x1xf32>
    %615 = vector.broadcast %614 : vector<2x1xf32> to vector<2x48xf32>
    %616 = arith.mulf %610, %615 : vector<2x48xf32>
    %617 = arith.addf %578, %616 : vector<2x48xf32>
    %c9_i32 = arith.constant 9 : i32
    %c0_165 = arith.constant 0 : index
    %618 = arith.index_cast %c9_i32 : i32 to index
    %c0_166 = arith.constant 0 : index
    %619 = vector.load %arg22[%c0_165, %618, %c0_166] : memref<2x10x144xf32, #tpu.memory_space<vmem>>, vector<2x1x144xf32>
    %620 = vector.shape_cast %619 : vector<2x1x144xf32> to vector<2x144xf32>
    %cst_167 = arith.constant dense<0.000000e+00> : vector<2x144xf32>
    %621 = tpu.matmul %610, %262, %cst_167 {dimension_numbers = #tpu.dot_dimension_numbers<[1], [0], [0], [1], [0, 0, 1, 1], [], []>} : vector<2x48xf32>, vector<48x144xf32>, vector<2x144xf32> -> vector<2x144xf32>
    %622 = vector.broadcast %263 : vector<1x144xf32> to vector<2x144xf32>
    %623 = arith.addf %621, %622 : vector<2x144xf32>
    %624 = vector.extract_strided_slice %620 {offsets = [0, 0], sizes = [2, 48], strides = [1, 1]} : vector<2x144xf32> to vector<2x48xf32>
    %625 = vector.extract_strided_slice %623 {offsets = [0, 0], sizes = [2, 48], strides = [1, 1]} : vector<2x144xf32> to vector<2x48xf32>
    %626 = arith.addf %624, %625 : vector<2x48xf32>
    %627 = arith.negf %626 : vector<2x48xf32>
    %628 = math.exp %627 : vector<2x48xf32>
    %cst_168 = arith.constant 1.000000e+00 : f32
    %629 = vector.broadcast %cst_168 : f32 to vector<2x48xf32>
    %630 = arith.addf %629, %628 : vector<2x48xf32>
    %631 = arith.divf %629, %630 : vector<2x48xf32>
    %632 = vector.extract_strided_slice %620 {offsets = [0, 48], sizes = [2, 48], strides = [1, 1]} : vector<2x144xf32> to vector<2x48xf32>
    %633 = vector.extract_strided_slice %623 {offsets = [0, 48], sizes = [2, 48], strides = [1, 1]} : vector<2x144xf32> to vector<2x48xf32>
    %634 = arith.addf %632, %633 : vector<2x48xf32>
    %635 = arith.negf %634 : vector<2x48xf32>
    %636 = math.exp %635 : vector<2x48xf32>
    %cst_169 = arith.constant 1.000000e+00 : f32
    %637 = vector.broadcast %cst_169 : f32 to vector<2x48xf32>
    %638 = arith.addf %637, %636 : vector<2x48xf32>
    %639 = arith.divf %637, %638 : vector<2x48xf32>
    %640 = vector.extract_strided_slice %620 {offsets = [0, 96], sizes = [2, 48], strides = [1, 1]} : vector<2x144xf32> to vector<2x48xf32>
    %641 = vector.extract_strided_slice %623 {offsets = [0, 96], sizes = [2, 48], strides = [1, 1]} : vector<2x144xf32> to vector<2x48xf32>
    %642 = arith.mulf %631, %641 : vector<2x48xf32>
    %643 = arith.addf %640, %642 : vector<2x48xf32>
    %644 = math.tanh %643 : vector<2x48xf32>
    %cst_170 = arith.constant 1.000000e+00 : f32
    %645 = vector.broadcast %cst_170 : f32 to vector<2x48xf32>
    %646 = arith.subf %645, %639 : vector<2x48xf32>
    %647 = arith.mulf %646, %644 : vector<2x48xf32>
    %648 = arith.mulf %639, %610 : vector<2x48xf32>
    %649 = arith.addf %647, %648 : vector<2x48xf32>
    %650 = vector.broadcast %c9_i32 : i32 to vector<2x1xi32>
    %651 = arith.cmpi slt, %650, %31 : vector<2x1xi32>
    %652 = arith.extui %651 : vector<2x1xi1> to vector<2x1xi32>
    %653 = arith.sitofp %652 : vector<2x1xi32> to vector<2x1xf32>
    %654 = vector.broadcast %653 : vector<2x1xf32> to vector<2x48xf32>
    %655 = arith.mulf %649, %654 : vector<2x48xf32>
    %656 = arith.addf %617, %655 : vector<2x48xf32>
    %c10_i32 = arith.constant 10 : i32
    %c0_i32_171 = arith.constant 0 : i32
    %c9_i32_172 = arith.constant 9 : i32
    %657 = arith.subi %c9_i32_172, %c0_i32_171 : i32
    %c0_173 = arith.constant 0 : index
    %658 = arith.index_cast %657 : i32 to index
    %c0_174 = arith.constant 0 : index
    %659 = vector.load %arg23[%c0_173, %658, %c0_174] : memref<2x10x144xf32, #tpu.memory_space<vmem>>, vector<2x1x144xf32>
    %660 = vector.shape_cast %659 : vector<2x1x144xf32> to vector<2x144xf32>
    %cst_175 = arith.constant dense<0.000000e+00> : vector<2x144xf32>
    %661 = tpu.matmul %247, %264, %cst_175 {dimension_numbers = #tpu.dot_dimension_numbers<[1], [0], [0], [1], [0, 0, 1, 1], [], []>} : vector<2x48xf32>, vector<48x144xf32>, vector<2x144xf32> -> vector<2x144xf32>
    %662 = vector.broadcast %265 : vector<1x144xf32> to vector<2x144xf32>
    %663 = arith.addf %661, %662 : vector<2x144xf32>
    %664 = vector.extract_strided_slice %660 {offsets = [0, 0], sizes = [2, 48], strides = [1, 1]} : vector<2x144xf32> to vector<2x48xf32>
    %665 = vector.extract_strided_slice %663 {offsets = [0, 0], sizes = [2, 48], strides = [1, 1]} : vector<2x144xf32> to vector<2x48xf32>
    %666 = arith.addf %664, %665 : vector<2x48xf32>
    %667 = arith.negf %666 : vector<2x48xf32>
    %668 = math.exp %667 : vector<2x48xf32>
    %cst_176 = arith.constant 1.000000e+00 : f32
    %669 = vector.broadcast %cst_176 : f32 to vector<2x48xf32>
    %670 = arith.addf %669, %668 : vector<2x48xf32>
    %671 = arith.divf %669, %670 : vector<2x48xf32>
    %672 = vector.extract_strided_slice %660 {offsets = [0, 48], sizes = [2, 48], strides = [1, 1]} : vector<2x144xf32> to vector<2x48xf32>
    %673 = vector.extract_strided_slice %663 {offsets = [0, 48], sizes = [2, 48], strides = [1, 1]} : vector<2x144xf32> to vector<2x48xf32>
    %674 = arith.addf %672, %673 : vector<2x48xf32>
    %675 = arith.negf %674 : vector<2x48xf32>
    %676 = math.exp %675 : vector<2x48xf32>
    %cst_177 = arith.constant 1.000000e+00 : f32
    %677 = vector.broadcast %cst_177 : f32 to vector<2x48xf32>
    %678 = arith.addf %677, %676 : vector<2x48xf32>
    %679 = arith.divf %677, %678 : vector<2x48xf32>
    %680 = vector.extract_strided_slice %660 {offsets = [0, 96], sizes = [2, 48], strides = [1, 1]} : vector<2x144xf32> to vector<2x48xf32>
    %681 = vector.extract_strided_slice %663 {offsets = [0, 96], sizes = [2, 48], strides = [1, 1]} : vector<2x144xf32> to vector<2x48xf32>
    %682 = arith.mulf %671, %681 : vector<2x48xf32>
    %683 = arith.addf %680, %682 : vector<2x48xf32>
    %684 = math.tanh %683 : vector<2x48xf32>
    %cst_178 = arith.constant 1.000000e+00 : f32
    %685 = vector.broadcast %cst_178 : f32 to vector<2x48xf32>
    %686 = arith.subf %685, %679 : vector<2x48xf32>
    %687 = arith.mulf %686, %684 : vector<2x48xf32>
    %688 = arith.mulf %679, %247 : vector<2x48xf32>
    %689 = arith.addf %687, %688 : vector<2x48xf32>
    %690 = vector.broadcast %657 : i32 to vector<2x1xi32>
    %691 = arith.cmpi slt, %690, %31 : vector<2x1xi32>
    %692 = arith.extui %691 : vector<2x1xi1> to vector<2x1xi32>
    %693 = arith.sitofp %692 : vector<2x1xi32> to vector<2x1xf32>
    %694 = vector.broadcast %693 : vector<2x1xf32> to vector<2x48xf32>
    %695 = arith.mulf %689, %694 : vector<2x48xf32>
    %696 = arith.addf %266, %695 : vector<2x48xf32>
    %c1_i32_179 = arith.constant 1 : i32
    %c9_i32_180 = arith.constant 9 : i32
    %697 = arith.subi %c9_i32_180, %c1_i32_179 : i32
    %c0_181 = arith.constant 0 : index
    %698 = arith.index_cast %697 : i32 to index
    %c0_182 = arith.constant 0 : index
    %699 = vector.load %arg23[%c0_181, %698, %c0_182] : memref<2x10x144xf32, #tpu.memory_space<vmem>>, vector<2x1x144xf32>
    %700 = vector.shape_cast %699 : vector<2x1x144xf32> to vector<2x144xf32>
    %cst_183 = arith.constant dense<0.000000e+00> : vector<2x144xf32>
    %701 = tpu.matmul %689, %264, %cst_183 {dimension_numbers = #tpu.dot_dimension_numbers<[1], [0], [0], [1], [0, 0, 1, 1], [], []>} : vector<2x48xf32>, vector<48x144xf32>, vector<2x144xf32> -> vector<2x144xf32>
    %702 = vector.broadcast %265 : vector<1x144xf32> to vector<2x144xf32>
    %703 = arith.addf %701, %702 : vector<2x144xf32>
    %704 = vector.extract_strided_slice %700 {offsets = [0, 0], sizes = [2, 48], strides = [1, 1]} : vector<2x144xf32> to vector<2x48xf32>
    %705 = vector.extract_strided_slice %703 {offsets = [0, 0], sizes = [2, 48], strides = [1, 1]} : vector<2x144xf32> to vector<2x48xf32>
    %706 = arith.addf %704, %705 : vector<2x48xf32>
    %707 = arith.negf %706 : vector<2x48xf32>
    %708 = math.exp %707 : vector<2x48xf32>
    %cst_184 = arith.constant 1.000000e+00 : f32
    %709 = vector.broadcast %cst_184 : f32 to vector<2x48xf32>
    %710 = arith.addf %709, %708 : vector<2x48xf32>
    %711 = arith.divf %709, %710 : vector<2x48xf32>
    %712 = vector.extract_strided_slice %700 {offsets = [0, 48], sizes = [2, 48], strides = [1, 1]} : vector<2x144xf32> to vector<2x48xf32>
    %713 = vector.extract_strided_slice %703 {offsets = [0, 48], sizes = [2, 48], strides = [1, 1]} : vector<2x144xf32> to vector<2x48xf32>
    %714 = arith.addf %712, %713 : vector<2x48xf32>
    %715 = arith.negf %714 : vector<2x48xf32>
    %716 = math.exp %715 : vector<2x48xf32>
    %cst_185 = arith.constant 1.000000e+00 : f32
    %717 = vector.broadcast %cst_185 : f32 to vector<2x48xf32>
    %718 = arith.addf %717, %716 : vector<2x48xf32>
    %719 = arith.divf %717, %718 : vector<2x48xf32>
    %720 = vector.extract_strided_slice %700 {offsets = [0, 96], sizes = [2, 48], strides = [1, 1]} : vector<2x144xf32> to vector<2x48xf32>
    %721 = vector.extract_strided_slice %703 {offsets = [0, 96], sizes = [2, 48], strides = [1, 1]} : vector<2x144xf32> to vector<2x48xf32>
    %722 = arith.mulf %711, %721 : vector<2x48xf32>
    %723 = arith.addf %720, %722 : vector<2x48xf32>
    %724 = math.tanh %723 : vector<2x48xf32>
    %cst_186 = arith.constant 1.000000e+00 : f32
    %725 = vector.broadcast %cst_186 : f32 to vector<2x48xf32>
    %726 = arith.subf %725, %719 : vector<2x48xf32>
    %727 = arith.mulf %726, %724 : vector<2x48xf32>
    %728 = arith.mulf %719, %689 : vector<2x48xf32>
    %729 = arith.addf %727, %728 : vector<2x48xf32>
    %730 = vector.broadcast %697 : i32 to vector<2x1xi32>
    %731 = arith.cmpi slt, %730, %31 : vector<2x1xi32>
    %732 = arith.extui %731 : vector<2x1xi1> to vector<2x1xi32>
    %733 = arith.sitofp %732 : vector<2x1xi32> to vector<2x1xf32>
    %734 = vector.broadcast %733 : vector<2x1xf32> to vector<2x48xf32>
    %735 = arith.mulf %729, %734 : vector<2x48xf32>
    %736 = arith.addf %696, %735 : vector<2x48xf32>
    %c2_i32_187 = arith.constant 2 : i32
    %c9_i32_188 = arith.constant 9 : i32
    %737 = arith.subi %c9_i32_188, %c2_i32_187 : i32
    %c0_189 = arith.constant 0 : index
    %738 = arith.index_cast %737 : i32 to index
    %c0_190 = arith.constant 0 : index
    %739 = vector.load %arg23[%c0_189, %738, %c0_190] : memref<2x10x144xf32, #tpu.memory_space<vmem>>, vector<2x1x144xf32>
    %740 = vector.shape_cast %739 : vector<2x1x144xf32> to vector<2x144xf32>
    %cst_191 = arith.constant dense<0.000000e+00> : vector<2x144xf32>
    %741 = tpu.matmul %729, %264, %cst_191 {dimension_numbers = #tpu.dot_dimension_numbers<[1], [0], [0], [1], [0, 0, 1, 1], [], []>} : vector<2x48xf32>, vector<48x144xf32>, vector<2x144xf32> -> vector<2x144xf32>
    %742 = vector.broadcast %265 : vector<1x144xf32> to vector<2x144xf32>
    %743 = arith.addf %741, %742 : vector<2x144xf32>
    %744 = vector.extract_strided_slice %740 {offsets = [0, 0], sizes = [2, 48], strides = [1, 1]} : vector<2x144xf32> to vector<2x48xf32>
    %745 = vector.extract_strided_slice %743 {offsets = [0, 0], sizes = [2, 48], strides = [1, 1]} : vector<2x144xf32> to vector<2x48xf32>
    %746 = arith.addf %744, %745 : vector<2x48xf32>
    %747 = arith.negf %746 : vector<2x48xf32>
    %748 = math.exp %747 : vector<2x48xf32>
    %cst_192 = arith.constant 1.000000e+00 : f32
    %749 = vector.broadcast %cst_192 : f32 to vector<2x48xf32>
    %750 = arith.addf %749, %748 : vector<2x48xf32>
    %751 = arith.divf %749, %750 : vector<2x48xf32>
    %752 = vector.extract_strided_slice %740 {offsets = [0, 48], sizes = [2, 48], strides = [1, 1]} : vector<2x144xf32> to vector<2x48xf32>
    %753 = vector.extract_strided_slice %743 {offsets = [0, 48], sizes = [2, 48], strides = [1, 1]} : vector<2x144xf32> to vector<2x48xf32>
    %754 = arith.addf %752, %753 : vector<2x48xf32>
    %755 = arith.negf %754 : vector<2x48xf32>
    %756 = math.exp %755 : vector<2x48xf32>
    %cst_193 = arith.constant 1.000000e+00 : f32
    %757 = vector.broadcast %cst_193 : f32 to vector<2x48xf32>
    %758 = arith.addf %757, %756 : vector<2x48xf32>
    %759 = arith.divf %757, %758 : vector<2x48xf32>
    %760 = vector.extract_strided_slice %740 {offsets = [0, 96], sizes = [2, 48], strides = [1, 1]} : vector<2x144xf32> to vector<2x48xf32>
    %761 = vector.extract_strided_slice %743 {offsets = [0, 96], sizes = [2, 48], strides = [1, 1]} : vector<2x144xf32> to vector<2x48xf32>
    %762 = arith.mulf %751, %761 : vector<2x48xf32>
    %763 = arith.addf %760, %762 : vector<2x48xf32>
    %764 = math.tanh %763 : vector<2x48xf32>
    %cst_194 = arith.constant 1.000000e+00 : f32
    %765 = vector.broadcast %cst_194 : f32 to vector<2x48xf32>
    %766 = arith.subf %765, %759 : vector<2x48xf32>
    %767 = arith.mulf %766, %764 : vector<2x48xf32>
    %768 = arith.mulf %759, %729 : vector<2x48xf32>
    %769 = arith.addf %767, %768 : vector<2x48xf32>
    %770 = vector.broadcast %737 : i32 to vector<2x1xi32>
    %771 = arith.cmpi slt, %770, %31 : vector<2x1xi32>
    %772 = arith.extui %771 : vector<2x1xi1> to vector<2x1xi32>
    %773 = arith.sitofp %772 : vector<2x1xi32> to vector<2x1xf32>
    %774 = vector.broadcast %773 : vector<2x1xf32> to vector<2x48xf32>
    %775 = arith.mulf %769, %774 : vector<2x48xf32>
    %776 = arith.addf %736, %775 : vector<2x48xf32>
    %c3_i32_195 = arith.constant 3 : i32
    %c9_i32_196 = arith.constant 9 : i32
    %777 = arith.subi %c9_i32_196, %c3_i32_195 : i32
    %c0_197 = arith.constant 0 : index
    %778 = arith.index_cast %777 : i32 to index
    %c0_198 = arith.constant 0 : index
    %779 = vector.load %arg23[%c0_197, %778, %c0_198] : memref<2x10x144xf32, #tpu.memory_space<vmem>>, vector<2x1x144xf32>
    %780 = vector.shape_cast %779 : vector<2x1x144xf32> to vector<2x144xf32>
    %cst_199 = arith.constant dense<0.000000e+00> : vector<2x144xf32>
    %781 = tpu.matmul %769, %264, %cst_199 {dimension_numbers = #tpu.dot_dimension_numbers<[1], [0], [0], [1], [0, 0, 1, 1], [], []>} : vector<2x48xf32>, vector<48x144xf32>, vector<2x144xf32> -> vector<2x144xf32>
    %782 = vector.broadcast %265 : vector<1x144xf32> to vector<2x144xf32>
    %783 = arith.addf %781, %782 : vector<2x144xf32>
    %784 = vector.extract_strided_slice %780 {offsets = [0, 0], sizes = [2, 48], strides = [1, 1]} : vector<2x144xf32> to vector<2x48xf32>
    %785 = vector.extract_strided_slice %783 {offsets = [0, 0], sizes = [2, 48], strides = [1, 1]} : vector<2x144xf32> to vector<2x48xf32>
    %786 = arith.addf %784, %785 : vector<2x48xf32>
    %787 = arith.negf %786 : vector<2x48xf32>
    %788 = math.exp %787 : vector<2x48xf32>
    %cst_200 = arith.constant 1.000000e+00 : f32
    %789 = vector.broadcast %cst_200 : f32 to vector<2x48xf32>
    %790 = arith.addf %789, %788 : vector<2x48xf32>
    %791 = arith.divf %789, %790 : vector<2x48xf32>
    %792 = vector.extract_strided_slice %780 {offsets = [0, 48], sizes = [2, 48], strides = [1, 1]} : vector<2x144xf32> to vector<2x48xf32>
    %793 = vector.extract_strided_slice %783 {offsets = [0, 48], sizes = [2, 48], strides = [1, 1]} : vector<2x144xf32> to vector<2x48xf32>
    %794 = arith.addf %792, %793 : vector<2x48xf32>
    %795 = arith.negf %794 : vector<2x48xf32>
    %796 = math.exp %795 : vector<2x48xf32>
    %cst_201 = arith.constant 1.000000e+00 : f32
    %797 = vector.broadcast %cst_201 : f32 to vector<2x48xf32>
    %798 = arith.addf %797, %796 : vector<2x48xf32>
    %799 = arith.divf %797, %798 : vector<2x48xf32>
    %800 = vector.extract_strided_slice %780 {offsets = [0, 96], sizes = [2, 48], strides = [1, 1]} : vector<2x144xf32> to vector<2x48xf32>
    %801 = vector.extract_strided_slice %783 {offsets = [0, 96], sizes = [2, 48], strides = [1, 1]} : vector<2x144xf32> to vector<2x48xf32>
    %802 = arith.mulf %791, %801 : vector<2x48xf32>
    %803 = arith.addf %800, %802 : vector<2x48xf32>
    %804 = math.tanh %803 : vector<2x48xf32>
    %cst_202 = arith.constant 1.000000e+00 : f32
    %805 = vector.broadcast %cst_202 : f32 to vector<2x48xf32>
    %806 = arith.subf %805, %799 : vector<2x48xf32>
    %807 = arith.mulf %806, %804 : vector<2x48xf32>
    %808 = arith.mulf %799, %769 : vector<2x48xf32>
    %809 = arith.addf %807, %808 : vector<2x48xf32>
    %810 = vector.broadcast %777 : i32 to vector<2x1xi32>
    %811 = arith.cmpi slt, %810, %31 : vector<2x1xi32>
    %812 = arith.extui %811 : vector<2x1xi1> to vector<2x1xi32>
    %813 = arith.sitofp %812 : vector<2x1xi32> to vector<2x1xf32>
    %814 = vector.broadcast %813 : vector<2x1xf32> to vector<2x48xf32>
    %815 = arith.mulf %809, %814 : vector<2x48xf32>
    %816 = arith.addf %776, %815 : vector<2x48xf32>
    %c4_i32_203 = arith.constant 4 : i32
    %c9_i32_204 = arith.constant 9 : i32
    %817 = arith.subi %c9_i32_204, %c4_i32_203 : i32
    %c0_205 = arith.constant 0 : index
    %818 = arith.index_cast %817 : i32 to index
    %c0_206 = arith.constant 0 : index
    %819 = vector.load %arg23[%c0_205, %818, %c0_206] : memref<2x10x144xf32, #tpu.memory_space<vmem>>, vector<2x1x144xf32>
    %820 = vector.shape_cast %819 : vector<2x1x144xf32> to vector<2x144xf32>
    %cst_207 = arith.constant dense<0.000000e+00> : vector<2x144xf32>
    %821 = tpu.matmul %809, %264, %cst_207 {dimension_numbers = #tpu.dot_dimension_numbers<[1], [0], [0], [1], [0, 0, 1, 1], [], []>} : vector<2x48xf32>, vector<48x144xf32>, vector<2x144xf32> -> vector<2x144xf32>
    %822 = vector.broadcast %265 : vector<1x144xf32> to vector<2x144xf32>
    %823 = arith.addf %821, %822 : vector<2x144xf32>
    %824 = vector.extract_strided_slice %820 {offsets = [0, 0], sizes = [2, 48], strides = [1, 1]} : vector<2x144xf32> to vector<2x48xf32>
    %825 = vector.extract_strided_slice %823 {offsets = [0, 0], sizes = [2, 48], strides = [1, 1]} : vector<2x144xf32> to vector<2x48xf32>
    %826 = arith.addf %824, %825 : vector<2x48xf32>
    %827 = arith.negf %826 : vector<2x48xf32>
    %828 = math.exp %827 : vector<2x48xf32>
    %cst_208 = arith.constant 1.000000e+00 : f32
    %829 = vector.broadcast %cst_208 : f32 to vector<2x48xf32>
    %830 = arith.addf %829, %828 : vector<2x48xf32>
    %831 = arith.divf %829, %830 : vector<2x48xf32>
    %832 = vector.extract_strided_slice %820 {offsets = [0, 48], sizes = [2, 48], strides = [1, 1]} : vector<2x144xf32> to vector<2x48xf32>
    %833 = vector.extract_strided_slice %823 {offsets = [0, 48], sizes = [2, 48], strides = [1, 1]} : vector<2x144xf32> to vector<2x48xf32>
    %834 = arith.addf %832, %833 : vector<2x48xf32>
    %835 = arith.negf %834 : vector<2x48xf32>
    %836 = math.exp %835 : vector<2x48xf32>
    %cst_209 = arith.constant 1.000000e+00 : f32
    %837 = vector.broadcast %cst_209 : f32 to vector<2x48xf32>
    %838 = arith.addf %837, %836 : vector<2x48xf32>
    %839 = arith.divf %837, %838 : vector<2x48xf32>
    %840 = vector.extract_strided_slice %820 {offsets = [0, 96], sizes = [2, 48], strides = [1, 1]} : vector<2x144xf32> to vector<2x48xf32>
    %841 = vector.extract_strided_slice %823 {offsets = [0, 96], sizes = [2, 48], strides = [1, 1]} : vector<2x144xf32> to vector<2x48xf32>
    %842 = arith.mulf %831, %841 : vector<2x48xf32>
    %843 = arith.addf %840, %842 : vector<2x48xf32>
    %844 = math.tanh %843 : vector<2x48xf32>
    %cst_210 = arith.constant 1.000000e+00 : f32
    %845 = vector.broadcast %cst_210 : f32 to vector<2x48xf32>
    %846 = arith.subf %845, %839 : vector<2x48xf32>
    %847 = arith.mulf %846, %844 : vector<2x48xf32>
    %848 = arith.mulf %839, %809 : vector<2x48xf32>
    %849 = arith.addf %847, %848 : vector<2x48xf32>
    %850 = vector.broadcast %817 : i32 to vector<2x1xi32>
    %851 = arith.cmpi slt, %850, %31 : vector<2x1xi32>
    %852 = arith.extui %851 : vector<2x1xi1> to vector<2x1xi32>
    %853 = arith.sitofp %852 : vector<2x1xi32> to vector<2x1xf32>
    %854 = vector.broadcast %853 : vector<2x1xf32> to vector<2x48xf32>
    %855 = arith.mulf %849, %854 : vector<2x48xf32>
    %856 = arith.addf %816, %855 : vector<2x48xf32>
    %c5_i32_211 = arith.constant 5 : i32
    %c9_i32_212 = arith.constant 9 : i32
    %857 = arith.subi %c9_i32_212, %c5_i32_211 : i32
    %c0_213 = arith.constant 0 : index
    %858 = arith.index_cast %857 : i32 to index
    %c0_214 = arith.constant 0 : index
    %859 = vector.load %arg23[%c0_213, %858, %c0_214] : memref<2x10x144xf32, #tpu.memory_space<vmem>>, vector<2x1x144xf32>
    %860 = vector.shape_cast %859 : vector<2x1x144xf32> to vector<2x144xf32>
    %cst_215 = arith.constant dense<0.000000e+00> : vector<2x144xf32>
    %861 = tpu.matmul %849, %264, %cst_215 {dimension_numbers = #tpu.dot_dimension_numbers<[1], [0], [0], [1], [0, 0, 1, 1], [], []>} : vector<2x48xf32>, vector<48x144xf32>, vector<2x144xf32> -> vector<2x144xf32>
    %862 = vector.broadcast %265 : vector<1x144xf32> to vector<2x144xf32>
    %863 = arith.addf %861, %862 : vector<2x144xf32>
    %864 = vector.extract_strided_slice %860 {offsets = [0, 0], sizes = [2, 48], strides = [1, 1]} : vector<2x144xf32> to vector<2x48xf32>
    %865 = vector.extract_strided_slice %863 {offsets = [0, 0], sizes = [2, 48], strides = [1, 1]} : vector<2x144xf32> to vector<2x48xf32>
    %866 = arith.addf %864, %865 : vector<2x48xf32>
    %867 = arith.negf %866 : vector<2x48xf32>
    %868 = math.exp %867 : vector<2x48xf32>
    %cst_216 = arith.constant 1.000000e+00 : f32
    %869 = vector.broadcast %cst_216 : f32 to vector<2x48xf32>
    %870 = arith.addf %869, %868 : vector<2x48xf32>
    %871 = arith.divf %869, %870 : vector<2x48xf32>
    %872 = vector.extract_strided_slice %860 {offsets = [0, 48], sizes = [2, 48], strides = [1, 1]} : vector<2x144xf32> to vector<2x48xf32>
    %873 = vector.extract_strided_slice %863 {offsets = [0, 48], sizes = [2, 48], strides = [1, 1]} : vector<2x144xf32> to vector<2x48xf32>
    %874 = arith.addf %872, %873 : vector<2x48xf32>
    %875 = arith.negf %874 : vector<2x48xf32>
    %876 = math.exp %875 : vector<2x48xf32>
    %cst_217 = arith.constant 1.000000e+00 : f32
    %877 = vector.broadcast %cst_217 : f32 to vector<2x48xf32>
    %878 = arith.addf %877, %876 : vector<2x48xf32>
    %879 = arith.divf %877, %878 : vector<2x48xf32>
    %880 = vector.extract_strided_slice %860 {offsets = [0, 96], sizes = [2, 48], strides = [1, 1]} : vector<2x144xf32> to vector<2x48xf32>
    %881 = vector.extract_strided_slice %863 {offsets = [0, 96], sizes = [2, 48], strides = [1, 1]} : vector<2x144xf32> to vector<2x48xf32>
    %882 = arith.mulf %871, %881 : vector<2x48xf32>
    %883 = arith.addf %880, %882 : vector<2x48xf32>
    %884 = math.tanh %883 : vector<2x48xf32>
    %cst_218 = arith.constant 1.000000e+00 : f32
    %885 = vector.broadcast %cst_218 : f32 to vector<2x48xf32>
    %886 = arith.subf %885, %879 : vector<2x48xf32>
    %887 = arith.mulf %886, %884 : vector<2x48xf32>
    %888 = arith.mulf %879, %849 : vector<2x48xf32>
    %889 = arith.addf %887, %888 : vector<2x48xf32>
    %890 = vector.broadcast %857 : i32 to vector<2x1xi32>
    %891 = arith.cmpi slt, %890, %31 : vector<2x1xi32>
    %892 = arith.extui %891 : vector<2x1xi1> to vector<2x1xi32>
    %893 = arith.sitofp %892 : vector<2x1xi32> to vector<2x1xf32>
    %894 = vector.broadcast %893 : vector<2x1xf32> to vector<2x48xf32>
    %895 = arith.mulf %889, %894 : vector<2x48xf32>
    %896 = arith.addf %856, %895 : vector<2x48xf32>
    %c6_i32_219 = arith.constant 6 : i32
    %c9_i32_220 = arith.constant 9 : i32
    %897 = arith.subi %c9_i32_220, %c6_i32_219 : i32
    %c0_221 = arith.constant 0 : index
    %898 = arith.index_cast %897 : i32 to index
    %c0_222 = arith.constant 0 : index
    %899 = vector.load %arg23[%c0_221, %898, %c0_222] : memref<2x10x144xf32, #tpu.memory_space<vmem>>, vector<2x1x144xf32>
    %900 = vector.shape_cast %899 : vector<2x1x144xf32> to vector<2x144xf32>
    %cst_223 = arith.constant dense<0.000000e+00> : vector<2x144xf32>
    %901 = tpu.matmul %889, %264, %cst_223 {dimension_numbers = #tpu.dot_dimension_numbers<[1], [0], [0], [1], [0, 0, 1, 1], [], []>} : vector<2x48xf32>, vector<48x144xf32>, vector<2x144xf32> -> vector<2x144xf32>
    %902 = vector.broadcast %265 : vector<1x144xf32> to vector<2x144xf32>
    %903 = arith.addf %901, %902 : vector<2x144xf32>
    %904 = vector.extract_strided_slice %900 {offsets = [0, 0], sizes = [2, 48], strides = [1, 1]} : vector<2x144xf32> to vector<2x48xf32>
    %905 = vector.extract_strided_slice %903 {offsets = [0, 0], sizes = [2, 48], strides = [1, 1]} : vector<2x144xf32> to vector<2x48xf32>
    %906 = arith.addf %904, %905 : vector<2x48xf32>
    %907 = arith.negf %906 : vector<2x48xf32>
    %908 = math.exp %907 : vector<2x48xf32>
    %cst_224 = arith.constant 1.000000e+00 : f32
    %909 = vector.broadcast %cst_224 : f32 to vector<2x48xf32>
    %910 = arith.addf %909, %908 : vector<2x48xf32>
    %911 = arith.divf %909, %910 : vector<2x48xf32>
    %912 = vector.extract_strided_slice %900 {offsets = [0, 48], sizes = [2, 48], strides = [1, 1]} : vector<2x144xf32> to vector<2x48xf32>
    %913 = vector.extract_strided_slice %903 {offsets = [0, 48], sizes = [2, 48], strides = [1, 1]} : vector<2x144xf32> to vector<2x48xf32>
    %914 = arith.addf %912, %913 : vector<2x48xf32>
    %915 = arith.negf %914 : vector<2x48xf32>
    %916 = math.exp %915 : vector<2x48xf32>
    %cst_225 = arith.constant 1.000000e+00 : f32
    %917 = vector.broadcast %cst_225 : f32 to vector<2x48xf32>
    %918 = arith.addf %917, %916 : vector<2x48xf32>
    %919 = arith.divf %917, %918 : vector<2x48xf32>
    %920 = vector.extract_strided_slice %900 {offsets = [0, 96], sizes = [2, 48], strides = [1, 1]} : vector<2x144xf32> to vector<2x48xf32>
    %921 = vector.extract_strided_slice %903 {offsets = [0, 96], sizes = [2, 48], strides = [1, 1]} : vector<2x144xf32> to vector<2x48xf32>
    %922 = arith.mulf %911, %921 : vector<2x48xf32>
    %923 = arith.addf %920, %922 : vector<2x48xf32>
    %924 = math.tanh %923 : vector<2x48xf32>
    %cst_226 = arith.constant 1.000000e+00 : f32
    %925 = vector.broadcast %cst_226 : f32 to vector<2x48xf32>
    %926 = arith.subf %925, %919 : vector<2x48xf32>
    %927 = arith.mulf %926, %924 : vector<2x48xf32>
    %928 = arith.mulf %919, %889 : vector<2x48xf32>
    %929 = arith.addf %927, %928 : vector<2x48xf32>
    %930 = vector.broadcast %897 : i32 to vector<2x1xi32>
    %931 = arith.cmpi slt, %930, %31 : vector<2x1xi32>
    %932 = arith.extui %931 : vector<2x1xi1> to vector<2x1xi32>
    %933 = arith.sitofp %932 : vector<2x1xi32> to vector<2x1xf32>
    %934 = vector.broadcast %933 : vector<2x1xf32> to vector<2x48xf32>
    %935 = arith.mulf %929, %934 : vector<2x48xf32>
    %936 = arith.addf %896, %935 : vector<2x48xf32>
    %c7_i32_227 = arith.constant 7 : i32
    %c9_i32_228 = arith.constant 9 : i32
    %937 = arith.subi %c9_i32_228, %c7_i32_227 : i32
    %c0_229 = arith.constant 0 : index
    %938 = arith.index_cast %937 : i32 to index
    %c0_230 = arith.constant 0 : index
    %939 = vector.load %arg23[%c0_229, %938, %c0_230] : memref<2x10x144xf32, #tpu.memory_space<vmem>>, vector<2x1x144xf32>
    %940 = vector.shape_cast %939 : vector<2x1x144xf32> to vector<2x144xf32>
    %cst_231 = arith.constant dense<0.000000e+00> : vector<2x144xf32>
    %941 = tpu.matmul %929, %264, %cst_231 {dimension_numbers = #tpu.dot_dimension_numbers<[1], [0], [0], [1], [0, 0, 1, 1], [], []>} : vector<2x48xf32>, vector<48x144xf32>, vector<2x144xf32> -> vector<2x144xf32>
    %942 = vector.broadcast %265 : vector<1x144xf32> to vector<2x144xf32>
    %943 = arith.addf %941, %942 : vector<2x144xf32>
    %944 = vector.extract_strided_slice %940 {offsets = [0, 0], sizes = [2, 48], strides = [1, 1]} : vector<2x144xf32> to vector<2x48xf32>
    %945 = vector.extract_strided_slice %943 {offsets = [0, 0], sizes = [2, 48], strides = [1, 1]} : vector<2x144xf32> to vector<2x48xf32>
    %946 = arith.addf %944, %945 : vector<2x48xf32>
    %947 = arith.negf %946 : vector<2x48xf32>
    %948 = math.exp %947 : vector<2x48xf32>
    %cst_232 = arith.constant 1.000000e+00 : f32
    %949 = vector.broadcast %cst_232 : f32 to vector<2x48xf32>
    %950 = arith.addf %949, %948 : vector<2x48xf32>
    %951 = arith.divf %949, %950 : vector<2x48xf32>
    %952 = vector.extract_strided_slice %940 {offsets = [0, 48], sizes = [2, 48], strides = [1, 1]} : vector<2x144xf32> to vector<2x48xf32>
    %953 = vector.extract_strided_slice %943 {offsets = [0, 48], sizes = [2, 48], strides = [1, 1]} : vector<2x144xf32> to vector<2x48xf32>
    %954 = arith.addf %952, %953 : vector<2x48xf32>
    %955 = arith.negf %954 : vector<2x48xf32>
    %956 = math.exp %955 : vector<2x48xf32>
    %cst_233 = arith.constant 1.000000e+00 : f32
    %957 = vector.broadcast %cst_233 : f32 to vector<2x48xf32>
    %958 = arith.addf %957, %956 : vector<2x48xf32>
    %959 = arith.divf %957, %958 : vector<2x48xf32>
    %960 = vector.extract_strided_slice %940 {offsets = [0, 96], sizes = [2, 48], strides = [1, 1]} : vector<2x144xf32> to vector<2x48xf32>
    %961 = vector.extract_strided_slice %943 {offsets = [0, 96], sizes = [2, 48], strides = [1, 1]} : vector<2x144xf32> to vector<2x48xf32>
    %962 = arith.mulf %951, %961 : vector<2x48xf32>
    %963 = arith.addf %960, %962 : vector<2x48xf32>
    %964 = math.tanh %963 : vector<2x48xf32>
    %cst_234 = arith.constant 1.000000e+00 : f32
    %965 = vector.broadcast %cst_234 : f32 to vector<2x48xf32>
    %966 = arith.subf %965, %959 : vector<2x48xf32>
    %967 = arith.mulf %966, %964 : vector<2x48xf32>
    %968 = arith.mulf %959, %929 : vector<2x48xf32>
    %969 = arith.addf %967, %968 : vector<2x48xf32>
    %970 = vector.broadcast %937 : i32 to vector<2x1xi32>
    %971 = arith.cmpi slt, %970, %31 : vector<2x1xi32>
    %972 = arith.extui %971 : vector<2x1xi1> to vector<2x1xi32>
    %973 = arith.sitofp %972 : vector<2x1xi32> to vector<2x1xf32>
    %974 = vector.broadcast %973 : vector<2x1xf32> to vector<2x48xf32>
    %975 = arith.mulf %969, %974 : vector<2x48xf32>
    %976 = arith.addf %936, %975 : vector<2x48xf32>
    %c8_i32_235 = arith.constant 8 : i32
    %c9_i32_236 = arith.constant 9 : i32
    %977 = arith.subi %c9_i32_236, %c8_i32_235 : i32
    %c0_237 = arith.constant 0 : index
    %978 = arith.index_cast %977 : i32 to index
    %c0_238 = arith.constant 0 : index
    %979 = vector.load %arg23[%c0_237, %978, %c0_238] : memref<2x10x144xf32, #tpu.memory_space<vmem>>, vector<2x1x144xf32>
    %980 = vector.shape_cast %979 : vector<2x1x144xf32> to vector<2x144xf32>
    %cst_239 = arith.constant dense<0.000000e+00> : vector<2x144xf32>
    %981 = tpu.matmul %969, %264, %cst_239 {dimension_numbers = #tpu.dot_dimension_numbers<[1], [0], [0], [1], [0, 0, 1, 1], [], []>} : vector<2x48xf32>, vector<48x144xf32>, vector<2x144xf32> -> vector<2x144xf32>
    %982 = vector.broadcast %265 : vector<1x144xf32> to vector<2x144xf32>
    %983 = arith.addf %981, %982 : vector<2x144xf32>
    %984 = vector.extract_strided_slice %980 {offsets = [0, 0], sizes = [2, 48], strides = [1, 1]} : vector<2x144xf32> to vector<2x48xf32>
    %985 = vector.extract_strided_slice %983 {offsets = [0, 0], sizes = [2, 48], strides = [1, 1]} : vector<2x144xf32> to vector<2x48xf32>
    %986 = arith.addf %984, %985 : vector<2x48xf32>
    %987 = arith.negf %986 : vector<2x48xf32>
    %988 = math.exp %987 : vector<2x48xf32>
    %cst_240 = arith.constant 1.000000e+00 : f32
    %989 = vector.broadcast %cst_240 : f32 to vector<2x48xf32>
    %990 = arith.addf %989, %988 : vector<2x48xf32>
    %991 = arith.divf %989, %990 : vector<2x48xf32>
    %992 = vector.extract_strided_slice %980 {offsets = [0, 48], sizes = [2, 48], strides = [1, 1]} : vector<2x144xf32> to vector<2x48xf32>
    %993 = vector.extract_strided_slice %983 {offsets = [0, 48], sizes = [2, 48], strides = [1, 1]} : vector<2x144xf32> to vector<2x48xf32>
    %994 = arith.addf %992, %993 : vector<2x48xf32>
    %995 = arith.negf %994 : vector<2x48xf32>
    %996 = math.exp %995 : vector<2x48xf32>
    %cst_241 = arith.constant 1.000000e+00 : f32
    %997 = vector.broadcast %cst_241 : f32 to vector<2x48xf32>
    %998 = arith.addf %997, %996 : vector<2x48xf32>
    %999 = arith.divf %997, %998 : vector<2x48xf32>
    %1000 = vector.extract_strided_slice %980 {offsets = [0, 96], sizes = [2, 48], strides = [1, 1]} : vector<2x144xf32> to vector<2x48xf32>
    %1001 = vector.extract_strided_slice %983 {offsets = [0, 96], sizes = [2, 48], strides = [1, 1]} : vector<2x144xf32> to vector<2x48xf32>
    %1002 = arith.mulf %991, %1001 : vector<2x48xf32>
    %1003 = arith.addf %1000, %1002 : vector<2x48xf32>
    %1004 = math.tanh %1003 : vector<2x48xf32>
    %cst_242 = arith.constant 1.000000e+00 : f32
    %1005 = vector.broadcast %cst_242 : f32 to vector<2x48xf32>
    %1006 = arith.subf %1005, %999 : vector<2x48xf32>
    %1007 = arith.mulf %1006, %1004 : vector<2x48xf32>
    %1008 = arith.mulf %999, %969 : vector<2x48xf32>
    %1009 = arith.addf %1007, %1008 : vector<2x48xf32>
    %1010 = vector.broadcast %977 : i32 to vector<2x1xi32>
    %1011 = arith.cmpi slt, %1010, %31 : vector<2x1xi32>
    %1012 = arith.extui %1011 : vector<2x1xi1> to vector<2x1xi32>
    %1013 = arith.sitofp %1012 : vector<2x1xi32> to vector<2x1xf32>
    %1014 = vector.broadcast %1013 : vector<2x1xf32> to vector<2x48xf32>
    %1015 = arith.mulf %1009, %1014 : vector<2x48xf32>
    %1016 = arith.addf %976, %1015 : vector<2x48xf32>
    %c9_i32_243 = arith.constant 9 : i32
    %c9_i32_244 = arith.constant 9 : i32
    %1017 = arith.subi %c9_i32_244, %c9_i32_243 : i32
    %c0_245 = arith.constant 0 : index
    %1018 = arith.index_cast %1017 : i32 to index
    %c0_246 = arith.constant 0 : index
    %1019 = vector.load %arg23[%c0_245, %1018, %c0_246] : memref<2x10x144xf32, #tpu.memory_space<vmem>>, vector<2x1x144xf32>
    %1020 = vector.shape_cast %1019 : vector<2x1x144xf32> to vector<2x144xf32>
    %cst_247 = arith.constant dense<0.000000e+00> : vector<2x144xf32>
    %1021 = tpu.matmul %1009, %264, %cst_247 {dimension_numbers = #tpu.dot_dimension_numbers<[1], [0], [0], [1], [0, 0, 1, 1], [], []>} : vector<2x48xf32>, vector<48x144xf32>, vector<2x144xf32> -> vector<2x144xf32>
    %1022 = vector.broadcast %265 : vector<1x144xf32> to vector<2x144xf32>
    %1023 = arith.addf %1021, %1022 : vector<2x144xf32>
    %1024 = vector.extract_strided_slice %1020 {offsets = [0, 0], sizes = [2, 48], strides = [1, 1]} : vector<2x144xf32> to vector<2x48xf32>
    %1025 = vector.extract_strided_slice %1023 {offsets = [0, 0], sizes = [2, 48], strides = [1, 1]} : vector<2x144xf32> to vector<2x48xf32>
    %1026 = arith.addf %1024, %1025 : vector<2x48xf32>
    %1027 = arith.negf %1026 : vector<2x48xf32>
    %1028 = math.exp %1027 : vector<2x48xf32>
    %cst_248 = arith.constant 1.000000e+00 : f32
    %1029 = vector.broadcast %cst_248 : f32 to vector<2x48xf32>
    %1030 = arith.addf %1029, %1028 : vector<2x48xf32>
    %1031 = arith.divf %1029, %1030 : vector<2x48xf32>
    %1032 = vector.extract_strided_slice %1020 {offsets = [0, 48], sizes = [2, 48], strides = [1, 1]} : vector<2x144xf32> to vector<2x48xf32>
    %1033 = vector.extract_strided_slice %1023 {offsets = [0, 48], sizes = [2, 48], strides = [1, 1]} : vector<2x144xf32> to vector<2x48xf32>
    %1034 = arith.addf %1032, %1033 : vector<2x48xf32>
    %1035 = arith.negf %1034 : vector<2x48xf32>
    %1036 = math.exp %1035 : vector<2x48xf32>
    %cst_249 = arith.constant 1.000000e+00 : f32
    %1037 = vector.broadcast %cst_249 : f32 to vector<2x48xf32>
    %1038 = arith.addf %1037, %1036 : vector<2x48xf32>
    %1039 = arith.divf %1037, %1038 : vector<2x48xf32>
    %1040 = vector.extract_strided_slice %1020 {offsets = [0, 96], sizes = [2, 48], strides = [1, 1]} : vector<2x144xf32> to vector<2x48xf32>
    %1041 = vector.extract_strided_slice %1023 {offsets = [0, 96], sizes = [2, 48], strides = [1, 1]} : vector<2x144xf32> to vector<2x48xf32>
    %1042 = arith.mulf %1031, %1041 : vector<2x48xf32>
    %1043 = arith.addf %1040, %1042 : vector<2x48xf32>
    %1044 = math.tanh %1043 : vector<2x48xf32>
    %cst_250 = arith.constant 1.000000e+00 : f32
    %1045 = vector.broadcast %cst_250 : f32 to vector<2x48xf32>
    %1046 = arith.subf %1045, %1039 : vector<2x48xf32>
    %1047 = arith.mulf %1046, %1044 : vector<2x48xf32>
    %1048 = arith.mulf %1039, %1009 : vector<2x48xf32>
    %1049 = arith.addf %1047, %1048 : vector<2x48xf32>
    %1050 = vector.broadcast %1017 : i32 to vector<2x1xi32>
    %1051 = arith.cmpi slt, %1050, %31 : vector<2x1xi32>
    %1052 = arith.extui %1051 : vector<2x1xi1> to vector<2x1xi32>
    %1053 = arith.sitofp %1052 : vector<2x1xi32> to vector<2x1xf32>
    %1054 = vector.broadcast %1053 : vector<2x1xf32> to vector<2x48xf32>
    %1055 = arith.mulf %1049, %1054 : vector<2x48xf32>
    %1056 = arith.addf %1016, %1055 : vector<2x48xf32>
    %c10_i32_251 = arith.constant 10 : i32
    %1057 = arith.sitofp %31 : vector<2x1xi32> to vector<2x1xf32>
    %cst_252 = arith.constant 1.000000e+00 : f32
    %1058 = vector.broadcast %cst_252 : f32 to vector<2x1xf32>
    %1059 = arith.maximumf %1057, %1058 : vector<2x1xf32>
    %1060 = tpu.reciprocal %1059 {approx = true} : vector<2x1xf32> -> vector<2x1xf32>
    %1061 = vector.broadcast %1060 : vector<2x1xf32> to vector<2x48xf32>
    %1062 = arith.mulf %656, %1061 : vector<2x48xf32>
    %1063 = vector.broadcast %1060 : vector<2x1xf32> to vector<2x48xf32>
    %1064 = arith.mulf %1056, %1063 : vector<2x48xf32>
    %1065 = tpu.concatenate %1062, %1064 in 1 : vector<2x48xf32>, vector<2x48xf32> -> vector<2x96xf32>
    %c0_253 = arith.constant 0 : index
    %c0_254 = arith.constant 0 : index
    %1066 = vector.load %arg21[%c0_253, %c0_254] : memref<2x96xf32, #tpu.memory_space<vmem>>, vector<2x96xf32>
    tpu.vector_store %arg21[%c0_253, %c0_254], %1065 {strides = array<i32>} : memref<2x96xf32, #tpu.memory_space<vmem>>, vector<2x96xf32>,
    return
  }
  func.func @transform_0(%arg0: i32, %arg1: memref<2xi32, #tpu.memory_space<smem>>, %arg2: memref<2xi32, #tpu.memory_space<smem>>) -> (i32, i32, i32) {
    %c0_i32 = arith.constant 0 : i32
    %c0_i32_0 = arith.constant 0 : i32
    %c0_i32_1 = arith.constant 0 : i32
    return %arg0, %c0_i32, %c0_i32_0 : i32, i32, i32
  }
  func.func @transform_1(%arg0: i32, %arg1: memref<2xi32, #tpu.memory_space<smem>>, %arg2: memref<2xi32, #tpu.memory_space<smem>>) -> (i32, i32, i32) {
    %c0_i32 = arith.constant 0 : i32
    %c0_i32_0 = arith.constant 0 : i32
    %c0_i32_1 = arith.constant 0 : i32
    return %arg0, %c0_i32, %c0_i32_0 : i32, i32, i32
  }
  func.func @transform_2(%arg0: i32, %arg1: memref<2xi32, #tpu.memory_space<smem>>, %arg2: memref<2xi32, #tpu.memory_space<smem>>) -> (i32, i32) {
    %c0_i32 = arith.constant 0 : i32
    %c0_i32_0 = arith.constant 0 : i32
    %c0_i32_1 = arith.constant 0 : i32
    return %c0_i32, %c0_i32_0 : i32, i32
  }
  func.func @transform_3(%arg0: i32, %arg1: memref<2xi32, #tpu.memory_space<smem>>, %arg2: memref<2xi32, #tpu.memory_space<smem>>) -> (i32, i32) {
    %c0_i32 = arith.constant 0 : i32
    %c0_i32_0 = arith.constant 0 : i32
    %c0_i32_1 = arith.constant 0 : i32
    return %c0_i32, %c0_i32_0 : i32, i32
  }
  func.func @transform_4(%arg0: i32, %arg1: memref<2xi32, #tpu.memory_space<smem>>, %arg2: memref<2xi32, #tpu.memory_space<smem>>) -> (i32, i32) {
    %c0_i32 = arith.constant 0 : i32
    %c0_i32_0 = arith.constant 0 : i32
    %c0_i32_1 = arith.constant 0 : i32
    return %c0_i32, %c0_i32_0 : i32, i32
  }
  func.func @transform_5(%arg0: i32, %arg1: memref<2xi32, #tpu.memory_space<smem>>, %arg2: memref<2xi32, #tpu.memory_space<smem>>) -> (i32, i32) {
    %c0_i32 = arith.constant 0 : i32
    %c0_i32_0 = arith.constant 0 : i32
    %c0_i32_1 = arith.constant 0 : i32
    return %c0_i32, %c0_i32_0 : i32, i32
  }
  func.func @transform_6(%arg0: i32, %arg1: memref<2xi32, #tpu.memory_space<smem>>, %arg2: memref<2xi32, #tpu.memory_space<smem>>) -> (i32, i32) {
    %c0_i32 = arith.constant 0 : i32
    %c0_i32_0 = arith.constant 0 : i32
    %c0_i32_1 = arith.constant 0 : i32
    return %c0_i32, %c0_i32_0 : i32, i32
  }
  func.func @transform_7(%arg0: i32, %arg1: memref<2xi32, #tpu.memory_space<smem>>, %arg2: memref<2xi32, #tpu.memory_space<smem>>) -> (i32, i32) {
    %c0_i32 = arith.constant 0 : i32
    %c0_i32_0 = arith.constant 0 : i32
    %c0_i32_1 = arith.constant 0 : i32
    return %c0_i32, %c0_i32_0 : i32, i32
  }
  func.func @transform_8(%arg0: i32, %arg1: memref<2xi32, #tpu.memory_space<smem>>, %arg2: memref<2xi32, #tpu.memory_space<smem>>) -> (i32, i32) {
    %c0_i32 = arith.constant 0 : i32
    %c0_i32_0 = arith.constant 0 : i32
    %c0_i32_1 = arith.constant 0 : i32
    return %c0_i32, %c0_i32_0 : i32, i32
  }
  func.func @transform_9(%arg0: i32, %arg1: memref<2xi32, #tpu.memory_space<smem>>, %arg2: memref<2xi32, #tpu.memory_space<smem>>) -> (i32, i32) {
    %c0_i32 = arith.constant 0 : i32
    %c0_i32_0 = arith.constant 0 : i32
    %c0_i32_1 = arith.constant 0 : i32
    return %c0_i32, %c0_i32_0 : i32, i32
  }
  func.func @transform_10(%arg0: i32, %arg1: memref<2xi32, #tpu.memory_space<smem>>, %arg2: memref<2xi32, #tpu.memory_space<smem>>) -> (i32, i32) {
    %c0_i32 = arith.constant 0 : i32
    %c0_i32_0 = arith.constant 0 : i32
    %c0_i32_1 = arith.constant 0 : i32
    return %c0_i32, %c0_i32_0 : i32, i32
  }
  func.func @transform_11(%arg0: i32, %arg1: memref<2xi32, #tpu.memory_space<smem>>, %arg2: memref<2xi32, #tpu.memory_space<smem>>) -> (i32, i32) {
    %c0_i32 = arith.constant 0 : i32
    %c0_i32_0 = arith.constant 0 : i32
    %c0_i32_1 = arith.constant 0 : i32
    return %c0_i32, %c0_i32_0 : i32, i32
  }
  func.func @transform_12(%arg0: i32, %arg1: memref<2xi32, #tpu.memory_space<smem>>, %arg2: memref<2xi32, #tpu.memory_space<smem>>) -> (i32, i32) {
    %c0_i32 = arith.constant 0 : i32
    %c0_i32_0 = arith.constant 0 : i32
    %c0_i32_1 = arith.constant 0 : i32
    return %c0_i32, %c0_i32_0 : i32, i32
  }
  func.func @transform_13(%arg0: i32, %arg1: memref<2xi32, #tpu.memory_space<smem>>, %arg2: memref<2xi32, #tpu.memory_space<smem>>) -> (i32, i32) {
    %c0_i32 = arith.constant 0 : i32
    %c0_i32_0 = arith.constant 0 : i32
    %c0_i32_1 = arith.constant 0 : i32
    return %c0_i32, %c0_i32_0 : i32, i32
  }
  func.func @transform_14(%arg0: i32, %arg1: memref<2xi32, #tpu.memory_space<smem>>, %arg2: memref<2xi32, #tpu.memory_space<smem>>) -> (i32, i32) {
    %c0_i32 = arith.constant 0 : i32
    %c0_i32_0 = arith.constant 0 : i32
    %c0_i32_1 = arith.constant 0 : i32
    return %c0_i32, %c0_i32_0 : i32, i32
  }
  func.func @transform_15(%arg0: i32, %arg1: memref<2xi32, #tpu.memory_space<smem>>, %arg2: memref<2xi32, #tpu.memory_space<smem>>) -> (i32, i32) {
    %c0_i32 = arith.constant 0 : i32
    %c0_i32_0 = arith.constant 0 : i32
    %c0_i32_1 = arith.constant 0 : i32
    return %c0_i32, %c0_i32_0 : i32, i32
  }
  func.func @transform_16(%arg0: i32, %arg1: memref<2xi32, #tpu.memory_space<smem>>, %arg2: memref<2xi32, #tpu.memory_space<smem>>) -> (i32, i32) {
    %c0_i32 = arith.constant 0 : i32
    %c0_i32_0 = arith.constant 0 : i32
    %c0_i32_1 = arith.constant 0 : i32
    return %c0_i32, %c0_i32_0 : i32, i32
  }
  func.func @transform_17(%arg0: i32, %arg1: memref<2xi32, #tpu.memory_space<smem>>, %arg2: memref<2xi32, #tpu.memory_space<smem>>) -> (i32, i32) {
    %c0_i32 = arith.constant 0 : i32
    %c0_i32_0 = arith.constant 0 : i32
    %c0_i32_1 = arith.constant 0 : i32
    return %c0_i32, %c0_i32_0 : i32, i32
  }
  func.func @transform_18(%arg0: i32, %arg1: memref<2xi32, #tpu.memory_space<smem>>, %arg2: memref<2xi32, #tpu.memory_space<smem>>) -> (i32, i32) {
    %c0_i32 = arith.constant 0 : i32
    %c0_i32_0 = arith.constant 0 : i32
    return %arg0, %c0_i32 : i32, i32
  }
}

</mosaic_0001>

<llo_original>
// kernel: fused_forward.1
$region0: #{fused_forward.1}
  #allocation0 [shape = 'u32[]', space=smem, size = 0x4, offset = 0x4, fixed_abs, tag = 'smem constant byte address 0x4 - core index']
  #allocation1 [shape = 'u32[144,128]{1,0:T(1,128)}', space=vmem, size = 0x12000, scoped, tag = 'internal scratch']
  #allocation2 [shape = 'f32[2,10,144]{2,1,0:T(8,128)}', space=vmem, size = 0x8000, scoped, tag = 'scratch operand']
  #allocation3 [shape = 'f32[2,10,144]{2,1,0:T(8,128)}', space=vmem, size = 0x8000, scoped, tag = 'scratch operand']
  #allocation4 [shape = 's32[1]{0}', space=sflag, size = 0x4, scoped, tag = 'scoped memory for fused_forward.1']
  #allocation5 [shape = 'u8[512]{0}', space=smem, size = 0x200, scoped, tag = 'prefetched SMEM operand 0']
  #allocation6 [shape = 'u8[512]{0}', space=smem, size = 0x200, scoped, tag = 'prefetched SMEM operand 1']
  %s0 = inlined_call_operand.vmem [shape: s32[2], index: 0, kind: input, shape index: {}]
  %s1 = inlined_call_operand.hbm [shape: s32[2], index: 1, kind: input, shape index: {}]
  %s2 = inlined_call_operand.vmem [shape: f32[2,10,48], index: 2, kind: input, shape index: {}]
  %s3 = inlined_call_operand.hbm [shape: f32[2,8,48], index: 3, kind: input, shape index: {}]
  %s4 = inlined_call_operand.hbm [shape: f32[48,48], index: 4, kind: input, shape index: {}]
  %s5 = inlined_call_operand.hbm [shape: f32[1,48], index: 5, kind: input, shape index: {}]
  %s6 = inlined_call_operand.hbm [shape: f32[48,48], index: 6, kind: input, shape index: {}]
  %s7 = inlined_call_operand.hbm [shape: f32[1,48], index: 7, kind: input, shape index: {}]
  %s8 = inlined_call_operand.hbm [shape: f32[48,48], index: 8, kind: input, shape index: {}]
  %s9 = inlined_call_operand.hbm [shape: f32[1,48], index: 9, kind: input, shape index: {}]
  %s10 = inlined_call_operand.hbm [shape: f32[48,48], index: 10, kind: input, shape index: {}]
  %s11 = inlined_call_operand.hbm [shape: f32[1,48], index: 11, kind: input, shape index: {}]
  %s12 = inlined_call_operand.vmem [shape: f32[48,144], index: 12, kind: input, shape index: {}]
  %s13 = inlined_call_operand.hbm [shape: f32[48,144], index: 13, kind: input, shape index: {}]
  %s14 = inlined_call_operand.vmem [shape: f32[1,144], index: 14, kind: input, shape index: {}]
  %s15 = inlined_call_operand.vmem [shape: f32[1,144], index: 15, kind: input, shape index: {}]
  %s16 = inlined_call_operand.hbm [shape: f32[48,144], index: 16, kind: input, shape index: {}]
  %s17 = inlined_call_operand.hbm [shape: f32[48,144], index: 17, kind: input, shape index: {}]
  %s18 = inlined_call_operand.vmem [shape: f32[1,144], index: 18, kind: input, shape index: {}]
  %s19 = inlined_call_operand.vmem [shape: f32[1,144], index: 19, kind: input, shape index: {}]
  %s20 = inlined_call_operand.hbm [shape: f32[2,96], index: 20, kind: output, shape index: {}]
  %s21 = sld [smem:[#allocation0]]
  $region130: #{fused_forward.1} parent=0
    _
  %s23 = ssub.s32 1, %s21
  %s24 = scalar_select 0, %s23, %s21
  %s25 = sshll.u32 %s0, 4
  %s26 = int_to_ptr.vmem [resolvable:$true] %s25
  %28 = dma.vmem_to_smem %s26, 16, [#allocation5], [#allocation4]
  %30 = dma.hbm_to_smem %s1, 16, [#allocation6], [#allocation4]
  %31 = dma.done [#allocation4], 32
  %32 = sfence
  $region1: #{fused_forward.1} parent=0
    #allocation7 [shape = 'u8[8192]{0}', space=vmem, size = 0x2000, scoped, tag = 'input window, operand 3, single buffered']
    #allocation8 [shape = 's32[1]{0}', space=sflag, size = 0x4, scoped, tag = 'scoped memory for fused_forward.1']
    #allocation9 [shape = 's32[1]{0}', space=sflag, size = 0x4, scoped, tag = 'scoped memory for fused_forward.1']
    #allocation10 [shape = 'u8[24576]{0}', space=vmem, size = 0x6000, scoped, tag = 'input window, operand 4, single buffered']
    #allocation11 [shape = 's32[1]{0}', space=sflag, size = 0x4, scoped, tag = 'scoped memory for fused_forward.1']
    #allocation12 [shape = 'u8[512]{0}', space=vmem, size = 0x400, scoped, tag = 'input window, operand 5, single buffered']
    #allocation13 [shape = 'u8[24576]{0}', space=vmem, size = 0x6000, scoped, tag = 'input window, operand 6, single buffered']
    #allocation14 [shape = 's32[1]{0}', space=sflag, size = 0x4, scoped, tag = 'scoped memory for fused_forward.1']
    #allocation15 [shape = 'u8[512]{0}', space=vmem, size = 0x400, scoped, tag = 'input window, operand 7, single buffered']
    #allocation16 [shape = 'u8[24576]{0}', space=vmem, size = 0x6000, scoped, tag = 'input window, operand 8, single buffered']
    #allocation17 [shape = 's32[1]{0}', space=sflag, size = 0x4, scoped, tag = 'scoped memory for fused_forward.1']
    #allocation18 [shape = 'u8[512]{0}', space=vmem, size = 0x400, scoped, tag = 'input window, operand 9, single buffered']
    #allocation19 [shape = 'u8[24576]{0}', space=vmem, size = 0x6000, scoped, tag = 'input window, operand 10, single buffered']
    #allocation20 [shape = 's32[1]{0}', space=sflag, size = 0x4, scoped, tag = 'scoped memory for fused_forward.1']
    #allocation21 [shape = 'u8[512]{0}', space=vmem, size = 0x400, scoped, tag = 'input window, operand 11, single buffered']
    #allocation22 [shape = 'u8[49152]{0}', space=vmem, size = 0xc000, scoped, tag = 'input window, operand 13, single buffered']
    #allocation23 [shape = 's32[1]{0}', space=sflag, size = 0x4, scoped, tag = 'scoped memory for fused_forward.1']
    #allocation24 [shape = 'u8[49152]{0}', space=vmem, size = 0xc000, scoped, tag = 'input window, operand 16, single buffered']
    #allocation25 [shape = 'u8[49152]{0}', space=vmem, size = 0xc000, scoped, tag = 'input window, operand 17, single buffered']
    #allocation26 [shape = 's32[1]{0}', space=sflag, size = 0x4, scoped, tag = 'scoped memory for fused_forward.1']
    #allocation27 [shape = 'u8[1024]{0}', space=vmem, size = 0x400, scoped, tag = 'output window, operand 0, single buffered']
    %33 = vsyncpa [#allocation8], 0
    %34 = vsyncpa [#allocation11], 0
    %35 = vsyncpa [#allocation14], 0
    %36 = vsyncpa [#allocation17], 0
    %37 = vsyncpa [#allocation20], 0
    %38 = vsyncpa [#allocation23], 0
    %39 = vsyncpa [#allocation26], 0
    %40 = vsyncpa [#allocation9], 0
    // Predicated region
    $region2: #{fused_forward.1} parent=1 // pred_check
      _
    $region3: #{fused_forward.1} parent=1 // pred_check_branch
      %42 = sbr.rel (0) target = $region5
    $region4: #{fused_forward.1} parent=1 // pred_region
      _
    $region5: #{fused_forward.1} parent=1 // pred_fallthru
      _
    // Predicated region
    $region6: #{fused_forward.1} parent=1 // pred_check
      _
    $region7: #{fused_forward.1} parent=1 // pred_check_branch
      %44 = sbr.rel (0) target = $region9
    $region8: #{fused_forward.1} parent=1 // pred_region
      %s46 = ssub.s32 256, 256
      %47 = vsyncadd [#allocation8], %s46
      %s48 = sshll.u32 [#allocation7], 4
      %s49 = int_to_ptr.vmem [resolvable:$true] %s48
      %54 = dma.hbm_to_vmem [thread:$0]  %s3, 256, %s49, [#allocation8], 128, 128, 8
    $region9: #{fused_forward.1} parent=1 // pred_fallthru
      _
    // Predicated region
    $region10: #{fused_forward.1} parent=1 // pred_check
      _
    $region11: #{fused_forward.1} parent=1 // pred_check_branch
      %56 = sbr.rel (0) target = $region13
    $region12: #{fused_forward.1} parent=1 // pred_region
      %s58 = ssub.s32 768, 768
      %59 = vsyncadd [#allocation11], %s58
      %s60 = sshll.u32 [#allocation10], 4
      %s61 = int_to_ptr.vmem [resolvable:$true] %s60
      %66 = dma.hbm_to_vmem [thread:$0]  %s4, 768, %s61, [#allocation11], 128, 128, 8
    $region13: #{fused_forward.1} parent=1 // pred_fallthru
      _
    // Predicated region
    $region14: #{fused_forward.1} parent=1 // pred_check
      _
    $region15: #{fused_forward.1} parent=1 // pred_check_branch
      %68 = sbr.rel (0) target = $region17
    $region16: #{fused_forward.1} parent=1 // pred_region
      %s70 = ssub.s32 16, 16
      %71 = vsyncadd [#allocation11], %s70
      %s73 = sshll.u32 [#allocation12], 4
      %s74 = int_to_ptr.vmem [resolvable:$true] %s73
      %76 = dma.hbm_to_vmem [thread:$0]  %s5, 16, %s74, [#allocation11]
    $region17: #{fused_forward.1} parent=1 // pred_fallthru
      _
    // Predicated region
    $region18: #{fused_forward.1} parent=1 // pred_check
      _
    $region19: #{fused_forward.1} parent=1 // pred_check_branch
      %78 = sbr.rel (0) target = $region21
    $region20: #{fused_forward.1} parent=1 // pred_region
      %s80 = ssub.s32 768, 768
      %81 = vsyncadd [#allocation14], %s80
      %s82 = sshll.u32 [#allocation13], 4
      %s83 = int_to_ptr.vmem [resolvable:$true] %s82
      %88 = dma.hbm_to_vmem [thread:$0]  %s6, 768, %s83, [#allocation14], 128, 128, 8
    $region21: #{fused_forward.1} parent=1 // pred_fallthru
      _
    // Predicated region
    $region22: #{fused_forward.1} parent=1 // pred_check
      _
    $region23: #{fused_forward.1} parent=1 // pred_check_branch
      %90 = sbr.rel (0) target = $region25
    $region24: #{fused_forward.1} parent=1 // pred_region
      %s92 = ssub.s32 16, 16
      %93 = vsyncadd [#allocation14], %s92
      %s95 = sshll.u32 [#allocation15], 4
      %s96 = int_to_ptr.vmem [resolvable:$true] %s95
      %98 = dma.hbm_to_vmem [thread:$0]  %s7, 16, %s96, [#allocation14]
    $region25: #{fused_forward.1} parent=1 // pred_fallthru
      _
    // Predicated region
    $region26: #{fused_forward.1} parent=1 // pred_check
      _
    $region27: #{fused_forward.1} parent=1 // pred_check_branch
      %100 = sbr.rel (0) target = $region29
    $region28: #{fused_forward.1} parent=1 // pred_region
      %s102 = ssub.s32 768, 768
      %103 = vsyncadd [#allocation17], %s102
      %s104 = sshll.u32 [#allocation16], 4
      %s105 = int_to_ptr.vmem [resolvable:$true] %s104
      %110 = dma.hbm_to_vmem [thread:$0]  %s8, 768, %s105, [#allocation17], 128, 128, 8
    $region29: #{fused_forward.1} parent=1 // pred_fallthru
      _
    // Predicated region
    $region30: #{fused_forward.1} parent=1 // pred_check
      _
    $region31: #{fused_forward.1} parent=1 // pred_check_branch
      %112 = sbr.rel (0) target = $region33
    $region32: #{fused_forward.1} parent=1 // pred_region
      %s114 = ssub.s32 16, 16
      %115 = vsyncadd [#allocation17], %s114
      %s117 = sshll.u32 [#allocation18], 4
      %s118 = int_to_ptr.vmem [resolvable:$true] %s117
      %120 = dma.hbm_to_vmem [thread:$0]  %s9, 16, %s118, [#allocation17]
    $region33: #{fused_forward.1} parent=1 // pred_fallthru
      _
    // Predicated region
    $region34: #{fused_forward.1} parent=1 // pred_check
      _
    $region35: #{fused_forward.1} parent=1 // pred_check_branch
      %122 = sbr.rel (0) target = $region37
    $region36: #{fused_forward.1} parent=1 // pred_region
      %s124 = ssub.s32 768, 768
      %125 = vsyncadd [#allocation20], %s124
      %s126 = sshll.u32 [#allocation19], 4
      %s127 = int_to_ptr.vmem [resolvable:$true] %s126
      %132 = dma.hbm_to_vmem [thread:$0]  %s10, 768, %s127, [#allocation20], 128, 128, 8
    $region37: #{fused_forward.1} parent=1 // pred_fallthru
      _
    // Predicated region
    $region38: #{fused_forward.1} parent=1 // pred_check
      _
    $region39: #{fused_forward.1} parent=1 // pred_check_branch
      %134 = sbr.rel (0) target = $region41
    $region40: #{fused_forward.1} parent=1 // pred_region
      %s136 = ssub.s32 16, 16
      %137 = vsyncadd [#allocation20], %s136
      %s139 = sshll.u32 [#allocation21], 4
      %s140 = int_to_ptr.vmem [resolvable:$true] %s139
      %142 = dma.hbm_to_vmem [thread:$0]  %s11, 16, %s140, [#allocation20]
    $region41: #{fused_forward.1} parent=1 // pred_fallthru
      _
    // Predicated region
    $region42: #{fused_forward.1} parent=1 // pred_check
      _
    $region43: #{fused_forward.1} parent=1 // pred_check_branch
      %144 = sbr.rel (0) target = $region45
    $region44: #{fused_forward.1} parent=1 // pred_region
      _
    $region45: #{fused_forward.1} parent=1 // pred_fallthru
      _
    // Predicated region
    $region46: #{fused_forward.1} parent=1 // pred_check
      _
    $region47: #{fused_forward.1} parent=1 // pred_check_branch
      %146 = sbr.rel (0) target = $region49
    $region48: #{fused_forward.1} parent=1 // pred_region
      %s148 = ssub.s32 1536, 1536
      %149 = vsyncadd [#allocation23], %s148
      %s150 = sshll.u32 [#allocation22], 4
      %s151 = int_to_ptr.vmem [resolvable:$true] %s150
      %156 = dma.hbm_to_vmem [thread:$0]  %s13, 1536, %s151, [#allocation23], 256, 256, 16
    $region49: #{fused_forward.1} parent=1 // pred_fallthru
      _
    // Predicated region
    $region50: #{fused_forward.1} parent=1 // pred_check
      _
    $region51: #{fused_forward.1} parent=1 // pred_check_branch
      %158 = sbr.rel (0) target = $region53
    $region52: #{fused_forward.1} parent=1 // pred_region
      _
    $region53: #{fused_forward.1} parent=1 // pred_fallthru
      _
    // Predicated region
    $region54: #{fused_forward.1} parent=1 // pred_check
      _
    $region55: #{fused_forward.1} parent=1 // pred_check_branch
      %160 = sbr.rel (0) target = $region57
    $region56: #{fused_forward.1} parent=1 // pred_region
      _
    $region57: #{fused_forward.1} parent=1 // pred_fallthru
      _
    // Predicated region
    $region58: #{fused_forward.1} parent=1 // pred_check
      _
    $region59: #{fused_forward.1} parent=1 // pred_check_branch
      %162 = sbr.rel (0) target = $region61
    $region60: #{fused_forward.1} parent=1 // pred_region
      %s164 = ssub.s32 1536, 1536
      %165 = vsyncadd [#allocation23], %s164
      %s166 = sshll.u32 [#allocation24], 4
      %s167 = int_to_ptr.vmem [resolvable:$true] %s166
      %172 = dma.hbm_to_vmem [thread:$0]  %s16, 1536, %s167, [#allocation23], 256, 256, 16
    $region61: #{fused_forward.1} parent=1 // pred_fallthru
      _
    // Predicated region
    $region62: #{fused_forward.1} parent=1 // pred_check
      _
    $region63: #{fused_forward.1} parent=1 // pred_check_branch
      %174 = sbr.rel (0) target = $region65
    $region64: #{fused_forward.1} parent=1 // pred_region
      %s176 = ssub.s32 1536, 1536
      %177 = vsyncadd [#allocation26], %s176
      %s178 = sshll.u32 [#allocation25], 4
      %s179 = int_to_ptr.vmem [resolvable:$true] %s178
      %184 = dma.hbm_to_vmem [thread:$0]  %s17, 1536, %s179, [#allocation26], 256, 256, 16
    $region65: #{fused_forward.1} parent=1 // pred_fallthru
      _
    // Predicated region
    $region66: #{fused_forward.1} parent=1 // pred_check
      _
    $region67: #{fused_forward.1} parent=1 // pred_check_branch
      %186 = sbr.rel (0) target = $region69
    $region68: #{fused_forward.1} parent=1 // pred_region
      _
    $region69: #{fused_forward.1} parent=1 // pred_fallthru
      _
    // Predicated region
    $region70: #{fused_forward.1} parent=1 // pred_check
      _
    $region71: #{fused_forward.1} parent=1 // pred_check_branch
      %188 = sbr.rel (0) target = $region73
    $region72: #{fused_forward.1} parent=1 // pred_region
      _
    $region73: #{fused_forward.1} parent=1 // pred_fallthru
      _
    // Predicated region
    $region74: #{fused_forward.1} parent=1 // pred_check
      _
    $region75: #{fused_forward.1} parent=1 // pred_check_branch
      %190 = sbr.rel (0) target = $region77
    $region76: #{fused_forward.1} parent=1 // pred_region
      %191 = dma.done [#allocation8], 256
    $region77: #{fused_forward.1} parent=1 // pred_fallthru
      _
    // Predicated region
    $region78: #{fused_forward.1} parent=1 // pred_check
      _
    $region79: #{fused_forward.1} parent=1 // pred_check_branch
      %193 = sbr.rel (0) target = $region81
    $region80: #{fused_forward.1} parent=1 // pred_region
      %194 = dma.done [#allocation11], 768
    $region81: #{fused_forward.1} parent=1 // pred_fallthru
      _
    // Predicated region
    $region82: #{fused_forward.1} parent=1 // pred_check
      _
    $region83: #{fused_forward.1} parent=1 // pred_check_branch
      %196 = sbr.rel (0) target = $region85
    $region84: #{fused_forward.1} parent=1 // pred_region
      %197 = dma.done [#allocation11], 16
    $region85: #{fused_forward.1} parent=1 // pred_fallthru
      _
    // Predicated region
    $region86: #{fused_forward.1} parent=1 // pred_check
      _
    $region87: #{fused_forward.1} parent=1 // pred_check_branch
      %199 = sbr.rel (0) target = $region89
    $region88: #{fused_forward.1} parent=1 // pred_region
      %200 = dma.done [#allocation14], 768
    $region89: #{fused_forward.1} parent=1 // pred_fallthru
      _
    // Predicated region
    $region90: #{fused_forward.1} parent=1 // pred_check
      _
    $region91: #{fused_forward.1} parent=1 // pred_check_branch
      %202 = sbr.rel (0) target = $region93
    $region92: #{fused_forward.1} parent=1 // pred_region
      %203 = dma.done [#allocation14], 16
    $region93: #{fused_forward.1} parent=1 // pred_fallthru
      _
    // Predicated region
    $region94: #{fused_forward.1} parent=1 // pred_check
      _
    $region95: #{fused_forward.1} parent=1 // pred_check_branch
      %205 = sbr.rel (0) target = $region97
    $region96: #{fused_forward.1} parent=1 // pred_region
      %206 = dma.done [#allocation17], 768
    $region97: #{fused_forward.1} parent=1 // pred_fallthru
      _
    // Predicated region
    $region98: #{fused_forward.1} parent=1 // pred_check
      _
    $region99: #{fused_forward.1} parent=1 // pred_check_branch
      %208 = sbr.rel (0) target = $region101
    $region100: #{fused_forward.1} parent=1 // pred_region
      %209 = dma.done [#allocation17], 16
    $region101: #{fused_forward.1} parent=1 // pred_fallthru
      _
    // Predicated region
    $region102: #{fused_forward.1} parent=1 // pred_check
      _
    $region103: #{fused_forward.1} parent=1 // pred_check_branch
      %211 = sbr.rel (0) target = $region105
    $region104: #{fused_forward.1} parent=1 // pred_region
      %212 = dma.done [#allocation20], 768
    $region105: #{fused_forward.1} parent=1 // pred_fallthru
      _
    // Predicated region
    $region106: #{fused_forward.1} parent=1 // pred_check
      _
    $region107: #{fused_forward.1} parent=1 // pred_check_branch
      %214 = sbr.rel (0) target = $region109
    $region108: #{fused_forward.1} parent=1 // pred_region
      %215 = dma.done [#allocation20], 16
    $region109: #{fused_forward.1} parent=1 // pred_fallthru
      _
    // Predicated region
    $region110: #{fused_forward.1} parent=1 // pred_check
      _
    $region111: #{fused_forward.1} parent=1 // pred_check_branch
      %217 = sbr.rel (0) target = $region113
    $region112: #{fused_forward.1} parent=1 // pred_region
      %218 = dma.done [#allocation23], 1536
    $region113: #{fused_forward.1} parent=1 // pred_fallthru
      _
    // Predicated region
    $region114: #{fused_forward.1} parent=1 // pred_check
      _
    $region115: #{fused_forward.1} parent=1 // pred_check_branch
      %220 = sbr.rel (0) target = $region117
    $region116: #{fused_forward.1} parent=1 // pred_region
      %221 = dma.done [#allocation23], 1536
    $region117: #{fused_forward.1} parent=1 // pred_fallthru
      _
    // Predicated region
    $region118: #{fused_forward.1} parent=1 // pred_check
      _
    $region119: #{fused_forward.1} parent=1 // pred_check_branch
      %223 = sbr.rel (0) target = $region121
    $region120: #{fused_forward.1} parent=1 // pred_region
      %224 = dma.done [#allocation26], 1536
    $region121: #{fused_forward.1} parent=1 // pred_fallthru
      _
    %s225 = smul.u32 0, 2
    %v226 = vlaneseq
    %v227 = vshrl.u32 %v226, 7
    %vm228 = vcmp.eq.s32.totalorder %v227, 0
    %s229 = sld [smem:[#allocation5 + %s225]]
    %v230 = vstv %s229
    %v231 = vsel %vm228, %v230, 0
    %s232 = sld [smem:[#allocation6 + %s225]]
    %v233 = vstv %s232
    %v234 = vsel %vm228, %v233, 0
    %vm235 = vcmp.eq.s32.totalorder %v227, 1
    %s236 = sadd.s32 %s225, 1
    %s237 = sld [smem:[#allocation5 + %s236]]
    %v238 = vstv %s237
    %v239 = vsel %vm235, %v238, %v231
    %s240 = sld [smem:[#allocation6 + %s236]]
    %v241 = vstv %s240
    %v242 = vsel %vm235, %v241, %v234
    %v243 = vld [vmem:[%s2] sm:$0xff]
    %v244 = vld [vmem:[%s2 + $0x8] sm:$0x3]
    %v245 = vld [vmem:[%s2 + $0x10] sm:$0xff]
    %v246 = vld [vmem:[%s2 + $0x18] sm:$0x3]
    %v247 = vld [vmem:[#allocation7] sm:$0xff]
    %v248 = vld [vmem:[#allocation7 + $0x8] sm:$0xff]
    %v253 = vcombine.high %v243, %v243
    %v255 = vunpack.c.l.s4 1983009808
    %v256 = vunpack.c.0.s8 %v255
    %v257 = vlaneseq
    %v258 = vshrl.u32 %v257, 7
    %v259 = vsub.s32 %v256, %v258
    %v260 = vrot.slane %v243, %v259
    %v262 = vunpack.c.l.s4 1983009808
    %v263 = vunpack.c.0.s8 %v262
    %v264 = vlaneseq
    %v265 = vshrl.u32 %v264, 7
    %v266 = vsub.s32 %v263, %v265
    %v267 = vrot.slane %v253, %v266
    %v268 = vcombine.high %v260, %v260
    %v269 = vcombine.high %v267, %v267
    %v271 = vunpack.c.l.s4 1983009808
    %v272 = vunpack.c.0.s8 %v271
    %v273 = vlaneseq
    %v274 = vshrl.u32 %v273, 7
    %v275 = vsub.s32 %v272, %v274
    %v276 = vrot.slane %v244, %v275
    %v277 = vcombine.high %v245, %v245
    %v279 = vunpack.c.l.s4 1983009808
    %v280 = vunpack.c.0.s8 %v279
    %v281 = vlaneseq
    %v282 = vshrl.u32 %v281, 7
    %v283 = vsub.s32 %v280, %v282
    %v284 = vrot.slane %v245, %v283
    %v286 = vunpack.c.l.s4 1983009808
    %v287 = vunpack.c.0.s8 %v286
    %v288 = vlaneseq
    %v289 = vshrl.u32 %v288, 7
    %v290 = vsub.s32 %v287, %v289
    %v291 = vrot.slane %v277, %v290
    %v292 = vcombine.high %v284, %v284
    %v293 = vcombine.high %v291, %v291
    %v295 = vunpack.c.l.s4 1983009808
    %v296 = vunpack.c.0.s8 %v295
    %v297 = vlaneseq
    %v298 = vshrl.u32 %v297, 7
    %v299 = vsub.s32 %v296, %v298
    %v300 = vrot.slane %v246, %v299
    %v301 = vld [vmem:[#allocation10] sm:$0xff]
    %v302 = vld [vmem:[#allocation10 + $0x8] sm:$0xff]
    %v303 = vld [vmem:[#allocation10 + $0x10] sm:$0xff]
    %v304 = vld [vmem:[#allocation10 + $0x18] sm:$0xff]
    %v305 = vld [vmem:[#allocation10 + $0x20] sm:$0xff]
    %v306 = vld [vmem:[#allocation10 + $0x28] sm:$0xff]
    %v307 = vld [vmem:[#allocation12] sm:$0x1]
    %v309 = vlaneseq
    %v310 = vshrl.u32 %v309, 7
    %v311 = vsub.s32 0, %v310
    %v312 = vrot.slane %v307, %v311
    %v314 = vcombine.low %v260, %v268
    %v315 = vcombine.low %v267, %v269
    %v317 = vunpack.c.l.s4 1983009808
    %v318 = vunpack.c.0.s8 %v317
    %v319 = vlaneseq
    %v320 = vshrl.u32 %v319, 7
    %v321 = vsub.s32 %v318, %v320
    %v322 = vrot.slane %v314, %v321
    %v324 = vunpack.c.l.s4 1983009808
    %v325 = vunpack.c.0.s8 %v324
    %v326 = vlaneseq
    %v327 = vshrl.u32 %v326, 7
    %v328 = vsub.s32 %v325, %v327
    %v329 = vrot.slane %v315, %v328
    %v330 = vcombine.low %v322, %v329
    %v331 = vcombine.low %v276, %v284
    %v332 = vcombine.low %v292, %v291
    %v334 = vunpack.c.l.s4 1983009808
    %v335 = vunpack.c.0.s8 %v334
    %v336 = vlaneseq
    %v337 = vshrl.u32 %v336, 7
    %v338 = vsub.s32 %v335, %v337
    %v339 = vrot.slane %v331, %v338
    %v341 = vunpack.c.l.s4 1983009808
    %v342 = vunpack.c.0.s8 %v341
    %v343 = vlaneseq
    %v344 = vshrl.u32 %v343, 7
    %v345 = vsub.s32 %v342, %v344
    %v346 = vrot.slane %v332, %v345
    %v347 = vcombine.low %v339, %v346
    %v348 = vcombine.low %v293, %v300
    %v350 = vunpack.c.l.s4 1983009808
    %v351 = vunpack.c.0.s8 %v350
    %v352 = vlaneseq
    %v353 = vshrl.u32 %v352, 7
    %v354 = vsub.s32 %v351, %v353
    %v355 = vrot.slane %v348, %v354
    %vm356 = vcmask 392192
    %v357 = vsel %vm356, %v330, 0
    %v359 = vsel %vm356, %v347, 0
    %v361 = vsel %vm356, %v355, 0
    %363 = vmatprep.subr.mxu0 0.0
    %364 = vmatpush1.msra.mxu0 %v301
    %365 = vmatprep.subr.mxu0 0.0
    %366 = vmatpush1.msra.mxu0 %v302
    %367 = vmatprep.subr.mxu0 0.0
    %368 = vmatpush1.msra.mxu0 %v303
    %369 = vmatprep.subr.mxu0 0.0
    %370 = vmatpush1.msra.mxu0 %v304
    %371 = vmatprep.subr.mxu0 0.0
    %372 = vmatpush1.msra.mxu0 %v305
    %373 = vmatprep.subr.mxu0 0.0
    %374 = vmatpush1.msra.mxu0 %v306
    %375 = vmatprep.subr.mxu0 0.0
    %376 = vmatpush1.msra.mxu0 0.0
    %377 = vmatprep.subr.mxu0 0.0
    %378 = vmatpush1.msra.mxu0 0.0
    %379 = vmatprep.subr.mxu0 0.0
    %380 = vmatpush1.msra.mxu0 0.0
    %381 = vmatprep.subr.mxu0 0.0
    %382 = vmatpush1.msra.mxu0 0.0
    %383 = vmatprep.subr.mxu0 0.0
    %384 = vmatpush1.msra.mxu0 0.0
    %385 = vmatprep.subr.mxu0 0.0
    %386 = vmatpush1.msra.mxu0 0.0
    %387 = vmatprep.subr.mxu0 0.0
    %388 = vmatpush1.msra.mxu0 0.0
    %389 = vmatprep.subr.mxu0 0.0
    %390 = vmatpush1.msra.mxu0 0.0
    %391 = vmatprep.subr.mxu0 0.0
    %392 = vmatpush1.msra.mxu0 0.0
    %393 = vmatprep.subr.mxu0 0.0
    %394 = vmatpush1.msra.mxu0 0.0
    %395 = vmatprep.subr.mxu0 0.0
    %396 = vmatpush1.msra.mxu0 0.0
    %397 = vmatprep.subr.mxu0 0.0
    %398 = vmatpush1.msra.mxu0 0.0
    %399 = vmatprep.subr.mxu0 0.0
    %400 = vmatpush1.msra.mxu0 0.0
    %401 = vmatprep.subr.mxu0 0.0
    %402 = vmatpush1.msra.mxu0 0.0
    %403 = vmatprep.subr.mxu0 0.0
    %404 = vmatpush1.msra.mxu0 0.0
    %405 = vmatprep.subr.mxu0 0.0
    %406 = vmatpush1.msra.mxu0 0.0
    %407 = vmatprep.subr.mxu0 0.0
    %408 = vmatpush1.msra.mxu0 0.0
    %409 = vmatprep.subr.mxu0 0.0
    %410 = vmatpush1.msra.mxu0 0.0
    %411 = vmatprep.subr.mxu0 0.0
    %412 = vmatpush1.msra.mxu0 0.0
    %413 = vmatprep.subr.mxu0 0.0
    %414 = vmatpush1.msra.mxu0 0.0
    %415 = vmatprep.subr.mxu0 0.0
    %416 = vmatpush1.msra.mxu0 0.0
    %417 = vmatprep.subr.mxu0 0.0
    %418 = vmatpush1.msra.mxu0 0.0
    %419 = vmatprep.subr.mxu0 0.0
    %420 = vmatpush1.msra.mxu0 0.0
    %421 = vmatprep.subr.mxu0 0.0
    %422 = vmatpush1.msra.mxu0 0.0
    %423 = vmatprep.subr.mxu0 0.0
    %424 = vmatpush1.msra.mxu0 0.0
    %425 = vmatprep.subr.mxu0 0.0
    %426 = vmatpush1.msra.mxu0 0.0
    %427 = vmatprep.mubr.f32.mxu0 0.0
    %428 = vmatmul.mubr.f32.gmra.mrb[0].mxu0 %v357
    %v429 = vpop.f32.mrb[0].mxu0
    %v430 = vadd.f32 %v312, %v429
    %v431 = vpop.f32.mrb[0].mxu0
    %432 = vmatprep.mubr.f32.mxu0 0.0
    %433 = vmatmul.mubr.f32.gmra.mrb[0].mxu0 %v359
    %v434 = vpop.f32.mrb[0].mxu0
    %v435 = vadd.f32 %v312, %v434
    %v436 = vpop.f32.mrb[0].mxu0
    %437 = vmatprep.mubr.f32.mxu0 0.0
    %438 = vmatmul.mubr.f32.gmra.mrb[0].mxu0 %v361
    %v439 = vpop.f32.mrb[0].mxu0
    %v440 = vadd.f32 %v312, %v439
    %v441 = vpop.f32.mrb[0].mxu0
    %442 = vdwg.mxu0
    %v446 = vcombine.high %v430, %v430
    %v448 = vunpack.c.l.s4 1983009808
    %v449 = vunpack.c.0.s8 %v448
    %v450 = vlaneseq
    %v451 = vshrl.u32 %v450, 7
    %v452 = vsub.s32 %v449, %v451
    %v453 = vrot.slane %v430, %v452
    %v455 = vunpack.c.l.s4 1983009808
    %v456 = vunpack.c.0.s8 %v455
    %v457 = vlaneseq
    %v458 = vshrl.u32 %v457, 7
    %v459 = vsub.s32 %v456, %v458
    %v460 = vrot.slane %v446, %v459
    %v461 = vcombine.high %v453, %v453
    %v462 = vcombine.high %v460, %v460
    %v463 = vcombine.high %v435, %v435
    %v465 = vunpack.c.l.s4 1983009808
    %v466 = vunpack.c.0.s8 %v465
    %v467 = vlaneseq
    %v468 = vshrl.u32 %v467, 7
    %v469 = vsub.s32 %v466, %v468
    %v470 = vrot.slane %v435, %v469
    %v472 = vunpack.c.l.s4 1983009808
    %v473 = vunpack.c.0.s8 %v472
    %v474 = vlaneseq
    %v475 = vshrl.u32 %v474, 7
    %v476 = vsub.s32 %v473, %v475
    %v477 = vrot.slane %v463, %v476
    %v478 = vcombine.high %v470, %v470
    %v479 = vcombine.high %v477, %v477
    %v481 = vunpack.c.l.s4 1983009808
    %v482 = vunpack.c.0.s8 %v481
    %v483 = vlaneseq
    %v484 = vshrl.u32 %v483, 7
    %v485 = vsub.s32 %v482, %v484
    %v486 = vrot.slane %v440, %v485
    %v487 = vcombine.high %v486, %v486
    %v498 = vld [vmem:[#allocation13] sm:$0xff]
    %v499 = vld [vmem:[#allocation13 + $0x8] sm:$0xff]
    %v500 = vld [vmem:[#allocation13 + $0x10] sm:$0xff]
    %v501 = vld [vmem:[#allocation13 + $0x18] sm:$0xff]
    %v502 = vld [vmem:[#allocation13 + $0x20] sm:$0xff]
    %v503 = vld [vmem:[#allocation13 + $0x28] sm:$0xff]
    %v504 = vld [vmem:[#allocation15] sm:$0x1]
    %v506 = vlaneseq
    %v507 = vshrl.u32 %v506, 7
    %v508 = vsub.s32 0, %v507
    %v509 = vrot.slane %v504, %v508
    %v512 = vsel %vm356, %v247, 0
    %v515 = vsel %vm356, %v248, 0
    %517 = vmatprep.subr.mxu0 0.0
    %518 = vmatpush1.msra.mxu0 %v498
    %519 = vmatprep.subr.mxu0 0.0
    %520 = vmatpush1.msra.mxu0 %v499
    %521 = vmatprep.subr.mxu0 0.0
    %522 = vmatpush1.msra.mxu0 %v500
    %523 = vmatprep.subr.mxu0 0.0
    %524 = vmatpush1.msra.mxu0 %v501
    %525 = vmatprep.subr.mxu0 0.0
    %526 = vmatpush1.msra.mxu0 %v502
    %527 = vmatprep.subr.mxu0 0.0
    %528 = vmatpush1.msra.mxu0 %v503
    %529 = vmatprep.subr.mxu0 0.0
    %530 = vmatpush1.msra.mxu0 0.0
    %531 = vmatprep.subr.mxu0 0.0
    %532 = vmatpush1.msra.mxu0 0.0
    %533 = vmatprep.subr.mxu0 0.0
    %534 = vmatpush1.msra.mxu0 0.0
    %535 = vmatprep.subr.mxu0 0.0
    %536 = vmatpush1.msra.mxu0 0.0
    %537 = vmatprep.subr.mxu0 0.0
    %538 = vmatpush1.msra.mxu0 0.0
    %539 = vmatprep.subr.mxu0 0.0
    %540 = vmatpush1.msra.mxu0 0.0
    %541 = vmatprep.subr.mxu0 0.0
    %542 = vmatpush1.msra.mxu0 0.0
    %543 = vmatprep.subr.mxu0 0.0
    %544 = vmatpush1.msra.mxu0 0.0
    %545 = vmatprep.subr.mxu0 0.0
    %546 = vmatpush1.msra.mxu0 0.0
    %547 = vmatprep.subr.mxu0 0.0
    %548 = vmatpush1.msra.mxu0 0.0
    %549 = vmatprep.subr.mxu0 0.0
    %550 = vmatpush1.msra.mxu0 0.0
    %551 = vmatprep.subr.mxu0 0.0
    %552 = vmatpush1.msra.mxu0 0.0
    %553 = vmatprep.subr.mxu0 0.0
    %554 = vmatpush1.msra.mxu0 0.0
    %555 = vmatprep.subr.mxu0 0.0
    %556 = vmatpush1.msra.mxu0 0.0
    %557 = vmatprep.subr.mxu0 0.0
    %558 = vmatpush1.msra.mxu0 0.0
    %559 = vmatprep.subr.mxu0 0.0
    %560 = vmatpush1.msra.mxu0 0.0
    %561 = vmatprep.subr.mxu0 0.0
    %562 = vmatpush1.msra.mxu0 0.0
    %563 = vmatprep.subr.mxu0 0.0
    %564 = vmatpush1.msra.mxu0 0.0
    %565 = vmatprep.subr.mxu0 0.0
    %566 = vmatpush1.msra.mxu0 0.0
    %567 = vmatprep.subr.mxu0 0.0
    %568 = vmatpush1.msra.mxu0 0.0
    %569 = vmatprep.subr.mxu0 0.0
    %570 = vmatpush1.msra.mxu0 0.0
    %571 = vmatprep.subr.mxu0 0.0
    %572 = vmatpush1.msra.mxu0 0.0
    %573 = vmatprep.subr.mxu0 0.0
    %574 = vmatpush1.msra.mxu0 0.0
    %575 = vmatprep.subr.mxu0 0.0
    %576 = vmatpush1.msra.mxu0 0.0
    %577 = vmatprep.subr.mxu0 0.0
    %578 = vmatpush1.msra.mxu0 0.0
    %579 = vmatprep.subr.mxu0 0.0
    %580 = vmatpush1.msra.mxu0 0.0
    %581 = vmatprep.mubr.f32.mxu0 0.0
    %582 = vmatmul.mubr.f32.gmra.mrb[0].mxu0 %v512
    %v583 = vpop.f32.mrb[0].mxu0
    %v584 = vadd.f32 %v509, %v583
    %v585 = vpop.f32.mrb[0].mxu0
    %586 = vmatprep.mubr.f32.mxu0 0.0
    %587 = vmatmul.mubr.f32.gmra.mrb[0].mxu0 %v515
    %v588 = vpop.f32.mrb[0].mxu0
    %v589 = vadd.f32 %v509, %v588
    %v590 = vpop.f32.mrb[0].mxu0
    %591 = vdwg.mxu0
    %v592 = vld [vmem:[#allocation16] sm:$0xff]
    %v593 = vld [vmem:[#allocation16 + $0x8] sm:$0xff]
    %v594 = vld [vmem:[#allocation16 + $0x10] sm:$0xff]
    %v595 = vld [vmem:[#allocation16 + $0x18] sm:$0xff]
    %v596 = vld [vmem:[#allocation16 + $0x20] sm:$0xff]
    %v597 = vld [vmem:[#allocation16 + $0x28] sm:$0xff]
    %v598 = vld [vmem:[#allocation18] sm:$0x1]
    %v600 = vlaneseq
    %v601 = vshrl.u32 %v600, 7
    %v602 = vsub.s32 0, %v601
    %v603 = vrot.slane %v598, %v602
    %605 = vmatprep.subr.mxu0 0.0
    %606 = vmatpush1.msra.mxu0 %v592
    %607 = vmatprep.subr.mxu0 0.0
    %608 = vmatpush1.msra.mxu0 %v593
    %609 = vmatprep.subr.mxu0 0.0
    %610 = vmatpush1.msra.mxu0 %v594
    %611 = vmatprep.subr.mxu0 0.0
    %612 = vmatpush1.msra.mxu0 %v595
    %613 = vmatprep.subr.mxu0 0.0
    %614 = vmatpush1.msra.mxu0 %v596
    %615 = vmatprep.subr.mxu0 0.0
    %616 = vmatpush1.msra.mxu0 %v597
    %617 = vmatprep.subr.mxu0 0.0
    %618 = vmatpush1.msra.mxu0 0.0
    %619 = vmatprep.subr.mxu0 0.0
    %620 = vmatpush1.msra.mxu0 0.0
    %621 = vmatprep.subr.mxu0 0.0
    %622 = vmatpush1.msra.mxu0 0.0
    %623 = vmatprep.subr.mxu0 0.0
    %624 = vmatpush1.msra.mxu0 0.0
    %625 = vmatprep.subr.mxu0 0.0
    %626 = vmatpush1.msra.mxu0 0.0
    %627 = vmatprep.subr.mxu0 0.0
    %628 = vmatpush1.msra.mxu0 0.0
    %629 = vmatprep.subr.mxu0 0.0
    %630 = vmatpush1.msra.mxu0 0.0
    %631 = vmatprep.subr.mxu0 0.0
    %632 = vmatpush1.msra.mxu0 0.0
    %633 = vmatprep.subr.mxu0 0.0
    %634 = vmatpush1.msra.mxu0 0.0
    %635 = vmatprep.subr.mxu0 0.0
    %636 = vmatpush1.msra.mxu0 0.0
    %637 = vmatprep.subr.mxu0 0.0
    %638 = vmatpush1.msra.mxu0 0.0
    %639 = vmatprep.subr.mxu0 0.0
    %640 = vmatpush1.msra.mxu0 0.0
    %641 = vmatprep.subr.mxu0 0.0
    %642 = vmatpush1.msra.mxu0 0.0
    %643 = vmatprep.subr.mxu0 0.0
    %644 = vmatpush1.msra.mxu0 0.0
    %645 = vmatprep.subr.mxu0 0.0
    %646 = vmatpush1.msra.mxu0 0.0
    %647 = vmatprep.subr.mxu0 0.0
    %648 = vmatpush1.msra.mxu0 0.0
    %649 = vmatprep.subr.mxu0 0.0
    %650 = vmatpush1.msra.mxu0 0.0
    %651 = vmatprep.subr.mxu0 0.0
    %652 = vmatpush1.msra.mxu0 0.0
    %653 = vmatprep.subr.mxu0 0.0
    %654 = vmatpush1.msra.mxu0 0.0
    %655 = vmatprep.subr.mxu0 0.0
    %656 = vmatpush1.msra.mxu0 0.0
    %657 = vmatprep.subr.mxu0 0.0
    %658 = vmatpush1.msra.mxu0 0.0
    %659 = vmatprep.subr.mxu0 0.0
    %660 = vmatpush1.msra.mxu0 0.0
    %661 = vmatprep.subr.mxu0 0.0
    %662 = vmatpush1.msra.mxu0 0.0
    %663 = vmatprep.subr.mxu0 0.0
    %664 = vmatpush1.msra.mxu0 0.0
    %665 = vmatprep.subr.mxu0 0.0
    %666 = vmatpush1.msra.mxu0 0.0
    %667 = vmatprep.subr.mxu0 0.0
    %668 = vmatpush1.msra.mxu0 0.0
    %669 = vmatprep.mubr.f32.mxu0 0.0
    %670 = vmatmul.mubr.f32.gmra.mrb[0].mxu0 %v512
    %v671 = vpop.f32.mrb[0].mxu0
    %v672 = vadd.f32 %v603, %v671
    %v673 = vpop.f32.mrb[0].mxu0
    %674 = vmatprep.mubr.f32.mxu0 0.0
    %675 = vmatmul.mubr.f32.gmra.mrb[0].mxu0 %v515
    %v676 = vpop.f32.mrb[0].mxu0
    %v677 = vadd.f32 %v603, %v676
    %v678 = vpop.f32.mrb[0].mxu0
    %679 = vdwg.mxu0
    %v680 = vadd.s32 %v227, 8
    %v681 = vlaneseq
    %v682 = vand.u32 %v681, 127
    %v683 = vlaneseq
    %v684 = vshrl.u32 %v683, 7
    %v685 = vsub.s32 0, %v684
    %v686 = vrot.slane %v239, %v685
    %v687 = vlaneseq
    %v688 = vshrl.u32 %v687, 7
    %v689 = vsub.s32 1, %v688
    %v690 = vrot.slane %v239, %v689
    %vm691 = vcmp.ge.s32.totalorder %v227, %v686
    %vm692 = vcmp.ge.s32.totalorder %v680, %v686
    %vm693 = vcmp.ge.s32.totalorder %v227, %v690
    %vm694 = vcmp.ge.s32.totalorder %v680, %v690
    %v695 = vlaneseq
    %v696 = vshrl.u32 %v695, 7
    %v697 = vsub.s32 0, %v696
    %v698 = vrot.slane %v242, %v697
    %v699 = vlaneseq
    %v700 = vshrl.u32 %v699, 7
    %v701 = vsub.s32 1, %v700
    %v702 = vrot.slane %v242, %v701
    %vm703 = vcmp.ge.s32.totalorder %v682, %v698
    %vm704 = vcmp.ge.s32.totalorder %v682, %v702
    %vm705 = vmor %vm691, %vm703
    %vm706 = vmor %vm692, %vm703
    %vm707 = vmor %vm693, %vm704
    %vm708 = vmor %vm694, %vm704
    %vm709 = vcmp.ge.s32.totalorder %v682, 0
    %vm710 = vcmp.lt.s32.totalorder %v682, 8
    %vm711 = vmand %vm709, %vm710
    %v712 = vsel %vm711, 1, 0
    %v713 = vcvt.s32.f32 %v712
    %v715 = vcombine.high %v713, %v713
    %v717 = vunpack.c.l.s4 1983009808
    %v718 = vunpack.c.0.s8 %v717
    %v719 = vlaneseq
    %v720 = vshrl.u32 %v719, 7
    %v721 = vsub.s32 %v718, %v720
    %v722 = vrot.slane %v713, %v721
    %v724 = vunpack.c.l.s4 1983009808
    %v725 = vunpack.c.0.s8 %v724
    %v726 = vlaneseq
    %v727 = vshrl.u32 %v726, 7
    %v728 = vsub.s32 %v725, %v727
    %v729 = vrot.slane %v715, %v728
    %v730 = vcombine.high %v722, %v722
    %v731 = vcombine.high %v729, %v729
    %v736 = vmul.f32 %v453, %v722
    %v737 = vmul.f32 %v461, %v730
    %v738 = vmul.f32 %v460, %v729
    %v739 = vmul.f32 %v462, %v731
    %v740 = vmul.f32 %v470, %v722
    %v741 = vmul.f32 %v478, %v722
    %v742 = vmul.f32 %v477, %v730
    %v743 = vmul.f32 %v479, %v729
    %v744 = vmul.f32 %v486, %v731
    %v745 = vmul.f32 %v487, %v722
    %v751 = vcombine.low %v736, %v737
    %v752 = vcombine.low %v738, %v739
    %v754 = vunpack.c.l.s4 1983009808
    %v755 = vunpack.c.0.s8 %v754
    %v756 = vlaneseq
    %v757 = vshrl.u32 %v756, 7
    %v758 = vsub.s32 %v755, %v757
    %v759 = vrot.slane %v751, %v758
    %v761 = vunpack.c.l.s4 1983009808
    %v762 = vunpack.c.0.s8 %v761
    %v763 = vlaneseq
    %v764 = vshrl.u32 %v763, 7
    %v765 = vsub.s32 %v762, %v764
    %v766 = vrot.slane %v752, %v765
    %v767 = vcombine.low %v759, %v766
    %v769 = vunpack.c.l.s4 1983009808
    %v770 = vunpack.c.0.s8 %v769
    %v771 = vlaneseq
    %v772 = vshrl.u32 %v771, 7
    %v773 = vsub.s32 %v770, %v772
    %v774 = vrot.slane %v740, %v773
    %v775 = vsel %vm356, %v767, 0
    %v777 = vsel %vm356, %v774, 0
    %v780 = vsel %vm356, %v584, 0
    %782 = vmatprep.subr.mxu0 0.0
    %783 = vmatpush1.xpose.msra.mxu0 %v780
    %784 = vmatprep.subr.mxu0 0.0
    %785 = vmatpush1.xpose.msra.mxu0 0.0
    %786 = vmatprep.subr.mxu0 0.0
    %787 = vmatpush1.xpose.msra.mxu0 0.0
    %788 = vmatprep.subr.mxu0 0.0
    %789 = vmatpush1.xpose.msra.mxu0 0.0
    %790 = vmatprep.subr.mxu0 0.0
    %791 = vmatpush1.xpose.msra.mxu0 0.0
    %792 = vmatprep.subr.mxu0 0.0
    %793 = vmatpush1.xpose.msra.mxu0 0.0
    %794 = vmatprep.subr.mxu0 0.0
    %795 = vmatpush1.xpose.msra.mxu0 0.0
    %796 = vmatprep.subr.mxu0 0.0
    %797 = vmatpush1.xpose.msra.mxu0 0.0
    %798 = vmatprep.subr.mxu0 0.0
    %799 = vmatpush1.xpose.msra.mxu0 0.0
    %800 = vmatprep.subr.mxu0 0.0
    %801 = vmatpush1.xpose.msra.mxu0 0.0
    %802 = vmatprep.subr.mxu0 0.0
    %803 = vmatpush1.xpose.msra.mxu0 0.0
    %804 = vmatprep.subr.mxu0 0.0
    %805 = vmatpush1.xpose.msra.mxu0 0.0
    %806 = vmatprep.subr.mxu0 0.0
    %807 = vmatpush1.xpose.msra.mxu0 0.0
    %808 = vmatprep.subr.mxu0 0.0
    %809 = vmatpush1.xpose.msra.mxu0 0.0
    %810 = vmatprep.subr.mxu0 0.0
    %811 = vmatpush1.xpose.msra.mxu0 0.0
    %812 = vmatprep.subr.mxu0 0.0
    %813 = vmatpush1.xpose.msra.mxu0 0.0
    %814 = vmatprep.subr.mxu0 0.0
    %815 = vmatpush1.xpose.msra.mxu0 0.0
    %816 = vmatprep.subr.mxu0 0.0
    %817 = vmatpush1.xpose.msra.mxu0 0.0
    %818 = vmatprep.subr.mxu0 0.0
    %819 = vmatpush1.xpose.msra.mxu0 0.0
    %820 = vmatprep.subr.mxu0 0.0
    %821 = vmatpush1.xpose.msra.mxu0 0.0
    %822 = vmatprep.subr.mxu0 0.0
    %823 = vmatpush1.xpose.msra.mxu0 0.0
    %824 = vmatprep.subr.mxu0 0.0
    %825 = vmatpush1.xpose.msra.mxu0 0.0
    %826 = vmatprep.subr.mxu0 0.0
    %827 = vmatpush1.xpose.msra.mxu0 0.0
    %828 = vmatprep.subr.mxu0 0.0
    %829 = vmatpush1.xpose.msra.mxu0 0.0
    %830 = vmatprep.subr.mxu0 0.0
    %831 = vmatpush1.xpose.msra.mxu0 0.0
    %832 = vmatprep.subr.mxu0 0.0
    %833 = vmatpush1.xpose.msra.mxu0 0.0
    %834 = vmatprep.subr.mxu0 0.0
    %835 = vmatpush1.xpose.msra.mxu0 0.0
    %836 = vmatprep.subr.mxu0 0.0
    %837 = vmatpush1.xpose.msra.mxu0 0.0
    %838 = vmatprep.subr.mxu0 0.0
    %839 = vmatpush1.xpose.msra.mxu0 0.0
    %840 = vmatprep.subr.mxu0 0.0
    %841 = vmatpush1.xpose.msra.mxu0 0.0
    %842 = vmatprep.subr.mxu0 0.0
    %843 = vmatpush1.xpose.msra.mxu0 0.0
    %844 = vmatprep.subr.mxu0 0.0
    %845 = vmatpush1.xpose.msra.mxu0 0.0
    %846 = vmatprep.mubr.f32.mxu0 0.0
    %847 = vmatmul.mubr.f32.gmra.mrb[0].mxu0 %v775
    %v848 = vpop.f32.mrb[0].mxu0
    %v849 = vadd.f32 0.0, %v848
    %v850 = vpop.f32.mrb[0].mxu0
    %851 = vmatprep.mubr.f32.mxu0 0.0
    %852 = vmatmul.mubr.f32.gmra.mrb[0].mxu0 %v777
    %v853 = vpop.f32.mrb[0].mxu0
    %v854 = vadd.f32 0.0, %v853
    %v855 = vpop.f32.mrb[0].mxu0
    %856 = vdwg.mxu0
    %v862 = vcombine.low %v741, %v742
    %v863 = vcombine.low %v743, %v744
    %v865 = vunpack.c.l.s4 1983009808
    %v866 = vunpack.c.0.s8 %v865
    %v867 = vlaneseq
    %v868 = vshrl.u32 %v867, 7
    %v869 = vsub.s32 %v866, %v868
    %v870 = vrot.slane %v862, %v869
    %v872 = vunpack.c.l.s4 1983009808
    %v873 = vunpack.c.0.s8 %v872
    %v874 = vlaneseq
    %v875 = vshrl.u32 %v874, 7
    %v876 = vsub.s32 %v873, %v875
    %v877 = vrot.slane %v863, %v876
    %v878 = vcombine.low %v870, %v877
    %v880 = vunpack.c.l.s4 1983009808
    %v881 = vunpack.c.0.s8 %v880
    %v882 = vlaneseq
    %v883 = vshrl.u32 %v882, 7
    %v884 = vsub.s32 %v881, %v883
    %v885 = vrot.slane %v745, %v884
    %v886 = vsel %vm356, %v878, 0
    %v888 = vsel %vm356, %v885, 0
    %v891 = vsel %vm356, %v589, 0
    %893 = vmatprep.subr.mxu0 0.0
    %894 = vmatpush1.xpose.msra.mxu0 %v891
    %895 = vmatprep.subr.mxu0 0.0
    %896 = vmatpush1.xpose.msra.mxu0 0.0
    %897 = vmatprep.subr.mxu0 0.0
    %898 = vmatpush1.xpose.msra.mxu0 0.0
    %899 = vmatprep.subr.mxu0 0.0
    %900 = vmatpush1.xpose.msra.mxu0 0.0
    %901 = vmatprep.subr.mxu0 0.0
    %902 = vmatpush1.xpose.msra.mxu0 0.0
    %903 = vmatprep.subr.mxu0 0.0
    %904 = vmatpush1.xpose.msra.mxu0 0.0
    %905 = vmatprep.subr.mxu0 0.0
    %906 = vmatpush1.xpose.msra.mxu0 0.0
    %907 = vmatprep.subr.mxu0 0.0
    %908 = vmatpush1.xpose.msra.mxu0 0.0
    %909 = vmatprep.subr.mxu0 0.0
    %910 = vmatpush1.xpose.msra.mxu0 0.0
    %911 = vmatprep.subr.mxu0 0.0
    %912 = vmatpush1.xpose.msra.mxu0 0.0
    %913 = vmatprep.subr.mxu0 0.0
    %914 = vmatpush1.xpose.msra.mxu0 0.0
    %915 = vmatprep.subr.mxu0 0.0
    %916 = vmatpush1.xpose.msra.mxu0 0.0
    %917 = vmatprep.subr.mxu0 0.0
    %918 = vmatpush1.xpose.msra.mxu0 0.0
    %919 = vmatprep.subr.mxu0 0.0
    %920 = vmatpush1.xpose.msra.mxu0 0.0
    %921 = vmatprep.subr.mxu0 0.0
    %922 = vmatpush1.xpose.msra.mxu0 0.0
    %923 = vmatprep.subr.mxu0 0.0
    %924 = vmatpush1.xpose.msra.mxu0 0.0
    %925 = vmatprep.subr.mxu0 0.0
    %926 = vmatpush1.xpose.msra.mxu0 0.0
    %927 = vmatprep.subr.mxu0 0.0
    %928 = vmatpush1.xpose.msra.mxu0 0.0
    %929 = vmatprep.subr.mxu0 0.0
    %930 = vmatpush1.xpose.msra.mxu0 0.0
    %931 = vmatprep.subr.mxu0 0.0
    %932 = vmatpush1.xpose.msra.mxu0 0.0
    %933 = vmatprep.subr.mxu0 0.0
    %934 = vmatpush1.xpose.msra.mxu0 0.0
    %935 = vmatprep.subr.mxu0 0.0
    %936 = vmatpush1.xpose.msra.mxu0 0.0
    %937 = vmatprep.subr.mxu0 0.0
    %938 = vmatpush1.xpose.msra.mxu0 0.0
    %939 = vmatprep.subr.mxu0 0.0
    %940 = vmatpush1.xpose.msra.mxu0 0.0
    %941 = vmatprep.subr.mxu0 0.0
    %942 = vmatpush1.xpose.msra.mxu0 0.0
    %943 = vmatprep.subr.mxu0 0.0
    %944 = vmatpush1.xpose.msra.mxu0 0.0
    %945 = vmatprep.subr.mxu0 0.0
    %946 = vmatpush1.xpose.msra.mxu0 0.0
    %947 = vmatprep.subr.mxu0 0.0
    %948 = vmatpush1.xpose.msra.mxu0 0.0
    %949 = vmatprep.subr.mxu0 0.0
    %950 = vmatpush1.xpose.msra.mxu0 0.0
    %951 = vmatprep.subr.mxu0 0.0
    %952 = vmatpush1.xpose.msra.mxu0 0.0
    %953 = vmatprep.subr.mxu0 0.0
    %954 = vmatpush1.xpose.msra.mxu0 0.0
    %955 = vmatprep.subr.mxu0 0.0
    %956 = vmatpush1.xpose.msra.mxu0 0.0
    %957 = vmatprep.mubr.f32.mxu0 0.0
    %958 = vmatmul.mubr.f32.gmra.mrb[0].mxu0 %v886
    %v959 = vpop.f32.mrb[0].mxu0
    %v960 = vadd.f32 0.0, %v959
    %v961 = vpop.f32.mrb[0].mxu0
    %962 = vmatprep.mubr.f32.mxu0 0.0
    %963 = vmatmul.mubr.f32.gmra.mrb[0].mxu0 %v888
    %v964 = vpop.f32.mrb[0].mxu0
    %v965 = vadd.f32 0.0, %v964
    %v966 = vpop.f32.mrb[0].mxu0
    %967 = vdwg.mxu0
    %v968 = vmul.f32 %v849, 0.35355338
    %v969 = vmul.f32 %v854, 0.35355338
    %v970 = vmul.f32 %v960, 0.35355338
    %v971 = vmul.f32 %v965, 0.35355338
    %v972 = vsel %vm705, -1e+09, %v968
    %v973 = vsel %vm706, -1e+09, %v969
    %v974 = vsel %vm707, -1e+09, %v970
    %v975 = vsel %vm708, -1e+09, %v971
    %vm976 = vcmask 64512
    %v977 = vsel %vm976, %v972, -inf
    %978 = vmax.xlane.f32.xlu0 %v977
    %v979 = vpop.xlane.xlu0 %978
    %vm980 = vcmask 58368
    %v981 = vsel %vm980, %v973, -inf
    %982 = vmax.xlane.f32.xlu0 %v981
    %v983 = vpop.xlane.xlu0 %982
    %v984 = vsel %vm976, %v974, -inf
    %985 = vmax.xlane.f32.xlu0 %v984
    %v986 = vpop.xlane.xlu0 %985
    %v987 = vsel %vm980, %v975, -inf
    %988 = vmax.xlane.f32.xlu0 %v987
    %v989 = vpop.xlane.xlu0 %988
    %v990 = vsub.f32 %v972, %v979
    %v991 = vsub.f32 %v973, %v983
    %v992 = vsub.f32 %v974, %v986
    %v993 = vsub.f32 %v975, %v989
    %v994 = vmul.f32 %v990, 1.442695
    %v995 = vpow.pop %v994
    %v996 = vmul.f32 %v991, 1.442695
    %v997 = vpow.pop %v996
    %v998 = vmul.f32 %v992, 1.442695
    %v999 = vpow.pop %v998
    %v1000 = vmul.f32 %v993, 1.442695
    %v1001 = vpow.pop %v1000
    %v1002 = vsel %vm976, %v995, 0.0
    %1003 = vadd.xlane.f32.xlu0 %v1002
    %v1004 = vpop.xlane.xlu0 %1003
    %v1005 = vsel %vm980, %v997, 0.0
    %1006 = vadd.xlane.f32.xlu0 %v1005
    %v1007 = vpop.xlane.xlu0 %1006
    %v1008 = vsel %vm976, %v999, 0.0
    %1009 = vadd.xlane.f32.xlu0 %v1008
    %v1010 = vpop.xlane.xlu0 %1009
    %v1011 = vsel %vm980, %v1001, 0.0
    %1012 = vadd.xlane.f32.xlu0 %v1011
    %v1013 = vpop.xlane.xlu0 %1012
    %v1014 = vrcp.pop %v1004
    %v1015 = vmul.f32 %v995, %v1014
    %v1016 = vrcp.pop %v1007
    %v1017 = vmul.f32 %v997, %v1016
    %v1018 = vrcp.pop %v1010
    %v1019 = vmul.f32 %v999, %v1018
    %v1020 = vrcp.pop %v1013
    %v1021 = vmul.f32 %v1001, %v1020
    %v1022 = vmul.f32 %v672, %v713
    %v1023 = vmul.f32 %v677, %v713
    %vm1024 = vcmp.ge.s32.totalorder %v682, 8
    %vm1025 = vcmp.lt.s32.totalorder %v682, 16
    %vm1026 = vmand %vm1024, %vm1025
    %v1027 = vsel %vm1026, 1, 0
    %v1028 = vcvt.s32.f32 %v1027
    %v1030 = vcombine.high %v1028, %v1028
    %v1032 = vunpack.c.l.s4 1983009808
    %v1033 = vunpack.c.0.s8 %v1032
    %v1034 = vlaneseq
    %v1035 = vshrl.u32 %v1034, 7
    %v1036 = vsub.s32 %v1033, %v1035
    %v1037 = vrot.slane %v1028, %v1036
    %v1039 = vunpack.c.l.s4 1983009808
    %v1040 = vunpack.c.0.s8 %v1039
    %v1041 = vlaneseq
    %v1042 = vshrl.u32 %v1041, 7
    %v1043 = vsub.s32 %v1040, %v1042
    %v1044 = vrot.slane %v1030, %v1043
    %v1045 = vcombine.high %v1037, %v1037
    %v1046 = vcombine.high %v1044, %v1044
    %v1051 = vmul.f32 %v453, %v1037
    %v1052 = vmul.f32 %v461, %v1045
    %v1053 = vmul.f32 %v460, %v1044
    %v1054 = vmul.f32 %v462, %v1046
    %v1055 = vmul.f32 %v470, %v1037
    %v1056 = vmul.f32 %v478, %v1037
    %v1057 = vmul.f32 %v477, %v1045
    %v1058 = vmul.f32 %v479, %v1044
    %v1059 = vmul.f32 %v486, %v1046
    %v1060 = vmul.f32 %v487, %v1037
    %v1066 = vcombine.low %v1051, %v1052
    %v1067 = vcombine.low %v1053, %v1054
    %v1069 = vunpack.c.l.s4 1983009808
    %v1070 = vunpack.c.0.s8 %v1069
    %v1071 = vlaneseq
    %v1072 = vshrl.u32 %v1071, 7
    %v1073 = vsub.s32 %v1070, %v1072
    %v1074 = vrot.slane %v1066, %v1073
    %v1076 = vunpack.c.l.s4 1983009808
    %v1077 = vunpack.c.0.s8 %v1076
    %v1078 = vlaneseq
    %v1079 = vshrl.u32 %v1078, 7
    %v1080 = vsub.s32 %v1077, %v1079
    %v1081 = vrot.slane %v1067, %v1080
    %v1082 = vcombine.low %v1074, %v1081
    %v1084 = vunpack.c.l.s4 1983009808
    %v1085 = vunpack.c.0.s8 %v1084
    %v1086 = vlaneseq
    %v1087 = vshrl.u32 %v1086, 7
    %v1088 = vsub.s32 %v1085, %v1087
    %v1089 = vrot.slane %v1055, %v1088
    %v1090 = vsel %vm356, %v1082, 0
    %v1092 = vsel %vm356, %v1089, 0
    %1094 = vmatprep.subr.mxu0 0.0
    %1095 = vmatpush1.xpose.msra.mxu0 %v780
    %1096 = vmatprep.subr.mxu0 0.0
    %1097 = vmatpush1.xpose.msra.mxu0 0.0
    %1098 = vmatprep.subr.mxu0 0.0
    %1099 = vmatpush1.xpose.msra.mxu0 0.0
    %1100 = vmatprep.subr.mxu0 0.0
    %1101 = vmatpush1.xpose.msra.mxu0 0.0
    %1102 = vmatprep.subr.mxu0 0.0
    %1103 = vmatpush1.xpose.msra.mxu0 0.0
    %1104 = vmatprep.subr.mxu0 0.0
    %1105 = vmatpush1.xpose.msra.mxu0 0.0
    %1106 = vmatprep.subr.mxu0 0.0
    %1107 = vmatpush1.xpose.msra.mxu0 0.0
    %1108 = vmatprep.subr.mxu0 0.0
    %1109 = vmatpush1.xpose.msra.mxu0 0.0
    %1110 = vmatprep.subr.mxu0 0.0
    %1111 = vmatpush1.xpose.msra.mxu0 0.0
    %1112 = vmatprep.subr.mxu0 0.0
    %1113 = vmatpush1.xpose.msra.mxu0 0.0
    %1114 = vmatprep.subr.mxu0 0.0
    %1115 = vmatpush1.xpose.msra.mxu0 0.0
    %1116 = vmatprep.subr.mxu0 0.0
    %1117 = vmatpush1.xpose.msra.mxu0 0.0
    %1118 = vmatprep.subr.mxu0 0.0
    %1119 = vmatpush1.xpose.msra.mxu0 0.0
    %1120 = vmatprep.subr.mxu0 0.0
    %1121 = vmatpush1.xpose.msra.mxu0 0.0
    %1122 = vmatprep.subr.mxu0 0.0
    %1123 = vmatpush1.xpose.msra.mxu0 0.0
    %1124 = vmatprep.subr.mxu0 0.0
    %1125 = vmatpush1.xpose.msra.mxu0 0.0
    %1126 = vmatprep.subr.mxu0 0.0
    %1127 = vmatpush1.xpose.msra.mxu0 0.0
    %1128 = vmatprep.subr.mxu0 0.0
    %1129 = vmatpush1.xpose.msra.mxu0 0.0
    %1130 = vmatprep.subr.mxu0 0.0
    %1131 = vmatpush1.xpose.msra.mxu0 0.0
    %1132 = vmatprep.subr.mxu0 0.0
    %1133 = vmatpush1.xpose.msra.mxu0 0.0
    %1134 = vmatprep.subr.mxu0 0.0
    %1135 = vmatpush1.xpose.msra.mxu0 0.0
    %1136 = vmatprep.subr.mxu0 0.0
    %1137 = vmatpush1.xpose.msra.mxu0 0.0
    %1138 = vmatprep.subr.mxu0 0.0
    %1139 = vmatpush1.xpose.msra.mxu0 0.0
    %1140 = vmatprep.subr.mxu0 0.0
    %1141 = vmatpush1.xpose.msra.mxu0 0.0
    %1142 = vmatprep.subr.mxu0 0.0
    %1143 = vmatpush1.xpose.msra.mxu0 0.0
    %1144 = vmatprep.subr.mxu0 0.0
    %1145 = vmatpush1.xpose.msra.mxu0 0.0
    %1146 = vmatprep.subr.mxu0 0.0
    %1147 = vmatpush1.xpose.msra.mxu0 0.0
    %1148 = vmatprep.subr.mxu0 0.0
    %1149 = vmatpush1.xpose.msra.mxu0 0.0
    %1150 = vmatprep.subr.mxu0 0.0
    %1151 = vmatpush1.xpose.msra.mxu0 0.0
    %1152 = vmatprep.subr.mxu0 0.0
    %1153 = vmatpush1.xpose.msra.mxu0 0.0
    %1154 = vmatprep.subr.mxu0 0.0
    %1155 = vmatpush1.xpose.msra.mxu0 0.0
    %1156 = vmatprep.subr.mxu0 0.0
    %1157 = vmatpush1.xpose.msra.mxu0 0.0
    %1158 = vmatprep.mubr.f32.mxu0 0.0
    %1159 = vmatmul.mubr.f32.gmra.mrb[0].mxu0 %v1090
    %v1160 = vpop.f32.mrb[0].mxu0
    %v1161 = vadd.f32 0.0, %v1160
    %v1162 = vpop.f32.mrb[0].mxu0
    %1163 = vmatprep.mubr.f32.mxu0 0.0
    %1164 = vmatmul.mubr.f32.gmra.mrb[0].mxu0 %v1092
    %v1165 = vpop.f32.mrb[0].mxu0
    %v1166 = vadd.f32 0.0, %v1165
    %v1167 = vpop.f32.mrb[0].mxu0
    %1168 = vdwg.mxu0
    %v1174 = vcombine.low %v1056, %v1057
    %v1175 = vcombine.low %v1058, %v1059
    %v1177 = vunpack.c.l.s4 1983009808
    %v1178 = vunpack.c.0.s8 %v1177
    %v1179 = vlaneseq
    %v1180 = vshrl.u32 %v1179, 7
    %v1181 = vsub.s32 %v1178, %v1180
    %v1182 = vrot.slane %v1174, %v1181
    %v1184 = vunpack.c.l.s4 1983009808
    %v1185 = vunpack.c.0.s8 %v1184
    %v1186 = vlaneseq
    %v1187 = vshrl.u32 %v1186, 7
    %v1188 = vsub.s32 %v1185, %v1187
    %v1189 = vrot.slane %v1175, %v1188
    %v1190 = vcombine.low %v1182, %v1189
    %v1192 = vunpack.c.l.s4 1983009808
    %v1193 = vunpack.c.0.s8 %v1192
    %v1194 = vlaneseq
    %v1195 = vshrl.u32 %v1194, 7
    %v1196 = vsub.s32 %v1193, %v1195
    %v1197 = vrot.slane %v1060, %v1196
    %v1198 = vsel %vm356, %v1190, 0
    %v1200 = vsel %vm356, %v1197, 0
    %1202 = vmatprep.subr.mxu0 0.0
    %1203 = vmatpush1.xpose.msra.mxu0 %v891
    %1204 = vmatprep.subr.mxu0 0.0
    %1205 = vmatpush1.xpose.msra.mxu0 0.0
    %1206 = vmatprep.subr.mxu0 0.0
    %1207 = vmatpush1.xpose.msra.mxu0 0.0
    %1208 = vmatprep.subr.mxu0 0.0
    %1209 = vmatpush1.xpose.msra.mxu0 0.0
    %1210 = vmatprep.subr.mxu0 0.0
    %1211 = vmatpush1.xpose.msra.mxu0 0.0
    %1212 = vmatprep.subr.mxu0 0.0
    %1213 = vmatpush1.xpose.msra.mxu0 0.0
    %1214 = vmatprep.subr.mxu0 0.0
    %1215 = vmatpush1.xpose.msra.mxu0 0.0
    %1216 = vmatprep.subr.mxu0 0.0
    %1217 = vmatpush1.xpose.msra.mxu0 0.0
    %1218 = vmatprep.subr.mxu0 0.0
    %1219 = vmatpush1.xpose.msra.mxu0 0.0
    %1220 = vmatprep.subr.mxu0 0.0
    %1221 = vmatpush1.xpose.msra.mxu0 0.0
    %1222 = vmatprep.subr.mxu0 0.0
    %1223 = vmatpush1.xpose.msra.mxu0 0.0
    %1224 = vmatprep.subr.mxu0 0.0
    %1225 = vmatpush1.xpose.msra.mxu0 0.0
    %1226 = vmatprep.subr.mxu0 0.0
    %1227 = vmatpush1.xpose.msra.mxu0 0.0
    %1228 = vmatprep.subr.mxu0 0.0
    %1229 = vmatpush1.xpose.msra.mxu0 0.0
    %1230 = vmatprep.subr.mxu0 0.0
    %1231 = vmatpush1.xpose.msra.mxu0 0.0
    %1232 = vmatprep.subr.mxu0 0.0
    %1233 = vmatpush1.xpose.msra.mxu0 0.0
    %1234 = vmatprep.subr.mxu0 0.0
    %1235 = vmatpush1.xpose.msra.mxu0 0.0
    %1236 = vmatprep.subr.mxu0 0.0
    %1237 = vmatpush1.xpose.msra.mxu0 0.0
    %1238 = vmatprep.subr.mxu0 0.0
    %1239 = vmatpush1.xpose.msra.mxu0 0.0
    %1240 = vmatprep.subr.mxu0 0.0
    %1241 = vmatpush1.xpose.msra.mxu0 0.0
    %1242 = vmatprep.subr.mxu0 0.0
    %1243 = vmatpush1.xpose.msra.mxu0 0.0
    %1244 = vmatprep.subr.mxu0 0.0
    %1245 = vmatpush1.xpose.msra.mxu0 0.0
    %1246 = vmatprep.subr.mxu0 0.0
    %1247 = vmatpush1.xpose.msra.mxu0 0.0
    %1248 = vmatprep.subr.mxu0 0.0
    %1249 = vmatpush1.xpose.msra.mxu0 0.0
    %1250 = vmatprep.subr.mxu0 0.0
    %1251 = vmatpush1.xpose.msra.mxu0 0.0
    %1252 = vmatprep.subr.mxu0 0.0
    %1253 = vmatpush1.xpose.msra.mxu0 0.0
    %1254 = vmatprep.subr.mxu0 0.0
    %1255 = vmatpush1.xpose.msra.mxu0 0.0
    %1256 = vmatprep.subr.mxu0 0.0
    %1257 = vmatpush1.xpose.msra.mxu0 0.0
    %1258 = vmatprep.subr.mxu0 0.0
    %1259 = vmatpush1.xpose.msra.mxu0 0.0
    %1260 = vmatprep.subr.mxu0 0.0
    %1261 = vmatpush1.xpose.msra.mxu0 0.0
    %1262 = vmatprep.subr.mxu0 0.0
    %1263 = vmatpush1.xpose.msra.mxu0 0.0
    %1264 = vmatprep.subr.mxu0 0.0
    %1265 = vmatpush1.xpose.msra.mxu0 0.0
    %1266 = vmatprep.mubr.f32.mxu0 0.0
    %1267 = vmatmul.mubr.f32.gmra.mrb[0].mxu0 %v1198
    %v1268 = vpop.f32.mrb[0].mxu0
    %v1269 = vadd.f32 0.0, %v1268
    %v1270 = vpop.f32.mrb[0].mxu0
    %1271 = vmatprep.mubr.f32.mxu0 0.0
    %1272 = vmatmul.mubr.f32.gmra.mrb[0].mxu0 %v1200
    %v1273 = vpop.f32.mrb[0].mxu0
    %v1274 = vadd.f32 0.0, %v1273
    %v1275 = vpop.f32.mrb[0].mxu0
    %1276 = vdwg.mxu0
    %v1277 = vmul.f32 %v1161, 0.35355338
    %v1278 = vmul.f32 %v1166, 0.35355338
    %v1279 = vmul.f32 %v1269, 0.35355338
    %v1280 = vmul.f32 %v1274, 0.35355338
    %v1281 = vsel %vm705, -1e+09, %v1277
    %v1282 = vsel %vm706, -1e+09, %v1278
    %v1283 = vsel %vm707, -1e+09, %v1279
    %v1284 = vsel %vm708, -1e+09, %v1280
    %v1285 = vsel %vm976, %v1281, -inf
    %1286 = vmax.xlane.f32.xlu0 %v1285
    %v1287 = vpop.xlane.xlu0 %1286
    %v1288 = vsel %vm980, %v1282, -inf
    %1289 = vmax.xlane.f32.xlu0 %v1288
    %v1290 = vpop.xlane.xlu0 %1289
    %v1291 = vsel %vm976, %v1283, -inf
    %1292 = vmax.xlane.f32.xlu0 %v1291
    %v1293 = vpop.xlane.xlu0 %1292
    %v1294 = vsel %vm980, %v1284, -inf
    %1295 = vmax.xlane.f32.xlu0 %v1294
    %v1296 = vpop.xlane.xlu0 %1295
    %v1297 = vsub.f32 %v1281, %v1287
    %v1298 = vsub.f32 %v1282, %v1290
    %v1299 = vsub.f32 %v1283, %v1293
    %v1300 = vsub.f32 %v1284, %v1296
    %v1301 = vmul.f32 %v1297, 1.442695
    %v1302 = vpow.pop %v1301
    %v1303 = vmul.f32 %v1298, 1.442695
    %v1304 = vpow.pop %v1303
    %v1305 = vmul.f32 %v1299, 1.442695
    %v1306 = vpow.pop %v1305
    %v1307 = vmul.f32 %v1300, 1.442695
    %v1308 = vpow.pop %v1307
    %v1309 = vsel %vm976, %v1302, 0.0
    %1310 = vadd.xlane.f32.xlu0 %v1309
    %v1311 = vpop.xlane.xlu0 %1310
    %v1312 = vsel %vm980, %v1304, 0.0
    %1313 = vadd.xlane.f32.xlu0 %v1312
    %v1314 = vpop.xlane.xlu0 %1313
    %v1315 = vsel %vm976, %v1306, 0.0
    %1316 = vadd.xlane.f32.xlu0 %v1315
    %v1317 = vpop.xlane.xlu0 %1316
    %v1318 = vsel %vm980, %v1308, 0.0
    %1319 = vadd.xlane.f32.xlu0 %v1318
    %v1320 = vpop.xlane.xlu0 %1319
    %v1321 = vrcp.pop %v1311
    %v1322 = vmul.f32 %v1302, %v1321
    %v1323 = vrcp.pop %v1314
    %v1324 = vmul.f32 %v1304, %v1323
    %v1325 = vrcp.pop %v1317
    %v1326 = vmul.f32 %v1306, %v1325
    %v1327 = vrcp.pop %v1320
    %v1328 = vmul.f32 %v1308, %v1327
    %v1329 = vmul.f32 %v672, %v1028
    %v1330 = vmul.f32 %v677, %v1028
    %v1332 = vsel %vm976, %v1322, 0
    %v1335 = vsel %vm976, %v1324, 0
    %1337 = vmatprep.subr.mxu0 0.0
    %1338 = vmatpush1.msra.mxu0 %v1329
    %1339 = vmatprep.subr.mxu0 0.0
    %1340 = vmatpush1.msra.mxu0 0.0
    %1341 = vmatprep.subr.mxu0 0.0
    %1342 = vmatpush1.msra.mxu0 0.0
    %1343 = vmatprep.subr.mxu0 0.0
    %1344 = vmatpush1.msra.mxu0 0.0
    %1345 = vmatprep.subr.mxu0 0.0
    %1346 = vmatpush1.msra.mxu0 0.0
    %1347 = vmatprep.subr.mxu0 0.0
    %1348 = vmatpush1.msra.mxu0 0.0
    %1349 = vmatprep.subr.mxu0 0.0
    %1350 = vmatpush1.msra.mxu0 0.0
    %1351 = vmatprep.subr.mxu0 0.0
    %1352 = vmatpush1.msra.mxu0 0.0
    %1353 = vmatprep.subr.mxu0 0.0
    %1354 = vmatpush1.msra.mxu0 0.0
    %1355 = vmatprep.subr.mxu0 0.0
    %1356 = vmatpush1.msra.mxu0 0.0
    %1357 = vmatprep.subr.mxu0 0.0
    %1358 = vmatpush1.msra.mxu0 0.0
    %1359 = vmatprep.subr.mxu0 0.0
    %1360 = vmatpush1.msra.mxu0 0.0
    %1361 = vmatprep.subr.mxu0 0.0
    %1362 = vmatpush1.msra.mxu0 0.0
    %1363 = vmatprep.subr.mxu0 0.0
    %1364 = vmatpush1.msra.mxu0 0.0
    %1365 = vmatprep.subr.mxu0 0.0
    %1366 = vmatpush1.msra.mxu0 0.0
    %1367 = vmatprep.subr.mxu0 0.0
    %1368 = vmatpush1.msra.mxu0 0.0
    %1369 = vmatprep.subr.mxu0 0.0
    %1370 = vmatpush1.msra.mxu0 0.0
    %1371 = vmatprep.subr.mxu0 0.0
    %1372 = vmatpush1.msra.mxu0 0.0
    %1373 = vmatprep.subr.mxu0 0.0
    %1374 = vmatpush1.msra.mxu0 0.0
    %1375 = vmatprep.subr.mxu0 0.0
    %1376 = vmatpush1.msra.mxu0 0.0
    %1377 = vmatprep.subr.mxu0 0.0
    %1378 = vmatpush1.msra.mxu0 0.0
    %1379 = vmatprep.subr.mxu0 0.0
    %1380 = vmatpush1.msra.mxu0 0.0
    %1381 = vmatprep.subr.mxu0 0.0
    %1382 = vmatpush1.msra.mxu0 0.0
    %1383 = vmatprep.subr.mxu0 0.0
    %1384 = vmatpush1.msra.mxu0 0.0
    %1385 = vmatprep.subr.mxu0 0.0
    %1386 = vmatpush1.msra.mxu0 0.0
    %1387 = vmatprep.subr.mxu0 0.0
    %1388 = vmatpush1.msra.mxu0 0.0
    %1389 = vmatprep.subr.mxu0 0.0
    %1390 = vmatpush1.msra.mxu0 0.0
    %1391 = vmatprep.subr.mxu0 0.0
    %1392 = vmatpush1.msra.mxu0 0.0
    %1393 = vmatprep.subr.mxu0 0.0
    %1394 = vmatpush1.msra.mxu0 0.0
    %1395 = vmatprep.subr.mxu0 0.0
    %1396 = vmatpush1.msra.mxu0 0.0
    %1397 = vmatprep.subr.mxu0 0.0
    %1398 = vmatpush1.msra.mxu0 0.0
    %1399 = vmatprep.subr.mxu0 0.0
    %1400 = vmatpush1.msra.mxu0 0.0
    %1401 = vmatprep.mubr.f32.mxu0 0.0
    %1402 = vmatmul.mubr.f32.gmra.mrb[0].mxu0 %v1332
    %v1403 = vpop.f32.mrb[0].mxu0
    %v1404 = vadd.f32 0.0, %v1403
    %v1405 = vpop.f32.mrb[0].mxu0
    %1406 = vmatprep.mubr.f32.mxu0 0.0
    %1407 = vmatmul.mubr.f32.gmra.mrb[0].mxu0 %v1335
    %v1408 = vpop.f32.mrb[0].mxu0
    %v1409 = vadd.f32 0.0, %v1408
    %v1410 = vpop.f32.mrb[0].mxu0
    %1411 = vdwg.mxu0
    %v1413 = vsel %vm976, %v1326, 0
    %v1416 = vsel %vm976, %v1328, 0
    %1418 = vmatprep.subr.mxu0 0.0
    %1419 = vmatpush1.msra.mxu0 %v1330
    %1420 = vmatprep.subr.mxu0 0.0
    %1421 = vmatpush1.msra.mxu0 0.0
    %1422 = vmatprep.subr.mxu0 0.0
    %1423 = vmatpush1.msra.mxu0 0.0
    %1424 = vmatprep.subr.mxu0 0.0
    %1425 = vmatpush1.msra.mxu0 0.0
    %1426 = vmatprep.subr.mxu0 0.0
    %1427 = vmatpush1.msra.mxu0 0.0
    %1428 = vmatprep.subr.mxu0 0.0
    %1429 = vmatpush1.msra.mxu0 0.0
    %1430 = vmatprep.subr.mxu0 0.0
    %1431 = vmatpush1.msra.mxu0 0.0
    %1432 = vmatprep.subr.mxu0 0.0
    %1433 = vmatpush1.msra.mxu0 0.0
    %1434 = vmatprep.subr.mxu0 0.0
    %1435 = vmatpush1.msra.mxu0 0.0
    %1436 = vmatprep.subr.mxu0 0.0
    %1437 = vmatpush1.msra.mxu0 0.0
    %1438 = vmatprep.subr.mxu0 0.0
    %1439 = vmatpush1.msra.mxu0 0.0
    %1440 = vmatprep.subr.mxu0 0.0
    %1441 = vmatpush1.msra.mxu0 0.0
    %1442 = vmatprep.subr.mxu0 0.0
    %1443 = vmatpush1.msra.mxu0 0.0
    %1444 = vmatprep.subr.mxu0 0.0
    %1445 = vmatpush1.msra.mxu0 0.0
    %1446 = vmatprep.subr.mxu0 0.0
    %1447 = vmatpush1.msra.mxu0 0.0
    %1448 = vmatprep.subr.mxu0 0.0
    %1449 = vmatpush1.msra.mxu0 0.0
    %1450 = vmatprep.subr.mxu0 0.0
    %1451 = vmatpush1.msra.mxu0 0.0
    %1452 = vmatprep.subr.mxu0 0.0
    %1453 = vmatpush1.msra.mxu0 0.0
    %1454 = vmatprep.subr.mxu0 0.0
    %1455 = vmatpush1.msra.mxu0 0.0
    %1456 = vmatprep.subr.mxu0 0.0
    %1457 = vmatpush1.msra.mxu0 0.0
    %1458 = vmatprep.subr.mxu0 0.0
    %1459 = vmatpush1.msra.mxu0 0.0
    %1460 = vmatprep.subr.mxu0 0.0
    %1461 = vmatpush1.msra.mxu0 0.0
    %1462 = vmatprep.subr.mxu0 0.0
    %1463 = vmatpush1.msra.mxu0 0.0
    %1464 = vmatprep.subr.mxu0 0.0
    %1465 = vmatpush1.msra.mxu0 0.0
    %1466 = vmatprep.subr.mxu0 0.0
    %1467 = vmatpush1.msra.mxu0 0.0
    %1468 = vmatprep.subr.mxu0 0.0
    %1469 = vmatpush1.msra.mxu0 0.0
    %1470 = vmatprep.subr.mxu0 0.0
    %1471 = vmatpush1.msra.mxu0 0.0
    %1472 = vmatprep.subr.mxu0 0.0
    %1473 = vmatpush1.msra.mxu0 0.0
    %1474 = vmatprep.subr.mxu0 0.0
    %1475 = vmatpush1.msra.mxu0 0.0
    %1476 = vmatprep.subr.mxu0 0.0
    %1477 = vmatpush1.msra.mxu0 0.0
    %1478 = vmatprep.subr.mxu0 0.0
    %1479 = vmatpush1.msra.mxu0 0.0
    %1480 = vmatprep.subr.mxu0 0.0
    %1481 = vmatpush1.msra.mxu0 0.0
    %1482 = vmatprep.mubr.f32.mxu0 0.0
    %1483 = vmatmul.mubr.f32.gmra.mrb[0].mxu0 %v1413
    %v1484 = vpop.f32.mrb[0].mxu0
    %v1485 = vadd.f32 0.0, %v1484
    %v1486 = vpop.f32.mrb[0].mxu0
    %1487 = vmatprep.mubr.f32.mxu0 0.0
    %1488 = vmatmul.mubr.f32.gmra.mrb[0].mxu0 %v1416
    %v1489 = vpop.f32.mrb[0].mxu0
    %v1490 = vadd.f32 0.0, %v1489
    %v1491 = vpop.f32.mrb[0].mxu0
    %1492 = vdwg.mxu0
    %v1494 = vsel %vm976, %v1015, 0
    %v1497 = vsel %vm976, %v1017, 0
    %1499 = vmatprep.subr.mxu0 0.0
    %1500 = vmatpush1.msra.mxu0 %v1022
    %1501 = vmatprep.subr.mxu0 0.0
    %1502 = vmatpush1.msra.mxu0 0.0
    %1503 = vmatprep.subr.mxu0 0.0
    %1504 = vmatpush1.msra.mxu0 0.0
    %1505 = vmatprep.subr.mxu0 0.0
    %1506 = vmatpush1.msra.mxu0 0.0
    %1507 = vmatprep.subr.mxu0 0.0
    %1508 = vmatpush1.msra.mxu0 0.0
    %1509 = vmatprep.subr.mxu0 0.0
    %1510 = vmatpush1.msra.mxu0 0.0
    %1511 = vmatprep.subr.mxu0 0.0
    %1512 = vmatpush1.msra.mxu0 0.0
    %1513 = vmatprep.subr.mxu0 0.0
    %1514 = vmatpush1.msra.mxu0 0.0
    %1515 = vmatprep.subr.mxu0 0.0
    %1516 = vmatpush1.msra.mxu0 0.0
    %1517 = vmatprep.subr.mxu0 0.0
    %1518 = vmatpush1.msra.mxu0 0.0
    %1519 = vmatprep.subr.mxu0 0.0
    %1520 = vmatpush1.msra.mxu0 0.0
    %1521 = vmatprep.subr.mxu0 0.0
    %1522 = vmatpush1.msra.mxu0 0.0
    %1523 = vmatprep.subr.mxu0 0.0
    %1524 = vmatpush1.msra.mxu0 0.0
    %1525 = vmatprep.subr.mxu0 0.0
    %1526 = vmatpush1.msra.mxu0 0.0
    %1527 = vmatprep.subr.mxu0 0.0
    %1528 = vmatpush1.msra.mxu0 0.0
    %1529 = vmatprep.subr.mxu0 0.0
    %1530 = vmatpush1.msra.mxu0 0.0
    %1531 = vmatprep.subr.mxu0 0.0
    %1532 = vmatpush1.msra.mxu0 0.0
    %1533 = vmatprep.subr.mxu0 0.0
    %1534 = vmatpush1.msra.mxu0 0.0
    %1535 = vmatprep.subr.mxu0 0.0
    %1536 = vmatpush1.msra.mxu0 0.0
    %1537 = vmatprep.subr.mxu0 0.0
    %1538 = vmatpush1.msra.mxu0 0.0
    %1539 = vmatprep.subr.mxu0 0.0
    %1540 = vmatpush1.msra.mxu0 0.0
    %1541 = vmatprep.subr.mxu0 0.0
    %1542 = vmatpush1.msra.mxu0 0.0
    %1543 = vmatprep.subr.mxu0 0.0
    %1544 = vmatpush1.msra.mxu0 0.0
    %1545 = vmatprep.subr.mxu0 0.0
    %1546 = vmatpush1.msra.mxu0 0.0
    %1547 = vmatprep.subr.mxu0 0.0
    %1548 = vmatpush1.msra.mxu0 0.0
    %1549 = vmatprep.subr.mxu0 0.0
    %1550 = vmatpush1.msra.mxu0 0.0
    %1551 = vmatprep.subr.mxu0 0.0
    %1552 = vmatpush1.msra.mxu0 0.0
    %1553 = vmatprep.subr.mxu0 0.0
    %1554 = vmatpush1.msra.mxu0 0.0
    %1555 = vmatprep.subr.mxu0 0.0
    %1556 = vmatpush1.msra.mxu0 0.0
    %1557 = vmatprep.subr.mxu0 0.0
    %1558 = vmatpush1.msra.mxu0 0.0
    %1559 = vmatprep.subr.mxu0 0.0
    %1560 = vmatpush1.msra.mxu0 0.0
    %1561 = vmatprep.subr.mxu0 0.0
    %1562 = vmatpush1.msra.mxu0 0.0
    %1563 = vmatprep.mubr.f32.mxu0 0.0
    %1564 = vmatmul.mubr.f32.gmra.mrb[0].mxu0 %v1494
    %v1565 = vpop.f32.mrb[0].mxu0
    %v1566 = vadd.f32 %v1404, %v1565
    %v1567 = vpop.f32.mrb[0].mxu0
    %1568 = vmatprep.mubr.f32.mxu0 0.0
    %1569 = vmatmul.mubr.f32.gmra.mrb[0].mxu0 %v1497
    %v1570 = vpop.f32.mrb[0].mxu0
    %v1571 = vadd.f32 %v1409, %v1570
    %v1572 = vpop.f32.mrb[0].mxu0
    %1573 = vdwg.mxu0
    %v1575 = vsel %vm976, %v1019, 0
    %v1578 = vsel %vm976, %v1021, 0
    %1580 = vmatprep.subr.mxu0 0.0
    %1581 = vmatpush1.msra.mxu0 %v1023
    %1582 = vmatprep.subr.mxu0 0.0
    %1583 = vmatpush1.msra.mxu0 0.0
    %1584 = vmatprep.subr.mxu0 0.0
    %1585 = vmatpush1.msra.mxu0 0.0
    %1586 = vmatprep.subr.mxu0 0.0
    %1587 = vmatpush1.msra.mxu0 0.0
    %1588 = vmatprep.subr.mxu0 0.0
    %1589 = vmatpush1.msra.mxu0 0.0
    %1590 = vmatprep.subr.mxu0 0.0
    %1591 = vmatpush1.msra.mxu0 0.0
    %1592 = vmatprep.subr.mxu0 0.0
    %1593 = vmatpush1.msra.mxu0 0.0
    %1594 = vmatprep.subr.mxu0 0.0
    %1595 = vmatpush1.msra.mxu0 0.0
    %1596 = vmatprep.subr.mxu0 0.0
    %1597 = vmatpush1.msra.mxu0 0.0
    %1598 = vmatprep.subr.mxu0 0.0
    %1599 = vmatpush1.msra.mxu0 0.0
    %1600 = vmatprep.subr.mxu0 0.0
    %1601 = vmatpush1.msra.mxu0 0.0
    %1602 = vmatprep.subr.mxu0 0.0
    %1603 = vmatpush1.msra.mxu0 0.0
    %1604 = vmatprep.subr.mxu0 0.0
    %1605 = vmatpush1.msra.mxu0 0.0
    %1606 = vmatprep.subr.mxu0 0.0
    %1607 = vmatpush1.msra.mxu0 0.0
    %1608 = vmatprep.subr.mxu0 0.0
    %1609 = vmatpush1.msra.mxu0 0.0
    %1610 = vmatprep.subr.mxu0 0.0
    %1611 = vmatpush1.msra.mxu0 0.0
    %1612 = vmatprep.subr.mxu0 0.0
    %1613 = vmatpush1.msra.mxu0 0.0
    %1614 = vmatprep.subr.mxu0 0.0
    %1615 = vmatpush1.msra.mxu0 0.0
    %1616 = vmatprep.subr.mxu0 0.0
    %1617 = vmatpush1.msra.mxu0 0.0
    %1618 = vmatprep.subr.mxu0 0.0
    %1619 = vmatpush1.msra.mxu0 0.0
    %1620 = vmatprep.subr.mxu0 0.0
    %1621 = vmatpush1.msra.mxu0 0.0
    %1622 = vmatprep.subr.mxu0 0.0
    %1623 = vmatpush1.msra.mxu0 0.0
    %1624 = vmatprep.subr.mxu0 0.0
    %1625 = vmatpush1.msra.mxu0 0.0
    %1626 = vmatprep.subr.mxu0 0.0
    %1627 = vmatpush1.msra.mxu0 0.0
    %1628 = vmatprep.subr.mxu0 0.0
    %1629 = vmatpush1.msra.mxu0 0.0
    %1630 = vmatprep.subr.mxu0 0.0
    %1631 = vmatpush1.msra.mxu0 0.0
    %1632 = vmatprep.subr.mxu0 0.0
    %1633 = vmatpush1.msra.mxu0 0.0
    %1634 = vmatprep.subr.mxu0 0.0
    %1635 = vmatpush1.msra.mxu0 0.0
    %1636 = vmatprep.subr.mxu0 0.0
    %1637 = vmatpush1.msra.mxu0 0.0
    %1638 = vmatprep.subr.mxu0 0.0
    %1639 = vmatpush1.msra.mxu0 0.0
    %1640 = vmatprep.subr.mxu0 0.0
    %1641 = vmatpush1.msra.mxu0 0.0
    %1642 = vmatprep.subr.mxu0 0.0
    %1643 = vmatpush1.msra.mxu0 0.0
    %1644 = vmatprep.mubr.f32.mxu0 0.0
    %1645 = vmatmul.mubr.f32.gmra.mrb[0].mxu0 %v1575
    %v1646 = vpop.f32.mrb[0].mxu0
    %v1647 = vadd.f32 %v1485, %v1646
    %v1648 = vpop.f32.mrb[0].mxu0
    %1649 = vmatprep.mubr.f32.mxu0 0.0
    %1650 = vmatmul.mubr.f32.gmra.mrb[0].mxu0 %v1578
    %v1651 = vpop.f32.mrb[0].mxu0
    %v1652 = vadd.f32 %v1490, %v1651
    %v1653 = vpop.f32.mrb[0].mxu0
    %1654 = vdwg.mxu0
    %vm1655 = vcmp.ge.s32.totalorder %v682, 16
    %vm1656 = vcmp.lt.s32.totalorder %v682, 24
    %vm1657 = vmand %vm1655, %vm1656
    %v1658 = vsel %vm1657, 1, 0
    %v1659 = vcvt.s32.f32 %v1658
    %v1661 = vcombine.high %v1659, %v1659
    %v1663 = vunpack.c.l.s4 1983009808
    %v1664 = vunpack.c.0.s8 %v1663
    %v1665 = vlaneseq
    %v1666 = vshrl.u32 %v1665, 7
    %v1667 = vsub.s32 %v1664, %v1666
    %v1668 = vrot.slane %v1659, %v1667
    %v1670 = vunpack.c.l.s4 1983009808
    %v1671 = vunpack.c.0.s8 %v1670
    %v1672 = vlaneseq
    %v1673 = vshrl.u32 %v1672, 7
    %v1674 = vsub.s32 %v1671, %v1673
    %v1675 = vrot.slane %v1661, %v1674
    %v1676 = vcombine.high %v1668, %v1668
    %v1677 = vcombine.high %v1675, %v1675
    %v1682 = vmul.f32 %v453, %v1668
    %v1683 = vmul.f32 %v461, %v1676
    %v1684 = vmul.f32 %v460, %v1675
    %v1685 = vmul.f32 %v462, %v1677
    %v1686 = vmul.f32 %v470, %v1668
    %v1687 = vmul.f32 %v478, %v1668
    %v1688 = vmul.f32 %v477, %v1676
    %v1689 = vmul.f32 %v479, %v1675
    %v1690 = vmul.f32 %v486, %v1677
    %v1691 = vmul.f32 %v487, %v1668
    %v1697 = vcombine.low %v1682, %v1683
    %v1698 = vcombine.low %v1684, %v1685
    %v1700 = vunpack.c.l.s4 1983009808
    %v1701 = vunpack.c.0.s8 %v1700
    %v1702 = vlaneseq
    %v1703 = vshrl.u32 %v1702, 7
    %v1704 = vsub.s32 %v1701, %v1703
    %v1705 = vrot.slane %v1697, %v1704
    %v1707 = vunpack.c.l.s4 1983009808
    %v1708 = vunpack.c.0.s8 %v1707
    %v1709 = vlaneseq
    %v1710 = vshrl.u32 %v1709, 7
    %v1711 = vsub.s32 %v1708, %v1710
    %v1712 = vrot.slane %v1698, %v1711
    %v1713 = vcombine.low %v1705, %v1712
    %v1715 = vunpack.c.l.s4 1983009808
    %v1716 = vunpack.c.0.s8 %v1715
    %v1717 = vlaneseq
    %v1718 = vshrl.u32 %v1717, 7
    %v1719 = vsub.s32 %v1716, %v1718
    %v1720 = vrot.slane %v1686, %v1719
    %v1721 = vsel %vm356, %v1713, 0
    %v1723 = vsel %vm356, %v1720, 0
    %1725 = vmatprep.subr.mxu0 0.0
    %1726 = vmatpush1.xpose.msra.mxu0 %v780
    %1727 = vmatprep.subr.mxu0 0.0
    %1728 = vmatpush1.xpose.msra.mxu0 0.0
    %1729 = vmatprep.subr.mxu0 0.0
    %1730 = vmatpush1.xpose.msra.mxu0 0.0
    %1731 = vmatprep.subr.mxu0 0.0
    %1732 = vmatpush1.xpose.msra.mxu0 0.0
    %1733 = vmatprep.subr.mxu0 0.0
    %1734 = vmatpush1.xpose.msra.mxu0 0.0
    %1735 = vmatprep.subr.mxu0 0.0
    %1736 = vmatpush1.xpose.msra.mxu0 0.0
    %1737 = vmatprep.subr.mxu0 0.0
    %1738 = vmatpush1.xpose.msra.mxu0 0.0
    %1739 = vmatprep.subr.mxu0 0.0
    %1740 = vmatpush1.xpose.msra.mxu0 0.0
    %1741 = vmatprep.subr.mxu0 0.0
    %1742 = vmatpush1.xpose.msra.mxu0 0.0
    %1743 = vmatprep.subr.mxu0 0.0
    %1744 = vmatpush1.xpose.msra.mxu0 0.0
    %1745 = vmatprep.subr.mxu0 0.0
    %1746 = vmatpush1.xpose.msra.mxu0 0.0
    %1747 = vmatprep.subr.mxu0 0.0
    %1748 = vmatpush1.xpose.msra.mxu0 0.0
    %1749 = vmatprep.subr.mxu0 0.0
    %1750 = vmatpush1.xpose.msra.mxu0 0.0
    %1751 = vmatprep.subr.mxu0 0.0
    %1752 = vmatpush1.xpose.msra.mxu0 0.0
    %1753 = vmatprep.subr.mxu0 0.0
    %1754 = vmatpush1.xpose.msra.mxu0 0.0
    %1755 = vmatprep.subr.mxu0 0.0
    %1756 = vmatpush1.xpose.msra.mxu0 0.0
    %1757 = vmatprep.subr.mxu0 0.0
    %1758 = vmatpush1.xpose.msra.mxu0 0.0
    %1759 = vmatprep.subr.mxu0 0.0
    %1760 = vmatpush1.xpose.msra.mxu0 0.0
    %1761 = vmatprep.subr.mxu0 0.0
    %1762 = vmatpush1.xpose.msra.mxu0 0.0
    %1763 = vmatprep.subr.mxu0 0.0
    %1764 = vmatpush1.xpose.msra.mxu0 0.0
    %1765 = vmatprep.subr.mxu0 0.0
    %1766 = vmatpush1.xpose.msra.mxu0 0.0
    %1767 = vmatprep.subr.mxu0 0.0
    %1768 = vmatpush1.xpose.msra.mxu0 0.0
    %1769 = vmatprep.subr.mxu0 0.0
    %1770 = vmatpush1.xpose.msra.mxu0 0.0
    %1771 = vmatprep.subr.mxu0 0.0
    %1772 = vmatpush1.xpose.msra.mxu0 0.0
    %1773 = vmatprep.subr.mxu0 0.0
    %1774 = vmatpush1.xpose.msra.mxu0 0.0
    %1775 = vmatprep.subr.mxu0 0.0
    %1776 = vmatpush1.xpose.msra.mxu0 0.0
    %1777 = vmatprep.subr.mxu0 0.0
    %1778 = vmatpush1.xpose.msra.mxu0 0.0
    %1779 = vmatprep.subr.mxu0 0.0
    %1780 = vmatpush1.xpose.msra.mxu0 0.0
    %1781 = vmatprep.subr.mxu0 0.0
    %1782 = vmatpush1.xpose.msra.mxu0 0.0
    %1783 = vmatprep.subr.mxu0 0.0
    %1784 = vmatpush1.xpose.msra.mxu0 0.0
    %1785 = vmatprep.subr.mxu0 0.0
    %1786 = vmatpush1.xpose.msra.mxu0 0.0
    %1787 = vmatprep.subr.mxu0 0.0
    %1788 = vmatpush1.xpose.msra.mxu0 0.0
    %1789 = vmatprep.mubr.f32.mxu0 0.0
    %1790 = vmatmul.mubr.f32.gmra.mrb[0].mxu0 %v1721
    %v1791 = vpop.f32.mrb[0].mxu0
    %v1792 = vadd.f32 0.0, %v1791
    %v1793 = vpop.f32.mrb[0].mxu0
    %1794 = vmatprep.mubr.f32.mxu0 0.0
    %1795 = vmatmul.mubr.f32.gmra.mrb[0].mxu0 %v1723
    %v1796 = vpop.f32.mrb[0].mxu0
    %v1797 = vadd.f32 0.0, %v1796
    %v1798 = vpop.f32.mrb[0].mxu0
    %1799 = vdwg.mxu0
    %v1805 = vcombine.low %v1687, %v1688
    %v1806 = vcombine.low %v1689, %v1690
    %v1808 = vunpack.c.l.s4 1983009808
    %v1809 = vunpack.c.0.s8 %v1808
    %v1810 = vlaneseq
    %v1811 = vshrl.u32 %v1810, 7
    %v1812 = vsub.s32 %v1809, %v1811
    %v1813 = vrot.slane %v1805, %v1812
    %v1815 = vunpack.c.l.s4 1983009808
    %v1816 = vunpack.c.0.s8 %v1815
    %v1817 = vlaneseq
    %v1818 = vshrl.u32 %v1817, 7
    %v1819 = vsub.s32 %v1816, %v1818
    %v1820 = vrot.slane %v1806, %v1819
    %v1821 = vcombine.low %v1813, %v1820
    %v1823 = vunpack.c.l.s4 1983009808
    %v1824 = vunpack.c.0.s8 %v1823
    %v1825 = vlaneseq
    %v1826 = vshrl.u32 %v1825, 7
    %v1827 = vsub.s32 %v1824, %v1826
    %v1828 = vrot.slane %v1691, %v1827
    %v1829 = vsel %vm356, %v1821, 0
    %v1831 = vsel %vm356, %v1828, 0
    %1833 = vmatprep.subr.mxu0 0.0
    %1834 = vmatpush1.xpose.msra.mxu0 %v891
    %1835 = vmatprep.subr.mxu0 0.0
    %1836 = vmatpush1.xpose.msra.mxu0 0.0
    %1837 = vmatprep.subr.mxu0 0.0
    %1838 = vmatpush1.xpose.msra.mxu0 0.0
    %1839 = vmatprep.subr.mxu0 0.0
    %1840 = vmatpush1.xpose.msra.mxu0 0.0
    %1841 = vmatprep.subr.mxu0 0.0
    %1842 = vmatpush1.xpose.msra.mxu0 0.0
    %1843 = vmatprep.subr.mxu0 0.0
    %1844 = vmatpush1.xpose.msra.mxu0 0.0
    %1845 = vmatprep.subr.mxu0 0.0
    %1846 = vmatpush1.xpose.msra.mxu0 0.0
    %1847 = vmatprep.subr.mxu0 0.0
    %1848 = vmatpush1.xpose.msra.mxu0 0.0
    %1849 = vmatprep.subr.mxu0 0.0
    %1850 = vmatpush1.xpose.msra.mxu0 0.0
    %1851 = vmatprep.subr.mxu0 0.0
    %1852 = vmatpush1.xpose.msra.mxu0 0.0
    %1853 = vmatprep.subr.mxu0 0.0
    %1854 = vmatpush1.xpose.msra.mxu0 0.0
    %1855 = vmatprep.subr.mxu0 0.0
    %1856 = vmatpush1.xpose.msra.mxu0 0.0
    %1857 = vmatprep.subr.mxu0 0.0
    %1858 = vmatpush1.xpose.msra.mxu0 0.0
    %1859 = vmatprep.subr.mxu0 0.0
    %1860 = vmatpush1.xpose.msra.mxu0 0.0
    %1861 = vmatprep.subr.mxu0 0.0
    %1862 = vmatpush1.xpose.msra.mxu0 0.0
    %1863 = vmatprep.subr.mxu0 0.0
    %1864 = vmatpush1.xpose.msra.mxu0 0.0
    %1865 = vmatprep.subr.mxu0 0.0
    %1866 = vmatpush1.xpose.msra.mxu0 0.0
    %1867 = vmatprep.subr.mxu0 0.0
    %1868 = vmatpush1.xpose.msra.mxu0 0.0
    %1869 = vmatprep.subr.mxu0 0.0
    %1870 = vmatpush1.xpose.msra.mxu0 0.0
    %1871 = vmatprep.subr.mxu0 0.0
    %1872 = vmatpush1.xpose.msra.mxu0 0.0
    %1873 = vmatprep.subr.mxu0 0.0
    %1874 = vmatpush1.xpose.msra.mxu0 0.0
    %1875 = vmatprep.subr.mxu0 0.0
    %1876 = vmatpush1.xpose.msra.mxu0 0.0
    %1877 = vmatprep.subr.mxu0 0.0
    %1878 = vmatpush1.xpose.msra.mxu0 0.0
    %1879 = vmatprep.subr.mxu0 0.0
    %1880 = vmatpush1.xpose.msra.mxu0 0.0
    %1881 = vmatprep.subr.mxu0 0.0
    %1882 = vmatpush1.xpose.msra.mxu0 0.0
    %1883 = vmatprep.subr.mxu0 0.0
    %1884 = vmatpush1.xpose.msra.mxu0 0.0
    %1885 = vmatprep.subr.mxu0 0.0
    %1886 = vmatpush1.xpose.msra.mxu0 0.0
    %1887 = vmatprep.subr.mxu0 0.0
    %1888 = vmatpush1.xpose.msra.mxu0 0.0
    %1889 = vmatprep.subr.mxu0 0.0
    %1890 = vmatpush1.xpose.msra.mxu0 0.0
    %1891 = vmatprep.subr.mxu0 0.0
    %1892 = vmatpush1.xpose.msra.mxu0 0.0
    %1893 = vmatprep.subr.mxu0 0.0
    %1894 = vmatpush1.xpose.msra.mxu0 0.0
    %1895 = vmatprep.subr.mxu0 0.0
    %1896 = vmatpush1.xpose.msra.mxu0 0.0
    %1897 = vmatprep.mubr.f32.mxu0 0.0
    %1898 = vmatmul.mubr.f32.gmra.mrb[0].mxu0 %v1829
    %v1899 = vpop.f32.mrb[0].mxu0
    %v1900 = vadd.f32 0.0, %v1899
    %v1901 = vpop.f32.mrb[0].mxu0
    %1902 = vmatprep.mubr.f32.mxu0 0.0
    %1903 = vmatmul.mubr.f32.gmra.mrb[0].mxu0 %v1831
    %v1904 = vpop.f32.mrb[0].mxu0
    %v1905 = vadd.f32 0.0, %v1904
    %v1906 = vpop.f32.mrb[0].mxu0
    %1907 = vdwg.mxu0
    %v1908 = vmul.f32 %v1792, 0.35355338
    %v1909 = vmul.f32 %v1797, 0.35355338
    %v1910 = vmul.f32 %v1900, 0.35355338
    %v1911 = vmul.f32 %v1905, 0.35355338
    %v1912 = vsel %vm705, -1e+09, %v1908
    %v1913 = vsel %vm706, -1e+09, %v1909
    %v1914 = vsel %vm707, -1e+09, %v1910
    %v1915 = vsel %vm708, -1e+09, %v1911
    %v1916 = vsel %vm976, %v1912, -inf
    %1917 = vmax.xlane.f32.xlu0 %v1916
    %v1918 = vpop.xlane.xlu0 %1917
    %v1919 = vsel %vm980, %v1913, -inf
    %1920 = vmax.xlane.f32.xlu0 %v1919
    %v1921 = vpop.xlane.xlu0 %1920
    %v1922 = vsel %vm976, %v1914, -inf
    %1923 = vmax.xlane.f32.xlu0 %v1922
    %v1924 = vpop.xlane.xlu0 %1923
    %v1925 = vsel %vm980, %v1915, -inf
    %1926 = vmax.xlane.f32.xlu0 %v1925
    %v1927 = vpop.xlane.xlu0 %1926
    %v1928 = vsub.f32 %v1912, %v1918
    %v1929 = vsub.f32 %v1913, %v1921
    %v1930 = vsub.f32 %v1914, %v1924
    %v1931 = vsub.f32 %v1915, %v1927
    %v1932 = vmul.f32 %v1928, 1.442695
    %v1933 = vpow.pop %v1932
    %v1934 = vmul.f32 %v1929, 1.442695
    %v1935 = vpow.pop %v1934
    %v1936 = vmul.f32 %v1930, 1.442695
    %v1937 = vpow.pop %v1936
    %v1938 = vmul.f32 %v1931, 1.442695
    %v1939 = vpow.pop %v1938
    %v1940 = vsel %vm976, %v1933, 0.0
    %1941 = vadd.xlane.f32.xlu0 %v1940
    %v1942 = vpop.xlane.xlu0 %1941
    %v1943 = vsel %vm980, %v1935, 0.0
    %1944 = vadd.xlane.f32.xlu0 %v1943
    %v1945 = vpop.xlane.xlu0 %1944
    %v1946 = vsel %vm976, %v1937, 0.0
    %1947 = vadd.xlane.f32.xlu0 %v1946
    %v1948 = vpop.xlane.xlu0 %1947
    %v1949 = vsel %vm980, %v1939, 0.0
    %1950 = vadd.xlane.f32.xlu0 %v1949
    %v1951 = vpop.xlane.xlu0 %1950
    %v1952 = vrcp.pop %v1942
    %v1953 = vmul.f32 %v1933, %v1952
    %v1954 = vrcp.pop %v1945
    %v1955 = vmul.f32 %v1935, %v1954
    %v1956 = vrcp.pop %v1948
    %v1957 = vmul.f32 %v1937, %v1956
    %v1958 = vrcp.pop %v1951
    %v1959 = vmul.f32 %v1939, %v1958
    %v1960 = vmul.f32 %v672, %v1659
    %v1961 = vmul.f32 %v677, %v1659
    %v1963 = vsel %vm976, %v1953, 0
    %v1966 = vsel %vm976, %v1955, 0
    %1968 = vmatprep.subr.mxu0 0.0
    %1969 = vmatpush1.msra.mxu0 %v1960
    %1970 = vmatprep.subr.mxu0 0.0
    %1971 = vmatpush1.msra.mxu0 0.0
    %1972 = vmatprep.subr.mxu0 0.0
    %1973 = vmatpush1.msra.mxu0 0.0
    %1974 = vmatprep.subr.mxu0 0.0
    %1975 = vmatpush1.msra.mxu0 0.0
    %1976 = vmatprep.subr.mxu0 0.0
    %1977 = vmatpush1.msra.mxu0 0.0
    %1978 = vmatprep.subr.mxu0 0.0
    %1979 = vmatpush1.msra.mxu0 0.0
    %1980 = vmatprep.subr.mxu0 0.0
    %1981 = vmatpush1.msra.mxu0 0.0
    %1982 = vmatprep.subr.mxu0 0.0
    %1983 = vmatpush1.msra.mxu0 0.0
    %1984 = vmatprep.subr.mxu0 0.0
    %1985 = vmatpush1.msra.mxu0 0.0
    %1986 = vmatprep.subr.mxu0 0.0
    %1987 = vmatpush1.msra.mxu0 0.0
    %1988 = vmatprep.subr.mxu0 0.0
    %1989 = vmatpush1.msra.mxu0 0.0
    %1990 = vmatprep.subr.mxu0 0.0
    %1991 = vmatpush1.msra.mxu0 0.0
    %1992 = vmatprep.subr.mxu0 0.0
    %1993 = vmatpush1.msra.mxu0 0.0
    %1994 = vmatprep.subr.mxu0 0.0
    %1995 = vmatpush1.msra.mxu0 0.0
    %1996 = vmatprep.subr.mxu0 0.0
    %1997 = vmatpush1.msra.mxu0 0.0
    %1998 = vmatprep.subr.mxu0 0.0
    %1999 = vmatpush1.msra.mxu0 0.0
    %2000 = vmatprep.subr.mxu0 0.0
    %2001 = vmatpush1.msra.mxu0 0.0
    %2002 = vmatprep.subr.mxu0 0.0
    %2003 = vmatpush1.msra.mxu0 0.0
    %2004 = vmatprep.subr.mxu0 0.0
    %2005 = vmatpush1.msra.mxu0 0.0
    %2006 = vmatprep.subr.mxu0 0.0
    %2007 = vmatpush1.msra.mxu0 0.0
    %2008 = vmatprep.subr.mxu0 0.0
    %2009 = vmatpush1.msra.mxu0 0.0
    %2010 = vmatprep.subr.mxu0 0.0
    %2011 = vmatpush1.msra.mxu0 0.0
    %2012 = vmatprep.subr.mxu0 0.0
    %2013 = vmatpush1.msra.mxu0 0.0
    %2014 = vmatprep.subr.mxu0 0.0
    %2015 = vmatpush1.msra.mxu0 0.0
    %2016 = vmatprep.subr.mxu0 0.0
    %2017 = vmatpush1.msra.mxu0 0.0
    %2018 = vmatprep.subr.mxu0 0.0
    %2019 = vmatpush1.msra.mxu0 0.0
    %2020 = vmatprep.subr.mxu0 0.0
    %2021 = vmatpush1.msra.mxu0 0.0
    %2022 = vmatprep.subr.mxu0 0.0
    %2023 = vmatpush1.msra.mxu0 0.0
    %2024 = vmatprep.subr.mxu0 0.0
    %2025 = vmatpush1.msra.mxu0 0.0
    %2026 = vmatprep.subr.mxu0 0.0
    %2027 = vmatpush1.msra.mxu0 0.0
    %2028 = vmatprep.subr.mxu0 0.0
    %2029 = vmatpush1.msra.mxu0 0.0
    %2030 = vmatprep.subr.mxu0 0.0
    %2031 = vmatpush1.msra.mxu0 0.0
    %2032 = vmatprep.mubr.f32.mxu0 0.0
    %2033 = vmatmul.mubr.f32.gmra.mrb[0].mxu0 %v1963
    %v2034 = vpop.f32.mrb[0].mxu0
    %v2035 = vadd.f32 0.0, %v2034
    %v2036 = vpop.f32.mrb[0].mxu0
    %2037 = vmatprep.mubr.f32.mxu0 0.0
    %2038 = vmatmul.mubr.f32.gmra.mrb[0].mxu0 %v1966
    %v2039 = vpop.f32.mrb[0].mxu0
    %v2040 = vadd.f32 0.0, %v2039
    %v2041 = vpop.f32.mrb[0].mxu0
    %2042 = vdwg.mxu0
    %v2044 = vsel %vm976, %v1957, 0
    %v2047 = vsel %vm976, %v1959, 0
    %2049 = vmatprep.subr.mxu0 0.0
    %2050 = vmatpush1.msra.mxu0 %v1961
    %2051 = vmatprep.subr.mxu0 0.0
    %2052 = vmatpush1.msra.mxu0 0.0
    %2053 = vmatprep.subr.mxu0 0.0
    %2054 = vmatpush1.msra.mxu0 0.0
    %2055 = vmatprep.subr.mxu0 0.0
    %2056 = vmatpush1.msra.mxu0 0.0
    %2057 = vmatprep.subr.mxu0 0.0
    %2058 = vmatpush1.msra.mxu0 0.0
    %2059 = vmatprep.subr.mxu0 0.0
    %2060 = vmatpush1.msra.mxu0 0.0
    %2061 = vmatprep.subr.mxu0 0.0
    %2062 = vmatpush1.msra.mxu0 0.0
    %2063 = vmatprep.subr.mxu0 0.0
    %2064 = vmatpush1.msra.mxu0 0.0
    %2065 = vmatprep.subr.mxu0 0.0
    %2066 = vmatpush1.msra.mxu0 0.0
    %2067 = vmatprep.subr.mxu0 0.0
    %2068 = vmatpush1.msra.mxu0 0.0
    %2069 = vmatprep.subr.mxu0 0.0
    %2070 = vmatpush1.msra.mxu0 0.0
    %2071 = vmatprep.subr.mxu0 0.0
    %2072 = vmatpush1.msra.mxu0 0.0
    %2073 = vmatprep.subr.mxu0 0.0
    %2074 = vmatpush1.msra.mxu0 0.0
    %2075 = vmatprep.subr.mxu0 0.0
    %2076 = vmatpush1.msra.mxu0 0.0
    %2077 = vmatprep.subr.mxu0 0.0
    %2078 = vmatpush1.msra.mxu0 0.0
    %2079 = vmatprep.subr.mxu0 0.0
    %2080 = vmatpush1.msra.mxu0 0.0
    %2081 = vmatprep.subr.mxu0 0.0
    %2082 = vmatpush1.msra.mxu0 0.0
    %2083 = vmatprep.subr.mxu0 0.0
    %2084 = vmatpush1.msra.mxu0 0.0
    %2085 = vmatprep.subr.mxu0 0.0
    %2086 = vmatpush1.msra.mxu0 0.0
    %2087 = vmatprep.subr.mxu0 0.0
    %2088 = vmatpush1.msra.mxu0 0.0
    %2089 = vmatprep.subr.mxu0 0.0
    %2090 = vmatpush1.msra.mxu0 0.0
    %2091 = vmatprep.subr.mxu0 0.0
    %2092 = vmatpush1.msra.mxu0 0.0
    %2093 = vmatprep.subr.mxu0 0.0
    %2094 = vmatpush1.msra.mxu0 0.0
    %2095 = vmatprep.subr.mxu0 0.0
    %2096 = vmatpush1.msra.mxu0 0.0
    %2097 = vmatprep.subr.mxu0 0.0
    %2098 = vmatpush1.msra.mxu0 0.0
    %2099 = vmatprep.subr.mxu0 0.0
    %2100 = vmatpush1.msra.mxu0 0.0
    %2101 = vmatprep.subr.mxu0 0.0
    %2102 = vmatpush1.msra.mxu0 0.0
    %2103 = vmatprep.subr.mxu0 0.0
    %2104 = vmatpush1.msra.mxu0 0.0
    %2105 = vmatprep.subr.mxu0 0.0
    %2106 = vmatpush1.msra.mxu0 0.0
    %2107 = vmatprep.subr.mxu0 0.0
    %2108 = vmatpush1.msra.mxu0 0.0
    %2109 = vmatprep.subr.mxu0 0.0
    %2110 = vmatpush1.msra.mxu0 0.0
    %2111 = vmatprep.subr.mxu0 0.0
    %2112 = vmatpush1.msra.mxu0 0.0
    %2113 = vmatprep.mubr.f32.mxu0 0.0
    %2114 = vmatmul.mubr.f32.gmra.mrb[0].mxu0 %v2044
    %v2115 = vpop.f32.mrb[0].mxu0
    %v2116 = vadd.f32 0.0, %v2115
    %v2117 = vpop.f32.mrb[0].mxu0
    %2118 = vmatprep.mubr.f32.mxu0 0.0
    %2119 = vmatmul.mubr.f32.gmra.mrb[0].mxu0 %v2047
    %v2120 = vpop.f32.mrb[0].mxu0
    %v2121 = vadd.f32 0.0, %v2120
    %v2122 = vpop.f32.mrb[0].mxu0
    %2123 = vdwg.mxu0
    %v2124 = vadd.f32 %v1566, %v2035
    %v2125 = vadd.f32 %v1571, %v2040
    %v2126 = vadd.f32 %v1647, %v2116
    %v2127 = vadd.f32 %v1652, %v2121
    %vm2128 = vcmp.ge.s32.totalorder %v682, 24
    %vm2129 = vcmp.lt.s32.totalorder %v682, 32
    %vm2130 = vmand %vm2128, %vm2129
    %v2131 = vsel %vm2130, 1, 0
    %v2132 = vcvt.s32.f32 %v2131
    %v2134 = vcombine.high %v2132, %v2132
    %v2136 = vunpack.c.l.s4 1983009808
    %v2137 = vunpack.c.0.s8 %v2136
    %v2138 = vlaneseq
    %v2139 = vshrl.u32 %v2138, 7
    %v2140 = vsub.s32 %v2137, %v2139
    %v2141 = vrot.slane %v2132, %v2140
    %v2143 = vunpack.c.l.s4 1983009808
    %v2144 = vunpack.c.0.s8 %v2143
    %v2145 = vlaneseq
    %v2146 = vshrl.u32 %v2145, 7
    %v2147 = vsub.s32 %v2144, %v2146
    %v2148 = vrot.slane %v2134, %v2147
    %v2149 = vcombine.high %v2141, %v2141
    %v2150 = vcombine.high %v2148, %v2148
    %v2155 = vmul.f32 %v453, %v2141
    %v2156 = vmul.f32 %v461, %v2149
    %v2157 = vmul.f32 %v460, %v2148
    %v2158 = vmul.f32 %v462, %v2150
    %v2159 = vmul.f32 %v470, %v2141
    %v2160 = vmul.f32 %v478, %v2141
    %v2161 = vmul.f32 %v477, %v2149
    %v2162 = vmul.f32 %v479, %v2148
    %v2163 = vmul.f32 %v486, %v2150
    %v2164 = vmul.f32 %v487, %v2141
    %v2170 = vcombine.low %v2155, %v2156
    %v2171 = vcombine.low %v2157, %v2158
    %v2173 = vunpack.c.l.s4 1983009808
    %v2174 = vunpack.c.0.s8 %v2173
    %v2175 = vlaneseq
    %v2176 = vshrl.u32 %v2175, 7
    %v2177 = vsub.s32 %v2174, %v2176
    %v2178 = vrot.slane %v2170, %v2177
    %v2180 = vunpack.c.l.s4 1983009808
    %v2181 = vunpack.c.0.s8 %v2180
    %v2182 = vlaneseq
    %v2183 = vshrl.u32 %v2182, 7
    %v2184 = vsub.s32 %v2181, %v2183
    %v2185 = vrot.slane %v2171, %v2184
    %v2186 = vcombine.low %v2178, %v2185
    %v2188 = vunpack.c.l.s4 1983009808
    %v2189 = vunpack.c.0.s8 %v2188
    %v2190 = vlaneseq
    %v2191 = vshrl.u32 %v2190, 7
    %v2192 = vsub.s32 %v2189, %v2191
    %v2193 = vrot.slane %v2159, %v2192
    %v2194 = vsel %vm356, %v2186, 0
    %v2196 = vsel %vm356, %v2193, 0
    %2198 = vmatprep.subr.mxu0 0.0
    %2199 = vmatpush1.xpose.msra.mxu0 %v780
    %2200 = vmatprep.subr.mxu0 0.0
    %2201 = vmatpush1.xpose.msra.mxu0 0.0
    %2202 = vmatprep.subr.mxu0 0.0
    %2203 = vmatpush1.xpose.msra.mxu0 0.0
    %2204 = vmatprep.subr.mxu0 0.0
    %2205 = vmatpush1.xpose.msra.mxu0 0.0
    %2206 = vmatprep.subr.mxu0 0.0
    %2207 = vmatpush1.xpose.msra.mxu0 0.0
    %2208 = vmatprep.subr.mxu0 0.0
    %2209 = vmatpush1.xpose.msra.mxu0 0.0
    %2210 = vmatprep.subr.mxu0 0.0
    %2211 = vmatpush1.xpose.msra.mxu0 0.0
    %2212 = vmatprep.subr.mxu0 0.0
    %2213 = vmatpush1.xpose.msra.mxu0 0.0
    %2214 = vmatprep.subr.mxu0 0.0
    %2215 = vmatpush1.xpose.msra.mxu0 0.0
    %2216 = vmatprep.subr.mxu0 0.0
    %2217 = vmatpush1.xpose.msra.mxu0 0.0
    %2218 = vmatprep.subr.mxu0 0.0
    %2219 = vmatpush1.xpose.msra.mxu0 0.0
    %2220 = vmatprep.subr.mxu0 0.0
    %2221 = vmatpush1.xpose.msra.mxu0 0.0
    %2222 = vmatprep.subr.mxu0 0.0
    %2223 = vmatpush1.xpose.msra.mxu0 0.0
    %2224 = vmatprep.subr.mxu0 0.0
    %2225 = vmatpush1.xpose.msra.mxu0 0.0
    %2226 = vmatprep.subr.mxu0 0.0
    %2227 = vmatpush1.xpose.msra.mxu0 0.0
    %2228 = vmatprep.subr.mxu0 0.0
    %2229 = vmatpush1.xpose.msra.mxu0 0.0
    %2230 = vmatprep.subr.mxu0 0.0
    %2231 = vmatpush1.xpose.msra.mxu0 0.0
    %2232 = vmatprep.subr.mxu0 0.0
    %2233 = vmatpush1.xpose.msra.mxu0 0.0
    %2234 = vmatprep.subr.mxu0 0.0
    %2235 = vmatpush1.xpose.msra.mxu0 0.0
    %2236 = vmatprep.subr.mxu0 0.0
    %2237 = vmatpush1.xpose.msra.mxu0 0.0
    %2238 = vmatprep.subr.mxu0 0.0
    %2239 = vmatpush1.xpose.msra.mxu0 0.0
    %2240 = vmatprep.subr.mxu0 0.0
    %2241 = vmatpush1.xpose.msra.mxu0 0.0
    %2242 = vmatprep.subr.mxu0 0.0
    %2243 = vmatpush1.xpose.msra.mxu0 0.0
    %2244 = vmatprep.subr.mxu0 0.0
    %2245 = vmatpush1.xpose.msra.mxu0 0.0
    %2246 = vmatprep.subr.mxu0 0.0
    %2247 = vmatpush1.xpose.msra.mxu0 0.0
    %2248 = vmatprep.subr.mxu0 0.0
    %2249 = vmatpush1.xpose.msra.mxu0 0.0
    %2250 = vmatprep.subr.mxu0 0.0
    %2251 = vmatpush1.xpose.msra.mxu0 0.0
    %2252 = vmatprep.subr.mxu0 0.0
    %2253 = vmatpush1.xpose.msra.mxu0 0.0
    %2254 = vmatprep.subr.mxu0 0.0
    %2255 = vmatpush1.xpose.msra.mxu0 0.0
    %2256 = vmatprep.subr.mxu0 0.0
    %2257 = vmatpush1.xpose.msra.mxu0 0.0
    %2258 = vmatprep.subr.mxu0 0.0
    %2259 = vmatpush1.xpose.msra.mxu0 0.0
    %2260 = vmatprep.subr.mxu0 0.0
    %2261 = vmatpush1.xpose.msra.mxu0 0.0
    %2262 = vmatprep.mubr.f32.mxu0 0.0
    %2263 = vmatmul.mubr.f32.gmra.mrb[0].mxu0 %v2194
    %v2264 = vpop.f32.mrb[0].mxu0
    %v2265 = vadd.f32 0.0, %v2264
    %v2266 = vpop.f32.mrb[0].mxu0
    %2267 = vmatprep.mubr.f32.mxu0 0.0
    %2268 = vmatmul.mubr.f32.gmra.mrb[0].mxu0 %v2196
    %v2269 = vpop.f32.mrb[0].mxu0
    %v2270 = vadd.f32 0.0, %v2269
    %v2271 = vpop.f32.mrb[0].mxu0
    %2272 = vdwg.mxu0
    %v2278 = vcombine.low %v2160, %v2161
    %v2279 = vcombine.low %v2162, %v2163
    %v2281 = vunpack.c.l.s4 1983009808
    %v2282 = vunpack.c.0.s8 %v2281
    %v2283 = vlaneseq
    %v2284 = vshrl.u32 %v2283, 7
    %v2285 = vsub.s32 %v2282, %v2284
    %v2286 = vrot.slane %v2278, %v2285
    %v2288 = vunpack.c.l.s4 1983009808
    %v2289 = vunpack.c.0.s8 %v2288
    %v2290 = vlaneseq
    %v2291 = vshrl.u32 %v2290, 7
    %v2292 = vsub.s32 %v2289, %v2291
    %v2293 = vrot.slane %v2279, %v2292
    %v2294 = vcombine.low %v2286, %v2293
    %v2296 = vunpack.c.l.s4 1983009808
    %v2297 = vunpack.c.0.s8 %v2296
    %v2298 = vlaneseq
    %v2299 = vshrl.u32 %v2298, 7
    %v2300 = vsub.s32 %v2297, %v2299
    %v2301 = vrot.slane %v2164, %v2300
    %v2302 = vsel %vm356, %v2294, 0
    %v2304 = vsel %vm356, %v2301, 0
    %2306 = vmatprep.subr.mxu0 0.0
    %2307 = vmatpush1.xpose.msra.mxu0 %v891
    %2308 = vmatprep.subr.mxu0 0.0
    %2309 = vmatpush1.xpose.msra.mxu0 0.0
    %2310 = vmatprep.subr.mxu0 0.0
    %2311 = vmatpush1.xpose.msra.mxu0 0.0
    %2312 = vmatprep.subr.mxu0 0.0
    %2313 = vmatpush1.xpose.msra.mxu0 0.0
    %2314 = vmatprep.subr.mxu0 0.0
    %2315 = vmatpush1.xpose.msra.mxu0 0.0
    %2316 = vmatprep.subr.mxu0 0.0
    %2317 = vmatpush1.xpose.msra.mxu0 0.0
    %2318 = vmatprep.subr.mxu0 0.0
    %2319 = vmatpush1.xpose.msra.mxu0 0.0
    %2320 = vmatprep.subr.mxu0 0.0
    %2321 = vmatpush1.xpose.msra.mxu0 0.0
    %2322 = vmatprep.subr.mxu0 0.0
    %2323 = vmatpush1.xpose.msra.mxu0 0.0
    %2324 = vmatprep.subr.mxu0 0.0
    %2325 = vmatpush1.xpose.msra.mxu0 0.0
    %2326 = vmatprep.subr.mxu0 0.0
    %2327 = vmatpush1.xpose.msra.mxu0 0.0
    %2328 = vmatprep.subr.mxu0 0.0
    %2329 = vmatpush1.xpose.msra.mxu0 0.0
    %2330 = vmatprep.subr.mxu0 0.0
    %2331 = vmatpush1.xpose.msra.mxu0 0.0
    %2332 = vmatprep.subr.mxu0 0.0
    %2333 = vmatpush1.xpose.msra.mxu0 0.0
    %2334 = vmatprep.subr.mxu0 0.0
    %2335 = vmatpush1.xpose.msra.mxu0 0.0
    %2336 = vmatprep.subr.mxu0 0.0
    %2337 = vmatpush1.xpose.msra.mxu0 0.0
    %2338 = vmatprep.subr.mxu0 0.0
    %2339 = vmatpush1.xpose.msra.mxu0 0.0
    %2340 = vmatprep.subr.mxu0 0.0
    %2341 = vmatpush1.xpose.msra.mxu0 0.0
    %2342 = vmatprep.subr.mxu0 0.0
    %2343 = vmatpush1.xpose.msra.mxu0 0.0
    %2344 = vmatprep.subr.mxu0 0.0
    %2345 = vmatpush1.xpose.msra.mxu0 0.0
    %2346 = vmatprep.subr.mxu0 0.0
    %2347 = vmatpush1.xpose.msra.mxu0 0.0
    %2348 = vmatprep.subr.mxu0 0.0
    %2349 = vmatpush1.xpose.msra.mxu0 0.0
    %2350 = vmatprep.subr.mxu0 0.0
    %2351 = vmatpush1.xpose.msra.mxu0 0.0
    %2352 = vmatprep.subr.mxu0 0.0
    %2353 = vmatpush1.xpose.msra.mxu0 0.0
    %2354 = vmatprep.subr.mxu0 0.0
    %2355 = vmatpush1.xpose.msra.mxu0 0.0
    %2356 = vmatprep.subr.mxu0 0.0
    %2357 = vmatpush1.xpose.msra.mxu0 0.0
    %2358 = vmatprep.subr.mxu0 0.0
    %2359 = vmatpush1.xpose.msra.mxu0 0.0
    %2360 = vmatprep.subr.mxu0 0.0
    %2361 = vmatpush1.xpose.msra.mxu0 0.0
    %2362 = vmatprep.subr.mxu0 0.0
    %2363 = vmatpush1.xpose.msra.mxu0 0.0
    %2364 = vmatprep.subr.mxu0 0.0
    %2365 = vmatpush1.xpose.msra.mxu0 0.0
    %2366 = vmatprep.subr.mxu0 0.0
    %2367 = vmatpush1.xpose.msra.mxu0 0.0
    %2368 = vmatprep.subr.mxu0 0.0
    %2369 = vmatpush1.xpose.msra.mxu0 0.0
    %2370 = vmatprep.mubr.f32.mxu0 0.0
    %2371 = vmatmul.mubr.f32.gmra.mrb[0].mxu0 %v2302
    %v2372 = vpop.f32.mrb[0].mxu0
    %v2373 = vadd.f32 0.0, %v2372
    %v2374 = vpop.f32.mrb[0].mxu0
    %2375 = vmatprep.mubr.f32.mxu0 0.0
    %2376 = vmatmul.mubr.f32.gmra.mrb[0].mxu0 %v2304
    %v2377 = vpop.f32.mrb[0].mxu0
    %v2378 = vadd.f32 0.0, %v2377
    %v2379 = vpop.f32.mrb[0].mxu0
    %2380 = vdwg.mxu0
    %v2381 = vmul.f32 %v2265, 0.35355338
    %v2382 = vmul.f32 %v2270, 0.35355338
    %v2383 = vmul.f32 %v2373, 0.35355338
    %v2384 = vmul.f32 %v2378, 0.35355338
    %v2385 = vsel %vm705, -1e+09, %v2381
    %v2386 = vsel %vm706, -1e+09, %v2382
    %v2387 = vsel %vm707, -1e+09, %v2383
    %v2388 = vsel %vm708, -1e+09, %v2384
    %v2389 = vsel %vm976, %v2385, -inf
    %2390 = vmax.xlane.f32.xlu0 %v2389
    %v2391 = vpop.xlane.xlu0 %2390
    %v2392 = vsel %vm980, %v2386, -inf
    %2393 = vmax.xlane.f32.xlu0 %v2392
    %v2394 = vpop.xlane.xlu0 %2393
    %v2395 = vsel %vm976, %v2387, -inf
    %2396 = vmax.xlane.f32.xlu0 %v2395
    %v2397 = vpop.xlane.xlu0 %2396
    %v2398 = vsel %vm980, %v2388, -inf
    %2399 = vmax.xlane.f32.xlu0 %v2398
    %v2400 = vpop.xlane.xlu0 %2399
    %v2401 = vsub.f32 %v2385, %v2391
    %v2402 = vsub.f32 %v2386, %v2394
    %v2403 = vsub.f32 %v2387, %v2397
    %v2404 = vsub.f32 %v2388, %v2400
    %v2405 = vmul.f32 %v2401, 1.442695
    %v2406 = vpow.pop %v2405
    %v2407 = vmul.f32 %v2402, 1.442695
    %v2408 = vpow.pop %v2407
    %v2409 = vmul.f32 %v2403, 1.442695
    %v2410 = vpow.pop %v2409
    %v2411 = vmul.f32 %v2404, 1.442695
    %v2412 = vpow.pop %v2411
    %v2413 = vsel %vm976, %v2406, 0.0
    %2414 = vadd.xlane.f32.xlu0 %v2413
    %v2415 = vpop.xlane.xlu0 %2414
    %v2416 = vsel %vm980, %v2408, 0.0
    %2417 = vadd.xlane.f32.xlu0 %v2416
    %v2418 = vpop.xlane.xlu0 %2417
    %v2419 = vsel %vm976, %v2410, 0.0
    %2420 = vadd.xlane.f32.xlu0 %v2419
    %v2421 = vpop.xlane.xlu0 %2420
    %v2422 = vsel %vm980, %v2412, 0.0
    %2423 = vadd.xlane.f32.xlu0 %v2422
    %v2424 = vpop.xlane.xlu0 %2423
    %v2425 = vrcp.pop %v2415
    %v2426 = vmul.f32 %v2406, %v2425
    %v2427 = vrcp.pop %v2418
    %v2428 = vmul.f32 %v2408, %v2427
    %v2429 = vrcp.pop %v2421
    %v2430 = vmul.f32 %v2410, %v2429
    %v2431 = vrcp.pop %v2424
    %v2432 = vmul.f32 %v2412, %v2431
    %v2433 = vmul.f32 %v672, %v2132
    %v2434 = vmul.f32 %v677, %v2132
    %v2436 = vsel %vm976, %v2426, 0
    %v2439 = vsel %vm976, %v2428, 0
    %2441 = vmatprep.subr.mxu0 0.0
    %2442 = vmatpush1.msra.mxu0 %v2433
    %2443 = vmatprep.subr.mxu0 0.0
    %2444 = vmatpush1.msra.mxu0 0.0
    %2445 = vmatprep.subr.mxu0 0.0
    %2446 = vmatpush1.msra.mxu0 0.0
    %2447 = vmatprep.subr.mxu0 0.0
    %2448 = vmatpush1.msra.mxu0 0.0
    %2449 = vmatprep.subr.mxu0 0.0
    %2450 = vmatpush1.msra.mxu0 0.0
    %2451 = vmatprep.subr.mxu0 0.0
    %2452 = vmatpush1.msra.mxu0 0.0
    %2453 = vmatprep.subr.mxu0 0.0
    %2454 = vmatpush1.msra.mxu0 0.0
    %2455 = vmatprep.subr.mxu0 0.0
    %2456 = vmatpush1.msra.mxu0 0.0
    %2457 = vmatprep.subr.mxu0 0.0
    %2458 = vmatpush1.msra.mxu0 0.0
    %2459 = vmatprep.subr.mxu0 0.0
    %2460 = vmatpush1.msra.mxu0 0.0
    %2461 = vmatprep.subr.mxu0 0.0
    %2462 = vmatpush1.msra.mxu0 0.0
    %2463 = vmatprep.subr.mxu0 0.0
    %2464 = vmatpush1.msra.mxu0 0.0
    %2465 = vmatprep.subr.mxu0 0.0
    %2466 = vmatpush1.msra.mxu0 0.0
    %2467 = vmatprep.subr.mxu0 0.0
    %2468 = vmatpush1.msra.mxu0 0.0
    %2469 = vmatprep.subr.mxu0 0.0
    %2470 = vmatpush1.msra.mxu0 0.0
    %2471 = vmatprep.subr.mxu0 0.0
    %2472 = vmatpush1.msra.mxu0 0.0
    %2473 = vmatprep.subr.mxu0 0.0
    %2474 = vmatpush1.msra.mxu0 0.0
    %2475 = vmatprep.subr.mxu0 0.0
    %2476 = vmatpush1.msra.mxu0 0.0
    %2477 = vmatprep.subr.mxu0 0.0
    %2478 = vmatpush1.msra.mxu0 0.0
    %2479 = vmatprep.subr.mxu0 0.0
    %2480 = vmatpush1.msra.mxu0 0.0
    %2481 = vmatprep.subr.mxu0 0.0
    %2482 = vmatpush1.msra.mxu0 0.0
    %2483 = vmatprep.subr.mxu0 0.0
    %2484 = vmatpush1.msra.mxu0 0.0
    %2485 = vmatprep.subr.mxu0 0.0
    %2486 = vmatpush1.msra.mxu0 0.0
    %2487 = vmatprep.subr.mxu0 0.0
    %2488 = vmatpush1.msra.mxu0 0.0
    %2489 = vmatprep.subr.mxu0 0.0
    %2490 = vmatpush1.msra.mxu0 0.0
    %2491 = vmatprep.subr.mxu0 0.0
    %2492 = vmatpush1.msra.mxu0 0.0
    %2493 = vmatprep.subr.mxu0 0.0
    %2494 = vmatpush1.msra.mxu0 0.0
    %2495 = vmatprep.subr.mxu0 0.0
    %2496 = vmatpush1.msra.mxu0 0.0
    %2497 = vmatprep.subr.mxu0 0.0
    %2498 = vmatpush1.msra.mxu0 0.0
    %2499 = vmatprep.subr.mxu0 0.0
    %2500 = vmatpush1.msra.mxu0 0.0
    %2501 = vmatprep.subr.mxu0 0.0
    %2502 = vmatpush1.msra.mxu0 0.0
    %2503 = vmatprep.subr.mxu0 0.0
    %2504 = vmatpush1.msra.mxu0 0.0
    %2505 = vmatprep.mubr.f32.mxu0 0.0
    %2506 = vmatmul.mubr.f32.gmra.mrb[0].mxu0 %v2436
    %v2507 = vpop.f32.mrb[0].mxu0
    %v2508 = vadd.f32 0.0, %v2507
    %v2509 = vpop.f32.mrb[0].mxu0
    %2510 = vmatprep.mubr.f32.mxu0 0.0
    %2511 = vmatmul.mubr.f32.gmra.mrb[0].mxu0 %v2439
    %v2512 = vpop.f32.mrb[0].mxu0
    %v2513 = vadd.f32 0.0, %v2512
    %v2514 = vpop.f32.mrb[0].mxu0
    %2515 = vdwg.mxu0
    %v2517 = vsel %vm976, %v2430, 0
    %v2520 = vsel %vm976, %v2432, 0
    %2522 = vmatprep.subr.mxu0 0.0
    %2523 = vmatpush1.msra.mxu0 %v2434
    %2524 = vmatprep.subr.mxu0 0.0
    %2525 = vmatpush1.msra.mxu0 0.0
    %2526 = vmatprep.subr.mxu0 0.0
    %2527 = vmatpush1.msra.mxu0 0.0
    %2528 = vmatprep.subr.mxu0 0.0
    %2529 = vmatpush1.msra.mxu0 0.0
    %2530 = vmatprep.subr.mxu0 0.0
    %2531 = vmatpush1.msra.mxu0 0.0
    %2532 = vmatprep.subr.mxu0 0.0
    %2533 = vmatpush1.msra.mxu0 0.0
    %2534 = vmatprep.subr.mxu0 0.0
    %2535 = vmatpush1.msra.mxu0 0.0
    %2536 = vmatprep.subr.mxu0 0.0
    %2537 = vmatpush1.msra.mxu0 0.0
    %2538 = vmatprep.subr.mxu0 0.0
    %2539 = vmatpush1.msra.mxu0 0.0
    %2540 = vmatprep.subr.mxu0 0.0
    %2541 = vmatpush1.msra.mxu0 0.0
    %2542 = vmatprep.subr.mxu0 0.0
    %2543 = vmatpush1.msra.mxu0 0.0
    %2544 = vmatprep.subr.mxu0 0.0
    %2545 = vmatpush1.msra.mxu0 0.0
    %2546 = vmatprep.subr.mxu0 0.0
    %2547 = vmatpush1.msra.mxu0 0.0
    %2548 = vmatprep.subr.mxu0 0.0
    %2549 = vmatpush1.msra.mxu0 0.0
    %2550 = vmatprep.subr.mxu0 0.0
    %2551 = vmatpush1.msra.mxu0 0.0
    %2552 = vmatprep.subr.mxu0 0.0
    %2553 = vmatpush1.msra.mxu0 0.0
    %2554 = vmatprep.subr.mxu0 0.0
    %2555 = vmatpush1.msra.mxu0 0.0
    %2556 = vmatprep.subr.mxu0 0.0
    %2557 = vmatpush1.msra.mxu0 0.0
    %2558 = vmatprep.subr.mxu0 0.0
    %2559 = vmatpush1.msra.mxu0 0.0
    %2560 = vmatprep.subr.mxu0 0.0
    %2561 = vmatpush1.msra.mxu0 0.0
    %2562 = vmatprep.subr.mxu0 0.0
    %2563 = vmatpush1.msra.mxu0 0.0
    %2564 = vmatprep.subr.mxu0 0.0
    %2565 = vmatpush1.msra.mxu0 0.0
    %2566 = vmatprep.subr.mxu0 0.0
    %2567 = vmatpush1.msra.mxu0 0.0
    %2568 = vmatprep.subr.mxu0 0.0
    %2569 = vmatpush1.msra.mxu0 0.0
    %2570 = vmatprep.subr.mxu0 0.0
    %2571 = vmatpush1.msra.mxu0 0.0
    %2572 = vmatprep.subr.mxu0 0.0
    %2573 = vmatpush1.msra.mxu0 0.0
    %2574 = vmatprep.subr.mxu0 0.0
    %2575 = vmatpush1.msra.mxu0 0.0
    %2576 = vmatprep.subr.mxu0 0.0
    %2577 = vmatpush1.msra.mxu0 0.0
    %2578 = vmatprep.subr.mxu0 0.0
    %2579 = vmatpush1.msra.mxu0 0.0
    %2580 = vmatprep.subr.mxu0 0.0
    %2581 = vmatpush1.msra.mxu0 0.0
    %2582 = vmatprep.subr.mxu0 0.0
    %2583 = vmatpush1.msra.mxu0 0.0
    %2584 = vmatprep.subr.mxu0 0.0
    %2585 = vmatpush1.msra.mxu0 0.0
    %2586 = vmatprep.mubr.f32.mxu0 0.0
    %2587 = vmatmul.mubr.f32.gmra.mrb[0].mxu0 %v2517
    %v2588 = vpop.f32.mrb[0].mxu0
    %v2589 = vadd.f32 0.0, %v2588
    %v2590 = vpop.f32.mrb[0].mxu0
    %2591 = vmatprep.mubr.f32.mxu0 0.0
    %2592 = vmatmul.mubr.f32.gmra.mrb[0].mxu0 %v2520
    %v2593 = vpop.f32.mrb[0].mxu0
    %v2594 = vadd.f32 0.0, %v2593
    %v2595 = vpop.f32.mrb[0].mxu0
    %2596 = vdwg.mxu0
    %v2597 = vadd.f32 %v2124, %v2508
    %v2598 = vadd.f32 %v2125, %v2513
    %v2599 = vadd.f32 %v2126, %v2589
    %v2600 = vadd.f32 %v2127, %v2594
    %vm2601 = vcmp.ge.s32.totalorder %v682, 32
    %vm2602 = vcmp.lt.s32.totalorder %v682, 40
    %vm2603 = vmand %vm2601, %vm2602
    %v2604 = vsel %vm2603, 1, 0
    %v2605 = vcvt.s32.f32 %v2604
    %v2607 = vcombine.high %v2605, %v2605
    %v2609 = vunpack.c.l.s4 1983009808
    %v2610 = vunpack.c.0.s8 %v2609
    %v2611 = vlaneseq
    %v2612 = vshrl.u32 %v2611, 7
    %v2613 = vsub.s32 %v2610, %v2612
    %v2614 = vrot.slane %v2605, %v2613
    %v2616 = vunpack.c.l.s4 1983009808
    %v2617 = vunpack.c.0.s8 %v2616
    %v2618 = vlaneseq
    %v2619 = vshrl.u32 %v2618, 7
    %v2620 = vsub.s32 %v2617, %v2619
    %v2621 = vrot.slane %v2607, %v2620
    %v2622 = vcombine.high %v2614, %v2614
    %v2623 = vcombine.high %v2621, %v2621
    %v2628 = vmul.f32 %v453, %v2614
    %v2629 = vmul.f32 %v461, %v2622
    %v2630 = vmul.f32 %v460, %v2621
    %v2631 = vmul.f32 %v462, %v2623
    %v2632 = vmul.f32 %v470, %v2614
    %v2633 = vmul.f32 %v478, %v2614
    %v2634 = vmul.f32 %v477, %v2622
    %v2635 = vmul.f32 %v479, %v2621
    %v2636 = vmul.f32 %v486, %v2623
    %v2637 = vmul.f32 %v487, %v2614
    %v2643 = vcombine.low %v2628, %v2629
    %v2644 = vcombine.low %v2630, %v2631
    %v2646 = vunpack.c.l.s4 1983009808
    %v2647 = vunpack.c.0.s8 %v2646
    %v2648 = vlaneseq
    %v2649 = vshrl.u32 %v2648, 7
    %v2650 = vsub.s32 %v2647, %v2649
    %v2651 = vrot.slane %v2643, %v2650
    %v2653 = vunpack.c.l.s4 1983009808
    %v2654 = vunpack.c.0.s8 %v2653
    %v2655 = vlaneseq
    %v2656 = vshrl.u32 %v2655, 7
    %v2657 = vsub.s32 %v2654, %v2656
    %v2658 = vrot.slane %v2644, %v2657
    %v2659 = vcombine.low %v2651, %v2658
    %v2661 = vunpack.c.l.s4 1983009808
    %v2662 = vunpack.c.0.s8 %v2661
    %v2663 = vlaneseq
    %v2664 = vshrl.u32 %v2663, 7
    %v2665 = vsub.s32 %v2662, %v2664
    %v2666 = vrot.slane %v2632, %v2665
    %v2667 = vsel %vm356, %v2659, 0
    %v2669 = vsel %vm356, %v2666, 0
    %2671 = vmatprep.subr.mxu0 0.0
    %2672 = vmatpush1.xpose.msra.mxu0 %v780
    %2673 = vmatprep.subr.mxu0 0.0
    %2674 = vmatpush1.xpose.msra.mxu0 0.0
    %2675 = vmatprep.subr.mxu0 0.0
    %2676 = vmatpush1.xpose.msra.mxu0 0.0
    %2677 = vmatprep.subr.mxu0 0.0
    %2678 = vmatpush1.xpose.msra.mxu0 0.0
    %2679 = vmatprep.subr.mxu0 0.0
    %2680 = vmatpush1.xpose.msra.mxu0 0.0
    %2681 = vmatprep.subr.mxu0 0.0
    %2682 = vmatpush1.xpose.msra.mxu0 0.0
    %2683 = vmatprep.subr.mxu0 0.0
    %2684 = vmatpush1.xpose.msra.mxu0 0.0
    %2685 = vmatprep.subr.mxu0 0.0
    %2686 = vmatpush1.xpose.msra.mxu0 0.0
    %2687 = vmatprep.subr.mxu0 0.0
    %2688 = vmatpush1.xpose.msra.mxu0 0.0
    %2689 = vmatprep.subr.mxu0 0.0
    %2690 = vmatpush1.xpose.msra.mxu0 0.0
    %2691 = vmatprep.subr.mxu0 0.0
    %2692 = vmatpush1.xpose.msra.mxu0 0.0
    %2693 = vmatprep.subr.mxu0 0.0
    %2694 = vmatpush1.xpose.msra.mxu0 0.0
    %2695 = vmatprep.subr.mxu0 0.0
    %2696 = vmatpush1.xpose.msra.mxu0 0.0
    %2697 = vmatprep.subr.mxu0 0.0
    %2698 = vmatpush1.xpose.msra.mxu0 0.0
    %2699 = vmatprep.subr.mxu0 0.0
    %2700 = vmatpush1.xpose.msra.mxu0 0.0
    %2701 = vmatprep.subr.mxu0 0.0
    %2702 = vmatpush1.xpose.msra.mxu0 0.0
    %2703 = vmatprep.subr.mxu0 0.0
    %2704 = vmatpush1.xpose.msra.mxu0 0.0
    %2705 = vmatprep.subr.mxu0 0.0
    %2706 = vmatpush1.xpose.msra.mxu0 0.0
    %2707 = vmatprep.subr.mxu0 0.0
    %2708 = vmatpush1.xpose.msra.mxu0 0.0
    %2709 = vmatprep.subr.mxu0 0.0
    %2710 = vmatpush1.xpose.msra.mxu0 0.0
    %2711 = vmatprep.subr.mxu0 0.0
    %2712 = vmatpush1.xpose.msra.mxu0 0.0
    %2713 = vmatprep.subr.mxu0 0.0
    %2714 = vmatpush1.xpose.msra.mxu0 0.0
    %2715 = vmatprep.subr.mxu0 0.0
    %2716 = vmatpush1.xpose.msra.mxu0 0.0
    %2717 = vmatprep.subr.mxu0 0.0
    %2718 = vmatpush1.xpose.msra.mxu0 0.0
    %2719 = vmatprep.subr.mxu0 0.0
    %2720 = vmatpush1.xpose.msra.mxu0 0.0
    %2721 = vmatprep.subr.mxu0 0.0
    %2722 = vmatpush1.xpose.msra.mxu0 0.0
    %2723 = vmatprep.subr.mxu0 0.0
    %2724 = vmatpush1.xpose.msra.mxu0 0.0
    %2725 = vmatprep.subr.mxu0 0.0
    %2726 = vmatpush1.xpose.msra.mxu0 0.0
    %2727 = vmatprep.subr.mxu0 0.0
    %2728 = vmatpush1.xpose.msra.mxu0 0.0
    %2729 = vmatprep.subr.mxu0 0.0
    %2730 = vmatpush1.xpose.msra.mxu0 0.0
    %2731 = vmatprep.subr.mxu0 0.0
    %2732 = vmatpush1.xpose.msra.mxu0 0.0
    %2733 = vmatprep.subr.mxu0 0.0
    %2734 = vmatpush1.xpose.msra.mxu0 0.0
    %2735 = vmatprep.mubr.f32.mxu0 0.0
    %2736 = vmatmul.mubr.f32.gmra.mrb[0].mxu0 %v2667
    %v2737 = vpop.f32.mrb[0].mxu0
    %v2738 = vadd.f32 0.0, %v2737
    %v2739 = vpop.f32.mrb[0].mxu0
    %2740 = vmatprep.mubr.f32.mxu0 0.0
    %2741 = vmatmul.mubr.f32.gmra.mrb[0].mxu0 %v2669
    %v2742 = vpop.f32.mrb[0].mxu0
    %v2743 = vadd.f32 0.0, %v2742
    %v2744 = vpop.f32.mrb[0].mxu0
    %2745 = vdwg.mxu0
    %v2751 = vcombine.low %v2633, %v2634
    %v2752 = vcombine.low %v2635, %v2636
    %v2754 = vunpack.c.l.s4 1983009808
    %v2755 = vunpack.c.0.s8 %v2754
    %v2756 = vlaneseq
    %v2757 = vshrl.u32 %v2756, 7
    %v2758 = vsub.s32 %v2755, %v2757
    %v2759 = vrot.slane %v2751, %v2758
    %v2761 = vunpack.c.l.s4 1983009808
    %v2762 = vunpack.c.0.s8 %v2761
    %v2763 = vlaneseq
    %v2764 = vshrl.u32 %v2763, 7
    %v2765 = vsub.s32 %v2762, %v2764
    %v2766 = vrot.slane %v2752, %v2765
    %v2767 = vcombine.low %v2759, %v2766
    %v2769 = vunpack.c.l.s4 1983009808
    %v2770 = vunpack.c.0.s8 %v2769
    %v2771 = vlaneseq
    %v2772 = vshrl.u32 %v2771, 7
    %v2773 = vsub.s32 %v2770, %v2772
    %v2774 = vrot.slane %v2637, %v2773
    %v2775 = vsel %vm356, %v2767, 0
    %v2777 = vsel %vm356, %v2774, 0
    %2779 = vmatprep.subr.mxu0 0.0
    %2780 = vmatpush1.xpose.msra.mxu0 %v891
    %2781 = vmatprep.subr.mxu0 0.0
    %2782 = vmatpush1.xpose.msra.mxu0 0.0
    %2783 = vmatprep.subr.mxu0 0.0
    %2784 = vmatpush1.xpose.msra.mxu0 0.0
    %2785 = vmatprep.subr.mxu0 0.0
    %2786 = vmatpush1.xpose.msra.mxu0 0.0
    %2787 = vmatprep.subr.mxu0 0.0
    %2788 = vmatpush1.xpose.msra.mxu0 0.0
    %2789 = vmatprep.subr.mxu0 0.0
    %2790 = vmatpush1.xpose.msra.mxu0 0.0
    %2791 = vmatprep.subr.mxu0 0.0
    %2792 = vmatpush1.xpose.msra.mxu0 0.0
    %2793 = vmatprep.subr.mxu0 0.0
    %2794 = vmatpush1.xpose.msra.mxu0 0.0
    %2795 = vmatprep.subr.mxu0 0.0
    %2796 = vmatpush1.xpose.msra.mxu0 0.0
    %2797 = vmatprep.subr.mxu0 0.0
    %2798 = vmatpush1.xpose.msra.mxu0 0.0
    %2799 = vmatprep.subr.mxu0 0.0
    %2800 = vmatpush1.xpose.msra.mxu0 0.0
    %2801 = vmatprep.subr.mxu0 0.0
    %2802 = vmatpush1.xpose.msra.mxu0 0.0
    %2803 = vmatprep.subr.mxu0 0.0
    %2804 = vmatpush1.xpose.msra.mxu0 0.0
    %2805 = vmatprep.subr.mxu0 0.0
    %2806 = vmatpush1.xpose.msra.mxu0 0.0
    %2807 = vmatprep.subr.mxu0 0.0
    %2808 = vmatpush1.xpose.msra.mxu0 0.0
    %2809 = vmatprep.subr.mxu0 0.0
    %2810 = vmatpush1.xpose.msra.mxu0 0.0
    %2811 = vmatprep.subr.mxu0 0.0
    %2812 = vmatpush1.xpose.msra.mxu0 0.0
    %2813 = vmatprep.subr.mxu0 0.0
    %2814 = vmatpush1.xpose.msra.mxu0 0.0
    %2815 = vmatprep.subr.mxu0 0.0
    %2816 = vmatpush1.xpose.msra.mxu0 0.0
    %2817 = vmatprep.subr.mxu0 0.0
    %2818 = vmatpush1.xpose.msra.mxu0 0.0
    %2819 = vmatprep.subr.mxu0 0.0
    %2820 = vmatpush1.xpose.msra.mxu0 0.0
    %2821 = vmatprep.subr.mxu0 0.0
    %2822 = vmatpush1.xpose.msra.mxu0 0.0
    %2823 = vmatprep.subr.mxu0 0.0
    %2824 = vmatpush1.xpose.msra.mxu0 0.0
    %2825 = vmatprep.subr.mxu0 0.0
    %2826 = vmatpush1.xpose.msra.mxu0 0.0
    %2827 = vmatprep.subr.mxu0 0.0
    %2828 = vmatpush1.xpose.msra.mxu0 0.0
    %2829 = vmatprep.subr.mxu0 0.0
    %2830 = vmatpush1.xpose.msra.mxu0 0.0
    %2831 = vmatprep.subr.mxu0 0.0
    %2832 = vmatpush1.xpose.msra.mxu0 0.0
    %2833 = vmatprep.subr.mxu0 0.0
    %2834 = vmatpush1.xpose.msra.mxu0 0.0
    %2835 = vmatprep.subr.mxu0 0.0
    %2836 = vmatpush1.xpose.msra.mxu0 0.0
    %2837 = vmatprep.subr.mxu0 0.0
    %2838 = vmatpush1.xpose.msra.mxu0 0.0
    %2839 = vmatprep.subr.mxu0 0.0
    %2840 = vmatpush1.xpose.msra.mxu0 0.0
    %2841 = vmatprep.subr.mxu0 0.0
    %2842 = vmatpush1.xpose.msra.mxu0 0.0
    %2843 = vmatprep.mubr.f32.mxu0 0.0
    %2844 = vmatmul.mubr.f32.gmra.mrb[0].mxu0 %v2775
    %v2845 = vpop.f32.mrb[0].mxu0
    %v2846 = vadd.f32 0.0, %v2845
    %v2847 = vpop.f32.mrb[0].mxu0
    %2848 = vmatprep.mubr.f32.mxu0 0.0
    %2849 = vmatmul.mubr.f32.gmra.mrb[0].mxu0 %v2777
    %v2850 = vpop.f32.mrb[0].mxu0
    %v2851 = vadd.f32 0.0, %v2850
    %v2852 = vpop.f32.mrb[0].mxu0
    %2853 = vdwg.mxu0
    %v2854 = vmul.f32 %v2738, 0.35355338
    %v2855 = vmul.f32 %v2743, 0.35355338
    %v2856 = vmul.f32 %v2846, 0.35355338
    %v2857 = vmul.f32 %v2851, 0.35355338
    %v2858 = vsel %vm705, -1e+09, %v2854
    %v2859 = vsel %vm706, -1e+09, %v2855
    %v2860 = vsel %vm707, -1e+09, %v2856
    %v2861 = vsel %vm708, -1e+09, %v2857
    %v2862 = vsel %vm976, %v2858, -inf
    %2863 = vmax.xlane.f32.xlu0 %v2862
    %v2864 = vpop.xlane.xlu0 %2863
    %v2865 = vsel %vm980, %v2859, -inf
    %2866 = vmax.xlane.f32.xlu0 %v2865
    %v2867 = vpop.xlane.xlu0 %2866
    %v2868 = vsel %vm976, %v2860, -inf
    %2869 = vmax.xlane.f32.xlu0 %v2868
    %v2870 = vpop.xlane.xlu0 %2869
    %v2871 = vsel %vm980, %v2861, -inf
    %2872 = vmax.xlane.f32.xlu0 %v2871
    %v2873 = vpop.xlane.xlu0 %2872
    %v2874 = vsub.f32 %v2858, %v2864
    %v2875 = vsub.f32 %v2859, %v2867
    %v2876 = vsub.f32 %v2860, %v2870
    %v2877 = vsub.f32 %v2861, %v2873
    %v2878 = vmul.f32 %v2874, 1.442695
    %v2879 = vpow.pop %v2878
    %v2880 = vmul.f32 %v2875, 1.442695
    %v2881 = vpow.pop %v2880
    %v2882 = vmul.f32 %v2876, 1.442695
    %v2883 = vpow.pop %v2882
    %v2884 = vmul.f32 %v2877, 1.442695
    %v2885 = vpow.pop %v2884
    %v2886 = vsel %vm976, %v2879, 0.0
    %2887 = vadd.xlane.f32.xlu0 %v2886
    %v2888 = vpop.xlane.xlu0 %2887
    %v2889 = vsel %vm980, %v2881, 0.0
    %2890 = vadd.xlane.f32.xlu0 %v2889
    %v2891 = vpop.xlane.xlu0 %2890
    %v2892 = vsel %vm976, %v2883, 0.0
    %2893 = vadd.xlane.f32.xlu0 %v2892
    %v2894 = vpop.xlane.xlu0 %2893
    %v2895 = vsel %vm980, %v2885, 0.0
    %2896 = vadd.xlane.f32.xlu0 %v2895
    %v2897 = vpop.xlane.xlu0 %2896
    %v2898 = vrcp.pop %v2888
    %v2899 = vmul.f32 %v2879, %v2898
    %v2900 = vrcp.pop %v2891
    %v2901 = vmul.f32 %v2881, %v2900
    %v2902 = vrcp.pop %v2894
    %v2903 = vmul.f32 %v2883, %v2902
    %v2904 = vrcp.pop %v2897
    %v2905 = vmul.f32 %v2885, %v2904
    %v2906 = vmul.f32 %v672, %v2605
    %v2907 = vmul.f32 %v677, %v2605
    %v2909 = vsel %vm976, %v2899, 0
    %v2912 = vsel %vm976, %v2901, 0
    %2914 = vmatprep.subr.mxu0 0.0
    %2915 = vmatpush1.msra.mxu0 %v2906
    %2916 = vmatprep.subr.mxu0 0.0
    %2917 = vmatpush1.msra.mxu0 0.0
    %2918 = vmatprep.subr.mxu0 0.0
    %2919 = vmatpush1.msra.mxu0 0.0
    %2920 = vmatprep.subr.mxu0 0.0
    %2921 = vmatpush1.msra.mxu0 0.0
    %2922 = vmatprep.subr.mxu0 0.0
    %2923 = vmatpush1.msra.mxu0 0.0
    %2924 = vmatprep.subr.mxu0 0.0
    %2925 = vmatpush1.msra.mxu0 0.0
    %2926 = vmatprep.subr.mxu0 0.0
    %2927 = vmatpush1.msra.mxu0 0.0
    %2928 = vmatprep.subr.mxu0 0.0
    %2929 = vmatpush1.msra.mxu0 0.0
    %2930 = vmatprep.subr.mxu0 0.0
    %2931 = vmatpush1.msra.mxu0 0.0
    %2932 = vmatprep.subr.mxu0 0.0
    %2933 = vmatpush1.msra.mxu0 0.0
    %2934 = vmatprep.subr.mxu0 0.0
    %2935 = vmatpush1.msra.mxu0 0.0
    %2936 = vmatprep.subr.mxu0 0.0
    %2937 = vmatpush1.msra.mxu0 0.0
    %2938 = vmatprep.subr.mxu0 0.0
    %2939 = vmatpush1.msra.mxu0 0.0
    %2940 = vmatprep.subr.mxu0 0.0
    %2941 = vmatpush1.msra.mxu0 0.0
    %2942 = vmatprep.subr.mxu0 0.0
    %2943 = vmatpush1.msra.mxu0 0.0
    %2944 = vmatprep.subr.mxu0 0.0
    %2945 = vmatpush1.msra.mxu0 0.0
    %2946 = vmatprep.subr.mxu0 0.0
    %2947 = vmatpush1.msra.mxu0 0.0
    %2948 = vmatprep.subr.mxu0 0.0
    %2949 = vmatpush1.msra.mxu0 0.0
    %2950 = vmatprep.subr.mxu0 0.0
    %2951 = vmatpush1.msra.mxu0 0.0
    %2952 = vmatprep.subr.mxu0 0.0
    %2953 = vmatpush1.msra.mxu0 0.0
    %2954 = vmatprep.subr.mxu0 0.0
    %2955 = vmatpush1.msra.mxu0 0.0
    %2956 = vmatprep.subr.mxu0 0.0
    %2957 = vmatpush1.msra.mxu0 0.0
    %2958 = vmatprep.subr.mxu0 0.0
    %2959 = vmatpush1.msra.mxu0 0.0
    %2960 = vmatprep.subr.mxu0 0.0
    %2961 = vmatpush1.msra.mxu0 0.0
    %2962 = vmatprep.subr.mxu0 0.0
    %2963 = vmatpush1.msra.mxu0 0.0
    %2964 = vmatprep.subr.mxu0 0.0
    %2965 = vmatpush1.msra.mxu0 0.0
    %2966 = vmatprep.subr.mxu0 0.0
    %2967 = vmatpush1.msra.mxu0 0.0
    %2968 = vmatprep.subr.mxu0 0.0
    %2969 = vmatpush1.msra.mxu0 0.0
    %2970 = vmatprep.subr.mxu0 0.0
    %2971 = vmatpush1.msra.mxu0 0.0
    %2972 = vmatprep.subr.mxu0 0.0
    %2973 = vmatpush1.msra.mxu0 0.0
    %2974 = vmatprep.subr.mxu0 0.0
    %2975 = vmatpush1.msra.mxu0 0.0
    %2976 = vmatprep.subr.mxu0 0.0
    %2977 = vmatpush1.msra.mxu0 0.0
    %2978 = vmatprep.mubr.f32.mxu0 0.0
    %2979 = vmatmul.mubr.f32.gmra.mrb[0].mxu0 %v2909
    %v2980 = vpop.f32.mrb[0].mxu0
    %v2981 = vadd.f32 0.0, %v2980
    %v2982 = vpop.f32.mrb[0].mxu0
    %2983 = vmatprep.mubr.f32.mxu0 0.0
    %2984 = vmatmul.mubr.f32.gmra.mrb[0].mxu0 %v2912
    %v2985 = vpop.f32.mrb[0].mxu0
    %v2986 = vadd.f32 0.0, %v2985
    %v2987 = vpop.f32.mrb[0].mxu0
    %2988 = vdwg.mxu0
    %v2990 = vsel %vm976, %v2903, 0
    %v2993 = vsel %vm976, %v2905, 0
    %2995 = vmatprep.subr.mxu0 0.0
    %2996 = vmatpush1.msra.mxu0 %v2907
    %2997 = vmatprep.subr.mxu0 0.0
    %2998 = vmatpush1.msra.mxu0 0.0
    %2999 = vmatprep.subr.mxu0 0.0
    %3000 = vmatpush1.msra.mxu0 0.0
    %3001 = vmatprep.subr.mxu0 0.0
    %3002 = vmatpush1.msra.mxu0 0.0
    %3003 = vmatprep.subr.mxu0 0.0
    %3004 = vmatpush1.msra.mxu0 0.0
    %3005 = vmatprep.subr.mxu0 0.0
    %3006 = vmatpush1.msra.mxu0 0.0
    %3007 = vmatprep.subr.mxu0 0.0
    %3008 = vmatpush1.msra.mxu0 0.0
    %3009 = vmatprep.subr.mxu0 0.0
    %3010 = vmatpush1.msra.mxu0 0.0
    %3011 = vmatprep.subr.mxu0 0.0
    %3012 = vmatpush1.msra.mxu0 0.0
    %3013 = vmatprep.subr.mxu0 0.0
    %3014 = vmatpush1.msra.mxu0 0.0
    %3015 = vmatprep.subr.mxu0 0.0
    %3016 = vmatpush1.msra.mxu0 0.0
    %3017 = vmatprep.subr.mxu0 0.0
    %3018 = vmatpush1.msra.mxu0 0.0
    %3019 = vmatprep.subr.mxu0 0.0
    %3020 = vmatpush1.msra.mxu0 0.0
    %3021 = vmatprep.subr.mxu0 0.0
    %3022 = vmatpush1.msra.mxu0 0.0
    %3023 = vmatprep.subr.mxu0 0.0
    %3024 = vmatpush1.msra.mxu0 0.0
    %3025 = vmatprep.subr.mxu0 0.0
    %3026 = vmatpush1.msra.mxu0 0.0
    %3027 = vmatprep.subr.mxu0 0.0
    %3028 = vmatpush1.msra.mxu0 0.0
    %3029 = vmatprep.subr.mxu0 0.0
    %3030 = vmatpush1.msra.mxu0 0.0
    %3031 = vmatprep.subr.mxu0 0.0
    %3032 = vmatpush1.msra.mxu0 0.0
    %3033 = vmatprep.subr.mxu0 0.0
    %3034 = vmatpush1.msra.mxu0 0.0
    %3035 = vmatprep.subr.mxu0 0.0
    %3036 = vmatpush1.msra.mxu0 0.0
    %3037 = vmatprep.subr.mxu0 0.0
    %3038 = vmatpush1.msra.mxu0 0.0
    %3039 = vmatprep.subr.mxu0 0.0
    %3040 = vmatpush1.msra.mxu0 0.0
    %3041 = vmatprep.subr.mxu0 0.0
    %3042 = vmatpush1.msra.mxu0 0.0
    %3043 = vmatprep.subr.mxu0 0.0
    %3044 = vmatpush1.msra.mxu0 0.0
    %3045 = vmatprep.subr.mxu0 0.0
    %3046 = vmatpush1.msra.mxu0 0.0
    %3047 = vmatprep.subr.mxu0 0.0
    %3048 = vmatpush1.msra.mxu0 0.0
    %3049 = vmatprep.subr.mxu0 0.0
    %3050 = vmatpush1.msra.mxu0 0.0
    %3051 = vmatprep.subr.mxu0 0.0
    %3052 = vmatpush1.msra.mxu0 0.0
    %3053 = vmatprep.subr.mxu0 0.0
    %3054 = vmatpush1.msra.mxu0 0.0
    %3055 = vmatprep.subr.mxu0 0.0
    %3056 = vmatpush1.msra.mxu0 0.0
    %3057 = vmatprep.subr.mxu0 0.0
    %3058 = vmatpush1.msra.mxu0 0.0
    %3059 = vmatprep.mubr.f32.mxu0 0.0
    %3060 = vmatmul.mubr.f32.gmra.mrb[0].mxu0 %v2990
    %v3061 = vpop.f32.mrb[0].mxu0
    %v3062 = vadd.f32 0.0, %v3061
    %v3063 = vpop.f32.mrb[0].mxu0
    %3064 = vmatprep.mubr.f32.mxu0 0.0
    %3065 = vmatmul.mubr.f32.gmra.mrb[0].mxu0 %v2993
    %v3066 = vpop.f32.mrb[0].mxu0
    %v3067 = vadd.f32 0.0, %v3066
    %v3068 = vpop.f32.mrb[0].mxu0
    %3069 = vdwg.mxu0
    %v3070 = vadd.f32 %v2597, %v2981
    %v3071 = vadd.f32 %v2598, %v2986
    %v3072 = vadd.f32 %v2599, %v3062
    %v3073 = vadd.f32 %v2600, %v3067
    %vm3074 = vcmp.ge.s32.totalorder %v682, 40
    %vm3075 = vcmp.lt.s32.totalorder %v682, 48
    %vm3076 = vmand %vm3074, %vm3075
    %v3077 = vsel %vm3076, 1, 0
    %v3078 = vcvt.s32.f32 %v3077
    %v3080 = vcombine.high %v3078, %v3078
    %v3082 = vunpack.c.l.s4 1983009808
    %v3083 = vunpack.c.0.s8 %v3082
    %v3084 = vlaneseq
    %v3085 = vshrl.u32 %v3084, 7
    %v3086 = vsub.s32 %v3083, %v3085
    %v3087 = vrot.slane %v3078, %v3086
    %v3089 = vunpack.c.l.s4 1983009808
    %v3090 = vunpack.c.0.s8 %v3089
    %v3091 = vlaneseq
    %v3092 = vshrl.u32 %v3091, 7
    %v3093 = vsub.s32 %v3090, %v3092
    %v3094 = vrot.slane %v3080, %v3093
    %v3095 = vcombine.high %v3087, %v3087
    %v3096 = vcombine.high %v3094, %v3094
    %v3101 = vmul.f32 %v453, %v3087
    %v3102 = vmul.f32 %v461, %v3095
    %v3103 = vmul.f32 %v460, %v3094
    %v3104 = vmul.f32 %v462, %v3096
    %v3105 = vmul.f32 %v470, %v3087
    %v3106 = vmul.f32 %v478, %v3087
    %v3107 = vmul.f32 %v477, %v3095
    %v3108 = vmul.f32 %v479, %v3094
    %v3109 = vmul.f32 %v486, %v3096
    %v3110 = vmul.f32 %v487, %v3087
    %v3116 = vcombine.low %v3101, %v3102
    %v3117 = vcombine.low %v3103, %v3104
    %v3119 = vunpack.c.l.s4 1983009808
    %v3120 = vunpack.c.0.s8 %v3119
    %v3121 = vlaneseq
    %v3122 = vshrl.u32 %v3121, 7
    %v3123 = vsub.s32 %v3120, %v3122
    %v3124 = vrot.slane %v3116, %v3123
    %v3126 = vunpack.c.l.s4 1983009808
    %v3127 = vunpack.c.0.s8 %v3126
    %v3128 = vlaneseq
    %v3129 = vshrl.u32 %v3128, 7
    %v3130 = vsub.s32 %v3127, %v3129
    %v3131 = vrot.slane %v3117, %v3130
    %v3132 = vcombine.low %v3124, %v3131
    %v3134 = vunpack.c.l.s4 1983009808
    %v3135 = vunpack.c.0.s8 %v3134
    %v3136 = vlaneseq
    %v3137 = vshrl.u32 %v3136, 7
    %v3138 = vsub.s32 %v3135, %v3137
    %v3139 = vrot.slane %v3105, %v3138
    %v3140 = vsel %vm356, %v3132, 0
    %v3142 = vsel %vm356, %v3139, 0
    %3144 = vmatprep.subr.mxu0 0.0
    %3145 = vmatpush1.xpose.msra.mxu0 %v780
    %3146 = vmatprep.subr.mxu0 0.0
    %3147 = vmatpush1.xpose.msra.mxu0 0.0
    %3148 = vmatprep.subr.mxu0 0.0
    %3149 = vmatpush1.xpose.msra.mxu0 0.0
    %3150 = vmatprep.subr.mxu0 0.0
    %3151 = vmatpush1.xpose.msra.mxu0 0.0
    %3152 = vmatprep.subr.mxu0 0.0
    %3153 = vmatpush1.xpose.msra.mxu0 0.0
    %3154 = vmatprep.subr.mxu0 0.0
    %3155 = vmatpush1.xpose.msra.mxu0 0.0
    %3156 = vmatprep.subr.mxu0 0.0
    %3157 = vmatpush1.xpose.msra.mxu0 0.0
    %3158 = vmatprep.subr.mxu0 0.0
    %3159 = vmatpush1.xpose.msra.mxu0 0.0
    %3160 = vmatprep.subr.mxu0 0.0
    %3161 = vmatpush1.xpose.msra.mxu0 0.0
    %3162 = vmatprep.subr.mxu0 0.0
    %3163 = vmatpush1.xpose.msra.mxu0 0.0
    %3164 = vmatprep.subr.mxu0 0.0
    %3165 = vmatpush1.xpose.msra.mxu0 0.0
    %3166 = vmatprep.subr.mxu0 0.0
    %3167 = vmatpush1.xpose.msra.mxu0 0.0
    %3168 = vmatprep.subr.mxu0 0.0
    %3169 = vmatpush1.xpose.msra.mxu0 0.0
    %3170 = vmatprep.subr.mxu0 0.0
    %3171 = vmatpush1.xpose.msra.mxu0 0.0
    %3172 = vmatprep.subr.mxu0 0.0
    %3173 = vmatpush1.xpose.msra.mxu0 0.0
    %3174 = vmatprep.subr.mxu0 0.0
    %3175 = vmatpush1.xpose.msra.mxu0 0.0
    %3176 = vmatprep.subr.mxu0 0.0
    %3177 = vmatpush1.xpose.msra.mxu0 0.0
    %3178 = vmatprep.subr.mxu0 0.0
    %3179 = vmatpush1.xpose.msra.mxu0 0.0
    %3180 = vmatprep.subr.mxu0 0.0
    %3181 = vmatpush1.xpose.msra.mxu0 0.0
    %3182 = vmatprep.subr.mxu0 0.0
    %3183 = vmatpush1.xpose.msra.mxu0 0.0
    %3184 = vmatprep.subr.mxu0 0.0
    %3185 = vmatpush1.xpose.msra.mxu0 0.0
    %3186 = vmatprep.subr.mxu0 0.0
    %3187 = vmatpush1.xpose.msra.mxu0 0.0
    %3188 = vmatprep.subr.mxu0 0.0
    %3189 = vmatpush1.xpose.msra.mxu0 0.0
    %3190 = vmatprep.subr.mxu0 0.0
    %3191 = vmatpush1.xpose.msra.mxu0 0.0
    %3192 = vmatprep.subr.mxu0 0.0
    %3193 = vmatpush1.xpose.msra.mxu0 0.0
    %3194 = vmatprep.subr.mxu0 0.0
    %3195 = vmatpush1.xpose.msra.mxu0 0.0
    %3196 = vmatprep.subr.mxu0 0.0
    %3197 = vmatpush1.xpose.msra.mxu0 0.0
    %3198 = vmatprep.subr.mxu0 0.0
    %3199 = vmatpush1.xpose.msra.mxu0 0.0
    %3200 = vmatprep.subr.mxu0 0.0
    %3201 = vmatpush1.xpose.msra.mxu0 0.0
    %3202 = vmatprep.subr.mxu0 0.0
    %3203 = vmatpush1.xpose.msra.mxu0 0.0
    %3204 = vmatprep.subr.mxu0 0.0
    %3205 = vmatpush1.xpose.msra.mxu0 0.0
    %3206 = vmatprep.subr.mxu0 0.0
    %3207 = vmatpush1.xpose.msra.mxu0 0.0
    %3208 = vmatprep.mubr.f32.mxu0 0.0
    %3209 = vmatmul.mubr.f32.gmra.mrb[0].mxu0 %v3140
    %v3210 = vpop.f32.mrb[0].mxu0
    %v3211 = vadd.f32 0.0, %v3210
    %v3212 = vpop.f32.mrb[0].mxu0
    %3213 = vmatprep.mubr.f32.mxu0 0.0
    %3214 = vmatmul.mubr.f32.gmra.mrb[0].mxu0 %v3142
    %v3215 = vpop.f32.mrb[0].mxu0
    %v3216 = vadd.f32 0.0, %v3215
    %v3217 = vpop.f32.mrb[0].mxu0
    %3218 = vdwg.mxu0
    %v3224 = vcombine.low %v3106, %v3107
    %v3225 = vcombine.low %v3108, %v3109
    %v3227 = vunpack.c.l.s4 1983009808
    %v3228 = vunpack.c.0.s8 %v3227
    %v3229 = vlaneseq
    %v3230 = vshrl.u32 %v3229, 7
    %v3231 = vsub.s32 %v3228, %v3230
    %v3232 = vrot.slane %v3224, %v3231
    %v3234 = vunpack.c.l.s4 1983009808
    %v3235 = vunpack.c.0.s8 %v3234
    %v3236 = vlaneseq
    %v3237 = vshrl.u32 %v3236, 7
    %v3238 = vsub.s32 %v3235, %v3237
    %v3239 = vrot.slane %v3225, %v3238
    %v3240 = vcombine.low %v3232, %v3239
    %v3242 = vunpack.c.l.s4 1983009808
    %v3243 = vunpack.c.0.s8 %v3242
    %v3244 = vlaneseq
    %v3245 = vshrl.u32 %v3244, 7
    %v3246 = vsub.s32 %v3243, %v3245
    %v3247 = vrot.slane %v3110, %v3246
    %v3248 = vsel %vm356, %v3240, 0
    %v3250 = vsel %vm356, %v3247, 0
    %3252 = vmatprep.subr.mxu0 0.0
    %3253 = vmatpush1.xpose.msra.mxu0 %v891
    %3254 = vmatprep.subr.mxu0 0.0
    %3255 = vmatpush1.xpose.msra.mxu0 0.0
    %3256 = vmatprep.subr.mxu0 0.0
    %3257 = vmatpush1.xpose.msra.mxu0 0.0
    %3258 = vmatprep.subr.mxu0 0.0
    %3259 = vmatpush1.xpose.msra.mxu0 0.0
    %3260 = vmatprep.subr.mxu0 0.0
    %3261 = vmatpush1.xpose.msra.mxu0 0.0
    %3262 = vmatprep.subr.mxu0 0.0
    %3263 = vmatpush1.xpose.msra.mxu0 0.0
    %3264 = vmatprep.subr.mxu0 0.0
    %3265 = vmatpush1.xpose.msra.mxu0 0.0
    %3266 = vmatprep.subr.mxu0 0.0
    %3267 = vmatpush1.xpose.msra.mxu0 0.0
    %3268 = vmatprep.subr.mxu0 0.0
    %3269 = vmatpush1.xpose.msra.mxu0 0.0
    %3270 = vmatprep.subr.mxu0 0.0
    %3271 = vmatpush1.xpose.msra.mxu0 0.0
    %3272 = vmatprep.subr.mxu0 0.0
    %3273 = vmatpush1.xpose.msra.mxu0 0.0
    %3274 = vmatprep.subr.mxu0 0.0
    %3275 = vmatpush1.xpose.msra.mxu0 0.0
    %3276 = vmatprep.subr.mxu0 0.0
    %3277 = vmatpush1.xpose.msra.mxu0 0.0
    %3278 = vmatprep.subr.mxu0 0.0
    %3279 = vmatpush1.xpose.msra.mxu0 0.0
    %3280 = vmatprep.subr.mxu0 0.0
    %3281 = vmatpush1.xpose.msra.mxu0 0.0
    %3282 = vmatprep.subr.mxu0 0.0
    %3283 = vmatpush1.xpose.msra.mxu0 0.0
    %3284 = vmatprep.subr.mxu0 0.0
    %3285 = vmatpush1.xpose.msra.mxu0 0.0
    %3286 = vmatprep.subr.mxu0 0.0
    %3287 = vmatpush1.xpose.msra.mxu0 0.0
    %3288 = vmatprep.subr.mxu0 0.0
    %3289 = vmatpush1.xpose.msra.mxu0 0.0
    %3290 = vmatprep.subr.mxu0 0.0
    %3291 = vmatpush1.xpose.msra.mxu0 0.0
    %3292 = vmatprep.subr.mxu0 0.0
    %3293 = vmatpush1.xpose.msra.mxu0 0.0
    %3294 = vmatprep.subr.mxu0 0.0
    %3295 = vmatpush1.xpose.msra.mxu0 0.0
    %3296 = vmatprep.subr.mxu0 0.0
    %3297 = vmatpush1.xpose.msra.mxu0 0.0
    %3298 = vmatprep.subr.mxu0 0.0
    %3299 = vmatpush1.xpose.msra.mxu0 0.0
    %3300 = vmatprep.subr.mxu0 0.0
    %3301 = vmatpush1.xpose.msra.mxu0 0.0
    %3302 = vmatprep.subr.mxu0 0.0
    %3303 = vmatpush1.xpose.msra.mxu0 0.0
    %3304 = vmatprep.subr.mxu0 0.0
    %3305 = vmatpush1.xpose.msra.mxu0 0.0
    %3306 = vmatprep.subr.mxu0 0.0
    %3307 = vmatpush1.xpose.msra.mxu0 0.0
    %3308 = vmatprep.subr.mxu0 0.0
    %3309 = vmatpush1.xpose.msra.mxu0 0.0
    %3310 = vmatprep.subr.mxu0 0.0
    %3311 = vmatpush1.xpose.msra.mxu0 0.0
    %3312 = vmatprep.subr.mxu0 0.0
    %3313 = vmatpush1.xpose.msra.mxu0 0.0
    %3314 = vmatprep.subr.mxu0 0.0
    %3315 = vmatpush1.xpose.msra.mxu0 0.0
    %3316 = vmatprep.mubr.f32.mxu0 0.0
    %3317 = vmatmul.mubr.f32.gmra.mrb[0].mxu0 %v3248
    %v3318 = vpop.f32.mrb[0].mxu0
    %v3319 = vadd.f32 0.0, %v3318
    %v3320 = vpop.f32.mrb[0].mxu0
    %3321 = vmatprep.mubr.f32.mxu0 0.0
    %3322 = vmatmul.mubr.f32.gmra.mrb[0].mxu0 %v3250
    %v3323 = vpop.f32.mrb[0].mxu0
    %v3324 = vadd.f32 0.0, %v3323
    %v3325 = vpop.f32.mrb[0].mxu0
    %3326 = vdwg.mxu0
    %v3327 = vmul.f32 %v3211, 0.35355338
    %v3328 = vmul.f32 %v3216, 0.35355338
    %v3329 = vmul.f32 %v3319, 0.35355338
    %v3330 = vmul.f32 %v3324, 0.35355338
    %v3331 = vsel %vm705, -1e+09, %v3327
    %v3332 = vsel %vm706, -1e+09, %v3328
    %v3333 = vsel %vm707, -1e+09, %v3329
    %v3334 = vsel %vm708, -1e+09, %v3330
    %v3335 = vsel %vm976, %v3331, -inf
    %3336 = vmax.xlane.f32.xlu0 %v3335
    %v3337 = vpop.xlane.xlu0 %3336
    %v3338 = vsel %vm980, %v3332, -inf
    %3339 = vmax.xlane.f32.xlu0 %v3338
    %v3340 = vpop.xlane.xlu0 %3339
    %v3341 = vsel %vm976, %v3333, -inf
    %3342 = vmax.xlane.f32.xlu0 %v3341
    %v3343 = vpop.xlane.xlu0 %3342
    %v3344 = vsel %vm980, %v3334, -inf
    %3345 = vmax.xlane.f32.xlu0 %v3344
    %v3346 = vpop.xlane.xlu0 %3345
    %v3347 = vsub.f32 %v3331, %v3337
    %v3348 = vsub.f32 %v3332, %v3340
    %v3349 = vsub.f32 %v3333, %v3343
    %v3350 = vsub.f32 %v3334, %v3346
    %v3351 = vmul.f32 %v3347, 1.442695
    %v3352 = vpow.pop %v3351
    %v3353 = vmul.f32 %v3348, 1.442695
    %v3354 = vpow.pop %v3353
    %v3355 = vmul.f32 %v3349, 1.442695
    %v3356 = vpow.pop %v3355
    %v3357 = vmul.f32 %v3350, 1.442695
    %v3358 = vpow.pop %v3357
    %v3359 = vsel %vm976, %v3352, 0.0
    %3360 = vadd.xlane.f32.xlu0 %v3359
    %v3361 = vpop.xlane.xlu0 %3360
    %v3362 = vsel %vm980, %v3354, 0.0
    %3363 = vadd.xlane.f32.xlu0 %v3362
    %v3364 = vpop.xlane.xlu0 %3363
    %v3365 = vsel %vm976, %v3356, 0.0
    %3366 = vadd.xlane.f32.xlu0 %v3365
    %v3367 = vpop.xlane.xlu0 %3366
    %v3368 = vsel %vm980, %v3358, 0.0
    %3369 = vadd.xlane.f32.xlu0 %v3368
    %v3370 = vpop.xlane.xlu0 %3369
    %v3371 = vrcp.pop %v3361
    %v3372 = vmul.f32 %v3352, %v3371
    %v3373 = vrcp.pop %v3364
    %v3374 = vmul.f32 %v3354, %v3373
    %v3375 = vrcp.pop %v3367
    %v3376 = vmul.f32 %v3356, %v3375
    %v3377 = vrcp.pop %v3370
    %v3378 = vmul.f32 %v3358, %v3377
    %v3379 = vmul.f32 %v672, %v3078
    %v3380 = vmul.f32 %v677, %v3078
    %v3382 = vsel %vm976, %v3372, 0
    %v3385 = vsel %vm976, %v3374, 0
    %3387 = vmatprep.subr.mxu0 0.0
    %3388 = vmatpush1.msra.mxu0 %v3379
    %3389 = vmatprep.subr.mxu0 0.0
    %3390 = vmatpush1.msra.mxu0 0.0
    %3391 = vmatprep.subr.mxu0 0.0
    %3392 = vmatpush1.msra.mxu0 0.0
    %3393 = vmatprep.subr.mxu0 0.0
    %3394 = vmatpush1.msra.mxu0 0.0
    %3395 = vmatprep.subr.mxu0 0.0
    %3396 = vmatpush1.msra.mxu0 0.0
    %3397 = vmatprep.subr.mxu0 0.0
    %3398 = vmatpush1.msra.mxu0 0.0
    %3399 = vmatprep.subr.mxu0 0.0
    %3400 = vmatpush1.msra.mxu0 0.0
    %3401 = vmatprep.subr.mxu0 0.0
    %3402 = vmatpush1.msra.mxu0 0.0
    %3403 = vmatprep.subr.mxu0 0.0
    %3404 = vmatpush1.msra.mxu0 0.0
    %3405 = vmatprep.subr.mxu0 0.0
    %3406 = vmatpush1.msra.mxu0 0.0
    %3407 = vmatprep.subr.mxu0 0.0
    %3408 = vmatpush1.msra.mxu0 0.0
    %3409 = vmatprep.subr.mxu0 0.0
    %3410 = vmatpush1.msra.mxu0 0.0
    %3411 = vmatprep.subr.mxu0 0.0
    %3412 = vmatpush1.msra.mxu0 0.0
    %3413 = vmatprep.subr.mxu0 0.0
    %3414 = vmatpush1.msra.mxu0 0.0
    %3415 = vmatprep.subr.mxu0 0.0
    %3416 = vmatpush1.msra.mxu0 0.0
    %3417 = vmatprep.subr.mxu0 0.0
    %3418 = vmatpush1.msra.mxu0 0.0
    %3419 = vmatprep.subr.mxu0 0.0
    %3420 = vmatpush1.msra.mxu0 0.0
    %3421 = vmatprep.subr.mxu0 0.0
    %3422 = vmatpush1.msra.mxu0 0.0
    %3423 = vmatprep.subr.mxu0 0.0
    %3424 = vmatpush1.msra.mxu0 0.0
    %3425 = vmatprep.subr.mxu0 0.0
    %3426 = vmatpush1.msra.mxu0 0.0
    %3427 = vmatprep.subr.mxu0 0.0
    %3428 = vmatpush1.msra.mxu0 0.0
    %3429 = vmatprep.subr.mxu0 0.0
    %3430 = vmatpush1.msra.mxu0 0.0
    %3431 = vmatprep.subr.mxu0 0.0
    %3432 = vmatpush1.msra.mxu0 0.0
    %3433 = vmatprep.subr.mxu0 0.0
    %3434 = vmatpush1.msra.mxu0 0.0
    %3435 = vmatprep.subr.mxu0 0.0
    %3436 = vmatpush1.msra.mxu0 0.0
    %3437 = vmatprep.subr.mxu0 0.0
    %3438 = vmatpush1.msra.mxu0 0.0
    %3439 = vmatprep.subr.mxu0 0.0
    %3440 = vmatpush1.msra.mxu0 0.0
    %3441 = vmatprep.subr.mxu0 0.0
    %3442 = vmatpush1.msra.mxu0 0.0
    %3443 = vmatprep.subr.mxu0 0.0
    %3444 = vmatpush1.msra.mxu0 0.0
    %3445 = vmatprep.subr.mxu0 0.0
    %3446 = vmatpush1.msra.mxu0 0.0
    %3447 = vmatprep.subr.mxu0 0.0
    %3448 = vmatpush1.msra.mxu0 0.0
    %3449 = vmatprep.subr.mxu0 0.0
    %3450 = vmatpush1.msra.mxu0 0.0
    %3451 = vmatprep.mubr.f32.mxu0 0.0
    %3452 = vmatmul.mubr.f32.gmra.mrb[0].mxu0 %v3382
    %v3453 = vpop.f32.mrb[0].mxu0
    %v3454 = vadd.f32 0.0, %v3453
    %v3455 = vpop.f32.mrb[0].mxu0
    %3456 = vmatprep.mubr.f32.mxu0 0.0
    %3457 = vmatmul.mubr.f32.gmra.mrb[0].mxu0 %v3385
    %v3458 = vpop.f32.mrb[0].mxu0
    %v3459 = vadd.f32 0.0, %v3458
    %v3460 = vpop.f32.mrb[0].mxu0
    %3461 = vdwg.mxu0
    %v3463 = vsel %vm976, %v3376, 0
    %v3466 = vsel %vm976, %v3378, 0
    %3468 = vmatprep.subr.mxu0 0.0
    %3469 = vmatpush1.msra.mxu0 %v3380
    %3470 = vmatprep.subr.mxu0 0.0
    %3471 = vmatpush1.msra.mxu0 0.0
    %3472 = vmatprep.subr.mxu0 0.0
    %3473 = vmatpush1.msra.mxu0 0.0
    %3474 = vmatprep.subr.mxu0 0.0
    %3475 = vmatpush1.msra.mxu0 0.0
    %3476 = vmatprep.subr.mxu0 0.0
    %3477 = vmatpush1.msra.mxu0 0.0
    %3478 = vmatprep.subr.mxu0 0.0
    %3479 = vmatpush1.msra.mxu0 0.0
    %3480 = vmatprep.subr.mxu0 0.0
    %3481 = vmatpush1.msra.mxu0 0.0
    %3482 = vmatprep.subr.mxu0 0.0
    %3483 = vmatpush1.msra.mxu0 0.0
    %3484 = vmatprep.subr.mxu0 0.0
    %3485 = vmatpush1.msra.mxu0 0.0
    %3486 = vmatprep.subr.mxu0 0.0
    %3487 = vmatpush1.msra.mxu0 0.0
    %3488 = vmatprep.subr.mxu0 0.0
    %3489 = vmatpush1.msra.mxu0 0.0
    %3490 = vmatprep.subr.mxu0 0.0
    %3491 = vmatpush1.msra.mxu0 0.0
    %3492 = vmatprep.subr.mxu0 0.0
    %3493 = vmatpush1.msra.mxu0 0.0
    %3494 = vmatprep.subr.mxu0 0.0
    %3495 = vmatpush1.msra.mxu0 0.0
    %3496 = vmatprep.subr.mxu0 0.0
    %3497 = vmatpush1.msra.mxu0 0.0
    %3498 = vmatprep.subr.mxu0 0.0
    %3499 = vmatpush1.msra.mxu0 0.0
    %3500 = vmatprep.subr.mxu0 0.0
    %3501 = vmatpush1.msra.mxu0 0.0
    %3502 = vmatprep.subr.mxu0 0.0
    %3503 = vmatpush1.msra.mxu0 0.0
    %3504 = vmatprep.subr.mxu0 0.0
    %3505 = vmatpush1.msra.mxu0 0.0
    %3506 = vmatprep.subr.mxu0 0.0
    %3507 = vmatpush1.msra.mxu0 0.0
    %3508 = vmatprep.subr.mxu0 0.0
    %3509 = vmatpush1.msra.mxu0 0.0
    %3510 = vmatprep.subr.mxu0 0.0
    %3511 = vmatpush1.msra.mxu0 0.0
    %3512 = vmatprep.subr.mxu0 0.0
    %3513 = vmatpush1.msra.mxu0 0.0
    %3514 = vmatprep.subr.mxu0 0.0
    %3515 = vmatpush1.msra.mxu0 0.0
    %3516 = vmatprep.subr.mxu0 0.0
    %3517 = vmatpush1.msra.mxu0 0.0
    %3518 = vmatprep.subr.mxu0 0.0
    %3519 = vmatpush1.msra.mxu0 0.0
    %3520 = vmatprep.subr.mxu0 0.0
    %3521 = vmatpush1.msra.mxu0 0.0
    %3522 = vmatprep.subr.mxu0 0.0
    %3523 = vmatpush1.msra.mxu0 0.0
    %3524 = vmatprep.subr.mxu0 0.0
    %3525 = vmatpush1.msra.mxu0 0.0
    %3526 = vmatprep.subr.mxu0 0.0
    %3527 = vmatpush1.msra.mxu0 0.0
    %3528 = vmatprep.subr.mxu0 0.0
    %3529 = vmatpush1.msra.mxu0 0.0
    %3530 = vmatprep.subr.mxu0 0.0
    %3531 = vmatpush1.msra.mxu0 0.0
    %3532 = vmatprep.mubr.f32.mxu0 0.0
    %3533 = vmatmul.mubr.f32.gmra.mrb[0].mxu0 %v3463
    %v3534 = vpop.f32.mrb[0].mxu0
    %v3535 = vadd.f32 0.0, %v3534
    %v3536 = vpop.f32.mrb[0].mxu0
    %3537 = vmatprep.mubr.f32.mxu0 0.0
    %3538 = vmatmul.mubr.f32.gmra.mrb[0].mxu0 %v3466
    %v3539 = vpop.f32.mrb[0].mxu0
    %v3540 = vadd.f32 0.0, %v3539
    %v3541 = vpop.f32.mrb[0].mxu0
    %3542 = vdwg.mxu0
    %v3543 = vadd.f32 %v3070, %v3454
    %v3544 = vadd.f32 %v3071, %v3459
    %v3545 = vadd.f32 %v3072, %v3535
    %v3546 = vadd.f32 %v3073, %v3540
    %v3551 = vcombine.high %v3543, %v3543
    %v3553 = vunpack.c.l.s4 1983009808
    %v3554 = vunpack.c.0.s8 %v3553
    %v3555 = vlaneseq
    %v3556 = vshrl.u32 %v3555, 7
    %v3557 = vsub.s32 %v3554, %v3556
    %v3558 = vrot.slane %v3543, %v3557
    %v3560 = vunpack.c.l.s4 1983009808
    %v3561 = vunpack.c.0.s8 %v3560
    %v3562 = vlaneseq
    %v3563 = vshrl.u32 %v3562, 7
    %v3564 = vsub.s32 %v3561, %v3563
    %v3565 = vrot.slane %v3551, %v3564
    %v3566 = vcombine.high %v3558, %v3558
    %v3567 = vcombine.high %v3565, %v3565
    %v3569 = vunpack.c.l.s4 1983009808
    %v3570 = vunpack.c.0.s8 %v3569
    %v3571 = vlaneseq
    %v3572 = vshrl.u32 %v3571, 7
    %v3573 = vsub.s32 %v3570, %v3572
    %v3574 = vrot.slane %v3544, %v3573
    %v3575 = vcombine.high %v3545, %v3545
    %v3577 = vunpack.c.l.s4 1983009808
    %v3578 = vunpack.c.0.s8 %v3577
    %v3579 = vlaneseq
    %v3580 = vshrl.u32 %v3579, 7
    %v3581 = vsub.s32 %v3578, %v3580
    %v3582 = vrot.slane %v3545, %v3581
    %v3584 = vunpack.c.l.s4 1983009808
    %v3585 = vunpack.c.0.s8 %v3584
    %v3586 = vlaneseq
    %v3587 = vshrl.u32 %v3586, 7
    %v3588 = vsub.s32 %v3585, %v3587
    %v3589 = vrot.slane %v3575, %v3588
    %v3590 = vcombine.high %v3582, %v3582
    %v3591 = vcombine.high %v3589, %v3589
    %v3593 = vunpack.c.l.s4 1983009808
    %v3594 = vunpack.c.0.s8 %v3593
    %v3595 = vlaneseq
    %v3596 = vshrl.u32 %v3595, 7
    %v3597 = vsub.s32 %v3594, %v3596
    %v3598 = vrot.slane %v3546, %v3597
    %v3599 = vld [vmem:[#allocation19] sm:$0xff]
    %v3600 = vld [vmem:[#allocation19 + $0x8] sm:$0xff]
    %v3601 = vld [vmem:[#allocation19 + $0x10] sm:$0xff]
    %v3602 = vld [vmem:[#allocation19 + $0x18] sm:$0xff]
    %v3603 = vld [vmem:[#allocation19 + $0x20] sm:$0xff]
    %v3604 = vld [vmem:[#allocation19 + $0x28] sm:$0xff]
    %v3605 = vld [vmem:[#allocation21] sm:$0x1]
    %v3607 = vlaneseq
    %v3608 = vshrl.u32 %v3607, 7
    %v3609 = vsub.s32 0, %v3608
    %v3610 = vrot.slane %v3605, %v3609
    %v3612 = vcombine.low %v3558, %v3566
    %v3613 = vcombine.low %v3565, %v3567
    %v3615 = vunpack.c.l.s4 1983009808
    %v3616 = vunpack.c.0.s8 %v3615
    %v3617 = vlaneseq
    %v3618 = vshrl.u32 %v3617, 7
    %v3619 = vsub.s32 %v3616, %v3618
    %v3620 = vrot.slane %v3612, %v3619
    %v3622 = vunpack.c.l.s4 1983009808
    %v3623 = vunpack.c.0.s8 %v3622
    %v3624 = vlaneseq
    %v3625 = vshrl.u32 %v3624, 7
    %v3626 = vsub.s32 %v3623, %v3625
    %v3627 = vrot.slane %v3613, %v3626
    %v3628 = vcombine.low %v3620, %v3627
    %v3629 = vcombine.low %v3574, %v3582
    %v3630 = vcombine.low %v3590, %v3589
    %v3632 = vunpack.c.l.s4 1983009808
    %v3633 = vunpack.c.0.s8 %v3632
    %v3634 = vlaneseq
    %v3635 = vshrl.u32 %v3634, 7
    %v3636 = vsub.s32 %v3633, %v3635
    %v3637 = vrot.slane %v3629, %v3636
    %v3639 = vunpack.c.l.s4 1983009808
    %v3640 = vunpack.c.0.s8 %v3639
    %v3641 = vlaneseq
    %v3642 = vshrl.u32 %v3641, 7
    %v3643 = vsub.s32 %v3640, %v3642
    %v3644 = vrot.slane %v3630, %v3643
    %v3645 = vcombine.low %v3637, %v3644
    %v3646 = vcombine.low %v3591, %v3598
    %v3648 = vunpack.c.l.s4 1983009808
    %v3649 = vunpack.c.0.s8 %v3648
    %v3650 = vlaneseq
    %v3651 = vshrl.u32 %v3650, 7
    %v3652 = vsub.s32 %v3649, %v3651
    %v3653 = vrot.slane %v3646, %v3652
    %v3654 = vsel %vm356, %v3628, 0
    %v3656 = vsel %vm356, %v3645, 0
    %v3658 = vsel %vm356, %v3653, 0
    %3660 = vmatprep.subr.mxu0 0.0
    %3661 = vmatpush1.msra.mxu0 %v3599
    %3662 = vmatprep.subr.mxu0 0.0
    %3663 = vmatpush1.msra.mxu0 %v3600
    %3664 = vmatprep.subr.mxu0 0.0
    %3665 = vmatpush1.msra.mxu0 %v3601
    %3666 = vmatprep.subr.mxu0 0.0
    %3667 = vmatpush1.msra.mxu0 %v3602
    %3668 = vmatprep.subr.mxu0 0.0
    %3669 = vmatpush1.msra.mxu0 %v3603
    %3670 = vmatprep.subr.mxu0 0.0
    %3671 = vmatpush1.msra.mxu0 %v3604
    %3672 = vmatprep.subr.mxu0 0.0
    %3673 = vmatpush1.msra.mxu0 0.0
    %3674 = vmatprep.subr.mxu0 0.0
    %3675 = vmatpush1.msra.mxu0 0.0
    %3676 = vmatprep.subr.mxu0 0.0
    %3677 = vmatpush1.msra.mxu0 0.0
    %3678 = vmatprep.subr.mxu0 0.0
    %3679 = vmatpush1.msra.mxu0 0.0
    %3680 = vmatprep.subr.mxu0 0.0
    %3681 = vmatpush1.msra.mxu0 0.0
    %3682 = vmatprep.subr.mxu0 0.0
    %3683 = vmatpush1.msra.mxu0 0.0
    %3684 = vmatprep.subr.mxu0 0.0
    %3685 = vmatpush1.msra.mxu0 0.0
    %3686 = vmatprep.subr.mxu0 0.0
    %3687 = vmatpush1.msra.mxu0 0.0
    %3688 = vmatprep.subr.mxu0 0.0
    %3689 = vmatpush1.msra.mxu0 0.0
    %3690 = vmatprep.subr.mxu0 0.0
    %3691 = vmatpush1.msra.mxu0 0.0
    %3692 = vmatprep.subr.mxu0 0.0
    %3693 = vmatpush1.msra.mxu0 0.0
    %3694 = vmatprep.subr.mxu0 0.0
    %3695 = vmatpush1.msra.mxu0 0.0
    %3696 = vmatprep.subr.mxu0 0.0
    %3697 = vmatpush1.msra.mxu0 0.0
    %3698 = vmatprep.subr.mxu0 0.0
    %3699 = vmatpush1.msra.mxu0 0.0
    %3700 = vmatprep.subr.mxu0 0.0
    %3701 = vmatpush1.msra.mxu0 0.0
    %3702 = vmatprep.subr.mxu0 0.0
    %3703 = vmatpush1.msra.mxu0 0.0
    %3704 = vmatprep.subr.mxu0 0.0
    %3705 = vmatpush1.msra.mxu0 0.0
    %3706 = vmatprep.subr.mxu0 0.0
    %3707 = vmatpush1.msra.mxu0 0.0
    %3708 = vmatprep.subr.mxu0 0.0
    %3709 = vmatpush1.msra.mxu0 0.0
    %3710 = vmatprep.subr.mxu0 0.0
    %3711 = vmatpush1.msra.mxu0 0.0
    %3712 = vmatprep.subr.mxu0 0.0
    %3713 = vmatpush1.msra.mxu0 0.0
    %3714 = vmatprep.subr.mxu0 0.0
    %3715 = vmatpush1.msra.mxu0 0.0
    %3716 = vmatprep.subr.mxu0 0.0
    %3717 = vmatpush1.msra.mxu0 0.0
    %3718 = vmatprep.subr.mxu0 0.0
    %3719 = vmatpush1.msra.mxu0 0.0
    %3720 = vmatprep.subr.mxu0 0.0
    %3721 = vmatpush1.msra.mxu0 0.0
    %3722 = vmatprep.subr.mxu0 0.0
    %3723 = vmatpush1.msra.mxu0 0.0
    %3724 = vmatprep.mubr.f32.mxu0 0.0
    %3725 = vmatmul.mubr.f32.gmra.mrb[0].mxu0 %v3654
    %v3726 = vpop.f32.mrb[0].mxu0
    %v3727 = vadd.f32 %v3610, %v3726
    %v3728 = vpop.f32.mrb[0].mxu0
    %3729 = vmatprep.mubr.f32.mxu0 0.0
    %3730 = vmatmul.mubr.f32.gmra.mrb[0].mxu0 %v3656
    %v3731 = vpop.f32.mrb[0].mxu0
    %v3732 = vadd.f32 %v3610, %v3731
    %v3733 = vpop.f32.mrb[0].mxu0
    %3734 = vmatprep.mubr.f32.mxu0 0.0
    %3735 = vmatmul.mubr.f32.gmra.mrb[0].mxu0 %v3658
    %v3736 = vpop.f32.mrb[0].mxu0
    %v3737 = vadd.f32 %v3610, %v3736
    %v3738 = vpop.f32.mrb[0].mxu0
    %3739 = vdwg.mxu0
    %v3743 = vadd.f32 %v3727, %v330
    %v3744 = vadd.f32 %v3732, %v347
    %v3745 = vadd.f32 %v3737, %v355
    %v3749 = vcombine.high %v3743, %v3743
    %v3751 = vunpack.c.l.s4 1983009808
    %v3752 = vunpack.c.0.s8 %v3751
    %v3753 = vlaneseq
    %v3754 = vshrl.u32 %v3753, 7
    %v3755 = vsub.s32 %v3752, %v3754
    %v3756 = vrot.slane %v3743, %v3755
    %v3758 = vunpack.c.l.s4 1983009808
    %v3759 = vunpack.c.0.s8 %v3758
    %v3760 = vlaneseq
    %v3761 = vshrl.u32 %v3760, 7
    %v3762 = vsub.s32 %v3759, %v3761
    %v3763 = vrot.slane %v3749, %v3762
    %v3764 = vcombine.high %v3756, %v3756
    %v3765 = vcombine.high %v3763, %v3763
    %v3766 = vcombine.high %v3744, %v3744
    %v3768 = vunpack.c.l.s4 1983009808
    %v3769 = vunpack.c.0.s8 %v3768
    %v3770 = vlaneseq
    %v3771 = vshrl.u32 %v3770, 7
    %v3772 = vsub.s32 %v3769, %v3771
    %v3773 = vrot.slane %v3744, %v3772
    %v3775 = vunpack.c.l.s4 1983009808
    %v3776 = vunpack.c.0.s8 %v3775
    %v3777 = vlaneseq
    %v3778 = vshrl.u32 %v3777, 7
    %v3779 = vsub.s32 %v3776, %v3778
    %v3780 = vrot.slane %v3766, %v3779
    %v3781 = vcombine.high %v3773, %v3773
    %v3782 = vcombine.high %v3780, %v3780
    %v3784 = vunpack.c.l.s4 1983009808
    %v3785 = vunpack.c.0.s8 %v3784
    %v3786 = vlaneseq
    %v3787 = vshrl.u32 %v3786, 7
    %v3788 = vsub.s32 %v3785, %v3787
    %v3789 = vrot.slane %v3745, %v3788
    %v3790 = vcombine.high %v3789, %v3789
    %v3791 = vcombine.low %v3756, %v3764
    %v3792 = vcombine.low %v3763, %v3765
    %v3794 = vunpack.c.l.s4 1983009808
    %v3795 = vunpack.c.0.s8 %v3794
    %v3796 = vlaneseq
    %v3797 = vshrl.u32 %v3796, 7
    %v3798 = vsub.s32 %v3795, %v3797
    %v3799 = vrot.slane %v3791, %v3798
    %v3801 = vunpack.c.l.s4 1983009808
    %v3802 = vunpack.c.0.s8 %v3801
    %v3803 = vlaneseq
    %v3804 = vshrl.u32 %v3803, 7
    %v3805 = vsub.s32 %v3802, %v3804
    %v3806 = vrot.slane %v3792, %v3805
    %v3807 = vcombine.low %v3799, %v3806
    %v3809 = vunpack.c.l.s4 1983009808
    %v3810 = vunpack.c.0.s8 %v3809
    %v3811 = vlaneseq
    %v3812 = vshrl.u32 %v3811, 7
    %v3813 = vsub.s32 %v3810, %v3812
    %v3814 = vrot.slane %v3773, %v3813
    %v3815 = vcombine.low %v3781, %v3780
    %v3816 = vcombine.low %v3782, %v3789
    %v3818 = vunpack.c.l.s4 1983009808
    %v3819 = vunpack.c.0.s8 %v3818
    %v3820 = vlaneseq
    %v3821 = vshrl.u32 %v3820, 7
    %v3822 = vsub.s32 %v3819, %v3821
    %v3823 = vrot.slane %v3815, %v3822
    %v3825 = vunpack.c.l.s4 1983009808
    %v3826 = vunpack.c.0.s8 %v3825
    %v3827 = vlaneseq
    %v3828 = vshrl.u32 %v3827, 7
    %v3829 = vsub.s32 %v3826, %v3828
    %v3830 = vrot.slane %v3816, %v3829
    %v3831 = vcombine.low %v3823, %v3830
    %v3833 = vunpack.c.l.s4 1983009808
    %v3834 = vunpack.c.0.s8 %v3833
    %v3835 = vlaneseq
    %v3836 = vshrl.u32 %v3835, 7
    %v3837 = vsub.s32 %v3834, %v3836
    %v3838 = vrot.slane %v3790, %v3837
    %v3843 = vsel %vm356, %v3807, -inf
    %vm3844 = vcmask 386048
    %v3845 = vsel %vm3844, %v3814, -inf
    %v3846 = vmax.f32 %v3843, %v3845
    %v3847 = vrot.slane %v3846, 4
    %v3848 = vmax.f32 %v3846, %v3847
    %v3849 = vrot.slane %v3848, 2
    %v3850 = vmax.f32 %v3848, %v3849
    %v3851 = vrot.slane %v3850, 1
    %v3852 = vmax.f32 %v3850, %v3851
    %v3853 = vsel %vm356, %v3831, -inf
    %v3854 = vsel %vm3844, %v3838, -inf
    %v3855 = vmax.f32 %v3853, %v3854
    %v3856 = vrot.slane %v3855, 4
    %v3857 = vmax.f32 %v3855, %v3856
    %v3858 = vrot.slane %v3857, 2
    %v3859 = vmax.f32 %v3857, %v3858
    %v3860 = vrot.slane %v3859, 1
    %v3861 = vmax.f32 %v3859, %v3860
    %v3862 = vld [vmem:[%s12] sm:$0xff]
    %v3863 = vld [vmem:[%s12 + $0x8] sm:$0xff]
    %v3864 = vld [vmem:[%s12 + $0x10] sm:$0xff]
    %v3865 = vld [vmem:[%s12 + $0x18] sm:$0xff]
    %v3866 = vld [vmem:[%s12 + $0x20] sm:$0xff]
    %v3867 = vld [vmem:[%s12 + $0x28] sm:$0xff]
    %v3868 = vld [vmem:[%s12 + $0x30] sm:$0xff]
    %v3869 = vld [vmem:[%s12 + $0x38] sm:$0xff]
    %v3870 = vld [vmem:[%s12 + $0x40] sm:$0xff]
    %v3871 = vld [vmem:[%s12 + $0x48] sm:$0xff]
    %v3872 = vld [vmem:[%s12 + $0x50] sm:$0xff]
    %v3873 = vld [vmem:[%s12 + $0x58] sm:$0xff]
    %v3874 = vld [vmem:[%s14] sm:$0x3]
    %v3876 = vlaneseq
    %v3877 = vshrl.u32 %v3876, 7
    %v3878 = vsub.s32 0, %v3877
    %v3879 = vrot.slane %v3874, %v3878
    %v3880 = vlaneseq
    %v3881 = vshrl.u32 %v3880, 7
    %v3882 = vsub.s32 1, %v3881
    %v3883 = vrot.slane %v3874, %v3882
    %v3886 = vsel %vm356, %v3743, 0
    %v3888 = vsel %vm356, %v3744, 0
    %v3890 = vsel %vm356, %v3745, 0
    %3892 = vmatprep.subr.mxu0 %v3863
    %3893 = vmatpush1.msra.mxu0 %v3862
    %3894 = vmatprep.subr.mxu0 %v3865
    %3895 = vmatpush1.msra.mxu0 %v3864
    %3896 = vmatprep.subr.mxu0 %v3867
    %3897 = vmatpush1.msra.mxu0 %v3866
    %3898 = vmatprep.subr.mxu0 %v3869
    %3899 = vmatpush1.msra.mxu0 %v3868
    %3900 = vmatprep.subr.mxu0 %v3871
    %3901 = vmatpush1.msra.mxu0 %v3870
    %3902 = vmatprep.subr.mxu0 %v3873
    %3903 = vmatpush1.msra.mxu0 %v3872
    %3904 = vmatprep.subr.mxu0 0.0
    %3905 = vmatpush1.msra.mxu0 0.0
    %3906 = vmatprep.subr.mxu0 0.0
    %3907 = vmatpush1.msra.mxu0 0.0
    %3908 = vmatprep.subr.mxu0 0.0
    %3909 = vmatpush1.msra.mxu0 0.0
    %3910 = vmatprep.subr.mxu0 0.0
    %3911 = vmatpush1.msra.mxu0 0.0
    %3912 = vmatprep.subr.mxu0 0.0
    %3913 = vmatpush1.msra.mxu0 0.0
    %3914 = vmatprep.subr.mxu0 0.0
    %3915 = vmatpush1.msra.mxu0 0.0
    %3916 = vmatprep.subr.mxu0 0.0
    %3917 = vmatpush1.msra.mxu0 0.0
    %3918 = vmatprep.subr.mxu0 0.0
    %3919 = vmatpush1.msra.mxu0 0.0
    %3920 = vmatprep.subr.mxu0 0.0
    %3921 = vmatpush1.msra.mxu0 0.0
    %3922 = vmatprep.subr.mxu0 0.0
    %3923 = vmatpush1.msra.mxu0 0.0
    %3924 = vmatprep.subr.mxu0 0.0
    %3925 = vmatpush1.msra.mxu0 0.0
    %3926 = vmatprep.subr.mxu0 0.0
    %3927 = vmatpush1.msra.mxu0 0.0
    %3928 = vmatprep.subr.mxu0 0.0
    %3929 = vmatpush1.msra.mxu0 0.0
    %3930 = vmatprep.subr.mxu0 0.0
    %3931 = vmatpush1.msra.mxu0 0.0
    %3932 = vmatprep.subr.mxu0 0.0
    %3933 = vmatpush1.msra.mxu0 0.0
    %3934 = vmatprep.subr.mxu0 0.0
    %3935 = vmatpush1.msra.mxu0 0.0
    %3936 = vmatprep.subr.mxu0 0.0
    %3937 = vmatpush1.msra.mxu0 0.0
    %3938 = vmatprep.subr.mxu0 0.0
    %3939 = vmatpush1.msra.mxu0 0.0
    %3940 = vmatprep.subr.mxu0 0.0
    %3941 = vmatpush1.msra.mxu0 0.0
    %3942 = vmatprep.subr.mxu0 0.0
    %3943 = vmatpush1.msra.mxu0 0.0
    %3944 = vmatprep.subr.mxu0 0.0
    %3945 = vmatpush1.msra.mxu0 0.0
    %3946 = vmatprep.subr.mxu0 0.0
    %3947 = vmatpush1.msra.mxu0 0.0
    %3948 = vmatprep.subr.mxu0 0.0
    %3949 = vmatpush1.msra.mxu0 0.0
    %3950 = vmatprep.subr.mxu0 0.0
    %3951 = vmatpush1.msra.mxu0 0.0
    %3952 = vmatprep.subr.mxu0 0.0
    %3953 = vmatpush1.msra.mxu0 0.0
    %3954 = vmatprep.subr.mxu0 0.0
    %3955 = vmatpush1.msra.mxu0 0.0
    %3956 = vmatprep.mubr.f32.mxu0 0.0
    %3957 = vmatmul.mubr.f32.gmra.mrb[0].mxu0 %v3886
    %v3958 = vpop.f32.mrb[0].mxu0
    %v3959 = vadd.f32 %v3879, %v3958
    %v3960 = vpop.f32.mrb[0].mxu0
    %v3961 = vadd.f32 %v3883, %v3960
    %3962 = vmatprep.mubr.f32.mxu0 0.0
    %3963 = vmatmul.mubr.f32.gmra.mrb[0].mxu0 %v3888
    %v3964 = vpop.f32.mrb[0].mxu0
    %v3965 = vadd.f32 %v3879, %v3964
    %v3966 = vpop.f32.mrb[0].mxu0
    %v3967 = vadd.f32 %v3883, %v3966
    %3968 = vmatprep.mubr.f32.mxu0 0.0
    %3969 = vmatmul.mubr.f32.gmra.mrb[0].mxu0 %v3890
    %v3970 = vpop.f32.mrb[0].mxu0
    %v3971 = vadd.f32 %v3879, %v3970
    %v3972 = vpop.f32.mrb[0].mxu0
    %v3973 = vadd.f32 %v3883, %v3972
    %3974 = vdwg.mxu0
    %v3981 = vcombine.low %v3959, %v3961
    %v3982 = vcombine.high %v3959, %v3961
    %v3984 = vunpack.c.l.s4 1983009808
    %v3985 = vunpack.c.0.s8 %v3984
    %v3986 = vlaneseq
    %v3987 = vshrl.u32 %v3986, 7
    %v3988 = vsub.s32 %v3985, %v3987
    %v3989 = vrot.slane %v3981, %v3988
    %v3991 = vunpack.c.l.s4 1983009808
    %v3992 = vunpack.c.0.s8 %v3991
    %v3993 = vlaneseq
    %v3994 = vshrl.u32 %v3993, 7
    %v3995 = vsub.s32 %v3992, %v3994
    %v3996 = vrot.slane %v3982, %v3995
    %v3997 = vcombine.high %v3989, %v3989
    %v3998 = vcombine.high %v3996, %v3996
    %v3999 = vcombine.low %v3965, %v3967
    %v4000 = vcombine.high %v3965, %v3967
    %v4002 = vunpack.c.l.s4 1983009808
    %v4003 = vunpack.c.0.s8 %v4002
    %v4004 = vlaneseq
    %v4005 = vshrl.u32 %v4004, 7
    %v4006 = vsub.s32 %v4003, %v4005
    %v4007 = vrot.slane %v3999, %v4006
    %v4009 = vunpack.c.l.s4 1983009808
    %v4010 = vunpack.c.0.s8 %v4009
    %v4011 = vlaneseq
    %v4012 = vshrl.u32 %v4011, 7
    %v4013 = vsub.s32 %v4010, %v4012
    %v4014 = vrot.slane %v4000, %v4013
    %v4015 = vcombine.high %v4007, %v4007
    %v4016 = vcombine.high %v4014, %v4014
    %v4017 = vcombine.low %v3971, %v3973
    %v4019 = vunpack.c.l.s4 1983009808
    %v4020 = vunpack.c.0.s8 %v4019
    %v4021 = vlaneseq
    %v4022 = vshrl.u32 %v4021, 7
    %v4023 = vsub.s32 %v4020, %v4022
    %v4024 = vrot.slane %v4017, %v4023
    %v4025 = vcombine.high %v4024, %v4024
    %v4026 = vcombine.low %v3989, %v3997
    %v4027 = vcombine.low %v3996, %v3998
    %v4029 = vunpack.c.l.s4 1983009808
    %v4030 = vunpack.c.0.s8 %v4029
    %v4031 = vlaneseq
    %v4032 = vshrl.u32 %v4031, 7
    %v4033 = vsub.s32 %v4030, %v4032
    %v4034 = vrot.slane %v4026, %v4033
    %v4036 = vunpack.c.l.s4 1983009808
    %v4037 = vunpack.c.0.s8 %v4036
    %v4038 = vlaneseq
    %v4039 = vshrl.u32 %v4038, 7
    %v4040 = vsub.s32 %v4037, %v4039
    %v4041 = vrot.slane %v4027, %v4040
    %v4042 = vcombine.low %v4034, %v4041
    %v4043 = vcombine.high %v4034, %v4041
    %v4045 = vunpack.c.l.s4 1983009808
    %v4046 = vunpack.c.0.s8 %v4045
    %v4047 = vlaneseq
    %v4048 = vshrl.u32 %v4047, 7
    %v4049 = vsub.s32 %v4046, %v4048
    %v4050 = vrot.slane %v4007, %v4049
    %v4051 = vcombine.high %v4050, %v4050
    %v4052 = vcombine.low %v4015, %v4014
    %v4053 = vcombine.low %v4016, %v4024
    %v4055 = vunpack.c.l.s4 1983009808
    %v4056 = vunpack.c.0.s8 %v4055
    %v4057 = vlaneseq
    %v4058 = vshrl.u32 %v4057, 7
    %v4059 = vsub.s32 %v4056, %v4058
    %v4060 = vrot.slane %v4052, %v4059
    %v4062 = vunpack.c.l.s4 1983009808
    %v4063 = vunpack.c.0.s8 %v4062
    %v4064 = vlaneseq
    %v4065 = vshrl.u32 %v4064, 7
    %v4066 = vsub.s32 %v4063, %v4065
    %v4067 = vrot.slane %v4053, %v4066
    %v4068 = vcombine.low %v4060, %v4067
    %v4069 = vcombine.high %v4060, %v4067
    %v4071 = vunpack.c.l.s4 1983009808
    %v4072 = vunpack.c.0.s8 %v4071
    %v4073 = vlaneseq
    %v4074 = vshrl.u32 %v4073, 7
    %v4075 = vsub.s32 %v4072, %v4074
    %v4076 = vrot.slane %v4025, %v4075
    %v4077 = vcombine.high %v4076, %v4076
    %4086 = vst [vmem:[#allocation2] sm:$0xff] %v4042
    %vm4087 = vcmask 130048
    %4088 = vst.msk [vmem:[#allocation2 + $0x8] sm:$0xff] %vm4087, %v4043
    %4089 = vst [vmem:[#allocation2 + $0x10] sm:$0x3] %v4050
    %vm4090 = vcmask 123904
    %4091 = vst.msk [vmem:[#allocation2 + $0x18] sm:$0x3] %vm4090, %v4051
    %4092 = vst [vmem:[#allocation2 + $0x20] sm:$0xff] %v4068
    %4093 = vst.msk [vmem:[#allocation2 + $0x28] sm:$0xff] %vm4087, %v4069
    %4094 = vst [vmem:[#allocation2 + $0x30] sm:$0x3] %v4076
    %4095 = vst.msk [vmem:[#allocation2 + $0x38] sm:$0x3] %vm4090, %v4077
    %v4096 = vld [vmem:[#allocation24] sm:$0xff]
    %v4097 = vld [vmem:[#allocation24 + $0x8] sm:$0xff]
    %v4098 = vld [vmem:[#allocation24 + $0x10] sm:$0xff]
    %v4099 = vld [vmem:[#allocation24 + $0x18] sm:$0xff]
    %v4100 = vld [vmem:[#allocation24 + $0x20] sm:$0xff]
    %v4101 = vld [vmem:[#allocation24 + $0x28] sm:$0xff]
    %v4102 = vld [vmem:[#allocation24 + $0x30] sm:$0xff]
    %v4103 = vld [vmem:[#allocation24 + $0x38] sm:$0xff]
    %v4104 = vld [vmem:[#allocation24 + $0x40] sm:$0xff]
    %v4105 = vld [vmem:[#allocation24 + $0x48] sm:$0xff]
    %v4106 = vld [vmem:[#allocation24 + $0x50] sm:$0xff]
    %v4107 = vld [vmem:[#allocation24 + $0x58] sm:$0xff]
    %v4108 = vld [vmem:[%s18] sm:$0x3]
    %v4110 = vlaneseq
    %v4111 = vshrl.u32 %v4110, 7
    %v4112 = vsub.s32 0, %v4111
    %v4113 = vrot.slane %v4108, %v4112
    %v4114 = vlaneseq
    %v4115 = vshrl.u32 %v4114, 7
    %v4116 = vsub.s32 1, %v4115
    %v4117 = vrot.slane %v4108, %v4116
    %4120 = vmatprep.subr.mxu0 %v4097
    %4121 = vmatpush1.msra.mxu0 %v4096
    %4122 = vmatprep.subr.mxu0 %v4099
    %4123 = vmatpush1.msra.mxu0 %v4098
    %4124 = vmatprep.subr.mxu0 %v4101
    %4125 = vmatpush1.msra.mxu0 %v4100
    %4126 = vmatprep.subr.mxu0 %v4103
    %4127 = vmatpush1.msra.mxu0 %v4102
    %4128 = vmatprep.subr.mxu0 %v4105
    %4129 = vmatpush1.msra.mxu0 %v4104
    %4130 = vmatprep.subr.mxu0 %v4107
    %4131 = vmatpush1.msra.mxu0 %v4106
    %4132 = vmatprep.subr.mxu0 0.0
    %4133 = vmatpush1.msra.mxu0 0.0
    %4134 = vmatprep.subr.mxu0 0.0
    %4135 = vmatpush1.msra.mxu0 0.0
    %4136 = vmatprep.subr.mxu0 0.0
    %4137 = vmatpush1.msra.mxu0 0.0
    %4138 = vmatprep.subr.mxu0 0.0
    %4139 = vmatpush1.msra.mxu0 0.0
    %4140 = vmatprep.subr.mxu0 0.0
    %4141 = vmatpush1.msra.mxu0 0.0
    %4142 = vmatprep.subr.mxu0 0.0
    %4143 = vmatpush1.msra.mxu0 0.0
    %4144 = vmatprep.subr.mxu0 0.0
    %4145 = vmatpush1.msra.mxu0 0.0
    %4146 = vmatprep.subr.mxu0 0.0
    %4147 = vmatpush1.msra.mxu0 0.0
    %4148 = vmatprep.subr.mxu0 0.0
    %4149 = vmatpush1.msra.mxu0 0.0
    %4150 = vmatprep.subr.mxu0 0.0
    %4151 = vmatpush1.msra.mxu0 0.0
    %4152 = vmatprep.subr.mxu0 0.0
    %4153 = vmatpush1.msra.mxu0 0.0
    %4154 = vmatprep.subr.mxu0 0.0
    %4155 = vmatpush1.msra.mxu0 0.0
    %4156 = vmatprep.subr.mxu0 0.0
    %4157 = vmatpush1.msra.mxu0 0.0
    %4158 = vmatprep.subr.mxu0 0.0
    %4159 = vmatpush1.msra.mxu0 0.0
    %4160 = vmatprep.subr.mxu0 0.0
    %4161 = vmatpush1.msra.mxu0 0.0
    %4162 = vmatprep.subr.mxu0 0.0
    %4163 = vmatpush1.msra.mxu0 0.0
    %4164 = vmatprep.subr.mxu0 0.0
    %4165 = vmatpush1.msra.mxu0 0.0
    %4166 = vmatprep.subr.mxu0 0.0
    %4167 = vmatpush1.msra.mxu0 0.0
    %4168 = vmatprep.subr.mxu0 0.0
    %4169 = vmatpush1.msra.mxu0 0.0
    %4170 = vmatprep.subr.mxu0 0.0
    %4171 = vmatpush1.msra.mxu0 0.0
    %4172 = vmatprep.subr.mxu0 0.0
    %4173 = vmatpush1.msra.mxu0 0.0
    %4174 = vmatprep.subr.mxu0 0.0
    %4175 = vmatpush1.msra.mxu0 0.0
    %4176 = vmatprep.subr.mxu0 0.0
    %4177 = vmatpush1.msra.mxu0 0.0
    %4178 = vmatprep.subr.mxu0 0.0
    %4179 = vmatpush1.msra.mxu0 0.0
    %4180 = vmatprep.subr.mxu0 0.0
    %4181 = vmatpush1.msra.mxu0 0.0
    %4182 = vmatprep.subr.mxu0 0.0
    %4183 = vmatpush1.msra.mxu0 0.0
    %4184 = vmatprep.mubr.f32.mxu0 0.0
    %4185 = vmatmul.mubr.f32.gmra.mrb[0].mxu0 %v3886
    %v4186 = vpop.f32.mrb[0].mxu0
    %v4187 = vadd.f32 %v4113, %v4186
    %v4188 = vpop.f32.mrb[0].mxu0
    %v4189 = vadd.f32 %v4117, %v4188
    %4190 = vmatprep.mubr.f32.mxu0 0.0
    %4191 = vmatmul.mubr.f32.gmra.mrb[0].mxu0 %v3888
    %v4192 = vpop.f32.mrb[0].mxu0
    %v4193 = vadd.f32 %v4113, %v4192
    %v4194 = vpop.f32.mrb[0].mxu0
    %v4195 = vadd.f32 %v4117, %v4194
    %4196 = vmatprep.mubr.f32.mxu0 0.0
    %4197 = vmatmul.mubr.f32.gmra.mrb[0].mxu0 %v3890
    %v4198 = vpop.f32.mrb[0].mxu0
    %v4199 = vadd.f32 %v4113, %v4198
    %v4200 = vpop.f32.mrb[0].mxu0
    %v4201 = vadd.f32 %v4117, %v4200
    %4202 = vdwg.mxu0
    %v4209 = vcombine.low %v4187, %v4189
    %v4210 = vcombine.high %v4187, %v4189
    %v4212 = vunpack.c.l.s4 1983009808
    %v4213 = vunpack.c.0.s8 %v4212
    %v4214 = vlaneseq
    %v4215 = vshrl.u32 %v4214, 7
    %v4216 = vsub.s32 %v4213, %v4215
    %v4217 = vrot.slane %v4209, %v4216
    %v4219 = vunpack.c.l.s4 1983009808
    %v4220 = vunpack.c.0.s8 %v4219
    %v4221 = vlaneseq
    %v4222 = vshrl.u32 %v4221, 7
    %v4223 = vsub.s32 %v4220, %v4222
    %v4224 = vrot.slane %v4210, %v4223
    %v4225 = vcombine.high %v4217, %v4217
    %v4226 = vcombine.high %v4224, %v4224
    %v4227 = vcombine.low %v4193, %v4195
    %v4228 = vcombine.high %v4193, %v4195
    %v4230 = vunpack.c.l.s4 1983009808
    %v4231 = vunpack.c.0.s8 %v4230
    %v4232 = vlaneseq
    %v4233 = vshrl.u32 %v4232, 7
    %v4234 = vsub.s32 %v4231, %v4233
    %v4235 = vrot.slane %v4227, %v4234
    %v4237 = vunpack.c.l.s4 1983009808
    %v4238 = vunpack.c.0.s8 %v4237
    %v4239 = vlaneseq
    %v4240 = vshrl.u32 %v4239, 7
    %v4241 = vsub.s32 %v4238, %v4240
    %v4242 = vrot.slane %v4228, %v4241
    %v4243 = vcombine.high %v4235, %v4235
    %v4244 = vcombine.high %v4242, %v4242
    %v4245 = vcombine.low %v4199, %v4201
    %v4247 = vunpack.c.l.s4 1983009808
    %v4248 = vunpack.c.0.s8 %v4247
    %v4249 = vlaneseq
    %v4250 = vshrl.u32 %v4249, 7
    %v4251 = vsub.s32 %v4248, %v4250
    %v4252 = vrot.slane %v4245, %v4251
    %v4253 = vcombine.high %v4252, %v4252
    %v4254 = vcombine.low %v4217, %v4225
    %v4255 = vcombine.low %v4224, %v4226
    %v4257 = vunpack.c.l.s4 1983009808
    %v4258 = vunpack.c.0.s8 %v4257
    %v4259 = vlaneseq
    %v4260 = vshrl.u32 %v4259, 7
    %v4261 = vsub.s32 %v4258, %v4260
    %v4262 = vrot.slane %v4254, %v4261
    %v4264 = vunpack.c.l.s4 1983009808
    %v4265 = vunpack.c.0.s8 %v4264
    %v4266 = vlaneseq
    %v4267 = vshrl.u32 %v4266, 7
    %v4268 = vsub.s32 %v4265, %v4267
    %v4269 = vrot.slane %v4255, %v4268
    %v4270 = vcombine.low %v4262, %v4269
    %v4271 = vcombine.high %v4262, %v4269
    %v4273 = vunpack.c.l.s4 1983009808
    %v4274 = vunpack.c.0.s8 %v4273
    %v4275 = vlaneseq
    %v4276 = vshrl.u32 %v4275, 7
    %v4277 = vsub.s32 %v4274, %v4276
    %v4278 = vrot.slane %v4235, %v4277
    %v4279 = vcombine.high %v4278, %v4278
    %v4280 = vcombine.low %v4243, %v4242
    %v4281 = vcombine.low %v4244, %v4252
    %v4283 = vunpack.c.l.s4 1983009808
    %v4284 = vunpack.c.0.s8 %v4283
    %v4285 = vlaneseq
    %v4286 = vshrl.u32 %v4285, 7
    %v4287 = vsub.s32 %v4284, %v4286
    %v4288 = vrot.slane %v4280, %v4287
    %v4290 = vunpack.c.l.s4 1983009808
    %v4291 = vunpack.c.0.s8 %v4290
    %v4292 = vlaneseq
    %v4293 = vshrl.u32 %v4292, 7
    %v4294 = vsub.s32 %v4291, %v4293
    %v4295 = vrot.slane %v4281, %v4294
    %v4296 = vcombine.low %v4288, %v4295
    %v4297 = vcombine.high %v4288, %v4295
    %v4299 = vunpack.c.l.s4 1983009808
    %v4300 = vunpack.c.0.s8 %v4299
    %v4301 = vlaneseq
    %v4302 = vshrl.u32 %v4301, 7
    %v4303 = vsub.s32 %v4300, %v4302
    %v4304 = vrot.slane %v4253, %v4303
    %v4305 = vcombine.high %v4304, %v4304
    %4314 = vst [vmem:[#allocation3] sm:$0xff] %v4270
    %4315 = vst.msk [vmem:[#allocation3 + $0x8] sm:$0xff] %vm4087, %v4271
    %4316 = vst [vmem:[#allocation3 + $0x10] sm:$0x3] %v4278
    %4317 = vst.msk [vmem:[#allocation3 + $0x18] sm:$0x3] %vm4090, %v4279
    %4318 = vst [vmem:[#allocation3 + $0x20] sm:$0xff] %v4296
    %4319 = vst.msk [vmem:[#allocation3 + $0x28] sm:$0xff] %vm4087, %v4297
    %4320 = vst [vmem:[#allocation3 + $0x30] sm:$0x3] %v4304
    %4321 = vst.msk [vmem:[#allocation3 + $0x38] sm:$0x3] %vm4090, %v4305
    %v4322 = vld [vmem:[#allocation22] sm:$0xff]
    %v4323 = vld [vmem:[#allocation22 + $0x8] sm:$0xff]
    %v4324 = vld [vmem:[#allocation22 + $0x10] sm:$0xff]
    %v4325 = vld [vmem:[#allocation22 + $0x18] sm:$0xff]
    %v4326 = vld [vmem:[#allocation22 + $0x20] sm:$0xff]
    %v4327 = vld [vmem:[#allocation22 + $0x28] sm:$0xff]
    %v4328 = vld [vmem:[#allocation22 + $0x30] sm:$0xff]
    %v4329 = vld [vmem:[#allocation22 + $0x38] sm:$0xff]
    %v4330 = vld [vmem:[#allocation22 + $0x40] sm:$0xff]
    %v4331 = vld [vmem:[#allocation22 + $0x48] sm:$0xff]
    %v4332 = vld [vmem:[#allocation22 + $0x50] sm:$0xff]
    %v4333 = vld [vmem:[#allocation22 + $0x58] sm:$0xff]
    %v4334 = vld [vmem:[%s15] sm:$0x3]
    %v4335 = vld [vmem:[#allocation25] sm:$0xff]
    %v4336 = vld [vmem:[#allocation25 + $0x8] sm:$0xff]
    %v4337 = vld [vmem:[#allocation25 + $0x10] sm:$0xff]
    %v4338 = vld [vmem:[#allocation25 + $0x18] sm:$0xff]
    %v4339 = vld [vmem:[#allocation25 + $0x20] sm:$0xff]
    %v4340 = vld [vmem:[#allocation25 + $0x28] sm:$0xff]
    %v4341 = vld [vmem:[#allocation25 + $0x30] sm:$0xff]
    %v4342 = vld [vmem:[#allocation25 + $0x38] sm:$0xff]
    %v4343 = vld [vmem:[#allocation25 + $0x40] sm:$0xff]
    %v4344 = vld [vmem:[#allocation25 + $0x48] sm:$0xff]
    %v4345 = vld [vmem:[#allocation25 + $0x50] sm:$0xff]
    %v4346 = vld [vmem:[#allocation25 + $0x58] sm:$0xff]
    %v4347 = vld [vmem:[%s19] sm:$0x3]
    %v4348 = vld [vmem:[#allocation2] ss:$8 sm:$0x3]
    %s4349 = scalar_lea.vmem [#allocation2], 32
    %v4350 = vld [vmem:[%s4349] ss:$8 sm:$0x3]
    %v4352 = vlaneseq
    %v4353 = vshrl.u32 %v4352, 7
    %v4354 = vsub.s32 0, %v4353
    %v4355 = vrot.slane %v4334, %v4354
    %v4356 = vlaneseq
    %v4357 = vshrl.u32 %v4356, 7
    %v4358 = vsub.s32 1, %v4357
    %v4359 = vrot.slane %v4334, %v4358
    %vm4364 = vcmask 1041409
    %v4365 = vsel %vm4364, %v3861, %v3852
    %v4366 = vsel %vm356, %v4365, 0
    %4368 = vmatprep.subr.mxu0 %v4323
    %4369 = vmatpush1.msra.mxu0 %v4322
    %4370 = vmatprep.subr.mxu0 %v4325
    %4371 = vmatpush1.msra.mxu0 %v4324
    %4372 = vmatprep.subr.mxu0 %v4327
    %4373 = vmatpush1.msra.mxu0 %v4326
    %4374 = vmatprep.subr.mxu0 %v4329
    %4375 = vmatpush1.msra.mxu0 %v4328
    %4376 = vmatprep.subr.mxu0 %v4331
    %4377 = vmatpush1.msra.mxu0 %v4330
    %4378 = vmatprep.subr.mxu0 %v4333
    %4379 = vmatpush1.msra.mxu0 %v4332
    %4380 = vmatprep.subr.mxu0 0.0
    %4381 = vmatpush1.msra.mxu0 0.0
    %4382 = vmatprep.subr.mxu0 0.0
    %4383 = vmatpush1.msra.mxu0 0.0
    %4384 = vmatprep.subr.mxu0 0.0
    %4385 = vmatpush1.msra.mxu0 0.0
    %4386 = vmatprep.subr.mxu0 0.0
    %4387 = vmatpush1.msra.mxu0 0.0
    %4388 = vmatprep.subr.mxu0 0.0
    %4389 = vmatpush1.msra.mxu0 0.0
    %4390 = vmatprep.subr.mxu0 0.0
    %4391 = vmatpush1.msra.mxu0 0.0
    %4392 = vmatprep.subr.mxu0 0.0
    %4393 = vmatpush1.msra.mxu0 0.0
    %4394 = vmatprep.subr.mxu0 0.0
    %4395 = vmatpush1.msra.mxu0 0.0
    %4396 = vmatprep.subr.mxu0 0.0
    %4397 = vmatpush1.msra.mxu0 0.0
    %4398 = vmatprep.subr.mxu0 0.0
    %4399 = vmatpush1.msra.mxu0 0.0
    %4400 = vmatprep.subr.mxu0 0.0
    %4401 = vmatpush1.msra.mxu0 0.0
    %4402 = vmatprep.subr.mxu0 0.0
    %4403 = vmatpush1.msra.mxu0 0.0
    %4404 = vmatprep.subr.mxu0 0.0
    %4405 = vmatpush1.msra.mxu0 0.0
    %4406 = vmatprep.subr.mxu0 0.0
    %4407 = vmatpush1.msra.mxu0 0.0
    %4408 = vmatprep.subr.mxu0 0.0
    %4409 = vmatpush1.msra.mxu0 0.0
    %4410 = vmatprep.subr.mxu0 0.0
    %4411 = vmatpush1.msra.mxu0 0.0
    %4412 = vmatprep.subr.mxu0 0.0
    %4413 = vmatpush1.msra.mxu0 0.0
    %4414 = vmatprep.subr.mxu0 0.0
    %4415 = vmatpush1.msra.mxu0 0.0
    %4416 = vmatprep.subr.mxu0 0.0
    %4417 = vmatpush1.msra.mxu0 0.0
    %4418 = vmatprep.subr.mxu0 0.0
    %4419 = vmatpush1.msra.mxu0 0.0
    %4420 = vmatprep.subr.mxu0 0.0
    %4421 = vmatpush1.msra.mxu0 0.0
    %4422 = vmatprep.subr.mxu0 0.0
    %4423 = vmatpush1.msra.mxu0 0.0
    %4424 = vmatprep.subr.mxu0 0.0
    %4425 = vmatpush1.msra.mxu0 0.0
    %4426 = vmatprep.subr.mxu0 0.0
    %4427 = vmatpush1.msra.mxu0 0.0
    %4428 = vmatprep.subr.mxu0 0.0
    %4429 = vmatpush1.msra.mxu0 0.0
    %4430 = vmatprep.subr.mxu0 0.0
    %4431 = vmatpush1.msra.mxu0 0.0
    %4432 = vmatprep.mubr.f32.mxu0 0.0
    %4433 = vmatmul.mubr.f32.gmra.mrb[0].mxu0 %v4366
    %v4434 = vpop.f32.mrb[0].mxu0
    %v4435 = vadd.f32 %v4355, %v4434
    %v4436 = vpop.f32.mrb[0].mxu0
    %v4437 = vadd.f32 %v4359, %v4436
    %4438 = vdwg.mxu0
    %v4441 = vunpack.c.l.s4 1966171168
    %v4442 = vunpack.c.0.s8 %v4441
    %v4443 = vlaneseq
    %v4444 = vshrl.u32 %v4443, 7
    %v4445 = vsub.s32 %v4442, %v4444
    %v4446 = vrot.slane %v4435, %v4445
    %v4447 = vcombine.high %v4446, %v4446
    %v4449 = vunpack.c.l.s4 1966171168
    %v4450 = vunpack.c.0.s8 %v4449
    %v4451 = vlaneseq
    %v4452 = vshrl.u32 %v4451, 7
    %v4453 = vsub.s32 %v4450, %v4452
    %v4454 = vrot.slane %v4446, %v4453
    %v4456 = vunpack.c.l.s4 1966171168
    %v4457 = vunpack.c.0.s8 %v4456
    %v4458 = vlaneseq
    %v4459 = vshrl.u32 %v4458, 7
    %v4460 = vsub.s32 %v4457, %v4459
    %v4461 = vrot.slane %v4447, %v4460
    %v4464 = vadd.f32 %v4348, %v4454
    %v4465 = vadd.f32 %v4350, %v4461
    %v4466 = vxor.u32 %v4464, 2147483648
    %v4467 = vxor.u32 %v4465, 2147483648
    %v4468 = vmul.f32 %v4466, 1.442695
    %v4469 = vpow.pop %v4468
    %v4470 = vmul.f32 %v4467, 1.442695
    %v4471 = vpow.pop %v4470
    %v4472 = vadd.f32 %v4469, 1.0
    %v4473 = vadd.f32 %v4471, 1.0
    %v4474 = vrcp.pop %v4472
    %v4475 = vmul.f32 1.0, %v4474
    %v4476 = vrcp.pop %v4473
    %v4477 = vmul.f32 1.0, %v4476
    %v4479 = vcombine.low %v4435, %v4437
    %v4481 = vunpack.c.l.s4 1966171168
    %v4482 = vunpack.c.0.s8 %v4481
    %v4483 = vlaneseq
    %v4484 = vshrl.u32 %v4483, 7
    %v4485 = vsub.s32 %v4482, %v4484
    %v4486 = vrot.slane %v4479, %v4485
    %v4487 = vcombine.high %v4486, %v4486
    %v4489 = vunpack.c.l.s4 1966171168
    %v4490 = vunpack.c.0.s8 %v4489
    %v4491 = vlaneseq
    %v4492 = vshrl.u32 %v4491, 7
    %v4493 = vsub.s32 %v4490, %v4492
    %v4494 = vrot.slane %v4486, %v4493
    %v4496 = vunpack.c.l.s4 1966171168
    %v4497 = vunpack.c.0.s8 %v4496
    %v4498 = vlaneseq
    %v4499 = vshrl.u32 %v4498, 7
    %v4500 = vsub.s32 %v4497, %v4499
    %v4501 = vrot.slane %v4487, %v4500
    %4502 = vrot.lane.b32.xlu0 %v4494, 32
    %v4503 = vpop.permute.xlu0 %4502
    %4504 = vrot.lane.b32.xlu0 %v4501, 32
    %v4505 = vpop.permute.xlu0 %4504
    %v4506 = vrot.slane %v4503, 1
    %v4507 = vrot.slane %v4505, 1
    %vm4508 = vcmask 261120
    %v4509 = vsel %vm4508, %v4503, %v4506
    %v4510 = vsel %vm4508, %v4505, %v4507
    %v4513 = vmul.f32 %v4475, %v4509
    %v4514 = vmul.f32 %v4477, %v4510
    %4517 = vrot.lane.b32.xlu0 %v4513, 96
    %v4518 = vpop.permute.xlu0 %4517
    %4519 = vrot.lane.b32.xlu0 %v4514, 96
    %v4520 = vpop.permute.xlu0 %4519
    %v4521 = vrot.slane %v4518, 7
    %v4522 = vrot.slane %v4520, 7
    %vm4523 = vcmask 785408
    %v4524 = vsel %vm4523, %v4521, %v4518
    %v4525 = vsel %vm4523, %v4522, %v4520
    %v4528 = vadd.f32 %v4348, %v4524
    %v4529 = vadd.f32 %v4350, %v4525
    %v4530 = vtanh.pop %v4528
    %v4531 = vtanh.pop %v4529
    %v4532 = vsub.f32 1.0, %v4475
    %v4533 = vsub.f32 1.0, %v4477
    %4536 = vrot.lane.b32.xlu0 %v4530, 80
    %v4537 = vpop.permute.xlu0 %4536
    %4538 = vrot.lane.b32.xlu0 %v4531, 80
    %v4539 = vpop.permute.xlu0 %4538
    %v4540 = vrot.slane %v4537, 1
    %v4541 = vrot.slane %v4539, 1
    %vm4542 = vcmask 654336
    %v4543 = vsel %vm4542, %v4537, %v4540
    %v4544 = vsel %vm4542, %v4539, %v4541
    %v4547 = vmul.f32 %v4532, %v4543
    %v4548 = vmul.f32 %v4533, %v4544
    %v4550 = vunpack.c.l.s4 1966171168
    %v4551 = vunpack.c.0.s8 %v4550
    %v4552 = vlaneseq
    %v4553 = vshrl.u32 %v4552, 7
    %v4554 = vsub.s32 %v4551, %v4553
    %v4555 = vrot.slane %v3852, %v4554
    %v4557 = vunpack.c.l.s4 1966171168
    %v4558 = vunpack.c.0.s8 %v4557
    %v4559 = vlaneseq
    %v4560 = vshrl.u32 %v4559, 7
    %v4561 = vsub.s32 %v4558, %v4560
    %v4562 = vrot.slane %v4555, %v4561
    %v4564 = vunpack.c.l.s4 1966171168
    %v4565 = vunpack.c.0.s8 %v4564
    %v4566 = vlaneseq
    %v4567 = vshrl.u32 %v4566, 7
    %v4568 = vsub.s32 %v4565, %v4567
    %v4569 = vrot.slane %v3861, %v4568
    %v4571 = vunpack.c.l.s4 1966171168
    %v4572 = vunpack.c.0.s8 %v4571
    %v4573 = vlaneseq
    %v4574 = vshrl.u32 %v4573, 7
    %v4575 = vsub.s32 %v4572, %v4574
    %v4576 = vrot.slane %v4569, %v4575
    %4577 = vrot.lane.b32.xlu0 %v4562, 48
    %v4578 = vpop.permute.xlu0 %4577
    %4579 = vrot.lane.b32.xlu0 %v4576, 48
    %v4580 = vpop.permute.xlu0 %4579
    %v4583 = vmul.f32 %v4475, %v4578
    %v4584 = vmul.f32 %v4477, %v4580
    %v4585 = vadd.f32 %v4547, %v4583
    %v4586 = vadd.f32 %v4548, %v4584
    %vm4587 = vcmp.gt.s32.totalorder %v242, 0
    %v4588 = vsel %vm4587, 1, 0
    %v4589 = vcvt.s32.f32 %v4588
    %v4591 = vlaneseq
    %v4592 = vshrl.u32 %v4591, 7
    %v4593 = vsub.s32 0, %v4592
    %v4594 = vrot.slane %v4589, %v4593
    %v4595 = vlaneseq
    %v4596 = vshrl.u32 %v4595, 7
    %v4597 = vsub.s32 1, %v4596
    %v4598 = vrot.slane %v4589, %v4597
    %v4601 = vmul.f32 %v4585, %v4594
    %v4602 = vmul.f32 %v4586, %v4598
    %v4603 = vadd.f32 %v4601, 0.0
    %v4604 = vadd.f32 %v4602, 0.0
    %s4605 = scalar_lea.vmem [#allocation2], 1
    %v4606 = vld [vmem:[%s4605] ss:$8 sm:$0x3]
    %s4607 = scalar_lea.vmem [#allocation2], 33
    %v4608 = vld [vmem:[%s4607] ss:$8 sm:$0x3]
    %v4611 = vcombine.low %v4585, %v4586
    %v4613 = vunpack.c.l.s4 1966171168
    %v4614 = vunpack.c.0.s8 %v4613
    %v4615 = vlaneseq
    %v4616 = vshrl.u32 %v4615, 7
    %v4617 = vsub.s32 %v4614, %v4616
    %v4618 = vrot.slane %v4611, %v4617
    %v4620 = vunpack.c.l.s4 1966171168
    %v4621 = vunpack.c.0.s8 %v4620
    %v4622 = vlaneseq
    %v4623 = vshrl.u32 %v4622, 7
    %v4624 = vsub.s32 %v4621, %v4623
    %v4625 = vrot.slane %v4618, %v4624
    %4626 = vrot.lane.b32.xlu0 %v4625, 80
    %v4627 = vpop.permute.xlu0 %4626
    %v4628 = vsel %vm356, %v4627, 0
    %4630 = vmatprep.subr.mxu0 %v4323
    %4631 = vmatpush1.msra.mxu0 %v4322
    %4632 = vmatprep.subr.mxu0 %v4325
    %4633 = vmatpush1.msra.mxu0 %v4324
    %4634 = vmatprep.subr.mxu0 %v4327
    %4635 = vmatpush1.msra.mxu0 %v4326
    %4636 = vmatprep.subr.mxu0 %v4329
    %4637 = vmatpush1.msra.mxu0 %v4328
    %4638 = vmatprep.subr.mxu0 %v4331
    %4639 = vmatpush1.msra.mxu0 %v4330
    %4640 = vmatprep.subr.mxu0 %v4333
    %4641 = vmatpush1.msra.mxu0 %v4332
    %4642 = vmatprep.subr.mxu0 0.0
    %4643 = vmatpush1.msra.mxu0 0.0
    %4644 = vmatprep.subr.mxu0 0.0
    %4645 = vmatpush1.msra.mxu0 0.0
    %4646 = vmatprep.subr.mxu0 0.0
    %4647 = vmatpush1.msra.mxu0 0.0
    %4648 = vmatprep.subr.mxu0 0.0
    %4649 = vmatpush1.msra.mxu0 0.0
    %4650 = vmatprep.subr.mxu0 0.0
    %4651 = vmatpush1.msra.mxu0 0.0
    %4652 = vmatprep.subr.mxu0 0.0
    %4653 = vmatpush1.msra.mxu0 0.0
    %4654 = vmatprep.subr.mxu0 0.0
    %4655 = vmatpush1.msra.mxu0 0.0
    %4656 = vmatprep.subr.mxu0 0.0
    %4657 = vmatpush1.msra.mxu0 0.0
    %4658 = vmatprep.subr.mxu0 0.0
    %4659 = vmatpush1.msra.mxu0 0.0
    %4660 = vmatprep.subr.mxu0 0.0
    %4661 = vmatpush1.msra.mxu0 0.0
    %4662 = vmatprep.subr.mxu0 0.0
    %4663 = vmatpush1.msra.mxu0 0.0
    %4664 = vmatprep.subr.mxu0 0.0
    %4665 = vmatpush1.msra.mxu0 0.0
    %4666 = vmatprep.subr.mxu0 0.0
    %4667 = vmatpush1.msra.mxu0 0.0
    %4668 = vmatprep.subr.mxu0 0.0
    %4669 = vmatpush1.msra.mxu0 0.0
    %4670 = vmatprep.subr.mxu0 0.0
    %4671 = vmatpush1.msra.mxu0 0.0
    %4672 = vmatprep.subr.mxu0 0.0
    %4673 = vmatpush1.msra.mxu0 0.0
    %4674 = vmatprep.subr.mxu0 0.0
    %4675 = vmatpush1.msra.mxu0 0.0
    %4676 = vmatprep.subr.mxu0 0.0
    %4677 = vmatpush1.msra.mxu0 0.0
    %4678 = vmatprep.subr.mxu0 0.0
    %4679 = vmatpush1.msra.mxu0 0.0
    %4680 = vmatprep.subr.mxu0 0.0
    %4681 = vmatpush1.msra.mxu0 0.0
    %4682 = vmatprep.subr.mxu0 0.0
    %4683 = vmatpush1.msra.mxu0 0.0
    %4684 = vmatprep.subr.mxu0 0.0
    %4685 = vmatpush1.msra.mxu0 0.0
    %4686 = vmatprep.subr.mxu0 0.0
    %4687 = vmatpush1.msra.mxu0 0.0
    %4688 = vmatprep.subr.mxu0 0.0
    %4689 = vmatpush1.msra.mxu0 0.0
    %4690 = vmatprep.subr.mxu0 0.0
    %4691 = vmatpush1.msra.mxu0 0.0
    %4692 = vmatprep.subr.mxu0 0.0
    %4693 = vmatpush1.msra.mxu0 0.0
    %4694 = vmatprep.mubr.f32.mxu0 0.0
    %4695 = vmatmul.mubr.f32.gmra.mrb[0].mxu0 %v4628
    %v4696 = vpop.f32.mrb[0].mxu0
    %v4697 = vadd.f32 %v4355, %v4696
    %v4698 = vpop.f32.mrb[0].mxu0
    %v4699 = vadd.f32 %v4359, %v4698
    %4700 = vdwg.mxu0
    %v4703 = vunpack.c.l.s4 1966171168
    %v4704 = vunpack.c.0.s8 %v4703
    %v4705 = vlaneseq
    %v4706 = vshrl.u32 %v4705, 7
    %v4707 = vsub.s32 %v4704, %v4706
    %v4708 = vrot.slane %v4697, %v4707
    %v4709 = vcombine.high %v4708, %v4708
    %v4711 = vunpack.c.l.s4 1966171168
    %v4712 = vunpack.c.0.s8 %v4711
    %v4713 = vlaneseq
    %v4714 = vshrl.u32 %v4713, 7
    %v4715 = vsub.s32 %v4712, %v4714
    %v4716 = vrot.slane %v4708, %v4715
    %v4718 = vunpack.c.l.s4 1966171168
    %v4719 = vunpack.c.0.s8 %v4718
    %v4720 = vlaneseq
    %v4721 = vshrl.u32 %v4720, 7
    %v4722 = vsub.s32 %v4719, %v4721
    %v4723 = vrot.slane %v4709, %v4722
    %v4726 = vadd.f32 %v4606, %v4716
    %v4727 = vadd.f32 %v4608, %v4723
    %v4728 = vxor.u32 %v4726, 2147483648
    %v4729 = vxor.u32 %v4727, 2147483648
    %v4730 = vmul.f32 %v4728, 1.442695
    %v4731 = vpow.pop %v4730
    %v4732 = vmul.f32 %v4729, 1.442695
    %v4733 = vpow.pop %v4732
    %v4734 = vadd.f32 %v4731, 1.0
    %v4735 = vadd.f32 %v4733, 1.0
    %v4736 = vrcp.pop %v4734
    %v4737 = vmul.f32 1.0, %v4736
    %v4738 = vrcp.pop %v4735
    %v4739 = vmul.f32 1.0, %v4738
    %v4741 = vcombine.low %v4697, %v4699
    %v4743 = vunpack.c.l.s4 1966171168
    %v4744 = vunpack.c.0.s8 %v4743
    %v4745 = vlaneseq
    %v4746 = vshrl.u32 %v4745, 7
    %v4747 = vsub.s32 %v4744, %v4746
    %v4748 = vrot.slane %v4741, %v4747
    %v4749 = vcombine.high %v4748, %v4748
    %v4751 = vunpack.c.l.s4 1966171168
    %v4752 = vunpack.c.0.s8 %v4751
    %v4753 = vlaneseq
    %v4754 = vshrl.u32 %v4753, 7
    %v4755 = vsub.s32 %v4752, %v4754
    %v4756 = vrot.slane %v4748, %v4755
    %v4758 = vunpack.c.l.s4 1966171168
    %v4759 = vunpack.c.0.s8 %v4758
    %v4760 = vlaneseq
    %v4761 = vshrl.u32 %v4760, 7
    %v4762 = vsub.s32 %v4759, %v4761
    %v4763 = vrot.slane %v4749, %v4762
    %4764 = vrot.lane.b32.xlu0 %v4756, 32
    %v4765 = vpop.permute.xlu0 %4764
    %4766 = vrot.lane.b32.xlu0 %v4763, 32
    %v4767 = vpop.permute.xlu0 %4766
    %v4768 = vrot.slane %v4765, 1
    %v4769 = vrot.slane %v4767, 1
    %v4770 = vsel %vm4508, %v4765, %v4768
    %v4771 = vsel %vm4508, %v4767, %v4769
    %v4774 = vmul.f32 %v4737, %v4770
    %v4775 = vmul.f32 %v4739, %v4771
    %4778 = vrot.lane.b32.xlu0 %v4774, 96
    %v4779 = vpop.permute.xlu0 %4778
    %4780 = vrot.lane.b32.xlu0 %v4775, 96
    %v4781 = vpop.permute.xlu0 %4780
    %v4782 = vrot.slane %v4779, 7
    %v4783 = vrot.slane %v4781, 7
    %v4784 = vsel %vm4523, %v4782, %v4779
    %v4785 = vsel %vm4523, %v4783, %v4781
    %v4788 = vadd.f32 %v4606, %v4784
    %v4789 = vadd.f32 %v4608, %v4785
    %v4790 = vtanh.pop %v4788
    %v4791 = vtanh.pop %v4789
    %v4792 = vsub.f32 1.0, %v4737
    %v4793 = vsub.f32 1.0, %v4739
    %4796 = vrot.lane.b32.xlu0 %v4790, 80
    %v4797 = vpop.permute.xlu0 %4796
    %4798 = vrot.lane.b32.xlu0 %v4791, 80
    %v4799 = vpop.permute.xlu0 %4798
    %v4800 = vrot.slane %v4797, 1
    %v4801 = vrot.slane %v4799, 1
    %v4802 = vsel %vm4542, %v4797, %v4800
    %v4803 = vsel %vm4542, %v4799, %v4801
    %v4806 = vmul.f32 %v4792, %v4802
    %v4807 = vmul.f32 %v4793, %v4803
    %v4808 = vmul.f32 %v4737, %v4585
    %v4809 = vmul.f32 %v4739, %v4586
    %v4810 = vadd.f32 %v4806, %v4808
    %v4811 = vadd.f32 %v4807, %v4809
    %vm4812 = vcmp.gt.s32.totalorder %v242, 1
    %v4813 = vsel %vm4812, 1, 0
    %v4814 = vcvt.s32.f32 %v4813
    %v4816 = vlaneseq
    %v4817 = vshrl.u32 %v4816, 7
    %v4818 = vsub.s32 0, %v4817
    %v4819 = vrot.slane %v4814, %v4818
    %v4820 = vlaneseq
    %v4821 = vshrl.u32 %v4820, 7
    %v4822 = vsub.s32 1, %v4821
    %v4823 = vrot.slane %v4814, %v4822
    %v4826 = vmul.f32 %v4810, %v4819
    %v4827 = vmul.f32 %v4811, %v4823
    %v4828 = vadd.f32 %v4603, %v4826
    %v4829 = vadd.f32 %v4604, %v4827
    %s4830 = scalar_lea.vmem [#allocation2], 2
    %v4831 = vld [vmem:[%s4830] ss:$8 sm:$0x3]
    %s4832 = scalar_lea.vmem [#allocation2], 34
    %v4833 = vld [vmem:[%s4832] ss:$8 sm:$0x3]
    %v4836 = vcombine.low %v4810, %v4811
    %v4838 = vunpack.c.l.s4 1966171168
    %v4839 = vunpack.c.0.s8 %v4838
    %v4840 = vlaneseq
    %v4841 = vshrl.u32 %v4840, 7
    %v4842 = vsub.s32 %v4839, %v4841
    %v4843 = vrot.slane %v4836, %v4842
    %v4845 = vunpack.c.l.s4 1966171168
    %v4846 = vunpack.c.0.s8 %v4845
    %v4847 = vlaneseq
    %v4848 = vshrl.u32 %v4847, 7
    %v4849 = vsub.s32 %v4846, %v4848
    %v4850 = vrot.slane %v4843, %v4849
    %4851 = vrot.lane.b32.xlu0 %v4850, 80
    %v4852 = vpop.permute.xlu0 %4851
    %v4853 = vsel %vm356, %v4852, 0
    %4855 = vmatprep.subr.mxu0 %v4323
    %4856 = vmatpush1.msra.mxu0 %v4322
    %4857 = vmatprep.subr.mxu0 %v4325
    %4858 = vmatpush1.msra.mxu0 %v4324
    %4859 = vmatprep.subr.mxu0 %v4327
    %4860 = vmatpush1.msra.mxu0 %v4326
    %4861 = vmatprep.subr.mxu0 %v4329
    %4862 = vmatpush1.msra.mxu0 %v4328
    %4863 = vmatprep.subr.mxu0 %v4331
    %4864 = vmatpush1.msra.mxu0 %v4330
    %4865 = vmatprep.subr.mxu0 %v4333
    %4866 = vmatpush1.msra.mxu0 %v4332
    %4867 = vmatprep.subr.mxu0 0.0
    %4868 = vmatpush1.msra.mxu0 0.0
    %4869 = vmatprep.subr.mxu0 0.0
    %4870 = vmatpush1.msra.mxu0 0.0
    %4871 = vmatprep.subr.mxu0 0.0
    %4872 = vmatpush1.msra.mxu0 0.0
    %4873 = vmatprep.subr.mxu0 0.0
    %4874 = vmatpush1.msra.mxu0 0.0
    %4875 = vmatprep.subr.mxu0 0.0
    %4876 = vmatpush1.msra.mxu0 0.0
    %4877 = vmatprep.subr.mxu0 0.0
    %4878 = vmatpush1.msra.mxu0 0.0
    %4879 = vmatprep.subr.mxu0 0.0
    %4880 = vmatpush1.msra.mxu0 0.0
    %4881 = vmatprep.subr.mxu0 0.0
    %4882 = vmatpush1.msra.mxu0 0.0
    %4883 = vmatprep.subr.mxu0 0.0
    %4884 = vmatpush1.msra.mxu0 0.0
    %4885 = vmatprep.subr.mxu0 0.0
    %4886 = vmatpush1.msra.mxu0 0.0
    %4887 = vmatprep.subr.mxu0 0.0
    %4888 = vmatpush1.msra.mxu0 0.0
    %4889 = vmatprep.subr.mxu0 0.0
    %4890 = vmatpush1.msra.mxu0 0.0
    %4891 = vmatprep.subr.mxu0 0.0
    %4892 = vmatpush1.msra.mxu0 0.0
    %4893 = vmatprep.subr.mxu0 0.0
    %4894 = vmatpush1.msra.mxu0 0.0
    %4895 = vmatprep.subr.mxu0 0.0
    %4896 = vmatpush1.msra.mxu0 0.0
    %4897 = vmatprep.subr.mxu0 0.0
    %4898 = vmatpush1.msra.mxu0 0.0
    %4899 = vmatprep.subr.mxu0 0.0
    %4900 = vmatpush1.msra.mxu0 0.0
    %4901 = vmatprep.subr.mxu0 0.0
    %4902 = vmatpush1.msra.mxu0 0.0
    %4903 = vmatprep.subr.mxu0 0.0
    %4904 = vmatpush1.msra.mxu0 0.0
    %4905 = vmatprep.subr.mxu0 0.0
    %4906 = vmatpush1.msra.mxu0 0.0
    %4907 = vmatprep.subr.mxu0 0.0
    %4908 = vmatpush1.msra.mxu0 0.0
    %4909 = vmatprep.subr.mxu0 0.0
    %4910 = vmatpush1.msra.mxu0 0.0
    %4911 = vmatprep.subr.mxu0 0.0
    %4912 = vmatpush1.msra.mxu0 0.0
    %4913 = vmatprep.subr.mxu0 0.0
    %4914 = vmatpush1.msra.mxu0 0.0
    %4915 = vmatprep.subr.mxu0 0.0
    %4916 = vmatpush1.msra.mxu0 0.0
    %4917 = vmatprep.subr.mxu0 0.0
    %4918 = vmatpush1.msra.mxu0 0.0
    %4919 = vmatprep.mubr.f32.mxu0 0.0
    %4920 = vmatmul.mubr.f32.gmra.mrb[0].mxu0 %v4853
    %v4921 = vpop.f32.mrb[0].mxu0
    %v4922 = vadd.f32 %v4355, %v4921
    %v4923 = vpop.f32.mrb[0].mxu0
    %v4924 = vadd.f32 %v4359, %v4923
    %4925 = vdwg.mxu0
    %v4928 = vunpack.c.l.s4 1966171168
    %v4929 = vunpack.c.0.s8 %v4928
    %v4930 = vlaneseq
    %v4931 = vshrl.u32 %v4930, 7
    %v4932 = vsub.s32 %v4929, %v4931
    %v4933 = vrot.slane %v4922, %v4932
    %v4934 = vcombine.high %v4933, %v4933
    %v4936 = vunpack.c.l.s4 1966171168
    %v4937 = vunpack.c.0.s8 %v4936
    %v4938 = vlaneseq
    %v4939 = vshrl.u32 %v4938, 7
    %v4940 = vsub.s32 %v4937, %v4939
    %v4941 = vrot.slane %v4933, %v4940
    %v4943 = vunpack.c.l.s4 1966171168
    %v4944 = vunpack.c.0.s8 %v4943
    %v4945 = vlaneseq
    %v4946 = vshrl.u32 %v4945, 7
    %v4947 = vsub.s32 %v4944, %v4946
    %v4948 = vrot.slane %v4934, %v4947
    %v4951 = vadd.f32 %v4831, %v4941
    %v4952 = vadd.f32 %v4833, %v4948
    %v4953 = vxor.u32 %v4951, 2147483648
    %v4954 = vxor.u32 %v4952, 2147483648
    %v4955 = vmul.f32 %v4953, 1.442695
    %v4956 = vpow.pop %v4955
    %v4957 = vmul.f32 %v4954, 1.442695
    %v4958 = vpow.pop %v4957
    %v4959 = vadd.f32 %v4956, 1.0
    %v4960 = vadd.f32 %v4958, 1.0
    %v4961 = vrcp.pop %v4959
    %v4962 = vmul.f32 1.0, %v4961
    %v4963 = vrcp.pop %v4960
    %v4964 = vmul.f32 1.0, %v4963
    %v4966 = vcombine.low %v4922, %v4924
    %v4968 = vunpack.c.l.s4 1966171168
    %v4969 = vunpack.c.0.s8 %v4968
    %v4970 = vlaneseq
    %v4971 = vshrl.u32 %v4970, 7
    %v4972 = vsub.s32 %v4969, %v4971
    %v4973 = vrot.slane %v4966, %v4972
    %v4974 = vcombine.high %v4973, %v4973
    %v4976 = vunpack.c.l.s4 1966171168
    %v4977 = vunpack.c.0.s8 %v4976
    %v4978 = vlaneseq
    %v4979 = vshrl.u32 %v4978, 7
    %v4980 = vsub.s32 %v4977, %v4979
    %v4981 = vrot.slane %v4973, %v4980
    %v4983 = vunpack.c.l.s4 1966171168
    %v4984 = vunpack.c.0.s8 %v4983
    %v4985 = vlaneseq
    %v4986 = vshrl.u32 %v4985, 7
    %v4987 = vsub.s32 %v4984, %v4986
    %v4988 = vrot.slane %v4974, %v4987
    %4989 = vrot.lane.b32.xlu0 %v4981, 32
    %v4990 = vpop.permute.xlu0 %4989
    %4991 = vrot.lane.b32.xlu0 %v4988, 32
    %v4992 = vpop.permute.xlu0 %4991
    %v4993 = vrot.slane %v4990, 1
    %v4994 = vrot.slane %v4992, 1
    %v4995 = vsel %vm4508, %v4990, %v4993
    %v4996 = vsel %vm4508, %v4992, %v4994
    %v4999 = vmul.f32 %v4962, %v4995
    %v5000 = vmul.f32 %v4964, %v4996
    %5003 = vrot.lane.b32.xlu0 %v4999, 96
    %v5004 = vpop.permute.xlu0 %5003
    %5005 = vrot.lane.b32.xlu0 %v5000, 96
    %v5006 = vpop.permute.xlu0 %5005
    %v5007 = vrot.slane %v5004, 7
    %v5008 = vrot.slane %v5006, 7
    %v5009 = vsel %vm4523, %v5007, %v5004
    %v5010 = vsel %vm4523, %v5008, %v5006
    %v5013 = vadd.f32 %v4831, %v5009
    %v5014 = vadd.f32 %v4833, %v5010
    %v5015 = vtanh.pop %v5013
    %v5016 = vtanh.pop %v5014
    %v5017 = vsub.f32 1.0, %v4962
    %v5018 = vsub.f32 1.0, %v4964
    %5021 = vrot.lane.b32.xlu0 %v5015, 80
    %v5022 = vpop.permute.xlu0 %5021
    %5023 = vrot.lane.b32.xlu0 %v5016, 80
    %v5024 = vpop.permute.xlu0 %5023
    %v5025 = vrot.slane %v5022, 1
    %v5026 = vrot.slane %v5024, 1
    %v5027 = vsel %vm4542, %v5022, %v5025
    %v5028 = vsel %vm4542, %v5024, %v5026
    %v5031 = vmul.f32 %v5017, %v5027
    %v5032 = vmul.f32 %v5018, %v5028
    %v5033 = vmul.f32 %v4962, %v4810
    %v5034 = vmul.f32 %v4964, %v4811
    %v5035 = vadd.f32 %v5031, %v5033
    %v5036 = vadd.f32 %v5032, %v5034
    %vm5037 = vcmp.gt.s32.totalorder %v242, 2
    %v5038 = vsel %vm5037, 1, 0
    %v5039 = vcvt.s32.f32 %v5038
    %v5041 = vlaneseq
    %v5042 = vshrl.u32 %v5041, 7
    %v5043 = vsub.s32 0, %v5042
    %v5044 = vrot.slane %v5039, %v5043
    %v5045 = vlaneseq
    %v5046 = vshrl.u32 %v5045, 7
    %v5047 = vsub.s32 1, %v5046
    %v5048 = vrot.slane %v5039, %v5047
    %v5051 = vmul.f32 %v5035, %v5044
    %v5052 = vmul.f32 %v5036, %v5048
    %v5053 = vadd.f32 %v4828, %v5051
    %v5054 = vadd.f32 %v4829, %v5052
    %s5055 = scalar_lea.vmem [#allocation2], 3
    %v5056 = vld [vmem:[%s5055] ss:$8 sm:$0x3]
    %s5057 = scalar_lea.vmem [#allocation2], 35
    %v5058 = vld [vmem:[%s5057] ss:$8 sm:$0x3]
    %v5061 = vcombine.low %v5035, %v5036
    %v5063 = vunpack.c.l.s4 1966171168
    %v5064 = vunpack.c.0.s8 %v5063
    %v5065 = vlaneseq
    %v5066 = vshrl.u32 %v5065, 7
    %v5067 = vsub.s32 %v5064, %v5066
    %v5068 = vrot.slane %v5061, %v5067
    %v5070 = vunpack.c.l.s4 1966171168
    %v5071 = vunpack.c.0.s8 %v5070
    %v5072 = vlaneseq
    %v5073 = vshrl.u32 %v5072, 7
    %v5074 = vsub.s32 %v5071, %v5073
    %v5075 = vrot.slane %v5068, %v5074
    %5076 = vrot.lane.b32.xlu0 %v5075, 80
    %v5077 = vpop.permute.xlu0 %5076
    %v5078 = vsel %vm356, %v5077, 0
    %5080 = vmatprep.subr.mxu0 %v4323
    %5081 = vmatpush1.msra.mxu0 %v4322
    %5082 = vmatprep.subr.mxu0 %v4325
    %5083 = vmatpush1.msra.mxu0 %v4324
    %5084 = vmatprep.subr.mxu0 %v4327
    %5085 = vmatpush1.msra.mxu0 %v4326
    %5086 = vmatprep.subr.mxu0 %v4329
    %5087 = vmatpush1.msra.mxu0 %v4328
    %5088 = vmatprep.subr.mxu0 %v4331
    %5089 = vmatpush1.msra.mxu0 %v4330
    %5090 = vmatprep.subr.mxu0 %v4333
    %5091 = vmatpush1.msra.mxu0 %v4332
    %5092 = vmatprep.subr.mxu0 0.0
    %5093 = vmatpush1.msra.mxu0 0.0
    %5094 = vmatprep.subr.mxu0 0.0
    %5095 = vmatpush1.msra.mxu0 0.0
    %5096 = vmatprep.subr.mxu0 0.0
    %5097 = vmatpush1.msra.mxu0 0.0
    %5098 = vmatprep.subr.mxu0 0.0
    %5099 = vmatpush1.msra.mxu0 0.0
    %5100 = vmatprep.subr.mxu0 0.0
    %5101 = vmatpush1.msra.mxu0 0.0
    %5102 = vmatprep.subr.mxu0 0.0
    %5103 = vmatpush1.msra.mxu0 0.0
    %5104 = vmatprep.subr.mxu0 0.0
    %5105 = vmatpush1.msra.mxu0 0.0
    %5106 = vmatprep.subr.mxu0 0.0
    %5107 = vmatpush1.msra.mxu0 0.0
    %5108 = vmatprep.subr.mxu0 0.0
    %5109 = vmatpush1.msra.mxu0 0.0
    %5110 = vmatprep.subr.mxu0 0.0
    %5111 = vmatpush1.msra.mxu0 0.0
    %5112 = vmatprep.subr.mxu0 0.0
    %5113 = vmatpush1.msra.mxu0 0.0
    %5114 = vmatprep.subr.mxu0 0.0
    %5115 = vmatpush1.msra.mxu0 0.0
    %5116 = vmatprep.subr.mxu0 0.0
    %5117 = vmatpush1.msra.mxu0 0.0
    %5118 = vmatprep.subr.mxu0 0.0
    %5119 = vmatpush1.msra.mxu0 0.0
    %5120 = vmatprep.subr.mxu0 0.0
    %5121 = vmatpush1.msra.mxu0 0.0
    %5122 = vmatprep.subr.mxu0 0.0
    %5123 = vmatpush1.msra.mxu0 0.0
    %5124 = vmatprep.subr.mxu0 0.0
    %5125 = vmatpush1.msra.mxu0 0.0
    %5126 = vmatprep.subr.mxu0 0.0
    %5127 = vmatpush1.msra.mxu0 0.0
    %5128 = vmatprep.subr.mxu0 0.0
    %5129 = vmatpush1.msra.mxu0 0.0
    %5130 = vmatprep.subr.mxu0 0.0
    %5131 = vmatpush1.msra.mxu0 0.0
    %5132 = vmatprep.subr.mxu0 0.0
    %5133 = vmatpush1.msra.mxu0 0.0
    %5134 = vmatprep.subr.mxu0 0.0
    %5135 = vmatpush1.msra.mxu0 0.0
    %5136 = vmatprep.subr.mxu0 0.0
    %5137 = vmatpush1.msra.mxu0 0.0
    %5138 = vmatprep.subr.mxu0 0.0
    %5139 = vmatpush1.msra.mxu0 0.0
    %5140 = vmatprep.subr.mxu0 0.0
    %5141 = vmatpush1.msra.mxu0 0.0
    %5142 = vmatprep.subr.mxu0 0.0
    %5143 = vmatpush1.msra.mxu0 0.0
    %5144 = vmatprep.mubr.f32.mxu0 0.0
    %5145 = vmatmul.mubr.f32.gmra.mrb[0].mxu0 %v5078
    %v5146 = vpop.f32.mrb[0].mxu0
    %v5147 = vadd.f32 %v4355, %v5146
    %v5148 = vpop.f32.mrb[0].mxu0
    %v5149 = vadd.f32 %v4359, %v5148
    %5150 = vdwg.mxu0
    %v5153 = vunpack.c.l.s4 1966171168
    %v5154 = vunpack.c.0.s8 %v5153
    %v5155 = vlaneseq
    %v5156 = vshrl.u32 %v5155, 7
    %v5157 = vsub.s32 %v5154, %v5156
    %v5158 = vrot.slane %v5147, %v5157
    %v5159 = vcombine.high %v5158, %v5158
    %v5161 = vunpack.c.l.s4 1966171168
    %v5162 = vunpack.c.0.s8 %v5161
    %v5163 = vlaneseq
    %v5164 = vshrl.u32 %v5163, 7
    %v5165 = vsub.s32 %v5162, %v5164
    %v5166 = vrot.slane %v5158, %v5165
    %v5168 = vunpack.c.l.s4 1966171168
    %v5169 = vunpack.c.0.s8 %v5168
    %v5170 = vlaneseq
    %v5171 = vshrl.u32 %v5170, 7
    %v5172 = vsub.s32 %v5169, %v5171
    %v5173 = vrot.slane %v5159, %v5172
    %v5176 = vadd.f32 %v5056, %v5166
    %v5177 = vadd.f32 %v5058, %v5173
    %v5178 = vxor.u32 %v5176, 2147483648
    %v5179 = vxor.u32 %v5177, 2147483648
    %v5180 = vmul.f32 %v5178, 1.442695
    %v5181 = vpow.pop %v5180
    %v5182 = vmul.f32 %v5179, 1.442695
    %v5183 = vpow.pop %v5182
    %v5184 = vadd.f32 %v5181, 1.0
    %v5185 = vadd.f32 %v5183, 1.0
    %v5186 = vrcp.pop %v5184
    %v5187 = vmul.f32 1.0, %v5186
    %v5188 = vrcp.pop %v5185
    %v5189 = vmul.f32 1.0, %v5188
    %v5191 = vcombine.low %v5147, %v5149
    %v5193 = vunpack.c.l.s4 1966171168
    %v5194 = vunpack.c.0.s8 %v5193
    %v5195 = vlaneseq
    %v5196 = vshrl.u32 %v5195, 7
    %v5197 = vsub.s32 %v5194, %v5196
    %v5198 = vrot.slane %v5191, %v5197
    %v5199 = vcombine.high %v5198, %v5198
    %v5201 = vunpack.c.l.s4 1966171168
    %v5202 = vunpack.c.0.s8 %v5201
    %v5203 = vlaneseq
    %v5204 = vshrl.u32 %v5203, 7
    %v5205 = vsub.s32 %v5202, %v5204
    %v5206 = vrot.slane %v5198, %v5205
    %v5208 = vunpack.c.l.s4 1966171168
    %v5209 = vunpack.c.0.s8 %v5208
    %v5210 = vlaneseq
    %v5211 = vshrl.u32 %v5210, 7
    %v5212 = vsub.s32 %v5209, %v5211
    %v5213 = vrot.slane %v5199, %v5212
    %5214 = vrot.lane.b32.xlu0 %v5206, 32
    %v5215 = vpop.permute.xlu0 %5214
    %5216 = vrot.lane.b32.xlu0 %v5213, 32
    %v5217 = vpop.permute.xlu0 %5216
    %v5218 = vrot.slane %v5215, 1
    %v5219 = vrot.slane %v5217, 1
    %v5220 = vsel %vm4508, %v5215, %v5218
    %v5221 = vsel %vm4508, %v5217, %v5219
    %v5224 = vmul.f32 %v5187, %v5220
    %v5225 = vmul.f32 %v5189, %v5221
    %5228 = vrot.lane.b32.xlu0 %v5224, 96
    %v5229 = vpop.permute.xlu0 %5228
    %5230 = vrot.lane.b32.xlu0 %v5225, 96
    %v5231 = vpop.permute.xlu0 %5230
    %v5232 = vrot.slane %v5229, 7
    %v5233 = vrot.slane %v5231, 7
    %v5234 = vsel %vm4523, %v5232, %v5229
    %v5235 = vsel %vm4523, %v5233, %v5231
    %v5238 = vadd.f32 %v5056, %v5234
    %v5239 = vadd.f32 %v5058, %v5235
    %v5240 = vtanh.pop %v5238
    %v5241 = vtanh.pop %v5239
    %v5242 = vsub.f32 1.0, %v5187
    %v5243 = vsub.f32 1.0, %v5189
    %5246 = vrot.lane.b32.xlu0 %v5240, 80
    %v5247 = vpop.permute.xlu0 %5246
    %5248 = vrot.lane.b32.xlu0 %v5241, 80
    %v5249 = vpop.permute.xlu0 %5248
    %v5250 = vrot.slane %v5247, 1
    %v5251 = vrot.slane %v5249, 1
    %v5252 = vsel %vm4542, %v5247, %v5250
    %v5253 = vsel %vm4542, %v5249, %v5251
    %v5256 = vmul.f32 %v5242, %v5252
    %v5257 = vmul.f32 %v5243, %v5253
    %v5258 = vmul.f32 %v5187, %v5035
    %v5259 = vmul.f32 %v5189, %v5036
    %v5260 = vadd.f32 %v5256, %v5258
    %v5261 = vadd.f32 %v5257, %v5259
    %vm5262 = vcmp.gt.s32.totalorder %v242, 3
    %v5263 = vsel %vm5262, 1, 0
    %v5264 = vcvt.s32.f32 %v5263
    %v5266 = vlaneseq
    %v5267 = vshrl.u32 %v5266, 7
    %v5268 = vsub.s32 0, %v5267
    %v5269 = vrot.slane %v5264, %v5268
    %v5270 = vlaneseq
    %v5271 = vshrl.u32 %v5270, 7
    %v5272 = vsub.s32 1, %v5271
    %v5273 = vrot.slane %v5264, %v5272
    %v5276 = vmul.f32 %v5260, %v5269
    %v5277 = vmul.f32 %v5261, %v5273
    %v5278 = vadd.f32 %v5053, %v5276
    %v5279 = vadd.f32 %v5054, %v5277
    %s5280 = scalar_lea.vmem [#allocation2], 4
    %v5281 = vld [vmem:[%s5280] ss:$8 sm:$0x3]
    %s5282 = scalar_lea.vmem [#allocation2], 36
    %v5283 = vld [vmem:[%s5282] ss:$8 sm:$0x3]
    %v5286 = vcombine.low %v5260, %v5261
    %v5288 = vunpack.c.l.s4 1966171168
    %v5289 = vunpack.c.0.s8 %v5288
    %v5290 = vlaneseq
    %v5291 = vshrl.u32 %v5290, 7
    %v5292 = vsub.s32 %v5289, %v5291
    %v5293 = vrot.slane %v5286, %v5292
    %v5295 = vunpack.c.l.s4 1966171168
    %v5296 = vunpack.c.0.s8 %v5295
    %v5297 = vlaneseq
    %v5298 = vshrl.u32 %v5297, 7
    %v5299 = vsub.s32 %v5296, %v5298
    %v5300 = vrot.slane %v5293, %v5299
    %5301 = vrot.lane.b32.xlu0 %v5300, 80
    %v5302 = vpop.permute.xlu0 %5301
    %v5303 = vsel %vm356, %v5302, 0
    %5305 = vmatprep.subr.mxu0 %v4323
    %5306 = vmatpush1.msra.mxu0 %v4322
    %5307 = vmatprep.subr.mxu0 %v4325
    %5308 = vmatpush1.msra.mxu0 %v4324
    %5309 = vmatprep.subr.mxu0 %v4327
    %5310 = vmatpush1.msra.mxu0 %v4326
    %5311 = vmatprep.subr.mxu0 %v4329
    %5312 = vmatpush1.msra.mxu0 %v4328
    %5313 = vmatprep.subr.mxu0 %v4331
    %5314 = vmatpush1.msra.mxu0 %v4330
    %5315 = vmatprep.subr.mxu0 %v4333
    %5316 = vmatpush1.msra.mxu0 %v4332
    %5317 = vmatprep.subr.mxu0 0.0
    %5318 = vmatpush1.msra.mxu0 0.0
    %5319 = vmatprep.subr.mxu0 0.0
    %5320 = vmatpush1.msra.mxu0 0.0
    %5321 = vmatprep.subr.mxu0 0.0
    %5322 = vmatpush1.msra.mxu0 0.0
    %5323 = vmatprep.subr.mxu0 0.0
    %5324 = vmatpush1.msra.mxu0 0.0
    %5325 = vmatprep.subr.mxu0 0.0
    %5326 = vmatpush1.msra.mxu0 0.0
    %5327 = vmatprep.subr.mxu0 0.0
    %5328 = vmatpush1.msra.mxu0 0.0
    %5329 = vmatprep.subr.mxu0 0.0
    %5330 = vmatpush1.msra.mxu0 0.0
    %5331 = vmatprep.subr.mxu0 0.0
    %5332 = vmatpush1.msra.mxu0 0.0
    %5333 = vmatprep.subr.mxu0 0.0
    %5334 = vmatpush1.msra.mxu0 0.0
    %5335 = vmatprep.subr.mxu0 0.0
    %5336 = vmatpush1.msra.mxu0 0.0
    %5337 = vmatprep.subr.mxu0 0.0
    %5338 = vmatpush1.msra.mxu0 0.0
    %5339 = vmatprep.subr.mxu0 0.0
    %5340 = vmatpush1.msra.mxu0 0.0
    %5341 = vmatprep.subr.mxu0 0.0
    %5342 = vmatpush1.msra.mxu0 0.0
    %5343 = vmatprep.subr.mxu0 0.0
    %5344 = vmatpush1.msra.mxu0 0.0
    %5345 = vmatprep.subr.mxu0 0.0
    %5346 = vmatpush1.msra.mxu0 0.0
    %5347 = vmatprep.subr.mxu0 0.0
    %5348 = vmatpush1.msra.mxu0 0.0
    %5349 = vmatprep.subr.mxu0 0.0
    %5350 = vmatpush1.msra.mxu0 0.0
    %5351 = vmatprep.subr.mxu0 0.0
    %5352 = vmatpush1.msra.mxu0 0.0
    %5353 = vmatprep.subr.mxu0 0.0
    %5354 = vmatpush1.msra.mxu0 0.0
    %5355 = vmatprep.subr.mxu0 0.0
    %5356 = vmatpush1.msra.mxu0 0.0
    %5357 = vmatprep.subr.mxu0 0.0
    %5358 = vmatpush1.msra.mxu0 0.0
    %5359 = vmatprep.subr.mxu0 0.0
    %5360 = vmatpush1.msra.mxu0 0.0
    %5361 = vmatprep.subr.mxu0 0.0
    %5362 = vmatpush1.msra.mxu0 0.0
    %5363 = vmatprep.subr.mxu0 0.0
    %5364 = vmatpush1.msra.mxu0 0.0
    %5365 = vmatprep.subr.mxu0 0.0
    %5366 = vmatpush1.msra.mxu0 0.0
    %5367 = vmatprep.subr.mxu0 0.0
    %5368 = vmatpush1.msra.mxu0 0.0
    %5369 = vmatprep.mubr.f32.mxu0 0.0
    %5370 = vmatmul.mubr.f32.gmra.mrb[0].mxu0 %v5303
    %v5371 = vpop.f32.mrb[0].mxu0
    %v5372 = vadd.f32 %v4355, %v5371
    %v5373 = vpop.f32.mrb[0].mxu0
    %v5374 = vadd.f32 %v4359, %v5373
    %5375 = vdwg.mxu0
    %v5378 = vunpack.c.l.s4 1966171168
    %v5379 = vunpack.c.0.s8 %v5378
    %v5380 = vlaneseq
    %v5381 = vshrl.u32 %v5380, 7
    %v5382 = vsub.s32 %v5379, %v5381
    %v5383 = vrot.slane %v5372, %v5382
    %v5384 = vcombine.high %v5383, %v5383
    %v5386 = vunpack.c.l.s4 1966171168
    %v5387 = vunpack.c.0.s8 %v5386
    %v5388 = vlaneseq
    %v5389 = vshrl.u32 %v5388, 7
    %v5390 = vsub.s32 %v5387, %v5389
    %v5391 = vrot.slane %v5383, %v5390
    %v5393 = vunpack.c.l.s4 1966171168
    %v5394 = vunpack.c.0.s8 %v5393
    %v5395 = vlaneseq
    %v5396 = vshrl.u32 %v5395, 7
    %v5397 = vsub.s32 %v5394, %v5396
    %v5398 = vrot.slane %v5384, %v5397
    %v5401 = vadd.f32 %v5281, %v5391
    %v5402 = vadd.f32 %v5283, %v5398
    %v5403 = vxor.u32 %v5401, 2147483648
    %v5404 = vxor.u32 %v5402, 2147483648
    %v5405 = vmul.f32 %v5403, 1.442695
    %v5406 = vpow.pop %v5405
    %v5407 = vmul.f32 %v5404, 1.442695
    %v5408 = vpow.pop %v5407
    %v5409 = vadd.f32 %v5406, 1.0
    %v5410 = vadd.f32 %v5408, 1.0
    %v5411 = vrcp.pop %v5409
    %v5412 = vmul.f32 1.0, %v5411
    %v5413 = vrcp.pop %v5410
    %v5414 = vmul.f32 1.0, %v5413
    %v5416 = vcombine.low %v5372, %v5374
    %v5418 = vunpack.c.l.s4 1966171168
    %v5419 = vunpack.c.0.s8 %v5418
    %v5420 = vlaneseq
    %v5421 = vshrl.u32 %v5420, 7
    %v5422 = vsub.s32 %v5419, %v5421
    %v5423 = vrot.slane %v5416, %v5422
    %v5424 = vcombine.high %v5423, %v5423
    %v5426 = vunpack.c.l.s4 1966171168
    %v5427 = vunpack.c.0.s8 %v5426
    %v5428 = vlaneseq
    %v5429 = vshrl.u32 %v5428, 7
    %v5430 = vsub.s32 %v5427, %v5429
    %v5431 = vrot.slane %v5423, %v5430
    %v5433 = vunpack.c.l.s4 1966171168
    %v5434 = vunpack.c.0.s8 %v5433
    %v5435 = vlaneseq
    %v5436 = vshrl.u32 %v5435, 7
    %v5437 = vsub.s32 %v5434, %v5436
    %v5438 = vrot.slane %v5424, %v5437
    %5439 = vrot.lane.b32.xlu0 %v5431, 32
    %v5440 = vpop.permute.xlu0 %5439
    %5441 = vrot.lane.b32.xlu0 %v5438, 32
    %v5442 = vpop.permute.xlu0 %5441
    %v5443 = vrot.slane %v5440, 1
    %v5444 = vrot.slane %v5442, 1
    %v5445 = vsel %vm4508, %v5440, %v5443
    %v5446 = vsel %vm4508, %v5442, %v5444
    %v5449 = vmul.f32 %v5412, %v5445
    %v5450 = vmul.f32 %v5414, %v5446
    %5453 = vrot.lane.b32.xlu0 %v5449, 96
    %v5454 = vpop.permute.xlu0 %5453
    %5455 = vrot.lane.b32.xlu0 %v5450, 96
    %v5456 = vpop.permute.xlu0 %5455
    %v5457 = vrot.slane %v5454, 7
    %v5458 = vrot.slane %v5456, 7
    %v5459 = vsel %vm4523, %v5457, %v5454
    %v5460 = vsel %vm4523, %v5458, %v5456
    %v5463 = vadd.f32 %v5281, %v5459
    %v5464 = vadd.f32 %v5283, %v5460
    %v5465 = vtanh.pop %v5463
    %v5466 = vtanh.pop %v5464
    %v5467 = vsub.f32 1.0, %v5412
    %v5468 = vsub.f32 1.0, %v5414
    %5471 = vrot.lane.b32.xlu0 %v5465, 80
    %v5472 = vpop.permute.xlu0 %5471
    %5473 = vrot.lane.b32.xlu0 %v5466, 80
    %v5474 = vpop.permute.xlu0 %5473
    %v5475 = vrot.slane %v5472, 1
    %v5476 = vrot.slane %v5474, 1
    %v5477 = vsel %vm4542, %v5472, %v5475
    %v5478 = vsel %vm4542, %v5474, %v5476
    %v5481 = vmul.f32 %v5467, %v5477
    %v5482 = vmul.f32 %v5468, %v5478
    %v5483 = vmul.f32 %v5412, %v5260
    %v5484 = vmul.f32 %v5414, %v5261
    %v5485 = vadd.f32 %v5481, %v5483
    %v5486 = vadd.f32 %v5482, %v5484
    %vm5487 = vcmp.gt.s32.totalorder %v242, 4
    %v5488 = vsel %vm5487, 1, 0
    %v5489 = vcvt.s32.f32 %v5488
    %v5491 = vlaneseq
    %v5492 = vshrl.u32 %v5491, 7
    %v5493 = vsub.s32 0, %v5492
    %v5494 = vrot.slane %v5489, %v5493
    %v5495 = vlaneseq
    %v5496 = vshrl.u32 %v5495, 7
    %v5497 = vsub.s32 1, %v5496
    %v5498 = vrot.slane %v5489, %v5497
    %v5501 = vmul.f32 %v5485, %v5494
    %v5502 = vmul.f32 %v5486, %v5498
    %v5503 = vadd.f32 %v5278, %v5501
    %v5504 = vadd.f32 %v5279, %v5502
    %s5505 = scalar_lea.vmem [#allocation2], 5
    %v5506 = vld [vmem:[%s5505] ss:$8 sm:$0x3]
    %s5507 = scalar_lea.vmem [#allocation2], 37
    %v5508 = vld [vmem:[%s5507] ss:$8 sm:$0x3]
    %v5511 = vcombine.low %v5485, %v5486
    %v5513 = vunpack.c.l.s4 1966171168
    %v5514 = vunpack.c.0.s8 %v5513
    %v5515 = vlaneseq
    %v5516 = vshrl.u32 %v5515, 7
    %v5517 = vsub.s32 %v5514, %v5516
    %v5518 = vrot.slane %v5511, %v5517
    %v5520 = vunpack.c.l.s4 1966171168
    %v5521 = vunpack.c.0.s8 %v5520
    %v5522 = vlaneseq
    %v5523 = vshrl.u32 %v5522, 7
    %v5524 = vsub.s32 %v5521, %v5523
    %v5525 = vrot.slane %v5518, %v5524
    %5526 = vrot.lane.b32.xlu0 %v5525, 80
    %v5527 = vpop.permute.xlu0 %5526
    %v5528 = vsel %vm356, %v5527, 0
    %5530 = vmatprep.subr.mxu0 %v4323
    %5531 = vmatpush1.msra.mxu0 %v4322
    %5532 = vmatprep.subr.mxu0 %v4325
    %5533 = vmatpush1.msra.mxu0 %v4324
    %5534 = vmatprep.subr.mxu0 %v4327
    %5535 = vmatpush1.msra.mxu0 %v4326
    %5536 = vmatprep.subr.mxu0 %v4329
    %5537 = vmatpush1.msra.mxu0 %v4328
    %5538 = vmatprep.subr.mxu0 %v4331
    %5539 = vmatpush1.msra.mxu0 %v4330
    %5540 = vmatprep.subr.mxu0 %v4333
    %5541 = vmatpush1.msra.mxu0 %v4332
    %5542 = vmatprep.subr.mxu0 0.0
    %5543 = vmatpush1.msra.mxu0 0.0
    %5544 = vmatprep.subr.mxu0 0.0
    %5545 = vmatpush1.msra.mxu0 0.0
    %5546 = vmatprep.subr.mxu0 0.0
    %5547 = vmatpush1.msra.mxu0 0.0
    %5548 = vmatprep.subr.mxu0 0.0
    %5549 = vmatpush1.msra.mxu0 0.0
    %5550 = vmatprep.subr.mxu0 0.0
    %5551 = vmatpush1.msra.mxu0 0.0
    %5552 = vmatprep.subr.mxu0 0.0
    %5553 = vmatpush1.msra.mxu0 0.0
    %5554 = vmatprep.subr.mxu0 0.0
    %5555 = vmatpush1.msra.mxu0 0.0
    %5556 = vmatprep.subr.mxu0 0.0
    %5557 = vmatpush1.msra.mxu0 0.0
    %5558 = vmatprep.subr.mxu0 0.0
    %5559 = vmatpush1.msra.mxu0 0.0
    %5560 = vmatprep.subr.mxu0 0.0
    %5561 = vmatpush1.msra.mxu0 0.0
    %5562 = vmatprep.subr.mxu0 0.0
    %5563 = vmatpush1.msra.mxu0 0.0
    %5564 = vmatprep.subr.mxu0 0.0
    %5565 = vmatpush1.msra.mxu0 0.0
    %5566 = vmatprep.subr.mxu0 0.0
    %5567 = vmatpush1.msra.mxu0 0.0
    %5568 = vmatprep.subr.mxu0 0.0
    %5569 = vmatpush1.msra.mxu0 0.0
    %5570 = vmatprep.subr.mxu0 0.0
    %5571 = vmatpush1.msra.mxu0 0.0
    %5572 = vmatprep.subr.mxu0 0.0
    %5573 = vmatpush1.msra.mxu0 0.0
    %5574 = vmatprep.subr.mxu0 0.0
    %5575 = vmatpush1.msra.mxu0 0.0
    %5576 = vmatprep.subr.mxu0 0.0
    %5577 = vmatpush1.msra.mxu0 0.0
    %5578 = vmatprep.subr.mxu0 0.0
    %5579 = vmatpush1.msra.mxu0 0.0
    %5580 = vmatprep.subr.mxu0 0.0
    %5581 = vmatpush1.msra.mxu0 0.0
    %5582 = vmatprep.subr.mxu0 0.0
    %5583 = vmatpush1.msra.mxu0 0.0
    %5584 = vmatprep.subr.mxu0 0.0
    %5585 = vmatpush1.msra.mxu0 0.0
    %5586 = vmatprep.subr.mxu0 0.0
    %5587 = vmatpush1.msra.mxu0 0.0
    %5588 = vmatprep.subr.mxu0 0.0
    %5589 = vmatpush1.msra.mxu0 0.0
    %5590 = vmatprep.subr.mxu0 0.0
    %5591 = vmatpush1.msra.mxu0 0.0
    %5592 = vmatprep.subr.mxu0 0.0
    %5593 = vmatpush1.msra.mxu0 0.0
    %5594 = vmatprep.mubr.f32.mxu0 0.0
    %5595 = vmatmul.mubr.f32.gmra.mrb[0].mxu0 %v5528
    %v5596 = vpop.f32.mrb[0].mxu0
    %v5597 = vadd.f32 %v4355, %v5596
    %v5598 = vpop.f32.mrb[0].mxu0
    %v5599 = vadd.f32 %v4359, %v5598
    %5600 = vdwg.mxu0
    %v5603 = vunpack.c.l.s4 1966171168
    %v5604 = vunpack.c.0.s8 %v5603
    %v5605 = vlaneseq
    %v5606 = vshrl.u32 %v5605, 7
    %v5607 = vsub.s32 %v5604, %v5606
    %v5608 = vrot.slane %v5597, %v5607
    %v5609 = vcombine.high %v5608, %v5608
    %v5611 = vunpack.c.l.s4 1966171168
    %v5612 = vunpack.c.0.s8 %v5611
    %v5613 = vlaneseq
    %v5614 = vshrl.u32 %v5613, 7
    %v5615 = vsub.s32 %v5612, %v5614
    %v5616 = vrot.slane %v5608, %v5615
    %v5618 = vunpack.c.l.s4 1966171168
    %v5619 = vunpack.c.0.s8 %v5618
    %v5620 = vlaneseq
    %v5621 = vshrl.u32 %v5620, 7
    %v5622 = vsub.s32 %v5619, %v5621
    %v5623 = vrot.slane %v5609, %v5622
    %v5626 = vadd.f32 %v5506, %v5616
    %v5627 = vadd.f32 %v5508, %v5623
    %v5628 = vxor.u32 %v5626, 2147483648
    %v5629 = vxor.u32 %v5627, 2147483648
    %v5630 = vmul.f32 %v5628, 1.442695
    %v5631 = vpow.pop %v5630
    %v5632 = vmul.f32 %v5629, 1.442695
    %v5633 = vpow.pop %v5632
    %v5634 = vadd.f32 %v5631, 1.0
    %v5635 = vadd.f32 %v5633, 1.0
    %v5636 = vrcp.pop %v5634
    %v5637 = vmul.f32 1.0, %v5636
    %v5638 = vrcp.pop %v5635
    %v5639 = vmul.f32 1.0, %v5638
    %v5641 = vcombine.low %v5597, %v5599
    %v5643 = vunpack.c.l.s4 1966171168
    %v5644 = vunpack.c.0.s8 %v5643
    %v5645 = vlaneseq
    %v5646 = vshrl.u32 %v5645, 7
    %v5647 = vsub.s32 %v5644, %v5646
    %v5648 = vrot.slane %v5641, %v5647
    %v5649 = vcombine.high %v5648, %v5648
    %v5651 = vunpack.c.l.s4 1966171168
    %v5652 = vunpack.c.0.s8 %v5651
    %v5653 = vlaneseq
    %v5654 = vshrl.u32 %v5653, 7
    %v5655 = vsub.s32 %v5652, %v5654
    %v5656 = vrot.slane %v5648, %v5655
    %v5658 = vunpack.c.l.s4 1966171168
    %v5659 = vunpack.c.0.s8 %v5658
    %v5660 = vlaneseq
    %v5661 = vshrl.u32 %v5660, 7
    %v5662 = vsub.s32 %v5659, %v5661
    %v5663 = vrot.slane %v5649, %v5662
    %5664 = vrot.lane.b32.xlu0 %v5656, 32
    %v5665 = vpop.permute.xlu0 %5664
    %5666 = vrot.lane.b32.xlu0 %v5663, 32
    %v5667 = vpop.permute.xlu0 %5666
    %v5668 = vrot.slane %v5665, 1
    %v5669 = vrot.slane %v5667, 1
    %v5670 = vsel %vm4508, %v5665, %v5668
    %v5671 = vsel %vm4508, %v5667, %v5669
    %v5674 = vmul.f32 %v5637, %v5670
    %v5675 = vmul.f32 %v5639, %v5671
    %5678 = vrot.lane.b32.xlu0 %v5674, 96
    %v5679 = vpop.permute.xlu0 %5678
    %5680 = vrot.lane.b32.xlu0 %v5675, 96
    %v5681 = vpop.permute.xlu0 %5680
    %v5682 = vrot.slane %v5679, 7
    %v5683 = vrot.slane %v5681, 7
    %v5684 = vsel %vm4523, %v5682, %v5679
    %v5685 = vsel %vm4523, %v5683, %v5681
    %v5688 = vadd.f32 %v5506, %v5684
    %v5689 = vadd.f32 %v5508, %v5685
    %v5690 = vtanh.pop %v5688
    %v5691 = vtanh.pop %v5689
    %v5692 = vsub.f32 1.0, %v5637
    %v5693 = vsub.f32 1.0, %v5639
    %5696 = vrot.lane.b32.xlu0 %v5690, 80
    %v5697 = vpop.permute.xlu0 %5696
    %5698 = vrot.lane.b32.xlu0 %v5691, 80
    %v5699 = vpop.permute.xlu0 %5698
    %v5700 = vrot.slane %v5697, 1
    %v5701 = vrot.slane %v5699, 1
    %v5702 = vsel %vm4542, %v5697, %v5700
    %v5703 = vsel %vm4542, %v5699, %v5701
    %v5706 = vmul.f32 %v5692, %v5702
    %v5707 = vmul.f32 %v5693, %v5703
    %v5708 = vmul.f32 %v5637, %v5485
    %v5709 = vmul.f32 %v5639, %v5486
    %v5710 = vadd.f32 %v5706, %v5708
    %v5711 = vadd.f32 %v5707, %v5709
    %vm5712 = vcmp.gt.s32.totalorder %v242, 5
    %v5713 = vsel %vm5712, 1, 0
    %v5714 = vcvt.s32.f32 %v5713
    %v5716 = vlaneseq
    %v5717 = vshrl.u32 %v5716, 7
    %v5718 = vsub.s32 0, %v5717
    %v5719 = vrot.slane %v5714, %v5718
    %v5720 = vlaneseq
    %v5721 = vshrl.u32 %v5720, 7
    %v5722 = vsub.s32 1, %v5721
    %v5723 = vrot.slane %v5714, %v5722
    %v5726 = vmul.f32 %v5710, %v5719
    %v5727 = vmul.f32 %v5711, %v5723
    %v5728 = vadd.f32 %v5503, %v5726
    %v5729 = vadd.f32 %v5504, %v5727
    %s5730 = scalar_lea.vmem [#allocation2], 6
    %v5731 = vld [vmem:[%s5730] ss:$8 sm:$0x3]
    %s5732 = scalar_lea.vmem [#allocation2], 38
    %v5733 = vld [vmem:[%s5732] ss:$8 sm:$0x3]
    %v5736 = vcombine.low %v5710, %v5711
    %v5738 = vunpack.c.l.s4 1966171168
    %v5739 = vunpack.c.0.s8 %v5738
    %v5740 = vlaneseq
    %v5741 = vshrl.u32 %v5740, 7
    %v5742 = vsub.s32 %v5739, %v5741
    %v5743 = vrot.slane %v5736, %v5742
    %v5745 = vunpack.c.l.s4 1966171168
    %v5746 = vunpack.c.0.s8 %v5745
    %v5747 = vlaneseq
    %v5748 = vshrl.u32 %v5747, 7
    %v5749 = vsub.s32 %v5746, %v5748
    %v5750 = vrot.slane %v5743, %v5749
    %5751 = vrot.lane.b32.xlu0 %v5750, 80
    %v5752 = vpop.permute.xlu0 %5751
    %v5753 = vsel %vm356, %v5752, 0
    %5755 = vmatprep.subr.mxu0 %v4323
    %5756 = vmatpush1.msra.mxu0 %v4322
    %5757 = vmatprep.subr.mxu0 %v4325
    %5758 = vmatpush1.msra.mxu0 %v4324
    %5759 = vmatprep.subr.mxu0 %v4327
    %5760 = vmatpush1.msra.mxu0 %v4326
    %5761 = vmatprep.subr.mxu0 %v4329
    %5762 = vmatpush1.msra.mxu0 %v4328
    %5763 = vmatprep.subr.mxu0 %v4331
    %5764 = vmatpush1.msra.mxu0 %v4330
    %5765 = vmatprep.subr.mxu0 %v4333
    %5766 = vmatpush1.msra.mxu0 %v4332
    %5767 = vmatprep.subr.mxu0 0.0
    %5768 = vmatpush1.msra.mxu0 0.0
    %5769 = vmatprep.subr.mxu0 0.0
    %5770 = vmatpush1.msra.mxu0 0.0
    %5771 = vmatprep.subr.mxu0 0.0
    %5772 = vmatpush1.msra.mxu0 0.0
    %5773 = vmatprep.subr.mxu0 0.0
    %5774 = vmatpush1.msra.mxu0 0.0
    %5775 = vmatprep.subr.mxu0 0.0
    %5776 = vmatpush1.msra.mxu0 0.0
    %5777 = vmatprep.subr.mxu0 0.0
    %5778 = vmatpush1.msra.mxu0 0.0
    %5779 = vmatprep.subr.mxu0 0.0
    %5780 = vmatpush1.msra.mxu0 0.0
    %5781 = vmatprep.subr.mxu0 0.0
    %5782 = vmatpush1.msra.mxu0 0.0
    %5783 = vmatprep.subr.mxu0 0.0
    %5784 = vmatpush1.msra.mxu0 0.0
    %5785 = vmatprep.subr.mxu0 0.0
    %5786 = vmatpush1.msra.mxu0 0.0
    %5787 = vmatprep.subr.mxu0 0.0
    %5788 = vmatpush1.msra.mxu0 0.0
    %5789 = vmatprep.subr.mxu0 0.0
    %5790 = vmatpush1.msra.mxu0 0.0
    %5791 = vmatprep.subr.mxu0 0.0
    %5792 = vmatpush1.msra.mxu0 0.0
    %5793 = vmatprep.subr.mxu0 0.0
    %5794 = vmatpush1.msra.mxu0 0.0
    %5795 = vmatprep.subr.mxu0 0.0
    %5796 = vmatpush1.msra.mxu0 0.0
    %5797 = vmatprep.subr.mxu0 0.0
    %5798 = vmatpush1.msra.mxu0 0.0
    %5799 = vmatprep.subr.mxu0 0.0
    %5800 = vmatpush1.msra.mxu0 0.0
    %5801 = vmatprep.subr.mxu0 0.0
    %5802 = vmatpush1.msra.mxu0 0.0
    %5803 = vmatprep.subr.mxu0 0.0
    %5804 = vmatpush1.msra.mxu0 0.0
    %5805 = vmatprep.subr.mxu0 0.0
    %5806 = vmatpush1.msra.mxu0 0.0
    %5807 = vmatprep.subr.mxu0 0.0
    %5808 = vmatpush1.msra.mxu0 0.0
    %5809 = vmatprep.subr.mxu0 0.0
    %5810 = vmatpush1.msra.mxu0 0.0
    %5811 = vmatprep.subr.mxu0 0.0
    %5812 = vmatpush1.msra.mxu0 0.0
    %5813 = vmatprep.subr.mxu0 0.0
    %5814 = vmatpush1.msra.mxu0 0.0
    %5815 = vmatprep.subr.mxu0 0.0
    %5816 = vmatpush1.msra.mxu0 0.0
    %5817 = vmatprep.subr.mxu0 0.0
    %5818 = vmatpush1.msra.mxu0 0.0
    %5819 = vmatprep.mubr.f32.mxu0 0.0
    %5820 = vmatmul.mubr.f32.gmra.mrb[0].mxu0 %v5753
    %v5821 = vpop.f32.mrb[0].mxu0
    %v5822 = vadd.f32 %v4355, %v5821
    %v5823 = vpop.f32.mrb[0].mxu0
    %v5824 = vadd.f32 %v4359, %v5823
    %5825 = vdwg.mxu0
    %v5828 = vunpack.c.l.s4 1966171168
    %v5829 = vunpack.c.0.s8 %v5828
    %v5830 = vlaneseq
    %v5831 = vshrl.u32 %v5830, 7
    %v5832 = vsub.s32 %v5829, %v5831
    %v5833 = vrot.slane %v5822, %v5832
    %v5834 = vcombine.high %v5833, %v5833
    %v5836 = vunpack.c.l.s4 1966171168
    %v5837 = vunpack.c.0.s8 %v5836
    %v5838 = vlaneseq
    %v5839 = vshrl.u32 %v5838, 7
    %v5840 = vsub.s32 %v5837, %v5839
    %v5841 = vrot.slane %v5833, %v5840
    %v5843 = vunpack.c.l.s4 1966171168
    %v5844 = vunpack.c.0.s8 %v5843
    %v5845 = vlaneseq
    %v5846 = vshrl.u32 %v5845, 7
    %v5847 = vsub.s32 %v5844, %v5846
    %v5848 = vrot.slane %v5834, %v5847
    %v5851 = vadd.f32 %v5731, %v5841
    %v5852 = vadd.f32 %v5733, %v5848
    %v5853 = vxor.u32 %v5851, 2147483648
    %v5854 = vxor.u32 %v5852, 2147483648
    %v5855 = vmul.f32 %v5853, 1.442695
    %v5856 = vpow.pop %v5855
    %v5857 = vmul.f32 %v5854, 1.442695
    %v5858 = vpow.pop %v5857
    %v5859 = vadd.f32 %v5856, 1.0
    %v5860 = vadd.f32 %v5858, 1.0
    %v5861 = vrcp.pop %v5859
    %v5862 = vmul.f32 1.0, %v5861
    %v5863 = vrcp.pop %v5860
    %v5864 = vmul.f32 1.0, %v5863
    %v5866 = vcombine.low %v5822, %v5824
    %v5868 = vunpack.c.l.s4 1966171168
    %v5869 = vunpack.c.0.s8 %v5868
    %v5870 = vlaneseq
    %v5871 = vshrl.u32 %v5870, 7
    %v5872 = vsub.s32 %v5869, %v5871
    %v5873 = vrot.slane %v5866, %v5872
    %v5874 = vcombine.high %v5873, %v5873
    %v5876 = vunpack.c.l.s4 1966171168
    %v5877 = vunpack.c.0.s8 %v5876
    %v5878 = vlaneseq
    %v5879 = vshrl.u32 %v5878, 7
    %v5880 = vsub.s32 %v5877, %v5879
    %v5881 = vrot.slane %v5873, %v5880
    %v5883 = vunpack.c.l.s4 1966171168
    %v5884 = vunpack.c.0.s8 %v5883
    %v5885 = vlaneseq
    %v5886 = vshrl.u32 %v5885, 7
    %v5887 = vsub.s32 %v5884, %v5886
    %v5888 = vrot.slane %v5874, %v5887
    %5889 = vrot.lane.b32.xlu0 %v5881, 32
    %v5890 = vpop.permute.xlu0 %5889
    %5891 = vrot.lane.b32.xlu0 %v5888, 32
    %v5892 = vpop.permute.xlu0 %5891
    %v5893 = vrot.slane %v5890, 1
    %v5894 = vrot.slane %v5892, 1
    %v5895 = vsel %vm4508, %v5890, %v5893
    %v5896 = vsel %vm4508, %v5892, %v5894
    %v5899 = vmul.f32 %v5862, %v5895
    %v5900 = vmul.f32 %v5864, %v5896
    %5903 = vrot.lane.b32.xlu0 %v5899, 96
    %v5904 = vpop.permute.xlu0 %5903
    %5905 = vrot.lane.b32.xlu0 %v5900, 96
    %v5906 = vpop.permute.xlu0 %5905
    %v5907 = vrot.slane %v5904, 7
    %v5908 = vrot.slane %v5906, 7
    %v5909 = vsel %vm4523, %v5907, %v5904
    %v5910 = vsel %vm4523, %v5908, %v5906
    %v5913 = vadd.f32 %v5731, %v5909
    %v5914 = vadd.f32 %v5733, %v5910
    %v5915 = vtanh.pop %v5913
    %v5916 = vtanh.pop %v5914
    %v5917 = vsub.f32 1.0, %v5862
    %v5918 = vsub.f32 1.0, %v5864
    %5921 = vrot.lane.b32.xlu0 %v5915, 80
    %v5922 = vpop.permute.xlu0 %5921
    %5923 = vrot.lane.b32.xlu0 %v5916, 80
    %v5924 = vpop.permute.xlu0 %5923
    %v5925 = vrot.slane %v5922, 1
    %v5926 = vrot.slane %v5924, 1
    %v5927 = vsel %vm4542, %v5922, %v5925
    %v5928 = vsel %vm4542, %v5924, %v5926
    %v5931 = vmul.f32 %v5917, %v5927
    %v5932 = vmul.f32 %v5918, %v5928
    %v5933 = vmul.f32 %v5862, %v5710
    %v5934 = vmul.f32 %v5864, %v5711
    %v5935 = vadd.f32 %v5931, %v5933
    %v5936 = vadd.f32 %v5932, %v5934
    %vm5937 = vcmp.gt.s32.totalorder %v242, 6
    %v5938 = vsel %vm5937, 1, 0
    %v5939 = vcvt.s32.f32 %v5938
    %v5941 = vlaneseq
    %v5942 = vshrl.u32 %v5941, 7
    %v5943 = vsub.s32 0, %v5942
    %v5944 = vrot.slane %v5939, %v5943
    %v5945 = vlaneseq
    %v5946 = vshrl.u32 %v5945, 7
    %v5947 = vsub.s32 1, %v5946
    %v5948 = vrot.slane %v5939, %v5947
    %v5951 = vmul.f32 %v5935, %v5944
    %v5952 = vmul.f32 %v5936, %v5948
    %v5953 = vadd.f32 %v5728, %v5951
    %v5954 = vadd.f32 %v5729, %v5952
    %s5955 = scalar_lea.vmem [#allocation2], 7
    %v5956 = vld [vmem:[%s5955] ss:$8 sm:$0x3]
    %s5957 = scalar_lea.vmem [#allocation2], 39
    %v5958 = vld [vmem:[%s5957] ss:$8 sm:$0x3]
    %v5961 = vcombine.low %v5935, %v5936
    %v5963 = vunpack.c.l.s4 1966171168
    %v5964 = vunpack.c.0.s8 %v5963
    %v5965 = vlaneseq
    %v5966 = vshrl.u32 %v5965, 7
    %v5967 = vsub.s32 %v5964, %v5966
    %v5968 = vrot.slane %v5961, %v5967
    %v5970 = vunpack.c.l.s4 1966171168
    %v5971 = vunpack.c.0.s8 %v5970
    %v5972 = vlaneseq
    %v5973 = vshrl.u32 %v5972, 7
    %v5974 = vsub.s32 %v5971, %v5973
    %v5975 = vrot.slane %v5968, %v5974
    %5976 = vrot.lane.b32.xlu0 %v5975, 80
    %v5977 = vpop.permute.xlu0 %5976
    %v5978 = vsel %vm356, %v5977, 0
    %5980 = vmatprep.subr.mxu0 %v4323
    %5981 = vmatpush1.msra.mxu0 %v4322
    %5982 = vmatprep.subr.mxu0 %v4325
    %5983 = vmatpush1.msra.mxu0 %v4324
    %5984 = vmatprep.subr.mxu0 %v4327
    %5985 = vmatpush1.msra.mxu0 %v4326
    %5986 = vmatprep.subr.mxu0 %v4329
    %5987 = vmatpush1.msra.mxu0 %v4328
    %5988 = vmatprep.subr.mxu0 %v4331
    %5989 = vmatpush1.msra.mxu0 %v4330
    %5990 = vmatprep.subr.mxu0 %v4333
    %5991 = vmatpush1.msra.mxu0 %v4332
    %5992 = vmatprep.subr.mxu0 0.0
    %5993 = vmatpush1.msra.mxu0 0.0
    %5994 = vmatprep.subr.mxu0 0.0
    %5995 = vmatpush1.msra.mxu0 0.0
    %5996 = vmatprep.subr.mxu0 0.0
    %5997 = vmatpush1.msra.mxu0 0.0
    %5998 = vmatprep.subr.mxu0 0.0
    %5999 = vmatpush1.msra.mxu0 0.0
    %6000 = vmatprep.subr.mxu0 0.0
    %6001 = vmatpush1.msra.mxu0 0.0
    %6002 = vmatprep.subr.mxu0 0.0
    %6003 = vmatpush1.msra.mxu0 0.0
    %6004 = vmatprep.subr.mxu0 0.0
    %6005 = vmatpush1.msra.mxu0 0.0
    %6006 = vmatprep.subr.mxu0 0.0
    %6007 = vmatpush1.msra.mxu0 0.0
    %6008 = vmatprep.subr.mxu0 0.0
    %6009 = vmatpush1.msra.mxu0 0.0
    %6010 = vmatprep.subr.mxu0 0.0
    %6011 = vmatpush1.msra.mxu0 0.0
    %6012 = vmatprep.subr.mxu0 0.0
    %6013 = vmatpush1.msra.mxu0 0.0
    %6014 = vmatprep.subr.mxu0 0.0
    %6015 = vmatpush1.msra.mxu0 0.0
    %6016 = vmatprep.subr.mxu0 0.0
    %6017 = vmatpush1.msra.mxu0 0.0
    %6018 = vmatprep.subr.mxu0 0.0
    %6019 = vmatpush1.msra.mxu0 0.0
    %6020 = vmatprep.subr.mxu0 0.0
    %6021 = vmatpush1.msra.mxu0 0.0
    %6022 = vmatprep.subr.mxu0 0.0
    %6023 = vmatpush1.msra.mxu0 0.0
    %6024 = vmatprep.subr.mxu0 0.0
    %6025 = vmatpush1.msra.mxu0 0.0
    %6026 = vmatprep.subr.mxu0 0.0
    %6027 = vmatpush1.msra.mxu0 0.0
    %6028 = vmatprep.subr.mxu0 0.0
    %6029 = vmatpush1.msra.mxu0 0.0
    %6030 = vmatprep.subr.mxu0 0.0
    %6031 = vmatpush1.msra.mxu0 0.0
    %6032 = vmatprep.subr.mxu0 0.0
    %6033 = vmatpush1.msra.mxu0 0.0
    %6034 = vmatprep.subr.mxu0 0.0
    %6035 = vmatpush1.msra.mxu0 0.0
    %6036 = vmatprep.subr.mxu0 0.0
    %6037 = vmatpush1.msra.mxu0 0.0
    %6038 = vmatprep.subr.mxu0 0.0
    %6039 = vmatpush1.msra.mxu0 0.0
    %6040 = vmatprep.subr.mxu0 0.0
    %6041 = vmatpush1.msra.mxu0 0.0
    %6042 = vmatprep.subr.mxu0 0.0
    %6043 = vmatpush1.msra.mxu0 0.0
    %6044 = vmatprep.mubr.f32.mxu0 0.0
    %6045 = vmatmul.mubr.f32.gmra.mrb[0].mxu0 %v5978
    %v6046 = vpop.f32.mrb[0].mxu0
    %v6047 = vadd.f32 %v4355, %v6046
    %v6048 = vpop.f32.mrb[0].mxu0
    %v6049 = vadd.f32 %v4359, %v6048
    %6050 = vdwg.mxu0
    %v6053 = vunpack.c.l.s4 1966171168
    %v6054 = vunpack.c.0.s8 %v6053
    %v6055 = vlaneseq
    %v6056 = vshrl.u32 %v6055, 7
    %v6057 = vsub.s32 %v6054, %v6056
    %v6058 = vrot.slane %v6047, %v6057
    %v6059 = vcombine.high %v6058, %v6058
    %v6061 = vunpack.c.l.s4 1966171168
    %v6062 = vunpack.c.0.s8 %v6061
    %v6063 = vlaneseq
    %v6064 = vshrl.u32 %v6063, 7
    %v6065 = vsub.s32 %v6062, %v6064
    %v6066 = vrot.slane %v6058, %v6065
    %v6068 = vunpack.c.l.s4 1966171168
    %v6069 = vunpack.c.0.s8 %v6068
    %v6070 = vlaneseq
    %v6071 = vshrl.u32 %v6070, 7
    %v6072 = vsub.s32 %v6069, %v6071
    %v6073 = vrot.slane %v6059, %v6072
    %v6076 = vadd.f32 %v5956, %v6066
    %v6077 = vadd.f32 %v5958, %v6073
    %v6078 = vxor.u32 %v6076, 2147483648
    %v6079 = vxor.u32 %v6077, 2147483648
    %v6080 = vmul.f32 %v6078, 1.442695
    %v6081 = vpow.pop %v6080
    %v6082 = vmul.f32 %v6079, 1.442695
    %v6083 = vpow.pop %v6082
    %v6084 = vadd.f32 %v6081, 1.0
    %v6085 = vadd.f32 %v6083, 1.0
    %v6086 = vrcp.pop %v6084
    %v6087 = vmul.f32 1.0, %v6086
    %v6088 = vrcp.pop %v6085
    %v6089 = vmul.f32 1.0, %v6088
    %v6091 = vcombine.low %v6047, %v6049
    %v6093 = vunpack.c.l.s4 1966171168
    %v6094 = vunpack.c.0.s8 %v6093
    %v6095 = vlaneseq
    %v6096 = vshrl.u32 %v6095, 7
    %v6097 = vsub.s32 %v6094, %v6096
    %v6098 = vrot.slane %v6091, %v6097
    %v6099 = vcombine.high %v6098, %v6098
    %v6101 = vunpack.c.l.s4 1966171168
    %v6102 = vunpack.c.0.s8 %v6101
    %v6103 = vlaneseq
    %v6104 = vshrl.u32 %v6103, 7
    %v6105 = vsub.s32 %v6102, %v6104
    %v6106 = vrot.slane %v6098, %v6105
    %v6108 = vunpack.c.l.s4 1966171168
    %v6109 = vunpack.c.0.s8 %v6108
    %v6110 = vlaneseq
    %v6111 = vshrl.u32 %v6110, 7
    %v6112 = vsub.s32 %v6109, %v6111
    %v6113 = vrot.slane %v6099, %v6112
    %6114 = vrot.lane.b32.xlu0 %v6106, 32
    %v6115 = vpop.permute.xlu0 %6114
    %6116 = vrot.lane.b32.xlu0 %v6113, 32
    %v6117 = vpop.permute.xlu0 %6116
    %v6118 = vrot.slane %v6115, 1
    %v6119 = vrot.slane %v6117, 1
    %v6120 = vsel %vm4508, %v6115, %v6118
    %v6121 = vsel %vm4508, %v6117, %v6119
    %v6124 = vmul.f32 %v6087, %v6120
    %v6125 = vmul.f32 %v6089, %v6121
    %6128 = vrot.lane.b32.xlu0 %v6124, 96
    %v6129 = vpop.permute.xlu0 %6128
    %6130 = vrot.lane.b32.xlu0 %v6125, 96
    %v6131 = vpop.permute.xlu0 %6130
    %v6132 = vrot.slane %v6129, 7
    %v6133 = vrot.slane %v6131, 7
    %v6134 = vsel %vm4523, %v6132, %v6129
    %v6135 = vsel %vm4523, %v6133, %v6131
    %v6138 = vadd.f32 %v5956, %v6134
    %v6139 = vadd.f32 %v5958, %v6135
    %v6140 = vtanh.pop %v6138
    %v6141 = vtanh.pop %v6139
    %v6142 = vsub.f32 1.0, %v6087
    %v6143 = vsub.f32 1.0, %v6089
    %6146 = vrot.lane.b32.xlu0 %v6140, 80
    %v6147 = vpop.permute.xlu0 %6146
    %6148 = vrot.lane.b32.xlu0 %v6141, 80
    %v6149 = vpop.permute.xlu0 %6148
    %v6150 = vrot.slane %v6147, 1
    %v6151 = vrot.slane %v6149, 1
    %v6152 = vsel %vm4542, %v6147, %v6150
    %v6153 = vsel %vm4542, %v6149, %v6151
    %v6156 = vmul.f32 %v6142, %v6152
    %v6157 = vmul.f32 %v6143, %v6153
    %v6158 = vmul.f32 %v6087, %v5935
    %v6159 = vmul.f32 %v6089, %v5936
    %v6160 = vadd.f32 %v6156, %v6158
    %v6161 = vadd.f32 %v6157, %v6159
    %vm6162 = vcmp.gt.s32.totalorder %v242, 7
    %v6163 = vsel %vm6162, 1, 0
    %v6164 = vcvt.s32.f32 %v6163
    %v6166 = vlaneseq
    %v6167 = vshrl.u32 %v6166, 7
    %v6168 = vsub.s32 0, %v6167
    %v6169 = vrot.slane %v6164, %v6168
    %v6170 = vlaneseq
    %v6171 = vshrl.u32 %v6170, 7
    %v6172 = vsub.s32 1, %v6171
    %v6173 = vrot.slane %v6164, %v6172
    %v6176 = vmul.f32 %v6160, %v6169
    %v6177 = vmul.f32 %v6161, %v6173
    %v6178 = vadd.f32 %v5953, %v6176
    %v6179 = vadd.f32 %v5954, %v6177
    %s6180 = scalar_lea.vmem [#allocation2], 16
    %v6181 = vld [vmem:[%s6180] ss:$8 sm:$0x3]
    %s6182 = scalar_lea.vmem [#allocation2], 48
    %v6183 = vld [vmem:[%s6182] ss:$8 sm:$0x3]
    %v6186 = vcombine.low %v6160, %v6161
    %v6188 = vunpack.c.l.s4 1966171168
    %v6189 = vunpack.c.0.s8 %v6188
    %v6190 = vlaneseq
    %v6191 = vshrl.u32 %v6190, 7
    %v6192 = vsub.s32 %v6189, %v6191
    %v6193 = vrot.slane %v6186, %v6192
    %v6195 = vunpack.c.l.s4 1966171168
    %v6196 = vunpack.c.0.s8 %v6195
    %v6197 = vlaneseq
    %v6198 = vshrl.u32 %v6197, 7
    %v6199 = vsub.s32 %v6196, %v6198
    %v6200 = vrot.slane %v6193, %v6199
    %6201 = vrot.lane.b32.xlu0 %v6200, 80
    %v6202 = vpop.permute.xlu0 %6201
    %v6203 = vsel %vm356, %v6202, 0
    %6205 = vmatprep.subr.mxu0 %v4323
    %6206 = vmatpush1.msra.mxu0 %v4322
    %6207 = vmatprep.subr.mxu0 %v4325
    %6208 = vmatpush1.msra.mxu0 %v4324
    %6209 = vmatprep.subr.mxu0 %v4327
    %6210 = vmatpush1.msra.mxu0 %v4326
    %6211 = vmatprep.subr.mxu0 %v4329
    %6212 = vmatpush1.msra.mxu0 %v4328
    %6213 = vmatprep.subr.mxu0 %v4331
    %6214 = vmatpush1.msra.mxu0 %v4330
    %6215 = vmatprep.subr.mxu0 %v4333
    %6216 = vmatpush1.msra.mxu0 %v4332
    %6217 = vmatprep.subr.mxu0 0.0
    %6218 = vmatpush1.msra.mxu0 0.0
    %6219 = vmatprep.subr.mxu0 0.0
    %6220 = vmatpush1.msra.mxu0 0.0
    %6221 = vmatprep.subr.mxu0 0.0
    %6222 = vmatpush1.msra.mxu0 0.0
    %6223 = vmatprep.subr.mxu0 0.0
    %6224 = vmatpush1.msra.mxu0 0.0
    %6225 = vmatprep.subr.mxu0 0.0
    %6226 = vmatpush1.msra.mxu0 0.0
    %6227 = vmatprep.subr.mxu0 0.0
    %6228 = vmatpush1.msra.mxu0 0.0
    %6229 = vmatprep.subr.mxu0 0.0
    %6230 = vmatpush1.msra.mxu0 0.0
    %6231 = vmatprep.subr.mxu0 0.0
    %6232 = vmatpush1.msra.mxu0 0.0
    %6233 = vmatprep.subr.mxu0 0.0
    %6234 = vmatpush1.msra.mxu0 0.0
    %6235 = vmatprep.subr.mxu0 0.0
    %6236 = vmatpush1.msra.mxu0 0.0
    %6237 = vmatprep.subr.mxu0 0.0
    %6238 = vmatpush1.msra.mxu0 0.0
    %6239 = vmatprep.subr.mxu0 0.0
    %6240 = vmatpush1.msra.mxu0 0.0
    %6241 = vmatprep.subr.mxu0 0.0
    %6242 = vmatpush1.msra.mxu0 0.0
    %6243 = vmatprep.subr.mxu0 0.0
    %6244 = vmatpush1.msra.mxu0 0.0
    %6245 = vmatprep.subr.mxu0 0.0
    %6246 = vmatpush1.msra.mxu0 0.0
    %6247 = vmatprep.subr.mxu0 0.0
    %6248 = vmatpush1.msra.mxu0 0.0
    %6249 = vmatprep.subr.mxu0 0.0
    %6250 = vmatpush1.msra.mxu0 0.0
    %6251 = vmatprep.subr.mxu0 0.0
    %6252 = vmatpush1.msra.mxu0 0.0
    %6253 = vmatprep.subr.mxu0 0.0
    %6254 = vmatpush1.msra.mxu0 0.0
    %6255 = vmatprep.subr.mxu0 0.0
    %6256 = vmatpush1.msra.mxu0 0.0
    %6257 = vmatprep.subr.mxu0 0.0
    %6258 = vmatpush1.msra.mxu0 0.0
    %6259 = vmatprep.subr.mxu0 0.0
    %6260 = vmatpush1.msra.mxu0 0.0
    %6261 = vmatprep.subr.mxu0 0.0
    %6262 = vmatpush1.msra.mxu0 0.0
    %6263 = vmatprep.subr.mxu0 0.0
    %6264 = vmatpush1.msra.mxu0 0.0
    %6265 = vmatprep.subr.mxu0 0.0
    %6266 = vmatpush1.msra.mxu0 0.0
    %6267 = vmatprep.subr.mxu0 0.0
    %6268 = vmatpush1.msra.mxu0 0.0
    %6269 = vmatprep.mubr.f32.mxu0 0.0
    %6270 = vmatmul.mubr.f32.gmra.mrb[0].mxu0 %v6203
    %v6271 = vpop.f32.mrb[0].mxu0
    %v6272 = vadd.f32 %v4355, %v6271
    %v6273 = vpop.f32.mrb[0].mxu0
    %v6274 = vadd.f32 %v4359, %v6273
    %6275 = vdwg.mxu0
    %v6278 = vunpack.c.l.s4 1966171168
    %v6279 = vunpack.c.0.s8 %v6278
    %v6280 = vlaneseq
    %v6281 = vshrl.u32 %v6280, 7
    %v6282 = vsub.s32 %v6279, %v6281
    %v6283 = vrot.slane %v6272, %v6282
    %v6284 = vcombine.high %v6283, %v6283
    %v6286 = vunpack.c.l.s4 1966171168
    %v6287 = vunpack.c.0.s8 %v6286
    %v6288 = vlaneseq
    %v6289 = vshrl.u32 %v6288, 7
    %v6290 = vsub.s32 %v6287, %v6289
    %v6291 = vrot.slane %v6283, %v6290
    %v6293 = vunpack.c.l.s4 1966171168
    %v6294 = vunpack.c.0.s8 %v6293
    %v6295 = vlaneseq
    %v6296 = vshrl.u32 %v6295, 7
    %v6297 = vsub.s32 %v6294, %v6296
    %v6298 = vrot.slane %v6284, %v6297
    %v6301 = vadd.f32 %v6181, %v6291
    %v6302 = vadd.f32 %v6183, %v6298
    %v6303 = vxor.u32 %v6301, 2147483648
    %v6304 = vxor.u32 %v6302, 2147483648
    %v6305 = vmul.f32 %v6303, 1.442695
    %v6306 = vpow.pop %v6305
    %v6307 = vmul.f32 %v6304, 1.442695
    %v6308 = vpow.pop %v6307
    %v6309 = vadd.f32 %v6306, 1.0
    %v6310 = vadd.f32 %v6308, 1.0
    %v6311 = vrcp.pop %v6309
    %v6312 = vmul.f32 1.0, %v6311
    %v6313 = vrcp.pop %v6310
    %v6314 = vmul.f32 1.0, %v6313
    %v6316 = vcombine.low %v6272, %v6274
    %v6318 = vunpack.c.l.s4 1966171168
    %v6319 = vunpack.c.0.s8 %v6318
    %v6320 = vlaneseq
    %v6321 = vshrl.u32 %v6320, 7
    %v6322 = vsub.s32 %v6319, %v6321
    %v6323 = vrot.slane %v6316, %v6322
    %v6324 = vcombine.high %v6323, %v6323
    %v6326 = vunpack.c.l.s4 1966171168
    %v6327 = vunpack.c.0.s8 %v6326
    %v6328 = vlaneseq
    %v6329 = vshrl.u32 %v6328, 7
    %v6330 = vsub.s32 %v6327, %v6329
    %v6331 = vrot.slane %v6323, %v6330
    %v6333 = vunpack.c.l.s4 1966171168
    %v6334 = vunpack.c.0.s8 %v6333
    %v6335 = vlaneseq
    %v6336 = vshrl.u32 %v6335, 7
    %v6337 = vsub.s32 %v6334, %v6336
    %v6338 = vrot.slane %v6324, %v6337
    %6339 = vrot.lane.b32.xlu0 %v6331, 32
    %v6340 = vpop.permute.xlu0 %6339
    %6341 = vrot.lane.b32.xlu0 %v6338, 32
    %v6342 = vpop.permute.xlu0 %6341
    %v6343 = vrot.slane %v6340, 1
    %v6344 = vrot.slane %v6342, 1
    %v6345 = vsel %vm4508, %v6340, %v6343
    %v6346 = vsel %vm4508, %v6342, %v6344
    %v6349 = vmul.f32 %v6312, %v6345
    %v6350 = vmul.f32 %v6314, %v6346
    %6353 = vrot.lane.b32.xlu0 %v6349, 96
    %v6354 = vpop.permute.xlu0 %6353
    %6355 = vrot.lane.b32.xlu0 %v6350, 96
    %v6356 = vpop.permute.xlu0 %6355
    %v6357 = vrot.slane %v6354, 7
    %v6358 = vrot.slane %v6356, 7
    %v6359 = vsel %vm4523, %v6357, %v6354
    %v6360 = vsel %vm4523, %v6358, %v6356
    %v6363 = vadd.f32 %v6181, %v6359
    %v6364 = vadd.f32 %v6183, %v6360
    %v6365 = vtanh.pop %v6363
    %v6366 = vtanh.pop %v6364
    %v6367 = vsub.f32 1.0, %v6312
    %v6368 = vsub.f32 1.0, %v6314
    %6371 = vrot.lane.b32.xlu0 %v6365, 80
    %v6372 = vpop.permute.xlu0 %6371
    %6373 = vrot.lane.b32.xlu0 %v6366, 80
    %v6374 = vpop.permute.xlu0 %6373
    %v6375 = vrot.slane %v6372, 1
    %v6376 = vrot.slane %v6374, 1
    %v6377 = vsel %vm4542, %v6372, %v6375
    %v6378 = vsel %vm4542, %v6374, %v6376
    %v6381 = vmul.f32 %v6367, %v6377
    %v6382 = vmul.f32 %v6368, %v6378
    %v6383 = vmul.f32 %v6312, %v6160
    %v6384 = vmul.f32 %v6314, %v6161
    %v6385 = vadd.f32 %v6381, %v6383
    %v6386 = vadd.f32 %v6382, %v6384
    %vm6387 = vcmp.gt.s32.totalorder %v242, 8
    %v6388 = vsel %vm6387, 1, 0
    %v6389 = vcvt.s32.f32 %v6388
    %v6391 = vlaneseq
    %v6392 = vshrl.u32 %v6391, 7
    %v6393 = vsub.s32 0, %v6392
    %v6394 = vrot.slane %v6389, %v6393
    %v6395 = vlaneseq
    %v6396 = vshrl.u32 %v6395, 7
    %v6397 = vsub.s32 1, %v6396
    %v6398 = vrot.slane %v6389, %v6397
    %v6401 = vmul.f32 %v6385, %v6394
    %v6402 = vmul.f32 %v6386, %v6398
    %v6403 = vadd.f32 %v6178, %v6401
    %v6404 = vadd.f32 %v6179, %v6402
    %s6405 = scalar_lea.vmem [#allocation2], 17
    %v6406 = vld [vmem:[%s6405] ss:$8 sm:$0x3]
    %s6407 = scalar_lea.vmem [#allocation2], 49
    %v6408 = vld [vmem:[%s6407] ss:$8 sm:$0x3]
    %v6411 = vcombine.low %v6385, %v6386
    %v6413 = vunpack.c.l.s4 1966171168
    %v6414 = vunpack.c.0.s8 %v6413
    %v6415 = vlaneseq
    %v6416 = vshrl.u32 %v6415, 7
    %v6417 = vsub.s32 %v6414, %v6416
    %v6418 = vrot.slane %v6411, %v6417
    %v6420 = vunpack.c.l.s4 1966171168
    %v6421 = vunpack.c.0.s8 %v6420
    %v6422 = vlaneseq
    %v6423 = vshrl.u32 %v6422, 7
    %v6424 = vsub.s32 %v6421, %v6423
    %v6425 = vrot.slane %v6418, %v6424
    %6426 = vrot.lane.b32.xlu0 %v6425, 80
    %v6427 = vpop.permute.xlu0 %6426
    %v6428 = vsel %vm356, %v6427, 0
    %6430 = vmatprep.subr.mxu0 %v4323
    %6431 = vmatpush1.msra.mxu0 %v4322
    %6432 = vmatprep.subr.mxu0 %v4325
    %6433 = vmatpush1.msra.mxu0 %v4324
    %6434 = vmatprep.subr.mxu0 %v4327
    %6435 = vmatpush1.msra.mxu0 %v4326
    %6436 = vmatprep.subr.mxu0 %v4329
    %6437 = vmatpush1.msra.mxu0 %v4328
    %6438 = vmatprep.subr.mxu0 %v4331
    %6439 = vmatpush1.msra.mxu0 %v4330
    %6440 = vmatprep.subr.mxu0 %v4333
    %6441 = vmatpush1.msra.mxu0 %v4332
    %6442 = vmatprep.subr.mxu0 0.0
    %6443 = vmatpush1.msra.mxu0 0.0
    %6444 = vmatprep.subr.mxu0 0.0
    %6445 = vmatpush1.msra.mxu0 0.0
    %6446 = vmatprep.subr.mxu0 0.0
    %6447 = vmatpush1.msra.mxu0 0.0
    %6448 = vmatprep.subr.mxu0 0.0
    %6449 = vmatpush1.msra.mxu0 0.0
    %6450 = vmatprep.subr.mxu0 0.0
    %6451 = vmatpush1.msra.mxu0 0.0
    %6452 = vmatprep.subr.mxu0 0.0
    %6453 = vmatpush1.msra.mxu0 0.0
    %6454 = vmatprep.subr.mxu0 0.0
    %6455 = vmatpush1.msra.mxu0 0.0
    %6456 = vmatprep.subr.mxu0 0.0
    %6457 = vmatpush1.msra.mxu0 0.0
    %6458 = vmatprep.subr.mxu0 0.0
    %6459 = vmatpush1.msra.mxu0 0.0
    %6460 = vmatprep.subr.mxu0 0.0
    %6461 = vmatpush1.msra.mxu0 0.0
    %6462 = vmatprep.subr.mxu0 0.0
    %6463 = vmatpush1.msra.mxu0 0.0
    %6464 = vmatprep.subr.mxu0 0.0
    %6465 = vmatpush1.msra.mxu0 0.0
    %6466 = vmatprep.subr.mxu0 0.0
    %6467 = vmatpush1.msra.mxu0 0.0
    %6468 = vmatprep.subr.mxu0 0.0
    %6469 = vmatpush1.msra.mxu0 0.0
    %6470 = vmatprep.subr.mxu0 0.0
    %6471 = vmatpush1.msra.mxu0 0.0
    %6472 = vmatprep.subr.mxu0 0.0
    %6473 = vmatpush1.msra.mxu0 0.0
    %6474 = vmatprep.subr.mxu0 0.0
    %6475 = vmatpush1.msra.mxu0 0.0
    %6476 = vmatprep.subr.mxu0 0.0
    %6477 = vmatpush1.msra.mxu0 0.0
    %6478 = vmatprep.subr.mxu0 0.0
    %6479 = vmatpush1.msra.mxu0 0.0
    %6480 = vmatprep.subr.mxu0 0.0
    %6481 = vmatpush1.msra.mxu0 0.0
    %6482 = vmatprep.subr.mxu0 0.0
    %6483 = vmatpush1.msra.mxu0 0.0
    %6484 = vmatprep.subr.mxu0 0.0
    %6485 = vmatpush1.msra.mxu0 0.0
    %6486 = vmatprep.subr.mxu0 0.0
    %6487 = vmatpush1.msra.mxu0 0.0
    %6488 = vmatprep.subr.mxu0 0.0
    %6489 = vmatpush1.msra.mxu0 0.0
    %6490 = vmatprep.subr.mxu0 0.0
    %6491 = vmatpush1.msra.mxu0 0.0
    %6492 = vmatprep.subr.mxu0 0.0
    %6493 = vmatpush1.msra.mxu0 0.0
    %6494 = vmatprep.mubr.f32.mxu0 0.0
    %6495 = vmatmul.mubr.f32.gmra.mrb[0].mxu0 %v6428
    %v6496 = vpop.f32.mrb[0].mxu0
    %v6497 = vadd.f32 %v4355, %v6496
    %v6498 = vpop.f32.mrb[0].mxu0
    %v6499 = vadd.f32 %v4359, %v6498
    %6500 = vdwg.mxu0
    %v6503 = vunpack.c.l.s4 1966171168
    %v6504 = vunpack.c.0.s8 %v6503
    %v6505 = vlaneseq
    %v6506 = vshrl.u32 %v6505, 7
    %v6507 = vsub.s32 %v6504, %v6506
    %v6508 = vrot.slane %v6497, %v6507
    %v6509 = vcombine.high %v6508, %v6508
    %v6511 = vunpack.c.l.s4 1966171168
    %v6512 = vunpack.c.0.s8 %v6511
    %v6513 = vlaneseq
    %v6514 = vshrl.u32 %v6513, 7
    %v6515 = vsub.s32 %v6512, %v6514
    %v6516 = vrot.slane %v6508, %v6515
    %v6518 = vunpack.c.l.s4 1966171168
    %v6519 = vunpack.c.0.s8 %v6518
    %v6520 = vlaneseq
    %v6521 = vshrl.u32 %v6520, 7
    %v6522 = vsub.s32 %v6519, %v6521
    %v6523 = vrot.slane %v6509, %v6522
    %v6526 = vadd.f32 %v6406, %v6516
    %v6527 = vadd.f32 %v6408, %v6523
    %v6528 = vxor.u32 %v6526, 2147483648
    %v6529 = vxor.u32 %v6527, 2147483648
    %v6530 = vmul.f32 %v6528, 1.442695
    %v6531 = vpow.pop %v6530
    %v6532 = vmul.f32 %v6529, 1.442695
    %v6533 = vpow.pop %v6532
    %v6534 = vadd.f32 %v6531, 1.0
    %v6535 = vadd.f32 %v6533, 1.0
    %v6536 = vrcp.pop %v6534
    %v6537 = vmul.f32 1.0, %v6536
    %v6538 = vrcp.pop %v6535
    %v6539 = vmul.f32 1.0, %v6538
    %v6541 = vcombine.low %v6497, %v6499
    %v6543 = vunpack.c.l.s4 1966171168
    %v6544 = vunpack.c.0.s8 %v6543
    %v6545 = vlaneseq
    %v6546 = vshrl.u32 %v6545, 7
    %v6547 = vsub.s32 %v6544, %v6546
    %v6548 = vrot.slane %v6541, %v6547
    %v6549 = vcombine.high %v6548, %v6548
    %v6551 = vunpack.c.l.s4 1966171168
    %v6552 = vunpack.c.0.s8 %v6551
    %v6553 = vlaneseq
    %v6554 = vshrl.u32 %v6553, 7
    %v6555 = vsub.s32 %v6552, %v6554
    %v6556 = vrot.slane %v6548, %v6555
    %v6558 = vunpack.c.l.s4 1966171168
    %v6559 = vunpack.c.0.s8 %v6558
    %v6560 = vlaneseq
    %v6561 = vshrl.u32 %v6560, 7
    %v6562 = vsub.s32 %v6559, %v6561
    %v6563 = vrot.slane %v6549, %v6562
    %6564 = vrot.lane.b32.xlu0 %v6556, 32
    %v6565 = vpop.permute.xlu0 %6564
    %6566 = vrot.lane.b32.xlu0 %v6563, 32
    %v6567 = vpop.permute.xlu0 %6566
    %v6568 = vrot.slane %v6565, 1
    %v6569 = vrot.slane %v6567, 1
    %v6570 = vsel %vm4508, %v6565, %v6568
    %v6571 = vsel %vm4508, %v6567, %v6569
    %v6574 = vmul.f32 %v6537, %v6570
    %v6575 = vmul.f32 %v6539, %v6571
    %6578 = vrot.lane.b32.xlu0 %v6574, 96
    %v6579 = vpop.permute.xlu0 %6578
    %6580 = vrot.lane.b32.xlu0 %v6575, 96
    %v6581 = vpop.permute.xlu0 %6580
    %v6582 = vrot.slane %v6579, 7
    %v6583 = vrot.slane %v6581, 7
    %v6584 = vsel %vm4523, %v6582, %v6579
    %v6585 = vsel %vm4523, %v6583, %v6581
    %v6588 = vadd.f32 %v6406, %v6584
    %v6589 = vadd.f32 %v6408, %v6585
    %v6590 = vtanh.pop %v6588
    %v6591 = vtanh.pop %v6589
    %v6592 = vsub.f32 1.0, %v6537
    %v6593 = vsub.f32 1.0, %v6539
    %6596 = vrot.lane.b32.xlu0 %v6590, 80
    %v6597 = vpop.permute.xlu0 %6596
    %6598 = vrot.lane.b32.xlu0 %v6591, 80
    %v6599 = vpop.permute.xlu0 %6598
    %v6600 = vrot.slane %v6597, 1
    %v6601 = vrot.slane %v6599, 1
    %v6602 = vsel %vm4542, %v6597, %v6600
    %v6603 = vsel %vm4542, %v6599, %v6601
    %v6606 = vmul.f32 %v6592, %v6602
    %v6607 = vmul.f32 %v6593, %v6603
    %v6608 = vmul.f32 %v6537, %v6385
    %v6609 = vmul.f32 %v6539, %v6386
    %v6610 = vadd.f32 %v6606, %v6608
    %v6611 = vadd.f32 %v6607, %v6609
    %vm6612 = vcmp.gt.s32.totalorder %v242, 9
    %v6613 = vsel %vm6612, 1, 0
    %v6614 = vcvt.s32.f32 %v6613
    %v6616 = vlaneseq
    %v6617 = vshrl.u32 %v6616, 7
    %v6618 = vsub.s32 0, %v6617
    %v6619 = vrot.slane %v6614, %v6618
    %v6620 = vlaneseq
    %v6621 = vshrl.u32 %v6620, 7
    %v6622 = vsub.s32 1, %v6621
    %v6623 = vrot.slane %v6614, %v6622
    %v6626 = vmul.f32 %v6610, %v6619
    %v6627 = vmul.f32 %v6611, %v6623
    %v6628 = vadd.f32 %v6403, %v6626
    %v6629 = vadd.f32 %v6404, %v6627
    %s6630 = scalar_lea.vmem [#allocation3], 17
    %v6631 = vld [vmem:[%s6630] ss:$8 sm:$0x3]
    %s6632 = scalar_lea.vmem [#allocation3], 49
    %v6633 = vld [vmem:[%s6632] ss:$8 sm:$0x3]
    %v6635 = vlaneseq
    %v6636 = vshrl.u32 %v6635, 7
    %v6637 = vsub.s32 0, %v6636
    %v6638 = vrot.slane %v4347, %v6637
    %v6639 = vlaneseq
    %v6640 = vshrl.u32 %v6639, 7
    %v6641 = vsub.s32 1, %v6640
    %v6642 = vrot.slane %v4347, %v6641
    %6645 = vmatprep.subr.mxu0 %v4336
    %6646 = vmatpush1.msra.mxu0 %v4335
    %6647 = vmatprep.subr.mxu0 %v4338
    %6648 = vmatpush1.msra.mxu0 %v4337
    %6649 = vmatprep.subr.mxu0 %v4340
    %6650 = vmatpush1.msra.mxu0 %v4339
    %6651 = vmatprep.subr.mxu0 %v4342
    %6652 = vmatpush1.msra.mxu0 %v4341
    %6653 = vmatprep.subr.mxu0 %v4344
    %6654 = vmatpush1.msra.mxu0 %v4343
    %6655 = vmatprep.subr.mxu0 %v4346
    %6656 = vmatpush1.msra.mxu0 %v4345
    %6657 = vmatprep.subr.mxu0 0.0
    %6658 = vmatpush1.msra.mxu0 0.0
    %6659 = vmatprep.subr.mxu0 0.0
    %6660 = vmatpush1.msra.mxu0 0.0
    %6661 = vmatprep.subr.mxu0 0.0
    %6662 = vmatpush1.msra.mxu0 0.0
    %6663 = vmatprep.subr.mxu0 0.0
    %6664 = vmatpush1.msra.mxu0 0.0
    %6665 = vmatprep.subr.mxu0 0.0
    %6666 = vmatpush1.msra.mxu0 0.0
    %6667 = vmatprep.subr.mxu0 0.0
    %6668 = vmatpush1.msra.mxu0 0.0
    %6669 = vmatprep.subr.mxu0 0.0
    %6670 = vmatpush1.msra.mxu0 0.0
    %6671 = vmatprep.subr.mxu0 0.0
    %6672 = vmatpush1.msra.mxu0 0.0
    %6673 = vmatprep.subr.mxu0 0.0
    %6674 = vmatpush1.msra.mxu0 0.0
    %6675 = vmatprep.subr.mxu0 0.0
    %6676 = vmatpush1.msra.mxu0 0.0
    %6677 = vmatprep.subr.mxu0 0.0
    %6678 = vmatpush1.msra.mxu0 0.0
    %6679 = vmatprep.subr.mxu0 0.0
    %6680 = vmatpush1.msra.mxu0 0.0
    %6681 = vmatprep.subr.mxu0 0.0
    %6682 = vmatpush1.msra.mxu0 0.0
    %6683 = vmatprep.subr.mxu0 0.0
    %6684 = vmatpush1.msra.mxu0 0.0
    %6685 = vmatprep.subr.mxu0 0.0
    %6686 = vmatpush1.msra.mxu0 0.0
    %6687 = vmatprep.subr.mxu0 0.0
    %6688 = vmatpush1.msra.mxu0 0.0
    %6689 = vmatprep.subr.mxu0 0.0
    %6690 = vmatpush1.msra.mxu0 0.0
    %6691 = vmatprep.subr.mxu0 0.0
    %6692 = vmatpush1.msra.mxu0 0.0
    %6693 = vmatprep.subr.mxu0 0.0
    %6694 = vmatpush1.msra.mxu0 0.0
    %6695 = vmatprep.subr.mxu0 0.0
    %6696 = vmatpush1.msra.mxu0 0.0
    %6697 = vmatprep.subr.mxu0 0.0
    %6698 = vmatpush1.msra.mxu0 0.0
    %6699 = vmatprep.subr.mxu0 0.0
    %6700 = vmatpush1.msra.mxu0 0.0
    %6701 = vmatprep.subr.mxu0 0.0
    %6702 = vmatpush1.msra.mxu0 0.0
    %6703 = vmatprep.subr.mxu0 0.0
    %6704 = vmatpush1.msra.mxu0 0.0
    %6705 = vmatprep.subr.mxu0 0.0
    %6706 = vmatpush1.msra.mxu0 0.0
    %6707 = vmatprep.subr.mxu0 0.0
    %6708 = vmatpush1.msra.mxu0 0.0
    %6709 = vmatprep.mubr.f32.mxu0 0.0
    %6710 = vmatmul.mubr.f32.gmra.mrb[0].mxu0 %v4366
    %v6711 = vpop.f32.mrb[0].mxu0
    %v6712 = vadd.f32 %v6638, %v6711
    %v6713 = vpop.f32.mrb[0].mxu0
    %v6714 = vadd.f32 %v6642, %v6713
    %6715 = vdwg.mxu0
    %v6718 = vunpack.c.l.s4 1966171168
    %v6719 = vunpack.c.0.s8 %v6718
    %v6720 = vlaneseq
    %v6721 = vshrl.u32 %v6720, 7
    %v6722 = vsub.s32 %v6719, %v6721
    %v6723 = vrot.slane %v6712, %v6722
    %v6724 = vcombine.high %v6723, %v6723
    %v6726 = vunpack.c.l.s4 1966171168
    %v6727 = vunpack.c.0.s8 %v6726
    %v6728 = vlaneseq
    %v6729 = vshrl.u32 %v6728, 7
    %v6730 = vsub.s32 %v6727, %v6729
    %v6731 = vrot.slane %v6723, %v6730
    %v6733 = vunpack.c.l.s4 1966171168
    %v6734 = vunpack.c.0.s8 %v6733
    %v6735 = vlaneseq
    %v6736 = vshrl.u32 %v6735, 7
    %v6737 = vsub.s32 %v6734, %v6736
    %v6738 = vrot.slane %v6724, %v6737
    %v6741 = vadd.f32 %v6631, %v6731
    %v6742 = vadd.f32 %v6633, %v6738
    %v6743 = vxor.u32 %v6741, 2147483648
    %v6744 = vxor.u32 %v6742, 2147483648
    %v6745 = vmul.f32 %v6743, 1.442695
    %v6746 = vpow.pop %v6745
    %v6747 = vmul.f32 %v6744, 1.442695
    %v6748 = vpow.pop %v6747
    %v6749 = vadd.f32 %v6746, 1.0
    %v6750 = vadd.f32 %v6748, 1.0
    %v6751 = vrcp.pop %v6749
    %v6752 = vmul.f32 1.0, %v6751
    %v6753 = vrcp.pop %v6750
    %v6754 = vmul.f32 1.0, %v6753
    %v6756 = vcombine.low %v6712, %v6714
    %v6758 = vunpack.c.l.s4 1966171168
    %v6759 = vunpack.c.0.s8 %v6758
    %v6760 = vlaneseq
    %v6761 = vshrl.u32 %v6760, 7
    %v6762 = vsub.s32 %v6759, %v6761
    %v6763 = vrot.slane %v6756, %v6762
    %v6764 = vcombine.high %v6763, %v6763
    %v6766 = vunpack.c.l.s4 1966171168
    %v6767 = vunpack.c.0.s8 %v6766
    %v6768 = vlaneseq
    %v6769 = vshrl.u32 %v6768, 7
    %v6770 = vsub.s32 %v6767, %v6769
    %v6771 = vrot.slane %v6763, %v6770
    %v6773 = vunpack.c.l.s4 1966171168
    %v6774 = vunpack.c.0.s8 %v6773
    %v6775 = vlaneseq
    %v6776 = vshrl.u32 %v6775, 7
    %v6777 = vsub.s32 %v6774, %v6776
    %v6778 = vrot.slane %v6764, %v6777
    %6779 = vrot.lane.b32.xlu0 %v6771, 32
    %v6780 = vpop.permute.xlu0 %6779
    %6781 = vrot.lane.b32.xlu0 %v6778, 32
    %v6782 = vpop.permute.xlu0 %6781
    %v6783 = vrot.slane %v6780, 1
    %v6784 = vrot.slane %v6782, 1
    %v6785 = vsel %vm4508, %v6780, %v6783
    %v6786 = vsel %vm4508, %v6782, %v6784
    %v6789 = vmul.f32 %v6752, %v6785
    %v6790 = vmul.f32 %v6754, %v6786
    %6793 = vrot.lane.b32.xlu0 %v6789, 96
    %v6794 = vpop.permute.xlu0 %6793
    %6795 = vrot.lane.b32.xlu0 %v6790, 96
    %v6796 = vpop.permute.xlu0 %6795
    %v6797 = vrot.slane %v6794, 7
    %v6798 = vrot.slane %v6796, 7
    %v6799 = vsel %vm4523, %v6797, %v6794
    %v6800 = vsel %vm4523, %v6798, %v6796
    %v6803 = vadd.f32 %v6631, %v6799
    %v6804 = vadd.f32 %v6633, %v6800
    %v6805 = vtanh.pop %v6803
    %v6806 = vtanh.pop %v6804
    %v6807 = vsub.f32 1.0, %v6752
    %v6808 = vsub.f32 1.0, %v6754
    %6811 = vrot.lane.b32.xlu0 %v6805, 80
    %v6812 = vpop.permute.xlu0 %6811
    %6813 = vrot.lane.b32.xlu0 %v6806, 80
    %v6814 = vpop.permute.xlu0 %6813
    %v6815 = vrot.slane %v6812, 1
    %v6816 = vrot.slane %v6814, 1
    %v6817 = vsel %vm4542, %v6812, %v6815
    %v6818 = vsel %vm4542, %v6814, %v6816
    %v6821 = vmul.f32 %v6807, %v6817
    %v6822 = vmul.f32 %v6808, %v6818
    %v6823 = vmul.f32 %v6752, %v4578
    %v6824 = vmul.f32 %v6754, %v4580
    %v6825 = vadd.f32 %v6821, %v6823
    %v6826 = vadd.f32 %v6822, %v6824
    %v6827 = vmul.f32 %v6825, %v6619
    %v6828 = vmul.f32 %v6826, %v6623
    %v6829 = vadd.f32 %v6827, 0.0
    %v6830 = vadd.f32 %v6828, 0.0
    %s6831 = scalar_lea.vmem [#allocation3], 16
    %v6832 = vld [vmem:[%s6831] ss:$8 sm:$0x3]
    %s6833 = scalar_lea.vmem [#allocation3], 48
    %v6834 = vld [vmem:[%s6833] ss:$8 sm:$0x3]
    %v6837 = vcombine.low %v6825, %v6826
    %v6839 = vunpack.c.l.s4 1966171168
    %v6840 = vunpack.c.0.s8 %v6839
    %v6841 = vlaneseq
    %v6842 = vshrl.u32 %v6841, 7
    %v6843 = vsub.s32 %v6840, %v6842
    %v6844 = vrot.slane %v6837, %v6843
    %v6846 = vunpack.c.l.s4 1966171168
    %v6847 = vunpack.c.0.s8 %v6846
    %v6848 = vlaneseq
    %v6849 = vshrl.u32 %v6848, 7
    %v6850 = vsub.s32 %v6847, %v6849
    %v6851 = vrot.slane %v6844, %v6850
    %6852 = vrot.lane.b32.xlu0 %v6851, 80
    %v6853 = vpop.permute.xlu0 %6852
    %v6854 = vsel %vm356, %v6853, 0
    %6856 = vmatprep.subr.mxu0 %v4336
    %6857 = vmatpush1.msra.mxu0 %v4335
    %6858 = vmatprep.subr.mxu0 %v4338
    %6859 = vmatpush1.msra.mxu0 %v4337
    %6860 = vmatprep.subr.mxu0 %v4340
    %6861 = vmatpush1.msra.mxu0 %v4339
    %6862 = vmatprep.subr.mxu0 %v4342
    %6863 = vmatpush1.msra.mxu0 %v4341
    %6864 = vmatprep.subr.mxu0 %v4344
    %6865 = vmatpush1.msra.mxu0 %v4343
    %6866 = vmatprep.subr.mxu0 %v4346
    %6867 = vmatpush1.msra.mxu0 %v4345
    %6868 = vmatprep.subr.mxu0 0.0
    %6869 = vmatpush1.msra.mxu0 0.0
    %6870 = vmatprep.subr.mxu0 0.0
    %6871 = vmatpush1.msra.mxu0 0.0
    %6872 = vmatprep.subr.mxu0 0.0
    %6873 = vmatpush1.msra.mxu0 0.0
    %6874 = vmatprep.subr.mxu0 0.0
    %6875 = vmatpush1.msra.mxu0 0.0
    %6876 = vmatprep.subr.mxu0 0.0
    %6877 = vmatpush1.msra.mxu0 0.0
    %6878 = vmatprep.subr.mxu0 0.0
    %6879 = vmatpush1.msra.mxu0 0.0
    %6880 = vmatprep.subr.mxu0 0.0
    %6881 = vmatpush1.msra.mxu0 0.0
    %6882 = vmatprep.subr.mxu0 0.0
    %6883 = vmatpush1.msra.mxu0 0.0
    %6884 = vmatprep.subr.mxu0 0.0
    %6885 = vmatpush1.msra.mxu0 0.0
    %6886 = vmatprep.subr.mxu0 0.0
    %6887 = vmatpush1.msra.mxu0 0.0
    %6888 = vmatprep.subr.mxu0 0.0
    %6889 = vmatpush1.msra.mxu0 0.0
    %6890 = vmatprep.subr.mxu0 0.0
    %6891 = vmatpush1.msra.mxu0 0.0
    %6892 = vmatprep.subr.mxu0 0.0
    %6893 = vmatpush1.msra.mxu0 0.0
    %6894 = vmatprep.subr.mxu0 0.0
    %6895 = vmatpush1.msra.mxu0 0.0
    %6896 = vmatprep.subr.mxu0 0.0
    %6897 = vmatpush1.msra.mxu0 0.0
    %6898 = vmatprep.subr.mxu0 0.0
    %6899 = vmatpush1.msra.mxu0 0.0
    %6900 = vmatprep.subr.mxu0 0.0
    %6901 = vmatpush1.msra.mxu0 0.0
    %6902 = vmatprep.subr.mxu0 0.0
    %6903 = vmatpush1.msra.mxu0 0.0
    %6904 = vmatprep.subr.mxu0 0.0
    %6905 = vmatpush1.msra.mxu0 0.0
    %6906 = vmatprep.subr.mxu0 0.0
    %6907 = vmatpush1.msra.mxu0 0.0
    %6908 = vmatprep.subr.mxu0 0.0
    %6909 = vmatpush1.msra.mxu0 0.0
    %6910 = vmatprep.subr.mxu0 0.0
    %6911 = vmatpush1.msra.mxu0 0.0
    %6912 = vmatprep.subr.mxu0 0.0
    %6913 = vmatpush1.msra.mxu0 0.0
    %6914 = vmatprep.subr.mxu0 0.0
    %6915 = vmatpush1.msra.mxu0 0.0
    %6916 = vmatprep.subr.mxu0 0.0
    %6917 = vmatpush1.msra.mxu0 0.0
    %6918 = vmatprep.subr.mxu0 0.0
    %6919 = vmatpush1.msra.mxu0 0.0
    %6920 = vmatprep.mubr.f32.mxu0 0.0
    %6921 = vmatmul.mubr.f32.gmra.mrb[0].mxu0 %v6854
    %v6922 = vpop.f32.mrb[0].mxu0
    %v6923 = vadd.f32 %v6638, %v6922
    %v6924 = vpop.f32.mrb[0].mxu0
    %v6925 = vadd.f32 %v6642, %v6924
    %6926 = vdwg.mxu0
    %v6929 = vunpack.c.l.s4 1966171168
    %v6930 = vunpack.c.0.s8 %v6929
    %v6931 = vlaneseq
    %v6932 = vshrl.u32 %v6931, 7
    %v6933 = vsub.s32 %v6930, %v6932
    %v6934 = vrot.slane %v6923, %v6933
    %v6935 = vcombine.high %v6934, %v6934
    %v6937 = vunpack.c.l.s4 1966171168
    %v6938 = vunpack.c.0.s8 %v6937
    %v6939 = vlaneseq
    %v6940 = vshrl.u32 %v6939, 7
    %v6941 = vsub.s32 %v6938, %v6940
    %v6942 = vrot.slane %v6934, %v6941
    %v6944 = vunpack.c.l.s4 1966171168
    %v6945 = vunpack.c.0.s8 %v6944
    %v6946 = vlaneseq
    %v6947 = vshrl.u32 %v6946, 7
    %v6948 = vsub.s32 %v6945, %v6947
    %v6949 = vrot.slane %v6935, %v6948
    %v6952 = vadd.f32 %v6832, %v6942
    %v6953 = vadd.f32 %v6834, %v6949
    %v6954 = vxor.u32 %v6952, 2147483648
    %v6955 = vxor.u32 %v6953, 2147483648
    %v6956 = vmul.f32 %v6954, 1.442695
    %v6957 = vpow.pop %v6956
    %v6958 = vmul.f32 %v6955, 1.442695
    %v6959 = vpow.pop %v6958
    %v6960 = vadd.f32 %v6957, 1.0
    %v6961 = vadd.f32 %v6959, 1.0
    %v6962 = vrcp.pop %v6960
    %v6963 = vmul.f32 1.0, %v6962
    %v6964 = vrcp.pop %v6961
    %v6965 = vmul.f32 1.0, %v6964
    %v6967 = vcombine.low %v6923, %v6925
    %v6969 = vunpack.c.l.s4 1966171168
    %v6970 = vunpack.c.0.s8 %v6969
    %v6971 = vlaneseq
    %v6972 = vshrl.u32 %v6971, 7
    %v6973 = vsub.s32 %v6970, %v6972
    %v6974 = vrot.slane %v6967, %v6973
    %v6975 = vcombine.high %v6974, %v6974
    %v6977 = vunpack.c.l.s4 1966171168
    %v6978 = vunpack.c.0.s8 %v6977
    %v6979 = vlaneseq
    %v6980 = vshrl.u32 %v6979, 7
    %v6981 = vsub.s32 %v6978, %v6980
    %v6982 = vrot.slane %v6974, %v6981
    %v6984 = vunpack.c.l.s4 1966171168
    %v6985 = vunpack.c.0.s8 %v6984
    %v6986 = vlaneseq
    %v6987 = vshrl.u32 %v6986, 7
    %v6988 = vsub.s32 %v6985, %v6987
    %v6989 = vrot.slane %v6975, %v6988
    %6990 = vrot.lane.b32.xlu0 %v6982, 32
    %v6991 = vpop.permute.xlu0 %6990
    %6992 = vrot.lane.b32.xlu0 %v6989, 32
    %v6993 = vpop.permute.xlu0 %6992
    %v6994 = vrot.slane %v6991, 1
    %v6995 = vrot.slane %v6993, 1
    %v6996 = vsel %vm4508, %v6991, %v6994
    %v6997 = vsel %vm4508, %v6993, %v6995
    %v7000 = vmul.f32 %v6963, %v6996
    %v7001 = vmul.f32 %v6965, %v6997
    %7004 = vrot.lane.b32.xlu0 %v7000, 96
    %v7005 = vpop.permute.xlu0 %7004
    %7006 = vrot.lane.b32.xlu0 %v7001, 96
    %v7007 = vpop.permute.xlu0 %7006
    %v7008 = vrot.slane %v7005, 7
    %v7009 = vrot.slane %v7007, 7
    %v7010 = vsel %vm4523, %v7008, %v7005
    %v7011 = vsel %vm4523, %v7009, %v7007
    %v7014 = vadd.f32 %v6832, %v7010
    %v7015 = vadd.f32 %v6834, %v7011
    %v7016 = vtanh.pop %v7014
    %v7017 = vtanh.pop %v7015
    %v7018 = vsub.f32 1.0, %v6963
    %v7019 = vsub.f32 1.0, %v6965
    %7022 = vrot.lane.b32.xlu0 %v7016, 80
    %v7023 = vpop.permute.xlu0 %7022
    %7024 = vrot.lane.b32.xlu0 %v7017, 80
    %v7025 = vpop.permute.xlu0 %7024
    %v7026 = vrot.slane %v7023, 1
    %v7027 = vrot.slane %v7025, 1
    %v7028 = vsel %vm4542, %v7023, %v7026
    %v7029 = vsel %vm4542, %v7025, %v7027
    %v7032 = vmul.f32 %v7018, %v7028
    %v7033 = vmul.f32 %v7019, %v7029
    %v7034 = vmul.f32 %v6963, %v6825
    %v7035 = vmul.f32 %v6965, %v6826
    %v7036 = vadd.f32 %v7032, %v7034
    %v7037 = vadd.f32 %v7033, %v7035
    %v7038 = vmul.f32 %v7036, %v6394
    %v7039 = vmul.f32 %v7037, %v6398
    %v7040 = vadd.f32 %v6829, %v7038
    %v7041 = vadd.f32 %v6830, %v7039
    %s7042 = scalar_lea.vmem [#allocation3], 7
    %v7043 = vld [vmem:[%s7042] ss:$8 sm:$0x3]
    %s7044 = scalar_lea.vmem [#allocation3], 39
    %v7045 = vld [vmem:[%s7044] ss:$8 sm:$0x3]
    %v7048 = vcombine.low %v7036, %v7037
    %v7050 = vunpack.c.l.s4 1966171168
    %v7051 = vunpack.c.0.s8 %v7050
    %v7052 = vlaneseq
    %v7053 = vshrl.u32 %v7052, 7
    %v7054 = vsub.s32 %v7051, %v7053
    %v7055 = vrot.slane %v7048, %v7054
    %v7057 = vunpack.c.l.s4 1966171168
    %v7058 = vunpack.c.0.s8 %v7057
    %v7059 = vlaneseq
    %v7060 = vshrl.u32 %v7059, 7
    %v7061 = vsub.s32 %v7058, %v7060
    %v7062 = vrot.slane %v7055, %v7061
    %7063 = vrot.lane.b32.xlu0 %v7062, 80
    %v7064 = vpop.permute.xlu0 %7063
    %v7065 = vsel %vm356, %v7064, 0
    %7067 = vmatprep.subr.mxu0 %v4336
    %7068 = vmatpush1.msra.mxu0 %v4335
    %7069 = vmatprep.subr.mxu0 %v4338
    %7070 = vmatpush1.msra.mxu0 %v4337
    %7071 = vmatprep.subr.mxu0 %v4340
    %7072 = vmatpush1.msra.mxu0 %v4339
    %7073 = vmatprep.subr.mxu0 %v4342
    %7074 = vmatpush1.msra.mxu0 %v4341
    %7075 = vmatprep.subr.mxu0 %v4344
    %7076 = vmatpush1.msra.mxu0 %v4343
    %7077 = vmatprep.subr.mxu0 %v4346
    %7078 = vmatpush1.msra.mxu0 %v4345
    %7079 = vmatprep.subr.mxu0 0.0
    %7080 = vmatpush1.msra.mxu0 0.0
    %7081 = vmatprep.subr.mxu0 0.0
    %7082 = vmatpush1.msra.mxu0 0.0
    %7083 = vmatprep.subr.mxu0 0.0
    %7084 = vmatpush1.msra.mxu0 0.0
    %7085 = vmatprep.subr.mxu0 0.0
    %7086 = vmatpush1.msra.mxu0 0.0
    %7087 = vmatprep.subr.mxu0 0.0
    %7088 = vmatpush1.msra.mxu0 0.0
    %7089 = vmatprep.subr.mxu0 0.0
    %7090 = vmatpush1.msra.mxu0 0.0
    %7091 = vmatprep.subr.mxu0 0.0
    %7092 = vmatpush1.msra.mxu0 0.0
    %7093 = vmatprep.subr.mxu0 0.0
    %7094 = vmatpush1.msra.mxu0 0.0
    %7095 = vmatprep.subr.mxu0 0.0
    %7096 = vmatpush1.msra.mxu0 0.0
    %7097 = vmatprep.subr.mxu0 0.0
    %7098 = vmatpush1.msra.mxu0 0.0
    %7099 = vmatprep.subr.mxu0 0.0
    %7100 = vmatpush1.msra.mxu0 0.0
    %7101 = vmatprep.subr.mxu0 0.0
    %7102 = vmatpush1.msra.mxu0 0.0
    %7103 = vmatprep.subr.mxu0 0.0
    %7104 = vmatpush1.msra.mxu0 0.0
    %7105 = vmatprep.subr.mxu0 0.0
    %7106 = vmatpush1.msra.mxu0 0.0
    %7107 = vmatprep.subr.mxu0 0.0
    %7108 = vmatpush1.msra.mxu0 0.0
    %7109 = vmatprep.subr.mxu0 0.0
    %7110 = vmatpush1.msra.mxu0 0.0
    %7111 = vmatprep.subr.mxu0 0.0
    %7112 = vmatpush1.msra.mxu0 0.0
    %7113 = vmatprep.subr.mxu0 0.0
    %7114 = vmatpush1.msra.mxu0 0.0
    %7115 = vmatprep.subr.mxu0 0.0
    %7116 = vmatpush1.msra.mxu0 0.0
    %7117 = vmatprep.subr.mxu0 0.0
    %7118 = vmatpush1.msra.mxu0 0.0
    %7119 = vmatprep.subr.mxu0 0.0
    %7120 = vmatpush1.msra.mxu0 0.0
    %7121 = vmatprep.subr.mxu0 0.0
    %7122 = vmatpush1.msra.mxu0 0.0
    %7123 = vmatprep.subr.mxu0 0.0
    %7124 = vmatpush1.msra.mxu0 0.0
    %7125 = vmatprep.subr.mxu0 0.0
    %7126 = vmatpush1.msra.mxu0 0.0
    %7127 = vmatprep.subr.mxu0 0.0
    %7128 = vmatpush1.msra.mxu0 0.0
    %7129 = vmatprep.subr.mxu0 0.0
    %7130 = vmatpush1.msra.mxu0 0.0
    %7131 = vmatprep.mubr.f32.mxu0 0.0
    %7132 = vmatmul.mubr.f32.gmra.mrb[0].mxu0 %v7065
    %v7133 = vpop.f32.mrb[0].mxu0
    %v7134 = vadd.f32 %v6638, %v7133
    %v7135 = vpop.f32.mrb[0].mxu0
    %v7136 = vadd.f32 %v6642, %v7135
    %7137 = vdwg.mxu0
    %v7140 = vunpack.c.l.s4 1966171168
    %v7141 = vunpack.c.0.s8 %v7140
    %v7142 = vlaneseq
    %v7143 = vshrl.u32 %v7142, 7
    %v7144 = vsub.s32 %v7141, %v7143
    %v7145 = vrot.slane %v7134, %v7144
    %v7146 = vcombine.high %v7145, %v7145
    %v7148 = vunpack.c.l.s4 1966171168
    %v7149 = vunpack.c.0.s8 %v7148
    %v7150 = vlaneseq
    %v7151 = vshrl.u32 %v7150, 7
    %v7152 = vsub.s32 %v7149, %v7151
    %v7153 = vrot.slane %v7145, %v7152
    %v7155 = vunpack.c.l.s4 1966171168
    %v7156 = vunpack.c.0.s8 %v7155
    %v7157 = vlaneseq
    %v7158 = vshrl.u32 %v7157, 7
    %v7159 = vsub.s32 %v7156, %v7158
    %v7160 = vrot.slane %v7146, %v7159
    %v7163 = vadd.f32 %v7043, %v7153
    %v7164 = vadd.f32 %v7045, %v7160
    %v7165 = vxor.u32 %v7163, 2147483648
    %v7166 = vxor.u32 %v7164, 2147483648
    %v7167 = vmul.f32 %v7165, 1.442695
    %v7168 = vpow.pop %v7167
    %v7169 = vmul.f32 %v7166, 1.442695
    %v7170 = vpow.pop %v7169
    %v7171 = vadd.f32 %v7168, 1.0
    %v7172 = vadd.f32 %v7170, 1.0
    %v7173 = vrcp.pop %v7171
    %v7174 = vmul.f32 1.0, %v7173
    %v7175 = vrcp.pop %v7172
    %v7176 = vmul.f32 1.0, %v7175
    %v7178 = vcombine.low %v7134, %v7136
    %v7180 = vunpack.c.l.s4 1966171168
    %v7181 = vunpack.c.0.s8 %v7180
    %v7182 = vlaneseq
    %v7183 = vshrl.u32 %v7182, 7
    %v7184 = vsub.s32 %v7181, %v7183
    %v7185 = vrot.slane %v7178, %v7184
    %v7186 = vcombine.high %v7185, %v7185
    %v7188 = vunpack.c.l.s4 1966171168
    %v7189 = vunpack.c.0.s8 %v7188
    %v7190 = vlaneseq
    %v7191 = vshrl.u32 %v7190, 7
    %v7192 = vsub.s32 %v7189, %v7191
    %v7193 = vrot.slane %v7185, %v7192
    %v7195 = vunpack.c.l.s4 1966171168
    %v7196 = vunpack.c.0.s8 %v7195
    %v7197 = vlaneseq
    %v7198 = vshrl.u32 %v7197, 7
    %v7199 = vsub.s32 %v7196, %v7198
    %v7200 = vrot.slane %v7186, %v7199
    %7201 = vrot.lane.b32.xlu0 %v7193, 32
    %v7202 = vpop.permute.xlu0 %7201
    %7203 = vrot.lane.b32.xlu0 %v7200, 32
    %v7204 = vpop.permute.xlu0 %7203
    %v7205 = vrot.slane %v7202, 1
    %v7206 = vrot.slane %v7204, 1
    %v7207 = vsel %vm4508, %v7202, %v7205
    %v7208 = vsel %vm4508, %v7204, %v7206
    %v7211 = vmul.f32 %v7174, %v7207
    %v7212 = vmul.f32 %v7176, %v7208
    %7215 = vrot.lane.b32.xlu0 %v7211, 96
    %v7216 = vpop.permute.xlu0 %7215
    %7217 = vrot.lane.b32.xlu0 %v7212, 96
    %v7218 = vpop.permute.xlu0 %7217
    %v7219 = vrot.slane %v7216, 7
    %v7220 = vrot.slane %v7218, 7
    %v7221 = vsel %vm4523, %v7219, %v7216
    %v7222 = vsel %vm4523, %v7220, %v7218
    %v7225 = vadd.f32 %v7043, %v7221
    %v7226 = vadd.f32 %v7045, %v7222
    %v7227 = vtanh.pop %v7225
    %v7228 = vtanh.pop %v7226
    %v7229 = vsub.f32 1.0, %v7174
    %v7230 = vsub.f32 1.0, %v7176
    %7233 = vrot.lane.b32.xlu0 %v7227, 80
    %v7234 = vpop.permute.xlu0 %7233
    %7235 = vrot.lane.b32.xlu0 %v7228, 80
    %v7236 = vpop.permute.xlu0 %7235
    %v7237 = vrot.slane %v7234, 1
    %v7238 = vrot.slane %v7236, 1
    %v7239 = vsel %vm4542, %v7234, %v7237
    %v7240 = vsel %vm4542, %v7236, %v7238
    %v7243 = vmul.f32 %v7229, %v7239
    %v7244 = vmul.f32 %v7230, %v7240
    %v7245 = vmul.f32 %v7174, %v7036
    %v7246 = vmul.f32 %v7176, %v7037
    %v7247 = vadd.f32 %v7243, %v7245
    %v7248 = vadd.f32 %v7244, %v7246
    %v7249 = vmul.f32 %v7247, %v6169
    %v7250 = vmul.f32 %v7248, %v6173
    %v7251 = vadd.f32 %v7040, %v7249
    %v7252 = vadd.f32 %v7041, %v7250
    %s7253 = scalar_lea.vmem [#allocation3], 6
    %v7254 = vld [vmem:[%s7253] ss:$8 sm:$0x3]
    %s7255 = scalar_lea.vmem [#allocation3], 38
    %v7256 = vld [vmem:[%s7255] ss:$8 sm:$0x3]
    %v7259 = vcombine.low %v7247, %v7248
    %v7261 = vunpack.c.l.s4 1966171168
    %v7262 = vunpack.c.0.s8 %v7261
    %v7263 = vlaneseq
    %v7264 = vshrl.u32 %v7263, 7
    %v7265 = vsub.s32 %v7262, %v7264
    %v7266 = vrot.slane %v7259, %v7265
    %v7268 = vunpack.c.l.s4 1966171168
    %v7269 = vunpack.c.0.s8 %v7268
    %v7270 = vlaneseq
    %v7271 = vshrl.u32 %v7270, 7
    %v7272 = vsub.s32 %v7269, %v7271
    %v7273 = vrot.slane %v7266, %v7272
    %7274 = vrot.lane.b32.xlu0 %v7273, 80
    %v7275 = vpop.permute.xlu0 %7274
    %v7276 = vsel %vm356, %v7275, 0
    %7278 = vmatprep.subr.mxu0 %v4336
    %7279 = vmatpush1.msra.mxu0 %v4335
    %7280 = vmatprep.subr.mxu0 %v4338
    %7281 = vmatpush1.msra.mxu0 %v4337
    %7282 = vmatprep.subr.mxu0 %v4340
    %7283 = vmatpush1.msra.mxu0 %v4339
    %7284 = vmatprep.subr.mxu0 %v4342
    %7285 = vmatpush1.msra.mxu0 %v4341
    %7286 = vmatprep.subr.mxu0 %v4344
    %7287 = vmatpush1.msra.mxu0 %v4343
    %7288 = vmatprep.subr.mxu0 %v4346
    %7289 = vmatpush1.msra.mxu0 %v4345
    %7290 = vmatprep.subr.mxu0 0.0
    %7291 = vmatpush1.msra.mxu0 0.0
    %7292 = vmatprep.subr.mxu0 0.0
    %7293 = vmatpush1.msra.mxu0 0.0
    %7294 = vmatprep.subr.mxu0 0.0
    %7295 = vmatpush1.msra.mxu0 0.0
    %7296 = vmatprep.subr.mxu0 0.0
    %7297 = vmatpush1.msra.mxu0 0.0
    %7298 = vmatprep.subr.mxu0 0.0
    %7299 = vmatpush1.msra.mxu0 0.0
    %7300 = vmatprep.subr.mxu0 0.0
    %7301 = vmatpush1.msra.mxu0 0.0
    %7302 = vmatprep.subr.mxu0 0.0
    %7303 = vmatpush1.msra.mxu0 0.0
    %7304 = vmatprep.subr.mxu0 0.0
    %7305 = vmatpush1.msra.mxu0 0.0
    %7306 = vmatprep.subr.mxu0 0.0
    %7307 = vmatpush1.msra.mxu0 0.0
    %7308 = vmatprep.subr.mxu0 0.0
    %7309 = vmatpush1.msra.mxu0 0.0
    %7310 = vmatprep.subr.mxu0 0.0
    %7311 = vmatpush1.msra.mxu0 0.0
    %7312 = vmatprep.subr.mxu0 0.0
    %7313 = vmatpush1.msra.mxu0 0.0
    %7314 = vmatprep.subr.mxu0 0.0
    %7315 = vmatpush1.msra.mxu0 0.0
    %7316 = vmatprep.subr.mxu0 0.0
    %7317 = vmatpush1.msra.mxu0 0.0
    %7318 = vmatprep.subr.mxu0 0.0
    %7319 = vmatpush1.msra.mxu0 0.0
    %7320 = vmatprep.subr.mxu0 0.0
    %7321 = vmatpush1.msra.mxu0 0.0
    %7322 = vmatprep.subr.mxu0 0.0
    %7323 = vmatpush1.msra.mxu0 0.0
    %7324 = vmatprep.subr.mxu0 0.0
    %7325 = vmatpush1.msra.mxu0 0.0
    %7326 = vmatprep.subr.mxu0 0.0
    %7327 = vmatpush1.msra.mxu0 0.0
    %7328 = vmatprep.subr.mxu0 0.0
    %7329 = vmatpush1.msra.mxu0 0.0
    %7330 = vmatprep.subr.mxu0 0.0
    %7331 = vmatpush1.msra.mxu0 0.0
    %7332 = vmatprep.subr.mxu0 0.0
    %7333 = vmatpush1.msra.mxu0 0.0
    %7334 = vmatprep.subr.mxu0 0.0
    %7335 = vmatpush1.msra.mxu0 0.0
    %7336 = vmatprep.subr.mxu0 0.0
    %7337 = vmatpush1.msra.mxu0 0.0
    %7338 = vmatprep.subr.mxu0 0.0
    %7339 = vmatpush1.msra.mxu0 0.0
    %7340 = vmatprep.subr.mxu0 0.0
    %7341 = vmatpush1.msra.mxu0 0.0
    %7342 = vmatprep.mubr.f32.mxu0 0.0
    %7343 = vmatmul.mubr.f32.gmra.mrb[0].mxu0 %v7276
    %v7344 = vpop.f32.mrb[0].mxu0
    %v7345 = vadd.f32 %v6638, %v7344
    %v7346 = vpop.f32.mrb[0].mxu0
    %v7347 = vadd.f32 %v6642, %v7346
    %7348 = vdwg.mxu0
    %v7351 = vunpack.c.l.s4 1966171168
    %v7352 = vunpack.c.0.s8 %v7351
    %v7353 = vlaneseq
    %v7354 = vshrl.u32 %v7353, 7
    %v7355 = vsub.s32 %v7352, %v7354
    %v7356 = vrot.slane %v7345, %v7355
    %v7357 = vcombine.high %v7356, %v7356
    %v7359 = vunpack.c.l.s4 1966171168
    %v7360 = vunpack.c.0.s8 %v7359
    %v7361 = vlaneseq
    %v7362 = vshrl.u32 %v7361, 7
    %v7363 = vsub.s32 %v7360, %v7362
    %v7364 = vrot.slane %v7356, %v7363
    %v7366 = vunpack.c.l.s4 1966171168
    %v7367 = vunpack.c.0.s8 %v7366
    %v7368 = vlaneseq
    %v7369 = vshrl.u32 %v7368, 7
    %v7370 = vsub.s32 %v7367, %v7369
    %v7371 = vrot.slane %v7357, %v7370
    %v7374 = vadd.f32 %v7254, %v7364
    %v7375 = vadd.f32 %v7256, %v7371
    %v7376 = vxor.u32 %v7374, 2147483648
    %v7377 = vxor.u32 %v7375, 2147483648
    %v7378 = vmul.f32 %v7376, 1.442695
    %v7379 = vpow.pop %v7378
    %v7380 = vmul.f32 %v7377, 1.442695
    %v7381 = vpow.pop %v7380
    %v7382 = vadd.f32 %v7379, 1.0
    %v7383 = vadd.f32 %v7381, 1.0
    %v7384 = vrcp.pop %v7382
    %v7385 = vmul.f32 1.0, %v7384
    %v7386 = vrcp.pop %v7383
    %v7387 = vmul.f32 1.0, %v7386
    %v7389 = vcombine.low %v7345, %v7347
    %v7391 = vunpack.c.l.s4 1966171168
    %v7392 = vunpack.c.0.s8 %v7391
    %v7393 = vlaneseq
    %v7394 = vshrl.u32 %v7393, 7
    %v7395 = vsub.s32 %v7392, %v7394
    %v7396 = vrot.slane %v7389, %v7395
    %v7397 = vcombine.high %v7396, %v7396
    %v7399 = vunpack.c.l.s4 1966171168
    %v7400 = vunpack.c.0.s8 %v7399
    %v7401 = vlaneseq
    %v7402 = vshrl.u32 %v7401, 7
    %v7403 = vsub.s32 %v7400, %v7402
    %v7404 = vrot.slane %v7396, %v7403
    %v7406 = vunpack.c.l.s4 1966171168
    %v7407 = vunpack.c.0.s8 %v7406
    %v7408 = vlaneseq
    %v7409 = vshrl.u32 %v7408, 7
    %v7410 = vsub.s32 %v7407, %v7409
    %v7411 = vrot.slane %v7397, %v7410
    %7412 = vrot.lane.b32.xlu0 %v7404, 32
    %v7413 = vpop.permute.xlu0 %7412
    %7414 = vrot.lane.b32.xlu0 %v7411, 32
    %v7415 = vpop.permute.xlu0 %7414
    %v7416 = vrot.slane %v7413, 1
    %v7417 = vrot.slane %v7415, 1
    %v7418 = vsel %vm4508, %v7413, %v7416
    %v7419 = vsel %vm4508, %v7415, %v7417
    %v7422 = vmul.f32 %v7385, %v7418
    %v7423 = vmul.f32 %v7387, %v7419
    %7426 = vrot.lane.b32.xlu0 %v7422, 96
    %v7427 = vpop.permute.xlu0 %7426
    %7428 = vrot.lane.b32.xlu0 %v7423, 96
    %v7429 = vpop.permute.xlu0 %7428
    %v7430 = vrot.slane %v7427, 7
    %v7431 = vrot.slane %v7429, 7
    %v7432 = vsel %vm4523, %v7430, %v7427
    %v7433 = vsel %vm4523, %v7431, %v7429
    %v7436 = vadd.f32 %v7254, %v7432
    %v7437 = vadd.f32 %v7256, %v7433
    %v7438 = vtanh.pop %v7436
    %v7439 = vtanh.pop %v7437
    %v7440 = vsub.f32 1.0, %v7385
    %v7441 = vsub.f32 1.0, %v7387
    %7444 = vrot.lane.b32.xlu0 %v7438, 80
    %v7445 = vpop.permute.xlu0 %7444
    %7446 = vrot.lane.b32.xlu0 %v7439, 80
    %v7447 = vpop.permute.xlu0 %7446
    %v7448 = vrot.slane %v7445, 1
    %v7449 = vrot.slane %v7447, 1
    %v7450 = vsel %vm4542, %v7445, %v7448
    %v7451 = vsel %vm4542, %v7447, %v7449
    %v7454 = vmul.f32 %v7440, %v7450
    %v7455 = vmul.f32 %v7441, %v7451
    %v7456 = vmul.f32 %v7385, %v7247
    %v7457 = vmul.f32 %v7387, %v7248
    %v7458 = vadd.f32 %v7454, %v7456
    %v7459 = vadd.f32 %v7455, %v7457
    %v7460 = vmul.f32 %v7458, %v5944
    %v7461 = vmul.f32 %v7459, %v5948
    %v7462 = vadd.f32 %v7251, %v7460
    %v7463 = vadd.f32 %v7252, %v7461
    %s7464 = scalar_lea.vmem [#allocation3], 5
    %v7465 = vld [vmem:[%s7464] ss:$8 sm:$0x3]
    %s7466 = scalar_lea.vmem [#allocation3], 37
    %v7467 = vld [vmem:[%s7466] ss:$8 sm:$0x3]
    %v7470 = vcombine.low %v7458, %v7459
    %v7472 = vunpack.c.l.s4 1966171168
    %v7473 = vunpack.c.0.s8 %v7472
    %v7474 = vlaneseq
    %v7475 = vshrl.u32 %v7474, 7
    %v7476 = vsub.s32 %v7473, %v7475
    %v7477 = vrot.slane %v7470, %v7476
    %v7479 = vunpack.c.l.s4 1966171168
    %v7480 = vunpack.c.0.s8 %v7479
    %v7481 = vlaneseq
    %v7482 = vshrl.u32 %v7481, 7
    %v7483 = vsub.s32 %v7480, %v7482
    %v7484 = vrot.slane %v7477, %v7483
    %7485 = vrot.lane.b32.xlu0 %v7484, 80
    %v7486 = vpop.permute.xlu0 %7485
    %v7487 = vsel %vm356, %v7486, 0
    %7489 = vmatprep.subr.mxu0 %v4336
    %7490 = vmatpush1.msra.mxu0 %v4335
    %7491 = vmatprep.subr.mxu0 %v4338
    %7492 = vmatpush1.msra.mxu0 %v4337
    %7493 = vmatprep.subr.mxu0 %v4340
    %7494 = vmatpush1.msra.mxu0 %v4339
    %7495 = vmatprep.subr.mxu0 %v4342
    %7496 = vmatpush1.msra.mxu0 %v4341
    %7497 = vmatprep.subr.mxu0 %v4344
    %7498 = vmatpush1.msra.mxu0 %v4343
    %7499 = vmatprep.subr.mxu0 %v4346
    %7500 = vmatpush1.msra.mxu0 %v4345
    %7501 = vmatprep.subr.mxu0 0.0
    %7502 = vmatpush1.msra.mxu0 0.0
    %7503 = vmatprep.subr.mxu0 0.0
    %7504 = vmatpush1.msra.mxu0 0.0
    %7505 = vmatprep.subr.mxu0 0.0
    %7506 = vmatpush1.msra.mxu0 0.0
    %7507 = vmatprep.subr.mxu0 0.0
    %7508 = vmatpush1.msra.mxu0 0.0
    %7509 = vmatprep.subr.mxu0 0.0
    %7510 = vmatpush1.msra.mxu0 0.0
    %7511 = vmatprep.subr.mxu0 0.0
    %7512 = vmatpush1.msra.mxu0 0.0
    %7513 = vmatprep.subr.mxu0 0.0
    %7514 = vmatpush1.msra.mxu0 0.0
    %7515 = vmatprep.subr.mxu0 0.0
    %7516 = vmatpush1.msra.mxu0 0.0
    %7517 = vmatprep.subr.mxu0 0.0
    %7518 = vmatpush1.msra.mxu0 0.0
    %7519 = vmatprep.subr.mxu0 0.0
    %7520 = vmatpush1.msra.mxu0 0.0
    %7521 = vmatprep.subr.mxu0 0.0
    %7522 = vmatpush1.msra.mxu0 0.0
    %7523 = vmatprep.subr.mxu0 0.0
    %7524 = vmatpush1.msra.mxu0 0.0
    %7525 = vmatprep.subr.mxu0 0.0
    %7526 = vmatpush1.msra.mxu0 0.0
    %7527 = vmatprep.subr.mxu0 0.0
    %7528 = vmatpush1.msra.mxu0 0.0
    %7529 = vmatprep.subr.mxu0 0.0
    %7530 = vmatpush1.msra.mxu0 0.0
    %7531 = vmatprep.subr.mxu0 0.0
    %7532 = vmatpush1.msra.mxu0 0.0
    %7533 = vmatprep.subr.mxu0 0.0
    %7534 = vmatpush1.msra.mxu0 0.0
    %7535 = vmatprep.subr.mxu0 0.0
    %7536 = vmatpush1.msra.mxu0 0.0
    %7537 = vmatprep.subr.mxu0 0.0
    %7538 = vmatpush1.msra.mxu0 0.0
    %7539 = vmatprep.subr.mxu0 0.0
    %7540 = vmatpush1.msra.mxu0 0.0
    %7541 = vmatprep.subr.mxu0 0.0
    %7542 = vmatpush1.msra.mxu0 0.0
    %7543 = vmatprep.subr.mxu0 0.0
    %7544 = vmatpush1.msra.mxu0 0.0
    %7545 = vmatprep.subr.mxu0 0.0
    %7546 = vmatpush1.msra.mxu0 0.0
    %7547 = vmatprep.subr.mxu0 0.0
    %7548 = vmatpush1.msra.mxu0 0.0
    %7549 = vmatprep.subr.mxu0 0.0
    %7550 = vmatpush1.msra.mxu0 0.0
    %7551 = vmatprep.subr.mxu0 0.0
    %7552 = vmatpush1.msra.mxu0 0.0
    %7553 = vmatprep.mubr.f32.mxu0 0.0
    %7554 = vmatmul.mubr.f32.gmra.mrb[0].mxu0 %v7487
    %v7555 = vpop.f32.mrb[0].mxu0
    %v7556 = vadd.f32 %v6638, %v7555
    %v7557 = vpop.f32.mrb[0].mxu0
    %v7558 = vadd.f32 %v6642, %v7557
    %7559 = vdwg.mxu0
    %v7562 = vunpack.c.l.s4 1966171168
    %v7563 = vunpack.c.0.s8 %v7562
    %v7564 = vlaneseq
    %v7565 = vshrl.u32 %v7564, 7
    %v7566 = vsub.s32 %v7563, %v7565
    %v7567 = vrot.slane %v7556, %v7566
    %v7568 = vcombine.high %v7567, %v7567
    %v7570 = vunpack.c.l.s4 1966171168
    %v7571 = vunpack.c.0.s8 %v7570
    %v7572 = vlaneseq
    %v7573 = vshrl.u32 %v7572, 7
    %v7574 = vsub.s32 %v7571, %v7573
    %v7575 = vrot.slane %v7567, %v7574
    %v7577 = vunpack.c.l.s4 1966171168
    %v7578 = vunpack.c.0.s8 %v7577
    %v7579 = vlaneseq
    %v7580 = vshrl.u32 %v7579, 7
    %v7581 = vsub.s32 %v7578, %v7580
    %v7582 = vrot.slane %v7568, %v7581
    %v7585 = vadd.f32 %v7465, %v7575
    %v7586 = vadd.f32 %v7467, %v7582
    %v7587 = vxor.u32 %v7585, 2147483648
    %v7588 = vxor.u32 %v7586, 2147483648
    %v7589 = vmul.f32 %v7587, 1.442695
    %v7590 = vpow.pop %v7589
    %v7591 = vmul.f32 %v7588, 1.442695
    %v7592 = vpow.pop %v7591
    %v7593 = vadd.f32 %v7590, 1.0
    %v7594 = vadd.f32 %v7592, 1.0
    %v7595 = vrcp.pop %v7593
    %v7596 = vmul.f32 1.0, %v7595
    %v7597 = vrcp.pop %v7594
    %v7598 = vmul.f32 1.0, %v7597
    %v7600 = vcombine.low %v7556, %v7558
    %v7602 = vunpack.c.l.s4 1966171168
    %v7603 = vunpack.c.0.s8 %v7602
    %v7604 = vlaneseq
    %v7605 = vshrl.u32 %v7604, 7
    %v7606 = vsub.s32 %v7603, %v7605
    %v7607 = vrot.slane %v7600, %v7606
    %v7608 = vcombine.high %v7607, %v7607
    %v7610 = vunpack.c.l.s4 1966171168
    %v7611 = vunpack.c.0.s8 %v7610
    %v7612 = vlaneseq
    %v7613 = vshrl.u32 %v7612, 7
    %v7614 = vsub.s32 %v7611, %v7613
    %v7615 = vrot.slane %v7607, %v7614
    %v7617 = vunpack.c.l.s4 1966171168
    %v7618 = vunpack.c.0.s8 %v7617
    %v7619 = vlaneseq
    %v7620 = vshrl.u32 %v7619, 7
    %v7621 = vsub.s32 %v7618, %v7620
    %v7622 = vrot.slane %v7608, %v7621
    %7623 = vrot.lane.b32.xlu0 %v7615, 32
    %v7624 = vpop.permute.xlu0 %7623
    %7625 = vrot.lane.b32.xlu0 %v7622, 32
    %v7626 = vpop.permute.xlu0 %7625
    %v7627 = vrot.slane %v7624, 1
    %v7628 = vrot.slane %v7626, 1
    %v7629 = vsel %vm4508, %v7624, %v7627
    %v7630 = vsel %vm4508, %v7626, %v7628
    %v7633 = vmul.f32 %v7596, %v7629
    %v7634 = vmul.f32 %v7598, %v7630
    %7637 = vrot.lane.b32.xlu0 %v7633, 96
    %v7638 = vpop.permute.xlu0 %7637
    %7639 = vrot.lane.b32.xlu0 %v7634, 96
    %v7640 = vpop.permute.xlu0 %7639
    %v7641 = vrot.slane %v7638, 7
    %v7642 = vrot.slane %v7640, 7
    %v7643 = vsel %vm4523, %v7641, %v7638
    %v7644 = vsel %vm4523, %v7642, %v7640
    %v7647 = vadd.f32 %v7465, %v7643
    %v7648 = vadd.f32 %v7467, %v7644
    %v7649 = vtanh.pop %v7647
    %v7650 = vtanh.pop %v7648
    %v7651 = vsub.f32 1.0, %v7596
    %v7652 = vsub.f32 1.0, %v7598
    %7655 = vrot.lane.b32.xlu0 %v7649, 80
    %v7656 = vpop.permute.xlu0 %7655
    %7657 = vrot.lane.b32.xlu0 %v7650, 80
    %v7658 = vpop.permute.xlu0 %7657
    %v7659 = vrot.slane %v7656, 1
    %v7660 = vrot.slane %v7658, 1
    %v7661 = vsel %vm4542, %v7656, %v7659
    %v7662 = vsel %vm4542, %v7658, %v7660
    %v7665 = vmul.f32 %v7651, %v7661
    %v7666 = vmul.f32 %v7652, %v7662
    %v7667 = vmul.f32 %v7596, %v7458
    %v7668 = vmul.f32 %v7598, %v7459
    %v7669 = vadd.f32 %v7665, %v7667
    %v7670 = vadd.f32 %v7666, %v7668
    %v7671 = vmul.f32 %v7669, %v5719
    %v7672 = vmul.f32 %v7670, %v5723
    %v7673 = vadd.f32 %v7462, %v7671
    %v7674 = vadd.f32 %v7463, %v7672
    %s7675 = scalar_lea.vmem [#allocation3], 4
    %v7676 = vld [vmem:[%s7675] ss:$8 sm:$0x3]
    %s7677 = scalar_lea.vmem [#allocation3], 36
    %v7678 = vld [vmem:[%s7677] ss:$8 sm:$0x3]
    %v7681 = vcombine.low %v7669, %v7670
    %v7683 = vunpack.c.l.s4 1966171168
    %v7684 = vunpack.c.0.s8 %v7683
    %v7685 = vlaneseq
    %v7686 = vshrl.u32 %v7685, 7
    %v7687 = vsub.s32 %v7684, %v7686
    %v7688 = vrot.slane %v7681, %v7687
    %v7690 = vunpack.c.l.s4 1966171168
    %v7691 = vunpack.c.0.s8 %v7690
    %v7692 = vlaneseq
    %v7693 = vshrl.u32 %v7692, 7
    %v7694 = vsub.s32 %v7691, %v7693
    %v7695 = vrot.slane %v7688, %v7694
    %7696 = vrot.lane.b32.xlu0 %v7695, 80
    %v7697 = vpop.permute.xlu0 %7696
    %v7698 = vsel %vm356, %v7697, 0
    %7700 = vmatprep.subr.mxu0 %v4336
    %7701 = vmatpush1.msra.mxu0 %v4335
    %7702 = vmatprep.subr.mxu0 %v4338
    %7703 = vmatpush1.msra.mxu0 %v4337
    %7704 = vmatprep.subr.mxu0 %v4340
    %7705 = vmatpush1.msra.mxu0 %v4339
    %7706 = vmatprep.subr.mxu0 %v4342
    %7707 = vmatpush1.msra.mxu0 %v4341
    %7708 = vmatprep.subr.mxu0 %v4344
    %7709 = vmatpush1.msra.mxu0 %v4343
    %7710 = vmatprep.subr.mxu0 %v4346
    %7711 = vmatpush1.msra.mxu0 %v4345
    %7712 = vmatprep.subr.mxu0 0.0
    %7713 = vmatpush1.msra.mxu0 0.0
    %7714 = vmatprep.subr.mxu0 0.0
    %7715 = vmatpush1.msra.mxu0 0.0
    %7716 = vmatprep.subr.mxu0 0.0
    %7717 = vmatpush1.msra.mxu0 0.0
    %7718 = vmatprep.subr.mxu0 0.0
    %7719 = vmatpush1.msra.mxu0 0.0
    %7720 = vmatprep.subr.mxu0 0.0
    %7721 = vmatpush1.msra.mxu0 0.0
    %7722 = vmatprep.subr.mxu0 0.0
    %7723 = vmatpush1.msra.mxu0 0.0
    %7724 = vmatprep.subr.mxu0 0.0
    %7725 = vmatpush1.msra.mxu0 0.0
    %7726 = vmatprep.subr.mxu0 0.0
    %7727 = vmatpush1.msra.mxu0 0.0
    %7728 = vmatprep.subr.mxu0 0.0
    %7729 = vmatpush1.msra.mxu0 0.0
    %7730 = vmatprep.subr.mxu0 0.0
    %7731 = vmatpush1.msra.mxu0 0.0
    %7732 = vmatprep.subr.mxu0 0.0
    %7733 = vmatpush1.msra.mxu0 0.0
    %7734 = vmatprep.subr.mxu0 0.0
    %7735 = vmatpush1.msra.mxu0 0.0
    %7736 = vmatprep.subr.mxu0 0.0
    %7737 = vmatpush1.msra.mxu0 0.0
    %7738 = vmatprep.subr.mxu0 0.0
    %7739 = vmatpush1.msra.mxu0 0.0
    %7740 = vmatprep.subr.mxu0 0.0
    %7741 = vmatpush1.msra.mxu0 0.0
    %7742 = vmatprep.subr.mxu0 0.0
    %7743 = vmatpush1.msra.mxu0 0.0
    %7744 = vmatprep.subr.mxu0 0.0
    %7745 = vmatpush1.msra.mxu0 0.0
    %7746 = vmatprep.subr.mxu0 0.0
    %7747 = vmatpush1.msra.mxu0 0.0
    %7748 = vmatprep.subr.mxu0 0.0
    %7749 = vmatpush1.msra.mxu0 0.0
    %7750 = vmatprep.subr.mxu0 0.0
    %7751 = vmatpush1.msra.mxu0 0.0
    %7752 = vmatprep.subr.mxu0 0.0
    %7753 = vmatpush1.msra.mxu0 0.0
    %7754 = vmatprep.subr.mxu0 0.0
    %7755 = vmatpush1.msra.mxu0 0.0
    %7756 = vmatprep.subr.mxu0 0.0
    %7757 = vmatpush1.msra.mxu0 0.0
    %7758 = vmatprep.subr.mxu0 0.0
    %7759 = vmatpush1.msra.mxu0 0.0
    %7760 = vmatprep.subr.mxu0 0.0
    %7761 = vmatpush1.msra.mxu0 0.0
    %7762 = vmatprep.subr.mxu0 0.0
    %7763 = vmatpush1.msra.mxu0 0.0
    %7764 = vmatprep.mubr.f32.mxu0 0.0
    %7765 = vmatmul.mubr.f32.gmra.mrb[0].mxu0 %v7698
    %v7766 = vpop.f32.mrb[0].mxu0
    %v7767 = vadd.f32 %v6638, %v7766
    %v7768 = vpop.f32.mrb[0].mxu0
    %v7769 = vadd.f32 %v6642, %v7768
    %7770 = vdwg.mxu0
    %v7773 = vunpack.c.l.s4 1966171168
    %v7774 = vunpack.c.0.s8 %v7773
    %v7775 = vlaneseq
    %v7776 = vshrl.u32 %v7775, 7
    %v7777 = vsub.s32 %v7774, %v7776
    %v7778 = vrot.slane %v7767, %v7777
    %v7779 = vcombine.high %v7778, %v7778
    %v7781 = vunpack.c.l.s4 1966171168
    %v7782 = vunpack.c.0.s8 %v7781
    %v7783 = vlaneseq
    %v7784 = vshrl.u32 %v7783, 7
    %v7785 = vsub.s32 %v7782, %v7784
    %v7786 = vrot.slane %v7778, %v7785
    %v7788 = vunpack.c.l.s4 1966171168
    %v7789 = vunpack.c.0.s8 %v7788
    %v7790 = vlaneseq
    %v7791 = vshrl.u32 %v7790, 7
    %v7792 = vsub.s32 %v7789, %v7791
    %v7793 = vrot.slane %v7779, %v7792
    %v7796 = vadd.f32 %v7676, %v7786
    %v7797 = vadd.f32 %v7678, %v7793
    %v7798 = vxor.u32 %v7796, 2147483648
    %v7799 = vxor.u32 %v7797, 2147483648
    %v7800 = vmul.f32 %v7798, 1.442695
    %v7801 = vpow.pop %v7800
    %v7802 = vmul.f32 %v7799, 1.442695
    %v7803 = vpow.pop %v7802
    %v7804 = vadd.f32 %v7801, 1.0
    %v7805 = vadd.f32 %v7803, 1.0
    %v7806 = vrcp.pop %v7804
    %v7807 = vmul.f32 1.0, %v7806
    %v7808 = vrcp.pop %v7805
    %v7809 = vmul.f32 1.0, %v7808
    %v7811 = vcombine.low %v7767, %v7769
    %v7813 = vunpack.c.l.s4 1966171168
    %v7814 = vunpack.c.0.s8 %v7813
    %v7815 = vlaneseq
    %v7816 = vshrl.u32 %v7815, 7
    %v7817 = vsub.s32 %v7814, %v7816
    %v7818 = vrot.slane %v7811, %v7817
    %v7819 = vcombine.high %v7818, %v7818
    %v7821 = vunpack.c.l.s4 1966171168
    %v7822 = vunpack.c.0.s8 %v7821
    %v7823 = vlaneseq
    %v7824 = vshrl.u32 %v7823, 7
    %v7825 = vsub.s32 %v7822, %v7824
    %v7826 = vrot.slane %v7818, %v7825
    %v7828 = vunpack.c.l.s4 1966171168
    %v7829 = vunpack.c.0.s8 %v7828
    %v7830 = vlaneseq
    %v7831 = vshrl.u32 %v7830, 7
    %v7832 = vsub.s32 %v7829, %v7831
    %v7833 = vrot.slane %v7819, %v7832
    %7834 = vrot.lane.b32.xlu0 %v7826, 32
    %v7835 = vpop.permute.xlu0 %7834
    %7836 = vrot.lane.b32.xlu0 %v7833, 32
    %v7837 = vpop.permute.xlu0 %7836
    %v7838 = vrot.slane %v7835, 1
    %v7839 = vrot.slane %v7837, 1
    %v7840 = vsel %vm4508, %v7835, %v7838
    %v7841 = vsel %vm4508, %v7837, %v7839
    %v7844 = vmul.f32 %v7807, %v7840
    %v7845 = vmul.f32 %v7809, %v7841
    %7848 = vrot.lane.b32.xlu0 %v7844, 96
    %v7849 = vpop.permute.xlu0 %7848
    %7850 = vrot.lane.b32.xlu0 %v7845, 96
    %v7851 = vpop.permute.xlu0 %7850
    %v7852 = vrot.slane %v7849, 7
    %v7853 = vrot.slane %v7851, 7
    %v7854 = vsel %vm4523, %v7852, %v7849
    %v7855 = vsel %vm4523, %v7853, %v7851
    %v7858 = vadd.f32 %v7676, %v7854
    %v7859 = vadd.f32 %v7678, %v7855
    %v7860 = vtanh.pop %v7858
    %v7861 = vtanh.pop %v7859
    %v7862 = vsub.f32 1.0, %v7807
    %v7863 = vsub.f32 1.0, %v7809
    %7866 = vrot.lane.b32.xlu0 %v7860, 80
    %v7867 = vpop.permute.xlu0 %7866
    %7868 = vrot.lane.b32.xlu0 %v7861, 80
    %v7869 = vpop.permute.xlu0 %7868
    %v7870 = vrot.slane %v7867, 1
    %v7871 = vrot.slane %v7869, 1
    %v7872 = vsel %vm4542, %v7867, %v7870
    %v7873 = vsel %vm4542, %v7869, %v7871
    %v7876 = vmul.f32 %v7862, %v7872
    %v7877 = vmul.f32 %v7863, %v7873
    %v7878 = vmul.f32 %v7807, %v7669
    %v7879 = vmul.f32 %v7809, %v7670
    %v7880 = vadd.f32 %v7876, %v7878
    %v7881 = vadd.f32 %v7877, %v7879
    %v7882 = vmul.f32 %v7880, %v5494
    %v7883 = vmul.f32 %v7881, %v5498
    %v7884 = vadd.f32 %v7673, %v7882
    %v7885 = vadd.f32 %v7674, %v7883
    %s7886 = scalar_lea.vmem [#allocation3], 3
    %v7887 = vld [vmem:[%s7886] ss:$8 sm:$0x3]
    %s7888 = scalar_lea.vmem [#allocation3], 35
    %v7889 = vld [vmem:[%s7888] ss:$8 sm:$0x3]
    %v7892 = vcombine.low %v7880, %v7881
    %v7894 = vunpack.c.l.s4 1966171168
    %v7895 = vunpack.c.0.s8 %v7894
    %v7896 = vlaneseq
    %v7897 = vshrl.u32 %v7896, 7
    %v7898 = vsub.s32 %v7895, %v7897
    %v7899 = vrot.slane %v7892, %v7898
    %v7901 = vunpack.c.l.s4 1966171168
    %v7902 = vunpack.c.0.s8 %v7901
    %v7903 = vlaneseq
    %v7904 = vshrl.u32 %v7903, 7
    %v7905 = vsub.s32 %v7902, %v7904
    %v7906 = vrot.slane %v7899, %v7905
    %7907 = vrot.lane.b32.xlu0 %v7906, 80
    %v7908 = vpop.permute.xlu0 %7907
    %v7909 = vsel %vm356, %v7908, 0
    %7911 = vmatprep.subr.mxu0 %v4336
    %7912 = vmatpush1.msra.mxu0 %v4335
    %7913 = vmatprep.subr.mxu0 %v4338
    %7914 = vmatpush1.msra.mxu0 %v4337
    %7915 = vmatprep.subr.mxu0 %v4340
    %7916 = vmatpush1.msra.mxu0 %v4339
    %7917 = vmatprep.subr.mxu0 %v4342
    %7918 = vmatpush1.msra.mxu0 %v4341
    %7919 = vmatprep.subr.mxu0 %v4344
    %7920 = vmatpush1.msra.mxu0 %v4343
    %7921 = vmatprep.subr.mxu0 %v4346
    %7922 = vmatpush1.msra.mxu0 %v4345
    %7923 = vmatprep.subr.mxu0 0.0
    %7924 = vmatpush1.msra.mxu0 0.0
    %7925 = vmatprep.subr.mxu0 0.0
    %7926 = vmatpush1.msra.mxu0 0.0
    %7927 = vmatprep.subr.mxu0 0.0
    %7928 = vmatpush1.msra.mxu0 0.0
    %7929 = vmatprep.subr.mxu0 0.0
    %7930 = vmatpush1.msra.mxu0 0.0
    %7931 = vmatprep.subr.mxu0 0.0
    %7932 = vmatpush1.msra.mxu0 0.0
    %7933 = vmatprep.subr.mxu0 0.0
    %7934 = vmatpush1.msra.mxu0 0.0
    %7935 = vmatprep.subr.mxu0 0.0
    %7936 = vmatpush1.msra.mxu0 0.0
    %7937 = vmatprep.subr.mxu0 0.0
    %7938 = vmatpush1.msra.mxu0 0.0
    %7939 = vmatprep.subr.mxu0 0.0
    %7940 = vmatpush1.msra.mxu0 0.0
    %7941 = vmatprep.subr.mxu0 0.0
    %7942 = vmatpush1.msra.mxu0 0.0
    %7943 = vmatprep.subr.mxu0 0.0
    %7944 = vmatpush1.msra.mxu0 0.0
    %7945 = vmatprep.subr.mxu0 0.0
    %7946 = vmatpush1.msra.mxu0 0.0
    %7947 = vmatprep.subr.mxu0 0.0
    %7948 = vmatpush1.msra.mxu0 0.0
    %7949 = vmatprep.subr.mxu0 0.0
    %7950 = vmatpush1.msra.mxu0 0.0
    %7951 = vmatprep.subr.mxu0 0.0
    %7952 = vmatpush1.msra.mxu0 0.0
    %7953 = vmatprep.subr.mxu0 0.0
    %7954 = vmatpush1.msra.mxu0 0.0
    %7955 = vmatprep.subr.mxu0 0.0
    %7956 = vmatpush1.msra.mxu0 0.0
    %7957 = vmatprep.subr.mxu0 0.0
    %7958 = vmatpush1.msra.mxu0 0.0
    %7959 = vmatprep.subr.mxu0 0.0
    %7960 = vmatpush1.msra.mxu0 0.0
    %7961 = vmatprep.subr.mxu0 0.0
    %7962 = vmatpush1.msra.mxu0 0.0
    %7963 = vmatprep.subr.mxu0 0.0
    %7964 = vmatpush1.msra.mxu0 0.0
    %7965 = vmatprep.subr.mxu0 0.0
    %7966 = vmatpush1.msra.mxu0 0.0
    %7967 = vmatprep.subr.mxu0 0.0
    %7968 = vmatpush1.msra.mxu0 0.0
    %7969 = vmatprep.subr.mxu0 0.0
    %7970 = vmatpush1.msra.mxu0 0.0
    %7971 = vmatprep.subr.mxu0 0.0
    %7972 = vmatpush1.msra.mxu0 0.0
    %7973 = vmatprep.subr.mxu0 0.0
    %7974 = vmatpush1.msra.mxu0 0.0
    %7975 = vmatprep.mubr.f32.mxu0 0.0
    %7976 = vmatmul.mubr.f32.gmra.mrb[0].mxu0 %v7909
    %v7977 = vpop.f32.mrb[0].mxu0
    %v7978 = vadd.f32 %v6638, %v7977
    %v7979 = vpop.f32.mrb[0].mxu0
    %v7980 = vadd.f32 %v6642, %v7979
    %7981 = vdwg.mxu0
    %v7984 = vunpack.c.l.s4 1966171168
    %v7985 = vunpack.c.0.s8 %v7984
    %v7986 = vlaneseq
    %v7987 = vshrl.u32 %v7986, 7
    %v7988 = vsub.s32 %v7985, %v7987
    %v7989 = vrot.slane %v7978, %v7988
    %v7990 = vcombine.high %v7989, %v7989
    %v7992 = vunpack.c.l.s4 1966171168
    %v7993 = vunpack.c.0.s8 %v7992
    %v7994 = vlaneseq
    %v7995 = vshrl.u32 %v7994, 7
    %v7996 = vsub.s32 %v7993, %v7995
    %v7997 = vrot.slane %v7989, %v7996
    %v7999 = vunpack.c.l.s4 1966171168
    %v8000 = vunpack.c.0.s8 %v7999
    %v8001 = vlaneseq
    %v8002 = vshrl.u32 %v8001, 7
    %v8003 = vsub.s32 %v8000, %v8002
    %v8004 = vrot.slane %v7990, %v8003
    %v8007 = vadd.f32 %v7887, %v7997
    %v8008 = vadd.f32 %v7889, %v8004
    %v8009 = vxor.u32 %v8007, 2147483648
    %v8010 = vxor.u32 %v8008, 2147483648
    %v8011 = vmul.f32 %v8009, 1.442695
    %v8012 = vpow.pop %v8011
    %v8013 = vmul.f32 %v8010, 1.442695
    %v8014 = vpow.pop %v8013
    %v8015 = vadd.f32 %v8012, 1.0
    %v8016 = vadd.f32 %v8014, 1.0
    %v8017 = vrcp.pop %v8015
    %v8018 = vmul.f32 1.0, %v8017
    %v8019 = vrcp.pop %v8016
    %v8020 = vmul.f32 1.0, %v8019
    %v8022 = vcombine.low %v7978, %v7980
    %v8024 = vunpack.c.l.s4 1966171168
    %v8025 = vunpack.c.0.s8 %v8024
    %v8026 = vlaneseq
    %v8027 = vshrl.u32 %v8026, 7
    %v8028 = vsub.s32 %v8025, %v8027
    %v8029 = vrot.slane %v8022, %v8028
    %v8030 = vcombine.high %v8029, %v8029
    %v8032 = vunpack.c.l.s4 1966171168
    %v8033 = vunpack.c.0.s8 %v8032
    %v8034 = vlaneseq
    %v8035 = vshrl.u32 %v8034, 7
    %v8036 = vsub.s32 %v8033, %v8035
    %v8037 = vrot.slane %v8029, %v8036
    %v8039 = vunpack.c.l.s4 1966171168
    %v8040 = vunpack.c.0.s8 %v8039
    %v8041 = vlaneseq
    %v8042 = vshrl.u32 %v8041, 7
    %v8043 = vsub.s32 %v8040, %v8042
    %v8044 = vrot.slane %v8030, %v8043
    %8045 = vrot.lane.b32.xlu0 %v8037, 32
    %v8046 = vpop.permute.xlu0 %8045
    %8047 = vrot.lane.b32.xlu0 %v8044, 32
    %v8048 = vpop.permute.xlu0 %8047
    %v8049 = vrot.slane %v8046, 1
    %v8050 = vrot.slane %v8048, 1
    %v8051 = vsel %vm4508, %v8046, %v8049
    %v8052 = vsel %vm4508, %v8048, %v8050
    %v8055 = vmul.f32 %v8018, %v8051
    %v8056 = vmul.f32 %v8020, %v8052
    %8059 = vrot.lane.b32.xlu0 %v8055, 96
    %v8060 = vpop.permute.xlu0 %8059
    %8061 = vrot.lane.b32.xlu0 %v8056, 96
    %v8062 = vpop.permute.xlu0 %8061
    %v8063 = vrot.slane %v8060, 7
    %v8064 = vrot.slane %v8062, 7
    %v8065 = vsel %vm4523, %v8063, %v8060
    %v8066 = vsel %vm4523, %v8064, %v8062
    %v8069 = vadd.f32 %v7887, %v8065
    %v8070 = vadd.f32 %v7889, %v8066
    %v8071 = vtanh.pop %v8069
    %v8072 = vtanh.pop %v8070
    %v8073 = vsub.f32 1.0, %v8018
    %v8074 = vsub.f32 1.0, %v8020
    %8077 = vrot.lane.b32.xlu0 %v8071, 80
    %v8078 = vpop.permute.xlu0 %8077
    %8079 = vrot.lane.b32.xlu0 %v8072, 80
    %v8080 = vpop.permute.xlu0 %8079
    %v8081 = vrot.slane %v8078, 1
    %v8082 = vrot.slane %v8080, 1
    %v8083 = vsel %vm4542, %v8078, %v8081
    %v8084 = vsel %vm4542, %v8080, %v8082
    %v8087 = vmul.f32 %v8073, %v8083
    %v8088 = vmul.f32 %v8074, %v8084
    %v8089 = vmul.f32 %v8018, %v7880
    %v8090 = vmul.f32 %v8020, %v7881
    %v8091 = vadd.f32 %v8087, %v8089
    %v8092 = vadd.f32 %v8088, %v8090
    %v8093 = vmul.f32 %v8091, %v5269
    %v8094 = vmul.f32 %v8092, %v5273
    %v8095 = vadd.f32 %v7884, %v8093
    %v8096 = vadd.f32 %v7885, %v8094
    %s8097 = scalar_lea.vmem [#allocation3], 2
    %v8098 = vld [vmem:[%s8097] ss:$8 sm:$0x3]
    %s8099 = scalar_lea.vmem [#allocation3], 34
    %v8100 = vld [vmem:[%s8099] ss:$8 sm:$0x3]
    %v8103 = vcombine.low %v8091, %v8092
    %v8105 = vunpack.c.l.s4 1966171168
    %v8106 = vunpack.c.0.s8 %v8105
    %v8107 = vlaneseq
    %v8108 = vshrl.u32 %v8107, 7
    %v8109 = vsub.s32 %v8106, %v8108
    %v8110 = vrot.slane %v8103, %v8109
    %v8112 = vunpack.c.l.s4 1966171168
    %v8113 = vunpack.c.0.s8 %v8112
    %v8114 = vlaneseq
    %v8115 = vshrl.u32 %v8114, 7
    %v8116 = vsub.s32 %v8113, %v8115
    %v8117 = vrot.slane %v8110, %v8116
    %8118 = vrot.lane.b32.xlu0 %v8117, 80
    %v8119 = vpop.permute.xlu0 %8118
    %v8120 = vsel %vm356, %v8119, 0
    %8122 = vmatprep.subr.mxu0 %v4336
    %8123 = vmatpush1.msra.mxu0 %v4335
    %8124 = vmatprep.subr.mxu0 %v4338
    %8125 = vmatpush1.msra.mxu0 %v4337
    %8126 = vmatprep.subr.mxu0 %v4340
    %8127 = vmatpush1.msra.mxu0 %v4339
    %8128 = vmatprep.subr.mxu0 %v4342
    %8129 = vmatpush1.msra.mxu0 %v4341
    %8130 = vmatprep.subr.mxu0 %v4344
    %8131 = vmatpush1.msra.mxu0 %v4343
    %8132 = vmatprep.subr.mxu0 %v4346
    %8133 = vmatpush1.msra.mxu0 %v4345
    %8134 = vmatprep.subr.mxu0 0.0
    %8135 = vmatpush1.msra.mxu0 0.0
    %8136 = vmatprep.subr.mxu0 0.0
    %8137 = vmatpush1.msra.mxu0 0.0
    %8138 = vmatprep.subr.mxu0 0.0
    %8139 = vmatpush1.msra.mxu0 0.0
    %8140 = vmatprep.subr.mxu0 0.0
    %8141 = vmatpush1.msra.mxu0 0.0
    %8142 = vmatprep.subr.mxu0 0.0
    %8143 = vmatpush1.msra.mxu0 0.0
    %8144 = vmatprep.subr.mxu0 0.0
    %8145 = vmatpush1.msra.mxu0 0.0
    %8146 = vmatprep.subr.mxu0 0.0
    %8147 = vmatpush1.msra.mxu0 0.0
    %8148 = vmatprep.subr.mxu0 0.0
    %8149 = vmatpush1.msra.mxu0 0.0
    %8150 = vmatprep.subr.mxu0 0.0
    %8151 = vmatpush1.msra.mxu0 0.0
    %8152 = vmatprep.subr.mxu0 0.0
    %8153 = vmatpush1.msra.mxu0 0.0
    %8154 = vmatprep.subr.mxu0 0.0
    %8155 = vmatpush1.msra.mxu0 0.0
    %8156 = vmatprep.subr.mxu0 0.0
    %8157 = vmatpush1.msra.mxu0 0.0
    %8158 = vmatprep.subr.mxu0 0.0
    %8159 = vmatpush1.msra.mxu0 0.0
    %8160 = vmatprep.subr.mxu0 0.0
    %8161 = vmatpush1.msra.mxu0 0.0
    %8162 = vmatprep.subr.mxu0 0.0
    %8163 = vmatpush1.msra.mxu0 0.0
    %8164 = vmatprep.subr.mxu0 0.0
    %8165 = vmatpush1.msra.mxu0 0.0
    %8166 = vmatprep.subr.mxu0 0.0
    %8167 = vmatpush1.msra.mxu0 0.0
    %8168 = vmatprep.subr.mxu0 0.0
    %8169 = vmatpush1.msra.mxu0 0.0
    %8170 = vmatprep.subr.mxu0 0.0
    %8171 = vmatpush1.msra.mxu0 0.0
    %8172 = vmatprep.subr.mxu0 0.0
    %8173 = vmatpush1.msra.mxu0 0.0
    %8174 = vmatprep.subr.mxu0 0.0
    %8175 = vmatpush1.msra.mxu0 0.0
    %8176 = vmatprep.subr.mxu0 0.0
    %8177 = vmatpush1.msra.mxu0 0.0
    %8178 = vmatprep.subr.mxu0 0.0
    %8179 = vmatpush1.msra.mxu0 0.0
    %8180 = vmatprep.subr.mxu0 0.0
    %8181 = vmatpush1.msra.mxu0 0.0
    %8182 = vmatprep.subr.mxu0 0.0
    %8183 = vmatpush1.msra.mxu0 0.0
    %8184 = vmatprep.subr.mxu0 0.0
    %8185 = vmatpush1.msra.mxu0 0.0
    %8186 = vmatprep.mubr.f32.mxu0 0.0
    %8187 = vmatmul.mubr.f32.gmra.mrb[0].mxu0 %v8120
    %v8188 = vpop.f32.mrb[0].mxu0
    %v8189 = vadd.f32 %v6638, %v8188
    %v8190 = vpop.f32.mrb[0].mxu0
    %v8191 = vadd.f32 %v6642, %v8190
    %8192 = vdwg.mxu0
    %v8195 = vunpack.c.l.s4 1966171168
    %v8196 = vunpack.c.0.s8 %v8195
    %v8197 = vlaneseq
    %v8198 = vshrl.u32 %v8197, 7
    %v8199 = vsub.s32 %v8196, %v8198
    %v8200 = vrot.slane %v8189, %v8199
    %v8201 = vcombine.high %v8200, %v8200
    %v8203 = vunpack.c.l.s4 1966171168
    %v8204 = vunpack.c.0.s8 %v8203
    %v8205 = vlaneseq
    %v8206 = vshrl.u32 %v8205, 7
    %v8207 = vsub.s32 %v8204, %v8206
    %v8208 = vrot.slane %v8200, %v8207
    %v8210 = vunpack.c.l.s4 1966171168
    %v8211 = vunpack.c.0.s8 %v8210
    %v8212 = vlaneseq
    %v8213 = vshrl.u32 %v8212, 7
    %v8214 = vsub.s32 %v8211, %v8213
    %v8215 = vrot.slane %v8201, %v8214
    %v8218 = vadd.f32 %v8098, %v8208
    %v8219 = vadd.f32 %v8100, %v8215
    %v8220 = vxor.u32 %v8218, 2147483648
    %v8221 = vxor.u32 %v8219, 2147483648
    %v8222 = vmul.f32 %v8220, 1.442695
    %v8223 = vpow.pop %v8222
    %v8224 = vmul.f32 %v8221, 1.442695
    %v8225 = vpow.pop %v8224
    %v8226 = vadd.f32 %v8223, 1.0
    %v8227 = vadd.f32 %v8225, 1.0
    %v8228 = vrcp.pop %v8226
    %v8229 = vmul.f32 1.0, %v8228
    %v8230 = vrcp.pop %v8227
    %v8231 = vmul.f32 1.0, %v8230
    %v8233 = vcombine.low %v8189, %v8191
    %v8235 = vunpack.c.l.s4 1966171168
    %v8236 = vunpack.c.0.s8 %v8235
    %v8237 = vlaneseq
    %v8238 = vshrl.u32 %v8237, 7
    %v8239 = vsub.s32 %v8236, %v8238
    %v8240 = vrot.slane %v8233, %v8239
    %v8241 = vcombine.high %v8240, %v8240
    %v8243 = vunpack.c.l.s4 1966171168
    %v8244 = vunpack.c.0.s8 %v8243
    %v8245 = vlaneseq
    %v8246 = vshrl.u32 %v8245, 7
    %v8247 = vsub.s32 %v8244, %v8246
    %v8248 = vrot.slane %v8240, %v8247
    %v8250 = vunpack.c.l.s4 1966171168
    %v8251 = vunpack.c.0.s8 %v8250
    %v8252 = vlaneseq
    %v8253 = vshrl.u32 %v8252, 7
    %v8254 = vsub.s32 %v8251, %v8253
    %v8255 = vrot.slane %v8241, %v8254
    %8256 = vrot.lane.b32.xlu0 %v8248, 32
    %v8257 = vpop.permute.xlu0 %8256
    %8258 = vrot.lane.b32.xlu0 %v8255, 32
    %v8259 = vpop.permute.xlu0 %8258
    %v8260 = vrot.slane %v8257, 1
    %v8261 = vrot.slane %v8259, 1
    %v8262 = vsel %vm4508, %v8257, %v8260
    %v8263 = vsel %vm4508, %v8259, %v8261
    %v8266 = vmul.f32 %v8229, %v8262
    %v8267 = vmul.f32 %v8231, %v8263
    %8270 = vrot.lane.b32.xlu0 %v8266, 96
    %v8271 = vpop.permute.xlu0 %8270
    %8272 = vrot.lane.b32.xlu0 %v8267, 96
    %v8273 = vpop.permute.xlu0 %8272
    %v8274 = vrot.slane %v8271, 7
    %v8275 = vrot.slane %v8273, 7
    %v8276 = vsel %vm4523, %v8274, %v8271
    %v8277 = vsel %vm4523, %v8275, %v8273
    %v8280 = vadd.f32 %v8098, %v8276
    %v8281 = vadd.f32 %v8100, %v8277
    %v8282 = vtanh.pop %v8280
    %v8283 = vtanh.pop %v8281
    %v8284 = vsub.f32 1.0, %v8229
    %v8285 = vsub.f32 1.0, %v8231
    %8288 = vrot.lane.b32.xlu0 %v8282, 80
    %v8289 = vpop.permute.xlu0 %8288
    %8290 = vrot.lane.b32.xlu0 %v8283, 80
    %v8291 = vpop.permute.xlu0 %8290
    %v8292 = vrot.slane %v8289, 1
    %v8293 = vrot.slane %v8291, 1
    %v8294 = vsel %vm4542, %v8289, %v8292
    %v8295 = vsel %vm4542, %v8291, %v8293
    %v8298 = vmul.f32 %v8284, %v8294
    %v8299 = vmul.f32 %v8285, %v8295
    %v8300 = vmul.f32 %v8229, %v8091
    %v8301 = vmul.f32 %v8231, %v8092
    %v8302 = vadd.f32 %v8298, %v8300
    %v8303 = vadd.f32 %v8299, %v8301
    %v8304 = vmul.f32 %v8302, %v5044
    %v8305 = vmul.f32 %v8303, %v5048
    %v8306 = vadd.f32 %v8095, %v8304
    %v8307 = vadd.f32 %v8096, %v8305
    %s8308 = scalar_lea.vmem [#allocation3], 1
    %v8309 = vld [vmem:[%s8308] ss:$8 sm:$0x3]
    %s8310 = scalar_lea.vmem [#allocation3], 33
    %v8311 = vld [vmem:[%s8310] ss:$8 sm:$0x3]
    %v8314 = vcombine.low %v8302, %v8303
    %v8316 = vunpack.c.l.s4 1966171168
    %v8317 = vunpack.c.0.s8 %v8316
    %v8318 = vlaneseq
    %v8319 = vshrl.u32 %v8318, 7
    %v8320 = vsub.s32 %v8317, %v8319
    %v8321 = vrot.slane %v8314, %v8320
    %v8323 = vunpack.c.l.s4 1966171168
    %v8324 = vunpack.c.0.s8 %v8323
    %v8325 = vlaneseq
    %v8326 = vshrl.u32 %v8325, 7
    %v8327 = vsub.s32 %v8324, %v8326
    %v8328 = vrot.slane %v8321, %v8327
    %8329 = vrot.lane.b32.xlu0 %v8328, 80
    %v8330 = vpop.permute.xlu0 %8329
    %v8331 = vsel %vm356, %v8330, 0
    %8333 = vmatprep.subr.mxu0 %v4336
    %8334 = vmatpush1.msra.mxu0 %v4335
    %8335 = vmatprep.subr.mxu0 %v4338
    %8336 = vmatpush1.msra.mxu0 %v4337
    %8337 = vmatprep.subr.mxu0 %v4340
    %8338 = vmatpush1.msra.mxu0 %v4339
    %8339 = vmatprep.subr.mxu0 %v4342
    %8340 = vmatpush1.msra.mxu0 %v4341
    %8341 = vmatprep.subr.mxu0 %v4344
    %8342 = vmatpush1.msra.mxu0 %v4343
    %8343 = vmatprep.subr.mxu0 %v4346
    %8344 = vmatpush1.msra.mxu0 %v4345
    %8345 = vmatprep.subr.mxu0 0.0
    %8346 = vmatpush1.msra.mxu0 0.0
    %8347 = vmatprep.subr.mxu0 0.0
    %8348 = vmatpush1.msra.mxu0 0.0
    %8349 = vmatprep.subr.mxu0 0.0
    %8350 = vmatpush1.msra.mxu0 0.0
    %8351 = vmatprep.subr.mxu0 0.0
    %8352 = vmatpush1.msra.mxu0 0.0
    %8353 = vmatprep.subr.mxu0 0.0
    %8354 = vmatpush1.msra.mxu0 0.0
    %8355 = vmatprep.subr.mxu0 0.0
    %8356 = vmatpush1.msra.mxu0 0.0
    %8357 = vmatprep.subr.mxu0 0.0
    %8358 = vmatpush1.msra.mxu0 0.0
    %8359 = vmatprep.subr.mxu0 0.0
    %8360 = vmatpush1.msra.mxu0 0.0
    %8361 = vmatprep.subr.mxu0 0.0
    %8362 = vmatpush1.msra.mxu0 0.0
    %8363 = vmatprep.subr.mxu0 0.0
    %8364 = vmatpush1.msra.mxu0 0.0
    %8365 = vmatprep.subr.mxu0 0.0
    %8366 = vmatpush1.msra.mxu0 0.0
    %8367 = vmatprep.subr.mxu0 0.0
    %8368 = vmatpush1.msra.mxu0 0.0
    %8369 = vmatprep.subr.mxu0 0.0
    %8370 = vmatpush1.msra.mxu0 0.0
    %8371 = vmatprep.subr.mxu0 0.0
    %8372 = vmatpush1.msra.mxu0 0.0
    %8373 = vmatprep.subr.mxu0 0.0
    %8374 = vmatpush1.msra.mxu0 0.0
    %8375 = vmatprep.subr.mxu0 0.0
    %8376 = vmatpush1.msra.mxu0 0.0
    %8377 = vmatprep.subr.mxu0 0.0
    %8378 = vmatpush1.msra.mxu0 0.0
    %8379 = vmatprep.subr.mxu0 0.0
    %8380 = vmatpush1.msra.mxu0 0.0
    %8381 = vmatprep.subr.mxu0 0.0
    %8382 = vmatpush1.msra.mxu0 0.0
    %8383 = vmatprep.subr.mxu0 0.0
    %8384 = vmatpush1.msra.mxu0 0.0
    %8385 = vmatprep.subr.mxu0 0.0
    %8386 = vmatpush1.msra.mxu0 0.0
    %8387 = vmatprep.subr.mxu0 0.0
    %8388 = vmatpush1.msra.mxu0 0.0
    %8389 = vmatprep.subr.mxu0 0.0
    %8390 = vmatpush1.msra.mxu0 0.0
    %8391 = vmatprep.subr.mxu0 0.0
    %8392 = vmatpush1.msra.mxu0 0.0
    %8393 = vmatprep.subr.mxu0 0.0
    %8394 = vmatpush1.msra.mxu0 0.0
    %8395 = vmatprep.subr.mxu0 0.0
    %8396 = vmatpush1.msra.mxu0 0.0
    %8397 = vmatprep.mubr.f32.mxu0 0.0
    %8398 = vmatmul.mubr.f32.gmra.mrb[0].mxu0 %v8331
    %v8399 = vpop.f32.mrb[0].mxu0
    %v8400 = vadd.f32 %v6638, %v8399
    %v8401 = vpop.f32.mrb[0].mxu0
    %v8402 = vadd.f32 %v6642, %v8401
    %8403 = vdwg.mxu0
    %v8406 = vunpack.c.l.s4 1966171168
    %v8407 = vunpack.c.0.s8 %v8406
    %v8408 = vlaneseq
    %v8409 = vshrl.u32 %v8408, 7
    %v8410 = vsub.s32 %v8407, %v8409
    %v8411 = vrot.slane %v8400, %v8410
    %v8412 = vcombine.high %v8411, %v8411
    %v8414 = vunpack.c.l.s4 1966171168
    %v8415 = vunpack.c.0.s8 %v8414
    %v8416 = vlaneseq
    %v8417 = vshrl.u32 %v8416, 7
    %v8418 = vsub.s32 %v8415, %v8417
    %v8419 = vrot.slane %v8411, %v8418
    %v8421 = vunpack.c.l.s4 1966171168
    %v8422 = vunpack.c.0.s8 %v8421
    %v8423 = vlaneseq
    %v8424 = vshrl.u32 %v8423, 7
    %v8425 = vsub.s32 %v8422, %v8424
    %v8426 = vrot.slane %v8412, %v8425
    %v8429 = vadd.f32 %v8309, %v8419
    %v8430 = vadd.f32 %v8311, %v8426
    %v8431 = vxor.u32 %v8429, 2147483648
    %v8432 = vxor.u32 %v8430, 2147483648
    %v8433 = vmul.f32 %v8431, 1.442695
    %v8434 = vpow.pop %v8433
    %v8435 = vmul.f32 %v8432, 1.442695
    %v8436 = vpow.pop %v8435
    %v8437 = vadd.f32 %v8434, 1.0
    %v8438 = vadd.f32 %v8436, 1.0
    %v8439 = vrcp.pop %v8437
    %v8440 = vmul.f32 1.0, %v8439
    %v8441 = vrcp.pop %v8438
    %v8442 = vmul.f32 1.0, %v8441
    %v8444 = vcombine.low %v8400, %v8402
    %v8446 = vunpack.c.l.s4 1966171168
    %v8447 = vunpack.c.0.s8 %v8446
    %v8448 = vlaneseq
    %v8449 = vshrl.u32 %v8448, 7
    %v8450 = vsub.s32 %v8447, %v8449
    %v8451 = vrot.slane %v8444, %v8450
    %v8452 = vcombine.high %v8451, %v8451
    %v8454 = vunpack.c.l.s4 1966171168
    %v8455 = vunpack.c.0.s8 %v8454
    %v8456 = vlaneseq
    %v8457 = vshrl.u32 %v8456, 7
    %v8458 = vsub.s32 %v8455, %v8457
    %v8459 = vrot.slane %v8451, %v8458
    %v8461 = vunpack.c.l.s4 1966171168
    %v8462 = vunpack.c.0.s8 %v8461
    %v8463 = vlaneseq
    %v8464 = vshrl.u32 %v8463, 7
    %v8465 = vsub.s32 %v8462, %v8464
    %v8466 = vrot.slane %v8452, %v8465
    %8467 = vrot.lane.b32.xlu0 %v8459, 32
    %v8468 = vpop.permute.xlu0 %8467
    %8469 = vrot.lane.b32.xlu0 %v8466, 32
    %v8470 = vpop.permute.xlu0 %8469
    %v8471 = vrot.slane %v8468, 1
    %v8472 = vrot.slane %v8470, 1
    %v8473 = vsel %vm4508, %v8468, %v8471
    %v8474 = vsel %vm4508, %v8470, %v8472
    %v8477 = vmul.f32 %v8440, %v8473
    %v8478 = vmul.f32 %v8442, %v8474
    %8481 = vrot.lane.b32.xlu0 %v8477, 96
    %v8482 = vpop.permute.xlu0 %8481
    %8483 = vrot.lane.b32.xlu0 %v8478, 96
    %v8484 = vpop.permute.xlu0 %8483
    %v8485 = vrot.slane %v8482, 7
    %v8486 = vrot.slane %v8484, 7
    %v8487 = vsel %vm4523, %v8485, %v8482
    %v8488 = vsel %vm4523, %v8486, %v8484
    %v8491 = vadd.f32 %v8309, %v8487
    %v8492 = vadd.f32 %v8311, %v8488
    %v8493 = vtanh.pop %v8491
    %v8494 = vtanh.pop %v8492
    %v8495 = vsub.f32 1.0, %v8440
    %v8496 = vsub.f32 1.0, %v8442
    %8499 = vrot.lane.b32.xlu0 %v8493, 80
    %v8500 = vpop.permute.xlu0 %8499
    %8501 = vrot.lane.b32.xlu0 %v8494, 80
    %v8502 = vpop.permute.xlu0 %8501
    %v8503 = vrot.slane %v8500, 1
    %v8504 = vrot.slane %v8502, 1
    %v8505 = vsel %vm4542, %v8500, %v8503
    %v8506 = vsel %vm4542, %v8502, %v8504
    %v8509 = vmul.f32 %v8495, %v8505
    %v8510 = vmul.f32 %v8496, %v8506
    %v8511 = vmul.f32 %v8440, %v8302
    %v8512 = vmul.f32 %v8442, %v8303
    %v8513 = vadd.f32 %v8509, %v8511
    %v8514 = vadd.f32 %v8510, %v8512
    %v8515 = vmul.f32 %v8513, %v4819
    %v8516 = vmul.f32 %v8514, %v4823
    %v8517 = vadd.f32 %v8306, %v8515
    %v8518 = vadd.f32 %v8307, %v8516
    %v8519 = vld [vmem:[#allocation3] ss:$8 sm:$0x3]
    %s8520 = scalar_lea.vmem [#allocation3], 32
    %v8521 = vld [vmem:[%s8520] ss:$8 sm:$0x3]
    %v8524 = vcombine.low %v8513, %v8514
    %v8526 = vunpack.c.l.s4 1966171168
    %v8527 = vunpack.c.0.s8 %v8526
    %v8528 = vlaneseq
    %v8529 = vshrl.u32 %v8528, 7
    %v8530 = vsub.s32 %v8527, %v8529
    %v8531 = vrot.slane %v8524, %v8530
    %v8533 = vunpack.c.l.s4 1966171168
    %v8534 = vunpack.c.0.s8 %v8533
    %v8535 = vlaneseq
    %v8536 = vshrl.u32 %v8535, 7
    %v8537 = vsub.s32 %v8534, %v8536
    %v8538 = vrot.slane %v8531, %v8537
    %8539 = vrot.lane.b32.xlu0 %v8538, 80
    %v8540 = vpop.permute.xlu0 %8539
    %v8541 = vsel %vm356, %v8540, 0
    %8543 = vmatprep.subr.mxu0 %v4336
    %8544 = vmatpush1.msra.mxu0 %v4335
    %8545 = vmatprep.subr.mxu0 %v4338
    %8546 = vmatpush1.msra.mxu0 %v4337
    %8547 = vmatprep.subr.mxu0 %v4340
    %8548 = vmatpush1.msra.mxu0 %v4339
    %8549 = vmatprep.subr.mxu0 %v4342
    %8550 = vmatpush1.msra.mxu0 %v4341
    %8551 = vmatprep.subr.mxu0 %v4344
    %8552 = vmatpush1.msra.mxu0 %v4343
    %8553 = vmatprep.subr.mxu0 %v4346
    %8554 = vmatpush1.msra.mxu0 %v4345
    %8555 = vmatprep.subr.mxu0 0.0
    %8556 = vmatpush1.msra.mxu0 0.0
    %8557 = vmatprep.subr.mxu0 0.0
    %8558 = vmatpush1.msra.mxu0 0.0
    %8559 = vmatprep.subr.mxu0 0.0
    %8560 = vmatpush1.msra.mxu0 0.0
    %8561 = vmatprep.subr.mxu0 0.0
    %8562 = vmatpush1.msra.mxu0 0.0
    %8563 = vmatprep.subr.mxu0 0.0
    %8564 = vmatpush1.msra.mxu0 0.0
    %8565 = vmatprep.subr.mxu0 0.0
    %8566 = vmatpush1.msra.mxu0 0.0
    %8567 = vmatprep.subr.mxu0 0.0
    %8568 = vmatpush1.msra.mxu0 0.0
    %8569 = vmatprep.subr.mxu0 0.0
    %8570 = vmatpush1.msra.mxu0 0.0
    %8571 = vmatprep.subr.mxu0 0.0
    %8572 = vmatpush1.msra.mxu0 0.0
    %8573 = vmatprep.subr.mxu0 0.0
    %8574 = vmatpush1.msra.mxu0 0.0
    %8575 = vmatprep.subr.mxu0 0.0
    %8576 = vmatpush1.msra.mxu0 0.0
    %8577 = vmatprep.subr.mxu0 0.0
    %8578 = vmatpush1.msra.mxu0 0.0
    %8579 = vmatprep.subr.mxu0 0.0
    %8580 = vmatpush1.msra.mxu0 0.0
    %8581 = vmatprep.subr.mxu0 0.0
    %8582 = vmatpush1.msra.mxu0 0.0
    %8583 = vmatprep.subr.mxu0 0.0
    %8584 = vmatpush1.msra.mxu0 0.0
    %8585 = vmatprep.subr.mxu0 0.0
    %8586 = vmatpush1.msra.mxu0 0.0
    %8587 = vmatprep.subr.mxu0 0.0
    %8588 = vmatpush1.msra.mxu0 0.0
    %8589 = vmatprep.subr.mxu0 0.0
    %8590 = vmatpush1.msra.mxu0 0.0
    %8591 = vmatprep.subr.mxu0 0.0
    %8592 = vmatpush1.msra.mxu0 0.0
    %8593 = vmatprep.subr.mxu0 0.0
    %8594 = vmatpush1.msra.mxu0 0.0
    %8595 = vmatprep.subr.mxu0 0.0
    %8596 = vmatpush1.msra.mxu0 0.0
    %8597 = vmatprep.subr.mxu0 0.0
    %8598 = vmatpush1.msra.mxu0 0.0
    %8599 = vmatprep.subr.mxu0 0.0
    %8600 = vmatpush1.msra.mxu0 0.0
    %8601 = vmatprep.subr.mxu0 0.0
    %8602 = vmatpush1.msra.mxu0 0.0
    %8603 = vmatprep.subr.mxu0 0.0
    %8604 = vmatpush1.msra.mxu0 0.0
    %8605 = vmatprep.subr.mxu0 0.0
    %8606 = vmatpush1.msra.mxu0 0.0
    %8607 = vmatprep.mubr.f32.mxu0 0.0
    %8608 = vmatmul.mubr.f32.gmra.mrb[0].mxu0 %v8541
    %v8609 = vpop.f32.mrb[0].mxu0
    %v8610 = vadd.f32 %v6638, %v8609
    %v8611 = vpop.f32.mrb[0].mxu0
    %v8612 = vadd.f32 %v6642, %v8611
    %8613 = vdwg.mxu0
    %v8616 = vunpack.c.l.s4 1966171168
    %v8617 = vunpack.c.0.s8 %v8616
    %v8618 = vlaneseq
    %v8619 = vshrl.u32 %v8618, 7
    %v8620 = vsub.s32 %v8617, %v8619
    %v8621 = vrot.slane %v8610, %v8620
    %v8622 = vcombine.high %v8621, %v8621
    %v8624 = vunpack.c.l.s4 1966171168
    %v8625 = vunpack.c.0.s8 %v8624
    %v8626 = vlaneseq
    %v8627 = vshrl.u32 %v8626, 7
    %v8628 = vsub.s32 %v8625, %v8627
    %v8629 = vrot.slane %v8621, %v8628
    %v8631 = vunpack.c.l.s4 1966171168
    %v8632 = vunpack.c.0.s8 %v8631
    %v8633 = vlaneseq
    %v8634 = vshrl.u32 %v8633, 7
    %v8635 = vsub.s32 %v8632, %v8634
    %v8636 = vrot.slane %v8622, %v8635
    %v8639 = vadd.f32 %v8519, %v8629
    %v8640 = vadd.f32 %v8521, %v8636
    %v8641 = vxor.u32 %v8639, 2147483648
    %v8642 = vxor.u32 %v8640, 2147483648
    %v8643 = vmul.f32 %v8641, 1.442695
    %v8644 = vpow.pop %v8643
    %v8645 = vmul.f32 %v8642, 1.442695
    %v8646 = vpow.pop %v8645
    %v8647 = vadd.f32 %v8644, 1.0
    %v8648 = vadd.f32 %v8646, 1.0
    %v8649 = vrcp.pop %v8647
    %v8650 = vmul.f32 1.0, %v8649
    %v8651 = vrcp.pop %v8648
    %v8652 = vmul.f32 1.0, %v8651
    %v8654 = vcombine.low %v8610, %v8612
    %v8656 = vunpack.c.l.s4 1966171168
    %v8657 = vunpack.c.0.s8 %v8656
    %v8658 = vlaneseq
    %v8659 = vshrl.u32 %v8658, 7
    %v8660 = vsub.s32 %v8657, %v8659
    %v8661 = vrot.slane %v8654, %v8660
    %v8662 = vcombine.high %v8661, %v8661
    %v8664 = vunpack.c.l.s4 1966171168
    %v8665 = vunpack.c.0.s8 %v8664
    %v8666 = vlaneseq
    %v8667 = vshrl.u32 %v8666, 7
    %v8668 = vsub.s32 %v8665, %v8667
    %v8669 = vrot.slane %v8661, %v8668
    %v8671 = vunpack.c.l.s4 1966171168
    %v8672 = vunpack.c.0.s8 %v8671
    %v8673 = vlaneseq
    %v8674 = vshrl.u32 %v8673, 7
    %v8675 = vsub.s32 %v8672, %v8674
    %v8676 = vrot.slane %v8662, %v8675
    %8677 = vrot.lane.b32.xlu0 %v8669, 32
    %v8678 = vpop.permute.xlu0 %8677
    %8679 = vrot.lane.b32.xlu0 %v8676, 32
    %v8680 = vpop.permute.xlu0 %8679
    %v8681 = vrot.slane %v8678, 1
    %v8682 = vrot.slane %v8680, 1
    %v8683 = vsel %vm4508, %v8678, %v8681
    %v8684 = vsel %vm4508, %v8680, %v8682
    %v8687 = vmul.f32 %v8650, %v8683
    %v8688 = vmul.f32 %v8652, %v8684
    %8691 = vrot.lane.b32.xlu0 %v8687, 96
    %v8692 = vpop.permute.xlu0 %8691
    %8693 = vrot.lane.b32.xlu0 %v8688, 96
    %v8694 = vpop.permute.xlu0 %8693
    %v8695 = vrot.slane %v8692, 7
    %v8696 = vrot.slane %v8694, 7
    %v8697 = vsel %vm4523, %v8695, %v8692
    %v8698 = vsel %vm4523, %v8696, %v8694
    %v8701 = vadd.f32 %v8519, %v8697
    %v8702 = vadd.f32 %v8521, %v8698
    %v8703 = vtanh.pop %v8701
    %v8704 = vtanh.pop %v8702
    %v8705 = vsub.f32 1.0, %v8650
    %v8706 = vsub.f32 1.0, %v8652
    %8709 = vrot.lane.b32.xlu0 %v8703, 80
    %v8710 = vpop.permute.xlu0 %8709
    %8711 = vrot.lane.b32.xlu0 %v8704, 80
    %v8712 = vpop.permute.xlu0 %8711
    %v8713 = vrot.slane %v8710, 1
    %v8714 = vrot.slane %v8712, 1
    %v8715 = vsel %vm4542, %v8710, %v8713
    %v8716 = vsel %vm4542, %v8712, %v8714
    %v8719 = vmul.f32 %v8705, %v8715
    %v8720 = vmul.f32 %v8706, %v8716
    %v8721 = vmul.f32 %v8650, %v8513
    %v8722 = vmul.f32 %v8652, %v8514
    %v8723 = vadd.f32 %v8719, %v8721
    %v8724 = vadd.f32 %v8720, %v8722
    %v8725 = vmul.f32 %v8723, %v4594
    %v8726 = vmul.f32 %v8724, %v4598
    %v8727 = vadd.f32 %v8517, %v8725
    %v8728 = vadd.f32 %v8518, %v8726
    %v8729 = vcvt.s32.f32 %v242
    %v8730 = vmax.f32 %v8729, 1.0
    %v8731 = vrcp.pop %v8730
    %v8733 = vlaneseq
    %v8734 = vshrl.u32 %v8733, 7
    %v8735 = vsub.s32 0, %v8734
    %v8736 = vrot.slane %v8731, %v8735
    %v8737 = vlaneseq
    %v8738 = vshrl.u32 %v8737, 7
    %v8739 = vsub.s32 1, %v8738
    %v8740 = vrot.slane %v8731, %v8739
    %v8743 = vmul.f32 %v6628, %v8736
    %v8744 = vmul.f32 %v6629, %v8740
    %v8745 = vmul.f32 %v8727, %v8736
    %v8746 = vmul.f32 %v8728, %v8740
    %v8749 = vcombine.low %v8743, %v8744
    %v8751 = vunpack.c.l.s4 1966171168
    %v8752 = vunpack.c.0.s8 %v8751
    %v8753 = vlaneseq
    %v8754 = vshrl.u32 %v8753, 7
    %v8755 = vsub.s32 %v8752, %v8754
    %v8756 = vrot.slane %v8749, %v8755
    %v8758 = vunpack.c.l.s4 1966171168
    %v8759 = vunpack.c.0.s8 %v8758
    %v8760 = vlaneseq
    %v8761 = vshrl.u32 %v8760, 7
    %v8762 = vsub.s32 %v8759, %v8761
    %v8763 = vrot.slane %v8756, %v8762
    %8764 = vrot.lane.b32.xlu0 %v8763, 80
    %v8765 = vpop.permute.xlu0 %8764
    %v8769 = vcombine.low %v8745, %v8746
    %v8771 = vunpack.c.l.s4 1966171168
    %v8772 = vunpack.c.0.s8 %v8771
    %v8773 = vlaneseq
    %v8774 = vshrl.u32 %v8773, 7
    %v8775 = vsub.s32 %v8772, %v8774
    %v8776 = vrot.slane %v8769, %v8775
    %v8778 = vunpack.c.l.s4 1966171168
    %v8779 = vunpack.c.0.s8 %v8778
    %v8780 = vlaneseq
    %v8781 = vshrl.u32 %v8780, 7
    %v8782 = vsub.s32 %v8779, %v8781
    %v8783 = vrot.slane %v8776, %v8782
    %v8785 = vsel %vm356, %v8765, %v8783
    %vm8786 = vcmask 779264
    %8787 = vst.msk [vmem:[#allocation27] sm:$0x3] %vm8786, %v8785
    // Predicated region
    $region122: #{fused_forward.1} parent=1 // pred_check
      _
    $region123: #{fused_forward.1} parent=1 // pred_check_branch
      %8789 = sbr.rel (0) target = $region125
    $region124: #{fused_forward.1} parent=1 // pred_region
      %s8791 = ssub.s32 32, 32
      %8792 = vsyncadd [#allocation9], %s8791
      %s8794 = sshll.u32 [#allocation27], 4
      %s8795 = int_to_ptr.vmem [resolvable:$true] %s8794
      %8797 = dma.vmem_to_hbm [thread:$0]  %s8795, 32, %s20, [#allocation9]
    $region125: #{fused_forward.1} parent=1 // pred_fallthru
      _
    // Predicated region
    $region126: #{fused_forward.1} parent=1 // pred_check
      _
    $region127: #{fused_forward.1} parent=1 // pred_check_branch
      %8799 = sbr.rel (0) target = $region129
    $region128: #{fused_forward.1} parent=1 // pred_region
      %8800 = dma.done [#allocation9], 32
    $region129: #{fused_forward.1} parent=1 // pred_fallthru
      _
    %8801 = vsyncpa [#allocation8], 1
    %8802 = vsyncpa [#allocation11], 1
    %8803 = vsyncpa [#allocation14], 1
    %8804 = vsyncpa [#allocation17], 1
    %8805 = vsyncpa [#allocation20], 1
    %8806 = vsyncpa [#allocation23], 1
    %8807 = vsyncpa [#allocation26], 1
    %8808 = vsyncpa [#allocation9], 1

</llo_original>
